<compile_context>
chip_gen: v6e
topology: v6e:2x2x1
jax: 0.10.0
libtpu: 0.0.40
codegen_flags: <defaults>
</compile_context>

<pallas_src>
import jax
import jax.numpy as jnp
import numpy as np
from jax.experimental import pallas as pl
from jax.experimental.pallas import tpu as pltpu


def basic_block_kernel(x_ref, w1_ref, w2_ref, s1_ref, b1_ref, s2_ref, b2_ref,
                       o_ref, col_scr):
    """One batch element per grid step.

    conv3x3 -> bn -> relu -> conv3x3 -> bn -> +identity -> relu, fully fused.

    Each conv = 3 accumulating MXU matmuls (one per kernel row dy):
        (H*W, 3*Cp) @ (3*Cp, Cp)    bf16 operands, f32 accumulation,
    where the LHS is a free outer-dim slice of the shared (H+2, W, 3*Cp)
    im2col scratch whose three lane blocks are the dx = 0/1/2 taps.
    """
    H = x_ref.shape[1]
    W = x_ref.shape[2]
    Cp = x_ref.shape[3]            # lane-padded channel count (multiple of 128)

    # ---- zero the scratch halo once per step (covers both convs) ----------
    # rows 0 and H+1 = top/bottom conv padding; column 0 of the dx=0 lane
    # block and column W-1 of the dx=2 lane block = left/right padding.
    # The interior writes below never touch these regions.
    col_scr[0:1, :, :] = jnp.zeros((1, W, 3 * Cp), col_scr.dtype)
    col_scr[H + 1:H + 2, :, :] = jnp.zeros((1, W, 3 * Cp), col_scr.dtype)
    col_scr[:, 0:1, 0:Cp] = jnp.zeros((H + 2, 1, Cp), col_scr.dtype)
    col_scr[:, W - 1:W, 2 * Cp:3 * Cp] = jnp.zeros((H + 2, 1, Cp),
                                                   col_scr.dtype)

    def conv3x3(inp_b, w_ref):
        """inp_b: (H, W, Cp) bf16  ->  (H*W, Cp) f32 conv output."""
        # dx = 1 (centre): lane-offset only, sublane-aligned full-width store.
        col_scr[1:H + 1, :, Cp:2 * Cp] = inp_b
        # dx = 0 / dx = 2: the only two shifted (sublane-misaligned) copies.
        # TODO(synk): these two could be produced with pltpu.roll (XLU) + a
        #             lane mask to take the shift off the vld/vst path.
        col_scr[1:H + 1, 1:W, 0:Cp] = inp_b[:, 0:W - 1, :]
        col_scr[1:H + 1, 0:W - 1, 2 * Cp:3 * Cp] = inp_b[:, 1:W, :]
        # Three accumulating matmuls, one per kernel row (dy = 0, 1, 2).
        acc = jnp.dot(col_scr[0:H, :, :].reshape(H * W, 3 * Cp),
                      w_ref[0:3 * Cp, :],
                      preferred_element_type=jnp.float32)
        acc = acc + jnp.dot(col_scr[1:H + 1, :, :].reshape(H * W, 3 * Cp),
                            w_ref[3 * Cp:6 * Cp, :],
                            preferred_element_type=jnp.float32)
        acc = acc + jnp.dot(col_scr[2:H + 2, :, :].reshape(H * W, 3 * Cp),
                            w_ref[6 * Cp:9 * Cp, :],
                            preferred_element_type=jnp.float32)
        return acc

    x_b = x_ref[0]                                     # (H, W, Cp) bf16

    # ---- conv1 -> bn1 (folded scale/bias) -> relu, f32 math ---------------
    acc1 = conv3x3(x_b, w1_ref)
    out1 = jnp.maximum(acc1 * s1_ref[...] + b1_ref[...], 0.0)

    # ---- conv2 -> bn2 -> +identity -> relu ---------------------------------
    acc2 = conv3x3(out1.reshape(H, W, Cp).astype(jnp.bfloat16), w2_ref)
    identity = x_b.reshape(H * W, Cp).astype(jnp.float32)
    out = jnp.maximum(acc2 * s2_ref[...] + b2_ref[...] + identity, 0.0)
    o_ref[0] = out.reshape(H, W, Cp).astype(o_ref.dtype)


def prepare_basic_block_params(w1_oihw, w2_oihw,
                               gamma1, beta1, mean1, var1,
                               gamma2, beta2, mean2, var2, eps=1e-5):
    """One-time parameter packing (hoisted out of the jitted per-call path)."""
    Cout, Cin = int(w1_oihw.shape[0]), int(w1_oihw.shape[1])
    assert Cin == Cout, "BasicBlock with downsample=None requires Cin == Cout"
    C = Cin
    Cp = ((C + 127) // 128) * 128

    def prep_w(w_oihw):
        # OIHW -> HWIO, pad both channel dims, flatten to a (9*Cp, Cp) matrix
        # with row order (dy, dx, cin) matching the kernel's lane-block layout.
        w = jnp.transpose(w_oihw, (2, 3, 1, 0)).astype(jnp.float32)
        if Cp != C:
            w = jnp.pad(w, ((0, 0), (0, 0), (0, Cp - C), (0, Cp - C)))
        return w.reshape(9 * Cp, Cp).astype(jnp.bfloat16)

    def fold_bn(g, b, m, v):
        inv = g / jnp.sqrt(v + eps)
        s = inv
        bb = b - m * inv
        if Cp != C:
            s = jnp.pad(s, ((0, Cp - C),))
            bb = jnp.pad(bb, ((0, Cp - C),))
        return (s.reshape(1, Cp).astype(jnp.float32),
                bb.reshape(1, Cp).astype(jnp.float32))

    s1, b1 = fold_bn(gamma1, beta1, mean1, var1)
    s2, b2 = fold_bn(gamma2, beta2, mean2, var2)
    return (prep_w(w1_oihw), prep_w(w2_oihw), s1, b1, s2, b2)


def basic_block_apply(x_nchw, params):
    """Per-call forward: layout ops + the fused Pallas kernel."""
    w1m, w2m, s1, b1, s2, b2 = params
    N, C, H, W = x_nchw.shape
    Cp = w1m.shape[1]

    # NCHW f32 -> NHWC bf16, channel-pad to the 128-lane width.  Padded
    # channels stay identically zero through conv/bn/relu/residual.
    # TODO(synk): in a full model keep activations NHWC / channel-padded /
    #             bf16 end-to-end so these layout ops leave the hot path.
    x = jnp.transpose(x_nchw, (0, 2, 3, 1)).astype(jnp.bfloat16)
    if Cp != C:
        x = jnp.pad(x, ((0, 0), (0, 0), (0, 0), (0, Cp - C)))

    flops = 2 * (2 * N * H * W * (9 * Cp) * Cp)               # two convs
    bytes_accessed = (x.size * 2 + w1m.size * 2 + w2m.size * 2
                      + (s1.size + b1.size + s2.size + b2.size) * 4
                      + N * H * W * Cp * 2)

    out_nhwc = pl.pallas_call(
        basic_block_kernel,
        out_shape=jax.ShapeDtypeStruct((N, H, W, Cp), jnp.bfloat16),
        grid_spec=pltpu.PrefetchScalarGridSpec(
            num_scalar_prefetch=0,
            grid=(N,),
            in_specs=[
                pl.BlockSpec((1, H, W, Cp), lambda n: (n, 0, 0, 0)),
                pl.BlockSpec((9 * Cp, Cp), lambda n: (0, 0)),
                pl.BlockSpec((9 * Cp, Cp), lambda n: (0, 0)),
                pl.BlockSpec((1, Cp), lambda n: (0, 0)),
                pl.BlockSpec((1, Cp), lambda n: (0, 0)),
                pl.BlockSpec((1, Cp), lambda n: (0, 0)),
                pl.BlockSpec((1, Cp), lambda n: (0, 0)),
            ],
            out_specs=pl.BlockSpec((1, H, W, Cp), lambda n: (n, 0, 0, 0)),
            scratch_shapes=[
                # shared im2col slab scratch: 3 dx lane-blocks, 2-row dy halo
                pltpu.VMEM((H + 2, W, 3 * Cp), jnp.bfloat16),
            ],
        ),
        compiler_params=pltpu.CompilerParams(
            dimension_semantics=("parallel",),        # megacore on v7x
            vmem_limit_bytes=32 * 1024 * 1024),
        cost_estimate=pl.CostEstimate(flops=flops, transcendentals=0,
                                      bytes_accessed=bytes_accessed),
    )(x, w1m, w2m, s1, b1, s2, b2)

    out = out_nhwc[..., :C]
    return jnp.transpose(out, (0, 3, 1, 2)).astype(x_nchw.dtype)   # NCHW f32


def basic_block_pallas(x, w1, w2, g1, be1, m1, v1, g2, be2, m2, v2, eps=1e-5):
    """Convenience: prepare + apply in one call."""
    params = prepare_basic_block_params(w1, w2, g1, be1, m1, v1,
                                        g2, be2, m2, v2, eps)
    return basic_block_apply(x, params)


def basic_block_reference(x, w1, w2, g1, be1, m1, v1, g2, be2, m2, v2, eps=1e-5):
    """Pure-JAX NCHW reference (eval-mode BN) for correctness checking."""
    dn = ("NCHW", "OIHW", "NCHW")

    def bn(y, g, b, m, v):
        g = g.reshape(1, -1, 1, 1); b = b.reshape(1, -1, 1, 1)
        m = m.reshape(1, -1, 1, 1); v = v.reshape(1, -1, 1, 1)
        return g * (y - m) / jnp.sqrt(v + eps) + b

    out = jax.lax.conv_general_dilated(x, w1, (1, 1), "SAME",
                                       dimension_numbers=dn)
    out = jnp.maximum(bn(out, g1, be1, m1, v1), 0.0)
    out = jax.lax.conv_general_dilated(out, w2, (1, 1), "SAME",
                                       dimension_numbers=dn)
    out = bn(out, g2, be2, m2, v2) + x
    return jnp.maximum(out, 0.0)


if __name__ == "__main__":
    N, C, H, W = 2, 4, 16, 16          # inplanes = planes = 4, stride = 1
    key = jax.random.PRNGKey(0)
    ks = jax.random.split(key, 12)

    x = jax.random.normal(ks[0], (N, C, H, W), dtype=jnp.float32)

    # conv weights, PyTorch layout (Cout, Cin, 3, 3), no bias
    w1 = jax.random.normal(ks[1], (C, C, 3, 3), dtype=jnp.float32) * 0.1
    w2 = jax.random.normal(ks[2], (C, C, 3, 3), dtype=jnp.float32) * 0.1

    # BatchNorm params + running stats (deterministic, non-trivial)
    gamma1 = 1.0 + 0.1 * jax.random.normal(ks[3], (C,), dtype=jnp.float32)
    beta1 = 0.1 * jax.random.normal(ks[4], (C,), dtype=jnp.float32)
    mean1 = 0.1 * jax.random.normal(ks[5], (C,), dtype=jnp.float32)
    var1 = 0.5 + jnp.abs(jax.random.normal(ks[6], (C,), dtype=jnp.float32))
    gamma2 = 1.0 + 0.1 * jax.random.normal(ks[7], (C,), dtype=jnp.float32)
    beta2 = 0.1 * jax.random.normal(ks[8], (C,), dtype=jnp.float32)
    mean2 = 0.1 * jax.random.normal(ks[9], (C,), dtype=jnp.float32)
    var2 = 0.5 + jnp.abs(jax.random.normal(ks[10], (C,), dtype=jnp.float32))

    # Parameter packing once (outside the jitted per-call path).
    params = prepare_basic_block_params(w1, w2,
                                        gamma1, beta1, mean1, var1,
                                        gamma2, beta2, mean2, var2)
    params = jax.tree_util.tree_map(jax.block_until_ready, params)

    fwd = jax.jit(basic_block_apply)
    out = jax.block_until_ready(fwd(x, params))

    ref = jax.block_until_ready(
        basic_block_reference(x, w1, w2,
                              gamma1, beta1, mean1, var1,
                              gamma2, beta2, mean2, var2))

    # Tolerance reflects bf16 activation I/O + bf16 matmul operands
    # (f32 accumulation and f32 BN/residual/ReLU math).
    np.testing.assert_allclose(np.asarray(out), np.asarray(ref),
                               rtol=2e-2, atol=3e-2)
    print("KERNEL_OK")
</pallas_src>

<mosaic_0001>
module attributes {stable_mosaic.version = 11 : i64} {
  func.func @basic_block_kernel(%arg0: i32, %arg1: memref<1x16x16x128xbf16, #tpu.memory_space<vmem>>, %arg2: memref<1152x128xbf16, #tpu.memory_space<vmem>>, %arg3: memref<1152x128xbf16, #tpu.memory_space<vmem>>, %arg4: memref<1x128xf32, #tpu.memory_space<vmem>>, %arg5: memref<1x128xf32, #tpu.memory_space<vmem>>, %arg6: memref<1x128xf32, #tpu.memory_space<vmem>>, %arg7: memref<1x128xf32, #tpu.memory_space<vmem>>, %arg8: memref<1x16x16x128xbf16, #tpu.memory_space<vmem>>, %arg9: memref<18x16x384xbf16, #tpu.memory_space<vmem>>) attributes {dimension_semantics = [#tpu.dimension_semantics<parallel>], iteration_bounds = array<i64: 2>, scalar_prefetch = 0 : i64, scratch_operands = 1 : i64, tpu.core_type = #tpu.core_type<tc>, window_params = [{transform_indices = @transform_0, window_bounds = array<i64: 1, 16, 16, 128>}, {pipeline_mode = #tpu.pipeline_mode<synchronous>, transform_indices = @transform_1, window_bounds = array<i64: 1152, 128>}, {pipeline_mode = #tpu.pipeline_mode<synchronous>, transform_indices = @transform_2, window_bounds = array<i64: 1152, 128>}, {pipeline_mode = #tpu.pipeline_mode<synchronous>, transform_indices = @transform_3, window_bounds = array<i64: 1, 128>}, {pipeline_mode = #tpu.pipeline_mode<synchronous>, transform_indices = @transform_4, window_bounds = array<i64: 1, 128>}, {pipeline_mode = #tpu.pipeline_mode<synchronous>, transform_indices = @transform_5, window_bounds = array<i64: 1, 128>}, {pipeline_mode = #tpu.pipeline_mode<synchronous>, transform_indices = @transform_6, window_bounds = array<i64: 1, 128>}, {transform_indices = @transform_7, window_bounds = array<i64: 1, 16, 16, 128>}]} {
    %cst = arith.constant 0.000000e+00 : bf16
    %0 = vector.broadcast %cst : bf16 to vector<1x16x384xbf16>
    %c0 = arith.constant 0 : index
    %c0_0 = arith.constant 0 : index
    %c0_1 = arith.constant 0 : index
    %1 = vector.load %arg9[%c0, %c0_0, %c0_1] : memref<18x16x384xbf16, #tpu.memory_space<vmem>>, vector<1x16x384xbf16>
    tpu.vector_store %arg9[%c0, %c0_0, %c0_1], %0 {strides = array<i32>} : memref<18x16x384xbf16, #tpu.memory_space<vmem>>, vector<1x16x384xbf16>,
    %cst_2 = arith.constant 0.000000e+00 : bf16
    %2 = vector.broadcast %cst_2 : bf16 to vector<1x16x384xbf16>
    %c17 = arith.constant 17 : index
    %c0_3 = arith.constant 0 : index
    %c0_4 = arith.constant 0 : index
    %3 = vector.load %arg9[%c17, %c0_3, %c0_4] : memref<18x16x384xbf16, #tpu.memory_space<vmem>>, vector<1x16x384xbf16>
    tpu.vector_store %arg9[%c17, %c0_3, %c0_4], %2 {strides = array<i32>} : memref<18x16x384xbf16, #tpu.memory_space<vmem>>, vector<1x16x384xbf16>,
    %cst_5 = arith.constant 0.000000e+00 : bf16
    %4 = vector.broadcast %cst_5 : bf16 to vector<18x1x128xbf16>
    %c0_6 = arith.constant 0 : index
    %c0_7 = arith.constant 0 : index
    %c0_8 = arith.constant 0 : index
    %5 = vector.load %arg9[%c0_6, %c0_7, %c0_8] : memref<18x16x384xbf16, #tpu.memory_space<vmem>>, vector<18x1x128xbf16>
    tpu.vector_store %arg9[%c0_6, %c0_7, %c0_8], %4 {strides = array<i32>} : memref<18x16x384xbf16, #tpu.memory_space<vmem>>, vector<18x1x128xbf16>,
    %cst_9 = arith.constant 0.000000e+00 : bf16
    %6 = vector.broadcast %cst_9 : bf16 to vector<18x1x128xbf16>
    %c0_10 = arith.constant 0 : index
    %c15 = arith.constant 15 : index
    %c256 = arith.constant 256 : index
    %7 = vector.load %arg9[%c0_10, %c15, %c256] : memref<18x16x384xbf16, #tpu.memory_space<vmem>>, vector<18x1x128xbf16>
    tpu.vector_store %arg9[%c0_10, %c15, %c256], %6 {strides = array<i32>} : memref<18x16x384xbf16, #tpu.memory_space<vmem>>, vector<18x1x128xbf16>,
    %c0_11 = arith.constant 0 : index
    %c0_12 = arith.constant 0 : index
    %c0_13 = arith.constant 0 : index
    %c0_14 = arith.constant 0 : index
    %8 = vector.load %arg1[%c0_11, %c0_12, %c0_13, %c0_14] : memref<1x16x16x128xbf16, #tpu.memory_space<vmem>>, vector<1x16x16x128xbf16>
    %9 = vector.shape_cast %8 : vector<1x16x16x128xbf16> to vector<16x16x128xbf16>
    %c1 = arith.constant 1 : index
    %c0_15 = arith.constant 0 : index
    %c128 = arith.constant 128 : index
    %10 = vector.load %arg9[%c1, %c0_15, %c128] : memref<18x16x384xbf16, #tpu.memory_space<vmem>>, vector<16x16x128xbf16>
    tpu.vector_store %arg9[%c1, %c0_15, %c128], %9 {strides = array<i32>} : memref<18x16x384xbf16, #tpu.memory_space<vmem>>, vector<16x16x128xbf16>,
    %11 = vector.extract_strided_slice %9 {offsets = [0, 0, 0], sizes = [16, 15, 128], strides = [1, 1, 1]} : vector<16x16x128xbf16> to vector<16x15x128xbf16>
    %c1_16 = arith.constant 1 : index
    %c1_17 = arith.constant 1 : index
    %c0_18 = arith.constant 0 : index
    %12 = vector.load %arg9[%c1_16, %c1_17, %c0_18] : memref<18x16x384xbf16, #tpu.memory_space<vmem>>, vector<16x15x128xbf16>
    tpu.vector_store %arg9[%c1_16, %c1_17, %c0_18], %11 {strides = array<i32>} : memref<18x16x384xbf16, #tpu.memory_space<vmem>>, vector<16x15x128xbf16>,
    %13 = vector.extract_strided_slice %9 {offsets = [0, 1, 0], sizes = [16, 15, 128], strides = [1, 1, 1]} : vector<16x16x128xbf16> to vector<16x15x128xbf16>
    %c1_19 = arith.constant 1 : index
    %c0_20 = arith.constant 0 : index
    %c256_21 = arith.constant 256 : index
    %14 = vector.load %arg9[%c1_19, %c0_20, %c256_21] : memref<18x16x384xbf16, #tpu.memory_space<vmem>>, vector<16x15x128xbf16>
    tpu.vector_store %arg9[%c1_19, %c0_20, %c256_21], %13 {strides = array<i32>} : memref<18x16x384xbf16, #tpu.memory_space<vmem>>, vector<16x15x128xbf16>,
    %c0_22 = arith.constant 0 : index
    %c0_23 = arith.constant 0 : index
    %c0_24 = arith.constant 0 : index
    %15 = vector.load %arg9[%c0_22, %c0_23, %c0_24] : memref<18x16x384xbf16, #tpu.memory_space<vmem>>, vector<16x16x384xbf16>
    %16 = vector.shape_cast %15 : vector<16x16x384xbf16> to vector<256x384xbf16>
    %c0_25 = arith.constant 0 : index
    %c0_26 = arith.constant 0 : index
    %17 = vector.load %arg2[%c0_25, %c0_26] : memref<1152x128xbf16, #tpu.memory_space<vmem>>, vector<384x128xbf16>
    %cst_27 = arith.constant dense<0.000000e+00> : vector<256x128xf32>
    %18 = tpu.matmul %16, %17, %cst_27 {dimension_numbers = #tpu.dot_dimension_numbers<[1], [0], [0], [1], [0, 0, 1, 1], [], []>} : vector<256x384xbf16>, vector<384x128xbf16>, vector<256x128xf32> -> vector<256x128xf32>
    %c1_28 = arith.constant 1 : index
    %c0_29 = arith.constant 0 : index
    %c0_30 = arith.constant 0 : index
    %19 = vector.load %arg9[%c1_28, %c0_29, %c0_30] : memref<18x16x384xbf16, #tpu.memory_space<vmem>>, vector<16x16x384xbf16>
    %20 = vector.shape_cast %19 : vector<16x16x384xbf16> to vector<256x384xbf16>
    %c384 = arith.constant 384 : index
    %c0_31 = arith.constant 0 : index
    %21 = vector.load %arg2[%c384, %c0_31] : memref<1152x128xbf16, #tpu.memory_space<vmem>>, vector<384x128xbf16>
    %cst_32 = arith.constant dense<0.000000e+00> : vector<256x128xf32>
    %22 = tpu.matmul %20, %21, %cst_32 {dimension_numbers = #tpu.dot_dimension_numbers<[1], [0], [0], [1], [0, 0, 1, 1], [], []>} : vector<256x384xbf16>, vector<384x128xbf16>, vector<256x128xf32> -> vector<256x128xf32>
    %23 = arith.addf %18, %22 : vector<256x128xf32>
    %c2 = arith.constant 2 : index
    %c0_33 = arith.constant 0 : index
    %c0_34 = arith.constant 0 : index
    %24 = vector.load %arg9[%c2, %c0_33, %c0_34] : memref<18x16x384xbf16, #tpu.memory_space<vmem>>, vector<16x16x384xbf16>
    %25 = vector.shape_cast %24 : vector<16x16x384xbf16> to vector<256x384xbf16>
    %c768 = arith.constant 768 : index
    %c0_35 = arith.constant 0 : index
    %26 = vector.load %arg2[%c768, %c0_35] : memref<1152x128xbf16, #tpu.memory_space<vmem>>, vector<384x128xbf16>
    %cst_36 = arith.constant dense<0.000000e+00> : vector<256x128xf32>
    %27 = tpu.matmul %25, %26, %cst_36 {dimension_numbers = #tpu.dot_dimension_numbers<[1], [0], [0], [1], [0, 0, 1, 1], [], []>} : vector<256x384xbf16>, vector<384x128xbf16>, vector<256x128xf32> -> vector<256x128xf32>
    %28 = arith.addf %23, %27 : vector<256x128xf32>
    %c0_37 = arith.constant 0 : index
    %c0_38 = arith.constant 0 : index
    %29 = vector.load %arg4[%c0_37, %c0_38] : memref<1x128xf32, #tpu.memory_space<vmem>>, vector<1x128xf32>
    %30 = vector.broadcast %29 : vector<1x128xf32> to vector<256x128xf32>
    %31 = arith.mulf %28, %30 : vector<256x128xf32>
    %c0_39 = arith.constant 0 : index
    %c0_40 = arith.constant 0 : index
    %32 = vector.load %arg5[%c0_39, %c0_40] : memref<1x128xf32, #tpu.memory_space<vmem>>, vector<1x128xf32>
    %33 = vector.broadcast %32 : vector<1x128xf32> to vector<256x128xf32>
    %34 = arith.addf %31, %33 : vector<256x128xf32>
    %cst_41 = arith.constant 0.000000e+00 : f32
    %35 = vector.broadcast %cst_41 : f32 to vector<256x128xf32>
    %36 = arith.maximumf %34, %35 : vector<256x128xf32>
    %37 = vector.shape_cast %36 : vector<256x128xf32> to vector<16x16x128xf32>
    %38 = arith.truncf %37 : vector<16x16x128xf32> to vector<16x16x128xbf16>
    %c1_42 = arith.constant 1 : index
    %c0_43 = arith.constant 0 : index
    %c128_44 = arith.constant 128 : index
    %39 = vector.load %arg9[%c1_42, %c0_43, %c128_44] : memref<18x16x384xbf16, #tpu.memory_space<vmem>>, vector<16x16x128xbf16>
    tpu.vector_store %arg9[%c1_42, %c0_43, %c128_44], %38 {strides = array<i32>} : memref<18x16x384xbf16, #tpu.memory_space<vmem>>, vector<16x16x128xbf16>,
    %40 = vector.extract_strided_slice %38 {offsets = [0, 0, 0], sizes = [16, 15, 128], strides = [1, 1, 1]} : vector<16x16x128xbf16> to vector<16x15x128xbf16>
    %c1_45 = arith.constant 1 : index
    %c1_46 = arith.constant 1 : index
    %c0_47 = arith.constant 0 : index
    %41 = vector.load %arg9[%c1_45, %c1_46, %c0_47] : memref<18x16x384xbf16, #tpu.memory_space<vmem>>, vector<16x15x128xbf16>
    tpu.vector_store %arg9[%c1_45, %c1_46, %c0_47], %40 {strides = array<i32>} : memref<18x16x384xbf16, #tpu.memory_space<vmem>>, vector<16x15x128xbf16>,
    %42 = vector.extract_strided_slice %38 {offsets = [0, 1, 0], sizes = [16, 15, 128], strides = [1, 1, 1]} : vector<16x16x128xbf16> to vector<16x15x128xbf16>
    %c1_48 = arith.constant 1 : index
    %c0_49 = arith.constant 0 : index
    %c256_50 = arith.constant 256 : index
    %43 = vector.load %arg9[%c1_48, %c0_49, %c256_50] : memref<18x16x384xbf16, #tpu.memory_space<vmem>>, vector<16x15x128xbf16>
    tpu.vector_store %arg9[%c1_48, %c0_49, %c256_50], %42 {strides = array<i32>} : memref<18x16x384xbf16, #tpu.memory_space<vmem>>, vector<16x15x128xbf16>,
    %c0_51 = arith.constant 0 : index
    %c0_52 = arith.constant 0 : index
    %c0_53 = arith.constant 0 : index
    %44 = vector.load %arg9[%c0_51, %c0_52, %c0_53] : memref<18x16x384xbf16, #tpu.memory_space<vmem>>, vector<16x16x384xbf16>
    %45 = vector.shape_cast %44 : vector<16x16x384xbf16> to vector<256x384xbf16>
    %c0_54 = arith.constant 0 : index
    %c0_55 = arith.constant 0 : index
    %46 = vector.load %arg3[%c0_54, %c0_55] : memref<1152x128xbf16, #tpu.memory_space<vmem>>, vector<384x128xbf16>
    %cst_56 = arith.constant dense<0.000000e+00> : vector<256x128xf32>
    %47 = tpu.matmul %45, %46, %cst_56 {dimension_numbers = #tpu.dot_dimension_numbers<[1], [0], [0], [1], [0, 0, 1, 1], [], []>} : vector<256x384xbf16>, vector<384x128xbf16>, vector<256x128xf32> -> vector<256x128xf32>
    %c1_57 = arith.constant 1 : index
    %c0_58 = arith.constant 0 : index
    %c0_59 = arith.constant 0 : index
    %48 = vector.load %arg9[%c1_57, %c0_58, %c0_59] : memref<18x16x384xbf16, #tpu.memory_space<vmem>>, vector<16x16x384xbf16>
    %49 = vector.shape_cast %48 : vector<16x16x384xbf16> to vector<256x384xbf16>
    %c384_60 = arith.constant 384 : index
    %c0_61 = arith.constant 0 : index
    %50 = vector.load %arg3[%c384_60, %c0_61] : memref<1152x128xbf16, #tpu.memory_space<vmem>>, vector<384x128xbf16>
    %cst_62 = arith.constant dense<0.000000e+00> : vector<256x128xf32>
    %51 = tpu.matmul %49, %50, %cst_62 {dimension_numbers = #tpu.dot_dimension_numbers<[1], [0], [0], [1], [0, 0, 1, 1], [], []>} : vector<256x384xbf16>, vector<384x128xbf16>, vector<256x128xf32> -> vector<256x128xf32>
    %52 = arith.addf %47, %51 : vector<256x128xf32>
    %c2_63 = arith.constant 2 : index
    %c0_64 = arith.constant 0 : index
    %c0_65 = arith.constant 0 : index
    %53 = vector.load %arg9[%c2_63, %c0_64, %c0_65] : memref<18x16x384xbf16, #tpu.memory_space<vmem>>, vector<16x16x384xbf16>
    %54 = vector.shape_cast %53 : vector<16x16x384xbf16> to vector<256x384xbf16>
    %c768_66 = arith.constant 768 : index
    %c0_67 = arith.constant 0 : index
    %55 = vector.load %arg3[%c768_66, %c0_67] : memref<1152x128xbf16, #tpu.memory_space<vmem>>, vector<384x128xbf16>
    %cst_68 = arith.constant dense<0.000000e+00> : vector<256x128xf32>
    %56 = tpu.matmul %54, %55, %cst_68 {dimension_numbers = #tpu.dot_dimension_numbers<[1], [0], [0], [1], [0, 0, 1, 1], [], []>} : vector<256x384xbf16>, vector<384x128xbf16>, vector<256x128xf32> -> vector<256x128xf32>
    %57 = arith.addf %52, %56 : vector<256x128xf32>
    %58 = vector.shape_cast %9 : vector<16x16x128xbf16> to vector<256x128xbf16>
    %59 = arith.extf %58 : vector<256x128xbf16> to vector<256x128xf32>
    %c0_69 = arith.constant 0 : index
    %c0_70 = arith.constant 0 : index
    %60 = vector.load %arg6[%c0_69, %c0_70] : memref<1x128xf32, #tpu.memory_space<vmem>>, vector<1x128xf32>
    %61 = vector.broadcast %60 : vector<1x128xf32> to vector<256x128xf32>
    %62 = arith.mulf %57, %61 : vector<256x128xf32>
    %c0_71 = arith.constant 0 : index
    %c0_72 = arith.constant 0 : index
    %63 = vector.load %arg7[%c0_71, %c0_72] : memref<1x128xf32, #tpu.memory_space<vmem>>, vector<1x128xf32>
    %64 = vector.broadcast %63 : vector<1x128xf32> to vector<256x128xf32>
    %65 = arith.addf %62, %64 : vector<256x128xf32>
    %66 = arith.addf %65, %59 : vector<256x128xf32>
    %cst_73 = arith.constant 0.000000e+00 : f32
    %67 = vector.broadcast %cst_73 : f32 to vector<256x128xf32>
    %68 = arith.maximumf %66, %67 : vector<256x128xf32>
    %69 = vector.shape_cast %68 : vector<256x128xf32> to vector<16x16x128xf32>
    %70 = arith.truncf %69 : vector<16x16x128xf32> to vector<16x16x128xbf16>
    %c0_74 = arith.constant 0 : index
    %c0_75 = arith.constant 0 : index
    %c0_76 = arith.constant 0 : index
    %c0_77 = arith.constant 0 : index
    %71 = vector.load %arg8[%c0_74, %c0_75, %c0_76, %c0_77] : memref<1x16x16x128xbf16, #tpu.memory_space<vmem>>, vector<1x16x16x128xbf16>
    %72 = vector.shape_cast %71 : vector<1x16x16x128xbf16> to vector<16x16x128xbf16>
    %73 = vector.shape_cast %70 : vector<16x16x128xbf16> to vector<1x16x16x128xbf16>
    tpu.vector_store %arg8[%c0_74, %c0_75, %c0_76, %c0_77], %73 {strides = array<i32>} : memref<1x16x16x128xbf16, #tpu.memory_space<vmem>>, vector<1x16x16x128xbf16>,
    return
  }
  func.func @transform_0(%arg0: i32) -> (i32, i32, i32, i32) {
    %c0_i32 = arith.constant 0 : i32
    %c0_i32_0 = arith.constant 0 : i32
    %c0_i32_1 = arith.constant 0 : i32
    %c0_i32_2 = arith.constant 0 : i32
    return %arg0, %c0_i32, %c0_i32_0, %c0_i32_1 : i32, i32, i32, i32
  }
  func.func @transform_1(%arg0: i32) -> (i32, i32) {
    %c0_i32 = arith.constant 0 : i32
    %c0_i32_0 = arith.constant 0 : i32
    %c0_i32_1 = arith.constant 0 : i32
    return %c0_i32, %c0_i32_0 : i32, i32
  }
  func.func @transform_2(%arg0: i32) -> (i32, i32) {
    %c0_i32 = arith.constant 0 : i32
    %c0_i32_0 = arith.constant 0 : i32
    %c0_i32_1 = arith.constant 0 : i32
    return %c0_i32, %c0_i32_0 : i32, i32
  }
  func.func @transform_3(%arg0: i32) -> (i32, i32) {
    %c0_i32 = arith.constant 0 : i32
    %c0_i32_0 = arith.constant 0 : i32
    %c0_i32_1 = arith.constant 0 : i32
    return %c0_i32, %c0_i32_0 : i32, i32
  }
  func.func @transform_4(%arg0: i32) -> (i32, i32) {
    %c0_i32 = arith.constant 0 : i32
    %c0_i32_0 = arith.constant 0 : i32
    %c0_i32_1 = arith.constant 0 : i32
    return %c0_i32, %c0_i32_0 : i32, i32
  }
  func.func @transform_5(%arg0: i32) -> (i32, i32) {
    %c0_i32 = arith.constant 0 : i32
    %c0_i32_0 = arith.constant 0 : i32
    %c0_i32_1 = arith.constant 0 : i32
    return %c0_i32, %c0_i32_0 : i32, i32
  }
  func.func @transform_6(%arg0: i32) -> (i32, i32) {
    %c0_i32 = arith.constant 0 : i32
    %c0_i32_0 = arith.constant 0 : i32
    %c0_i32_1 = arith.constant 0 : i32
    return %c0_i32, %c0_i32_0 : i32, i32
  }
  func.func @transform_7(%arg0: i32) -> (i32, i32, i32, i32) {
    %c0_i32 = arith.constant 0 : i32
    %c0_i32_0 = arith.constant 0 : i32
    %c0_i32_1 = arith.constant 0 : i32
    %c0_i32_2 = arith.constant 0 : i32
    return %arg0, %c0_i32, %c0_i32_0, %c0_i32_1 : i32, i32, i32, i32
  }
}

</mosaic_0001>

<llo_original>
// kernel: basic_block_apply.1
$region0: #{basic_block_apply.1}
  #allocation0 [shape = 'u32[]', space=smem, size = 0x4, offset = 0x4, fixed_abs, tag = 'smem constant byte address 0x4 - core index']
  #allocation1 [shape = 'u32[144,128]{1,0:T(1,128)}', space=vmem, size = 0x12000, scoped, tag = 'internal scratch']
  #allocation2 [shape = 'bf16[18,16,384]{2,1,0:T(8,128)(2,1)}', space=vmem, size = 0x36000, scoped, tag = 'scratch operand']
  %s0 = inlined_call_operand.vmem [shape: bf16[2,16,16,128], index: 0, kind: input, shape index: {}]
  %s1 = inlined_call_operand.vmem [shape: bf16[1152,128], index: 1, kind: input, shape index: {}]
  %s2 = inlined_call_operand.hbm [shape: bf16[1152,128], index: 2, kind: input, shape index: {}]
  %s3 = inlined_call_operand.vmem [shape: f32[1,128], index: 3, kind: input, shape index: {}]
  %s4 = inlined_call_operand.vmem [shape: f32[1,128], index: 4, kind: input, shape index: {}]
  %s5 = inlined_call_operand.vmem [shape: f32[1,128], index: 5, kind: input, shape index: {}]
  %s6 = inlined_call_operand.vmem [shape: f32[1,128], index: 6, kind: input, shape index: {}]
  %s7 = inlined_call_operand.vmem [shape: bf16[2,16,16,128], index: 7, kind: output, shape index: {}]
  %s8 = sld [smem:[#allocation0]]
  $region65: #{basic_block_apply.1} parent=0
    _
  %s10 = ssub.s32 1, %s8
  %s11 = scalar_select 0, %s10, %s8
  $region1: #{basic_block_apply.1} parent=0
    #allocation3 [shape = 'u8[294912]{0}', space=vmem, size = 0x48000, scoped, tag = 'input window, operand 2, single buffered']
    #allocation4 [shape = 's32[2]{0}', space=sflag, size = 0x8, scoped, tag = 'scoped memory for basic_block_apply.1']
    %12 = vsyncpa [#allocation4], 0
    loop: start=0, step=1, limit=4
    $region2: #{basic_block_apply.1} parent=1 // loop_pre_header
      _
    $region3: #{basic_block_apply.1} parent=1 // loop_header
      %s14 = sphi 0, %s18
      %p15 = scmp.ge.s32.totalorder %s14, 4
      %s24 = sphi 0, %s26
      %s27 = sphi 0, %s24
      %s28 = sphi 0, %s27
      %s44 = sphi 0, %s28
      %s48 = sphi 0, %s48
      %s50 = sphi 0, %s48
      %s51 = sphi 0, %s50
      %s65 = sphi 0, %s51
      %s69 = sphi 0, %s69
      %s71 = sphi 0, %s69
      %s72 = sphi 0, %s71
      %s86 = sphi 0, %s72
      %s90 = sphi 0, %s90
      %s92 = sphi 0, %s90
      %s93 = sphi 0, %s92
      %s107 = sphi 0, %s93
      %s111 = sphi 0, %s111
      %s113 = sphi 0, %s111
      %s114 = sphi 0, %s113
      %s128 = sphi 0, %s114
      %s132 = sphi 0, %s132
      %s134 = sphi 0, %s132
      %s135 = sphi 0, %s134
      %s149 = sphi 0, %s135
      %s153 = sphi 0, %s153
      %s155 = sphi 0, %s153
      %s156 = sphi 0, %s155
      %s170 = sphi 0, %s156
      %s176 = sphi 0, %s178
      %s179 = sphi 0, %s176
      %s180 = sphi 0, %s179
      %s196 = sphi 0, %s180
    $region4: #{basic_block_apply.1} parent=1 // loop_header_branch
      %17 = sbr.rel (%p15) target = $region8
    $region5: #{basic_block_apply.1} parent=1 // loop_body
      %s19 = ssub.s32 %s14, 1
      %s20 = ssub.s32 %s14, 2
      %s21 = sadd.s32 %s14, 1
      %s22 = ssub.s32 %s14, %s21
      %p23 = scmp.eq.s32.totalorder %s22, 0
      %s25 = sadd.s32 %s24, 1
      %s26 = scalar_select %p23, %s24, %s25
      %p29 = pneg %p23
      %p30 = scmp.eq.s32.totalorder %s14, 1
      %p31 = por %p29, %p30
      %p32 = scmp.ne.s32.totalorder %s24, %s27
      %p33 = scmp.eq.s32.totalorder %s14, 0
      %p34 = por %p32, %p33
      %p35 = scmp.ne.s32.totalorder %s24, %s27
      %p36 = scmp.eq.s32.totalorder %s19, 1
      %p37 = por %p35, %p36
      %p38 = scmp.ne.s32.totalorder %s27, %s28
      %p39 = scmp.eq.s32.totalorder %s19, 0
      %p40 = por %p38, %p39
      %p41 = scmp.ne.s32.totalorder %s27, %s28
      %p42 = scmp.eq.s32.totalorder %s20, 1
      %p43 = por %p41, %p42
      %p45 = scmp.ne.s32.totalorder %s28, %s44
      %p46 = scmp.eq.s32.totalorder %s20, 0
      %p47 = por %p45, %p46
      %s49 = sadd.s32 %s48, 1
      %p52 = scmp.eq.s32.totalorder %s14, 1
      %p53 = scmp.ne.s32.totalorder %s48, %s50
      %p54 = scmp.eq.s32.totalorder %s14, 0
      %p55 = por %p53, %p54
      %p56 = scmp.ne.s32.totalorder %s48, %s50
      %p57 = scmp.eq.s32.totalorder %s19, 1
      %p58 = por %p56, %p57
      %p59 = scmp.ne.s32.totalorder %s50, %s51
      %p60 = scmp.eq.s32.totalorder %s19, 0
      %p61 = por %p59, %p60
      %p62 = scmp.ne.s32.totalorder %s50, %s51
      %p63 = scmp.eq.s32.totalorder %s20, 1
      %p64 = por %p62, %p63
      %p66 = scmp.ne.s32.totalorder %s51, %s65
      %p67 = scmp.eq.s32.totalorder %s20, 0
      %p68 = por %p66, %p67
      %s70 = sadd.s32 %s69, 1
      %p73 = scmp.eq.s32.totalorder %s14, 1
      %p74 = scmp.ne.s32.totalorder %s69, %s71
      %p75 = scmp.eq.s32.totalorder %s14, 0
      %p76 = por %p74, %p75
      %p77 = scmp.ne.s32.totalorder %s69, %s71
      %p78 = scmp.eq.s32.totalorder %s19, 1
      %p79 = por %p77, %p78
      %p80 = scmp.ne.s32.totalorder %s71, %s72
      %p81 = scmp.eq.s32.totalorder %s19, 0
      %p82 = por %p80, %p81
      %p83 = scmp.ne.s32.totalorder %s71, %s72
      %p84 = scmp.eq.s32.totalorder %s20, 1
      %p85 = por %p83, %p84
      %p87 = scmp.ne.s32.totalorder %s72, %s86
      %p88 = scmp.eq.s32.totalorder %s20, 0
      %p89 = por %p87, %p88
      %s91 = sadd.s32 %s90, 1
      %p94 = scmp.eq.s32.totalorder %s14, 1
      %p95 = scmp.ne.s32.totalorder %s90, %s92
      %p96 = scmp.eq.s32.totalorder %s14, 0
      %p97 = por %p95, %p96
      %p98 = scmp.ne.s32.totalorder %s90, %s92
      %p99 = scmp.eq.s32.totalorder %s19, 1
      %p100 = por %p98, %p99
      %p101 = scmp.ne.s32.totalorder %s92, %s93
      %p102 = scmp.eq.s32.totalorder %s19, 0
      %p103 = por %p101, %p102
      %p104 = scmp.ne.s32.totalorder %s92, %s93
      %p105 = scmp.eq.s32.totalorder %s20, 1
      %p106 = por %p104, %p105
      %p108 = scmp.ne.s32.totalorder %s93, %s107
      %p109 = scmp.eq.s32.totalorder %s20, 0
      %p110 = por %p108, %p109
      %s112 = sadd.s32 %s111, 1
      %p115 = scmp.eq.s32.totalorder %s14, 1
      %p116 = scmp.ne.s32.totalorder %s111, %s113
      %p117 = scmp.eq.s32.totalorder %s14, 0
      %p118 = por %p116, %p117
      %p119 = scmp.ne.s32.totalorder %s111, %s113
      %p120 = scmp.eq.s32.totalorder %s19, 1
      %p121 = por %p119, %p120
      %p122 = scmp.ne.s32.totalorder %s113, %s114
      %p123 = scmp.eq.s32.totalorder %s19, 0
      %p124 = por %p122, %p123
      %p125 = scmp.ne.s32.totalorder %s113, %s114
      %p126 = scmp.eq.s32.totalorder %s20, 1
      %p127 = por %p125, %p126
      %p129 = scmp.ne.s32.totalorder %s114, %s128
      %p130 = scmp.eq.s32.totalorder %s20, 0
      %p131 = por %p129, %p130
      %s133 = sadd.s32 %s132, 1
      %p136 = scmp.eq.s32.totalorder %s14, 1
      %p137 = scmp.ne.s32.totalorder %s132, %s134
      %p138 = scmp.eq.s32.totalorder %s14, 0
      %p139 = por %p137, %p138
      %p140 = scmp.ne.s32.totalorder %s132, %s134
      %p141 = scmp.eq.s32.totalorder %s19, 1
      %p142 = por %p140, %p141
      %p143 = scmp.ne.s32.totalorder %s134, %s135
      %p144 = scmp.eq.s32.totalorder %s19, 0
      %p145 = por %p143, %p144
      %p146 = scmp.ne.s32.totalorder %s134, %s135
      %p147 = scmp.eq.s32.totalorder %s20, 1
      %p148 = por %p146, %p147
      %p150 = scmp.ne.s32.totalorder %s135, %s149
      %p151 = scmp.eq.s32.totalorder %s20, 0
      %p152 = por %p150, %p151
      %s154 = sadd.s32 %s153, 1
      %p157 = scmp.eq.s32.totalorder %s14, 1
      %p158 = scmp.ne.s32.totalorder %s153, %s155
      %p159 = scmp.eq.s32.totalorder %s14, 0
      %p160 = por %p158, %p159
      %p161 = scmp.ne.s32.totalorder %s153, %s155
      %p162 = scmp.eq.s32.totalorder %s19, 1
      %p163 = por %p161, %p162
      %p164 = scmp.ne.s32.totalorder %s155, %s156
      %p165 = scmp.eq.s32.totalorder %s19, 0
      %p166 = por %p164, %p165
      %p167 = scmp.ne.s32.totalorder %s155, %s156
      %p168 = scmp.eq.s32.totalorder %s20, 1
      %p169 = por %p167, %p168
      %p171 = scmp.ne.s32.totalorder %s156, %s170
      %p172 = scmp.eq.s32.totalorder %s20, 0
      %p173 = por %p171, %p172
      %s174 = ssub.s32 %s14, %s21
      %p175 = scmp.eq.s32.totalorder %s174, 0
      %s177 = sadd.s32 %s176, 1
      %s178 = scalar_select %p175, %s176, %s177
      %p181 = pneg %p175
      %p182 = scmp.eq.s32.totalorder %s14, 1
      %p183 = por %p181, %p182
      %p184 = scmp.ne.s32.totalorder %s176, %s179
      %p185 = scmp.eq.s32.totalorder %s14, 0
      %p186 = por %p184, %p185
      %p187 = scmp.ne.s32.totalorder %s176, %s179
      %p188 = scmp.eq.s32.totalorder %s19, 1
      %p189 = por %p187, %p188
      %p190 = scmp.ne.s32.totalorder %s179, %s180
      %p191 = scmp.eq.s32.totalorder %s19, 0
      %p192 = por %p190, %p191
      %p193 = scmp.ne.s32.totalorder %s179, %s180
      %p194 = scmp.eq.s32.totalorder %s20, 1
      %p195 = por %p193, %p194
      %p197 = scmp.ne.s32.totalorder %s180, %s196
      %p198 = scmp.eq.s32.totalorder %s20, 0
      %p199 = por %p197, %p198
      %p200 = scmp.le.s32.totalorder 1, %s14
      %p201 = scmp.lt.s32.totalorder %s14, 3
      %p202 = pnand %p200, %p201
      %p203 = pneg %p202
      // Predicated region
      $region9: #{basic_block_apply.1} parent=5 // pred_check
        _
      $region10: #{basic_block_apply.1} parent=5 // pred_check_branch
        %205 = sbr.rel (%p202) target = $region12
      $region11: #{basic_block_apply.1} parent=5 // pred_region
        %s206 = ssub.s32 %s14, 1
        // Predicated region
        $region13: #{basic_block_apply.1} parent=11 // pred_check
          %p207 = pneg %p61
        $region14: #{basic_block_apply.1} parent=11 // pred_check_branch
          %209 = sbr.rel (%p207) target = $region16
        $region15: #{basic_block_apply.1} parent=11 // pred_region
          _
        $region16: #{basic_block_apply.1} parent=11 // pred_fallthru
          _
        // Predicated region
        $region17: #{basic_block_apply.1} parent=11 // pred_check
          %p210 = pneg %p82
        $region18: #{basic_block_apply.1} parent=11 // pred_check_branch
          %212 = sbr.rel (%p210) target = $region20
        $region19: #{basic_block_apply.1} parent=11 // pred_region
          %s214 = ssub.s32 9216, 9216
          %215 = vsyncadd [#allocation4], %s214
          %s216 = sshll.u32 [#allocation3], 4
          %s217 = int_to_ptr.vmem [resolvable:$true] %s216
          %222 = dma.hbm_to_vmem [thread:$0]  %s2, 9216, %s217, [#allocation4], 64, 64, 4
        $region20: #{basic_block_apply.1} parent=11 // pred_fallthru
          _
        // Predicated region
        $region21: #{basic_block_apply.1} parent=11 // pred_check
          %p223 = pneg %p103
        $region22: #{basic_block_apply.1} parent=11 // pred_check_branch
          %225 = sbr.rel (%p223) target = $region24
        $region23: #{basic_block_apply.1} parent=11 // pred_region
          _
        $region24: #{basic_block_apply.1} parent=11 // pred_fallthru
          _
        // Predicated region
        $region25: #{basic_block_apply.1} parent=11 // pred_check
          %p226 = pneg %p124
        $region26: #{basic_block_apply.1} parent=11 // pred_check_branch
          %228 = sbr.rel (%p226) target = $region28
        $region27: #{basic_block_apply.1} parent=11 // pred_region
          _
        $region28: #{basic_block_apply.1} parent=11 // pred_fallthru
          _
        // Predicated region
        $region29: #{basic_block_apply.1} parent=11 // pred_check
          %p229 = pneg %p145
        $region30: #{basic_block_apply.1} parent=11 // pred_check_branch
          %231 = sbr.rel (%p229) target = $region32
        $region31: #{basic_block_apply.1} parent=11 // pred_region
          _
        $region32: #{basic_block_apply.1} parent=11 // pred_fallthru
          _
        // Predicated region
        $region33: #{basic_block_apply.1} parent=11 // pred_check
          %p232 = pneg %p166
        $region34: #{basic_block_apply.1} parent=11 // pred_check_branch
          %234 = sbr.rel (%p232) target = $region36
        $region35: #{basic_block_apply.1} parent=11 // pred_region
          _
        $region36: #{basic_block_apply.1} parent=11 // pred_fallthru
          _
      $region12: #{basic_block_apply.1} parent=5 // pred_fallthru
        _
      %p235 = scmp.lt.s32.totalorder %s14, 2
      // Predicated region
      $region37: #{basic_block_apply.1} parent=5 // pred_check
        %p236 = pneg %p235
      $region38: #{basic_block_apply.1} parent=5 // pred_check_branch
        %238 = sbr.rel (%p236) target = $region40
      $region39: #{basic_block_apply.1} parent=5 // pred_region
        // Predicated region
        $region41: #{basic_block_apply.1} parent=39 // pred_check
          %p239 = pneg %p34
        $region42: #{basic_block_apply.1} parent=39 // pred_check_branch
          %241 = sbr.rel (%p239) target = $region44
        $region43: #{basic_block_apply.1} parent=39 // pred_region
          %p242 = scmp.lt.s32.totalorder %s14, 1
          %s243 = scalar_select %p242, %s14, 1
          %s244 = smul.addr %s243, 32
          %s245 = smul.addr %s244, 4
          %s246 = scalar_lea.vmem %s0, %s245
        $region44: #{basic_block_apply.1} parent=39 // pred_fallthru
          _
      $region40: #{basic_block_apply.1} parent=5 // pred_fallthru
        _
      %p247 = scmp.le.s32.totalorder 1, %s14
      %p248 = scmp.lt.s32.totalorder %s14, 3
      %p249 = pnand %p247, %p248
      %p250 = pneg %p249
      // Predicated region
      $region45: #{basic_block_apply.1} parent=5 // pred_check
        _
      $region46: #{basic_block_apply.1} parent=5 // pred_check_branch
        %252 = sbr.rel (%p249) target = $region48
      $region47: #{basic_block_apply.1} parent=5 // pred_region
        %s253 = ssub.s32 %s14, 1
        // Predicated region
        $region49: #{basic_block_apply.1} parent=47 // pred_check
          %p254 = pneg %p82
        $region50: #{basic_block_apply.1} parent=47 // pred_check_branch
          %256 = sbr.rel (%p254) target = $region52
        $region51: #{basic_block_apply.1} parent=47 // pred_region
          %257 = dma.done [#allocation4], 9216
        $region52: #{basic_block_apply.1} parent=47 // pred_fallthru
          _
        %p258 = scmp.lt.s32.totalorder %s19, 1
        %s259 = scalar_select %p258, %s19, 1
        %s260 = smul.addr %s259, 32
        %s261 = smul.addr %s260, 4
        %s262 = scalar_lea.vmem %s0, %s261
        %p263 = pneg %p40
        %p264 = pneg %p37
        %p265 = pneg %p61
        %p266 = pneg %p58
        %p267 = pneg %p82
        %p268 = pneg %p79
        %p269 = pneg %p103
        %p270 = pneg %p100
        %p271 = pneg %p124
        %p272 = pneg %p121
        %p273 = pneg %p145
        %p274 = pneg %p142
        %p275 = pneg %p166
        %p276 = pneg %p163
        %p277 = pneg %p192
        %p278 = pneg %p189
        %p279 = scmp.lt.s32.totalorder %s19, 1
        %s280 = scalar_select %p279, %s19, 1
        %s281 = smul.addr %s280, 32
        %s282 = smul.addr %s281, 4
        %s283 = scalar_lea.vmem %s7, %s282
        %p284 = scmp.lt.s32.totalorder %s19, 1
        %s285 = scalar_select %p284, %s19, 1
        %s286 = smul.addr %s285, 32
        %s287 = smul.addr %s286, 4
        %s288 = scalar_lea.vmem %s0, %s287
        %p289 = scmp.lt.s32.totalorder %s19, 1
        %s290 = scalar_select %p289, %s19, 1
        %s291 = smul.addr %s290, 32
        %s292 = smul.addr %s291, 4
        %s293 = scalar_lea.vmem %s7, %s292
        %295 = vst [vmem:[#allocation2] sm:$0xff] 0
        %296 = vst [vmem:[#allocation2 + $0x8] sm:$0xf] 0
        %297 = vst [vmem:[#allocation2 + $0xc] sm:$0xff] 0
        %298 = vst [vmem:[#allocation2 + $0x14] sm:$0xf] 0
        %s299 = scalar_lea.vmem [#allocation2], 408
        %300 = vst [vmem:[%s299] sm:$0xff] 0
        %301 = vst [vmem:[%s299 + $0x8] sm:$0xf] 0
        %302 = vst [vmem:[%s299 + $0xc] sm:$0xff] 0
        %303 = vst [vmem:[%s299 + $0x14] sm:$0xf] 0
        %vm304 = vcmask 1040384
        %vm305 = vsmask.f32 256
        %vm306 = vmand %vm304, %vm305
        %v307 = vld [vmem:[#allocation2] sm:$0x1]
        %v308 = vsel %vm306, 0, %v307
        %309 = vst [vmem:[#allocation2] sm:$0x1] %v308
        %v310 = vld [vmem:[#allocation2 + $0x18] sm:$0x1]
        %v311 = vsel %vm306, 0, %v310
        %312 = vst [vmem:[#allocation2 + $0x18] sm:$0x1] %v311
        %v313 = vld [vmem:[#allocation2 + $0x30] sm:$0x1]
        %v314 = vsel %vm306, 0, %v313
        %315 = vst [vmem:[#allocation2 + $0x30] sm:$0x1] %v314
        %v316 = vld [vmem:[#allocation2 + $0x48] sm:$0x1]
        %v317 = vsel %vm306, 0, %v316
        %318 = vst [vmem:[#allocation2 + $0x48] sm:$0x1] %v317
        %v319 = vld [vmem:[#allocation2 + $0x60] sm:$0x1]
        %v320 = vsel %vm306, 0, %v319
        %321 = vst [vmem:[#allocation2 + $0x60] sm:$0x1] %v320
        %v322 = vld [vmem:[#allocation2 + $0x78] sm:$0x1]
        %v323 = vsel %vm306, 0, %v322
        %324 = vst [vmem:[#allocation2 + $0x78] sm:$0x1] %v323
        %v325 = vld [vmem:[#allocation2 + $0x90] sm:$0x1]
        %v326 = vsel %vm306, 0, %v325
        %327 = vst [vmem:[#allocation2 + $0x90] sm:$0x1] %v326
        %v328 = vld [vmem:[#allocation2 + $0xa8] sm:$0x1]
        %v329 = vsel %vm306, 0, %v328
        %330 = vst [vmem:[#allocation2 + $0xa8] sm:$0x1] %v329
        %v331 = vld [vmem:[#allocation2 + $0xc0] sm:$0x1]
        %v332 = vsel %vm306, 0, %v331
        %333 = vst [vmem:[#allocation2 + $0xc0] sm:$0x1] %v332
        %v334 = vld [vmem:[#allocation2 + $0xd8] sm:$0x1]
        %v335 = vsel %vm306, 0, %v334
        %336 = vst [vmem:[#allocation2 + $0xd8] sm:$0x1] %v335
        %v337 = vld [vmem:[#allocation2 + $0xf0] sm:$0x1]
        %v338 = vsel %vm306, 0, %v337
        %339 = vst [vmem:[#allocation2 + $0xf0] sm:$0x1] %v338
        %v340 = vld [vmem:[#allocation2 + $0x108] sm:$0x1]
        %v341 = vsel %vm306, 0, %v340
        %342 = vst [vmem:[#allocation2 + $0x108] sm:$0x1] %v341
        %v343 = vld [vmem:[#allocation2 + $0x120] sm:$0x1]
        %v344 = vsel %vm306, 0, %v343
        %345 = vst [vmem:[#allocation2 + $0x120] sm:$0x1] %v344
        %v346 = vld [vmem:[#allocation2 + $0x138] sm:$0x1]
        %v347 = vsel %vm306, 0, %v346
        %348 = vst [vmem:[#allocation2 + $0x138] sm:$0x1] %v347
        %v349 = vld [vmem:[#allocation2 + $0x150] sm:$0x1]
        %v350 = vsel %vm306, 0, %v349
        %351 = vst [vmem:[#allocation2 + $0x150] sm:$0x1] %v350
        %v352 = vld [vmem:[#allocation2 + $0x168] sm:$0x1]
        %v353 = vsel %vm306, 0, %v352
        %354 = vst [vmem:[#allocation2 + $0x168] sm:$0x1] %v353
        %v355 = vld [vmem:[#allocation2 + $0x180] sm:$0x1]
        %v356 = vsel %vm306, 0, %v355
        %357 = vst [vmem:[#allocation2 + $0x180] sm:$0x1] %v356
        %v358 = vld [vmem:[#allocation2 + $0x198] sm:$0x1]
        %v359 = vsel %vm306, 0, %v358
        %360 = vst [vmem:[#allocation2 + $0x198] sm:$0x1] %v359
        %vm361 = vcmask 1043459
        %vm362 = vsmask.f32 7950
        %vm363 = vmand %vm361, %vm362
        %v364 = vld [vmem:[#allocation2 + $0x14] sm:$0x8]
        %v365 = vsel %vm363, 0, %v364
        %366 = vst [vmem:[#allocation2 + $0x14] sm:$0x8] %v365
        %v367 = vld [vmem:[#allocation2 + $0x2c] sm:$0x8]
        %v368 = vsel %vm363, 0, %v367
        %369 = vst [vmem:[#allocation2 + $0x2c] sm:$0x8] %v368
        %v370 = vld [vmem:[#allocation2 + $0x44] sm:$0x8]
        %v371 = vsel %vm363, 0, %v370
        %372 = vst [vmem:[#allocation2 + $0x44] sm:$0x8] %v371
        %v373 = vld [vmem:[#allocation2 + $0x5c] sm:$0x8]
        %v374 = vsel %vm363, 0, %v373
        %375 = vst [vmem:[#allocation2 + $0x5c] sm:$0x8] %v374
        %v376 = vld [vmem:[#allocation2 + $0x74] sm:$0x8]
        %v377 = vsel %vm363, 0, %v376
        %378 = vst [vmem:[#allocation2 + $0x74] sm:$0x8] %v377
        %v379 = vld [vmem:[#allocation2 + $0x8c] sm:$0x8]
        %v380 = vsel %vm363, 0, %v379
        %381 = vst [vmem:[#allocation2 + $0x8c] sm:$0x8] %v380
        %v382 = vld [vmem:[#allocation2 + $0xa4] sm:$0x8]
        %v383 = vsel %vm363, 0, %v382
        %384 = vst [vmem:[#allocation2 + $0xa4] sm:$0x8] %v383
        %v385 = vld [vmem:[#allocation2 + $0xbc] sm:$0x8]
        %v386 = vsel %vm363, 0, %v385
        %387 = vst [vmem:[#allocation2 + $0xbc] sm:$0x8] %v386
        %v388 = vld [vmem:[#allocation2 + $0xd4] sm:$0x8]
        %v389 = vsel %vm363, 0, %v388
        %390 = vst [vmem:[#allocation2 + $0xd4] sm:$0x8] %v389
        %v391 = vld [vmem:[#allocation2 + $0xec] sm:$0x8]
        %v392 = vsel %vm363, 0, %v391
        %393 = vst [vmem:[#allocation2 + $0xec] sm:$0x8] %v392
        %v394 = vld [vmem:[#allocation2 + $0x104] sm:$0x8]
        %v395 = vsel %vm363, 0, %v394
        %396 = vst [vmem:[#allocation2 + $0x104] sm:$0x8] %v395
        %v397 = vld [vmem:[#allocation2 + $0x11c] sm:$0x8]
        %v398 = vsel %vm363, 0, %v397
        %399 = vst [vmem:[#allocation2 + $0x11c] sm:$0x8] %v398
        %v400 = vld [vmem:[#allocation2 + $0x134] sm:$0x8]
        %v401 = vsel %vm363, 0, %v400
        %402 = vst [vmem:[#allocation2 + $0x134] sm:$0x8] %v401
        %v403 = vld [vmem:[#allocation2 + $0x14c] sm:$0x8]
        %v404 = vsel %vm363, 0, %v403
        %405 = vst [vmem:[#allocation2 + $0x14c] sm:$0x8] %v404
        %v406 = vld [vmem:[#allocation2 + $0x164] sm:$0x8]
        %v407 = vsel %vm363, 0, %v406
        %408 = vst [vmem:[#allocation2 + $0x164] sm:$0x8] %v407
        %v409 = vld [vmem:[#allocation2 + $0x17c] sm:$0x8]
        %v410 = vsel %vm363, 0, %v409
        %411 = vst [vmem:[#allocation2 + $0x17c] sm:$0x8] %v410
        %v412 = vld [vmem:[#allocation2 + $0x194] sm:$0x8]
        %v413 = vsel %vm363, 0, %v412
        %414 = vst [vmem:[#allocation2 + $0x194] sm:$0x8] %v413
        %v415 = vld [vmem:[#allocation2 + $0x1ac] sm:$0x8]
        %v416 = vsel %vm363, 0, %v415
        %417 = vst [vmem:[#allocation2 + $0x1ac] sm:$0x8] %v416
        %v418 = vld [vmem:[%s288] sm:$0xf]
        %v419 = vld [vmem:[%s288 + $0x4] sm:$0xf]
        %v420 = vld [vmem:[%s288 + $0x8] sm:$0xf]
        %v421 = vld [vmem:[%s288 + $0xc] sm:$0xf]
        %v422 = vld [vmem:[%s288 + $0x10] sm:$0xf]
        %v423 = vld [vmem:[%s288 + $0x14] sm:$0xf]
        %v424 = vld [vmem:[%s288 + $0x18] sm:$0xf]
        %v425 = vld [vmem:[%s288 + $0x1c] sm:$0xf]
        %v426 = vld [vmem:[%s288 + $0x20] sm:$0xf]
        %v427 = vld [vmem:[%s288 + $0x24] sm:$0xf]
        %v428 = vld [vmem:[%s288 + $0x28] sm:$0xf]
        %v429 = vld [vmem:[%s288 + $0x2c] sm:$0xf]
        %v430 = vld [vmem:[%s288 + $0x30] sm:$0xf]
        %v431 = vld [vmem:[%s288 + $0x34] sm:$0xf]
        %v432 = vld [vmem:[%s288 + $0x38] sm:$0xf]
        %v433 = vld [vmem:[%s288 + $0x3c] sm:$0xf]
        %v434 = vld [vmem:[%s288 + $0x40] sm:$0xf]
        %v435 = vld [vmem:[%s288 + $0x44] sm:$0xf]
        %v436 = vld [vmem:[%s288 + $0x48] sm:$0xf]
        %v437 = vld [vmem:[%s288 + $0x4c] sm:$0xf]
        %v438 = vld [vmem:[%s288 + $0x50] sm:$0xf]
        %v439 = vld [vmem:[%s288 + $0x54] sm:$0xf]
        %v440 = vld [vmem:[%s288 + $0x58] sm:$0xf]
        %v441 = vld [vmem:[%s288 + $0x5c] sm:$0xf]
        %v442 = vld [vmem:[%s288 + $0x60] sm:$0xf]
        %v443 = vld [vmem:[%s288 + $0x64] sm:$0xf]
        %v444 = vld [vmem:[%s288 + $0x68] sm:$0xf]
        %v445 = vld [vmem:[%s288 + $0x6c] sm:$0xf]
        %v446 = vld [vmem:[%s288 + $0x70] sm:$0xf]
        %v447 = vld [vmem:[%s288 + $0x74] sm:$0xf]
        %v448 = vld [vmem:[%s288 + $0x78] sm:$0xf]
        %v449 = vld [vmem:[%s288 + $0x7c] sm:$0xf]
        %s450 = scalar_lea.vmem [#allocation2], 24
        %451 = vst [vmem:[%s450 + $0x4] sm:$0xf] %v418
        %452 = vst [vmem:[%s450 + $0x10] sm:$0xf] %v419
        %453 = vst [vmem:[%s450 + $0x1c] sm:$0xf] %v420
        %454 = vst [vmem:[%s450 + $0x28] sm:$0xf] %v421
        %455 = vst [vmem:[%s450 + $0x34] sm:$0xf] %v422
        %456 = vst [vmem:[%s450 + $0x40] sm:$0xf] %v423
        %457 = vst [vmem:[%s450 + $0x4c] sm:$0xf] %v424
        %458 = vst [vmem:[%s450 + $0x58] sm:$0xf] %v425
        %459 = vst [vmem:[%s450 + $0x64] sm:$0xf] %v426
        %460 = vst [vmem:[%s450 + $0x70] sm:$0xf] %v427
        %461 = vst [vmem:[%s450 + $0x7c] sm:$0xf] %v428
        %462 = vst [vmem:[%s450 + $0x88] sm:$0xf] %v429
        %463 = vst [vmem:[%s450 + $0x94] sm:$0xf] %v430
        %464 = vst [vmem:[%s450 + $0xa0] sm:$0xf] %v431
        %465 = vst [vmem:[%s450 + $0xac] sm:$0xf] %v432
        %466 = vst [vmem:[%s450 + $0xb8] sm:$0xf] %v433
        %467 = vst [vmem:[%s450 + $0xc4] sm:$0xf] %v434
        %468 = vst [vmem:[%s450 + $0xd0] sm:$0xf] %v435
        %469 = vst [vmem:[%s450 + $0xdc] sm:$0xf] %v436
        %470 = vst [vmem:[%s450 + $0xe8] sm:$0xf] %v437
        %471 = vst [vmem:[%s450 + $0xf4] sm:$0xf] %v438
        %472 = vst [vmem:[%s450 + $0x100] sm:$0xf] %v439
        %473 = vst [vmem:[%s450 + $0x10c] sm:$0xf] %v440
        %474 = vst [vmem:[%s450 + $0x118] sm:$0xf] %v441
        %475 = vst [vmem:[%s450 + $0x124] sm:$0xf] %v442
        %476 = vst [vmem:[%s450 + $0x130] sm:$0xf] %v443
        %477 = vst [vmem:[%s450 + $0x13c] sm:$0xf] %v444
        %478 = vst [vmem:[%s450 + $0x148] sm:$0xf] %v445
        %479 = vst [vmem:[%s450 + $0x154] sm:$0xf] %v446
        %480 = vst [vmem:[%s450 + $0x160] sm:$0xf] %v447
        %481 = vst [vmem:[%s450 + $0x16c] sm:$0xf] %v448
        %482 = vst [vmem:[%s450 + $0x178] sm:$0xf] %v449
        %vm483 = vsmask.f32 4368
        %vm484 = vmor %vm305, %vm483
        %v486 = vshrl.u32 %v418, 16
        %v488 = vrot.slane %v486, 7
        %v489 = vshll.u32 %v418, 16
        %v491 = vor.u32 %v488, %v489
        %v492 = vrot.slane %v488, 4
        %v494 = vshrl.u32 %v419, 16
        %v496 = vrot.slane %v494, 7
        %v497 = vshll.u32 %v419, 16
        %v499 = vor.u32 %v496, %v497
        %v500 = vsel %vm484, %v492, %v499
        %v502 = vshrl.u32 %v420, 16
        %v504 = vrot.slane %v502, 7
        %v505 = vshll.u32 %v420, 16
        %v507 = vor.u32 %v504, %v505
        %v508 = vrot.slane %v504, 4
        %v510 = vshrl.u32 %v421, 16
        %v512 = vrot.slane %v510, 7
        %v513 = vshll.u32 %v421, 16
        %v515 = vor.u32 %v512, %v513
        %v516 = vsel %vm484, %v508, %v515
        %v518 = vshrl.u32 %v422, 16
        %v520 = vrot.slane %v518, 7
        %v521 = vshll.u32 %v422, 16
        %v523 = vor.u32 %v520, %v521
        %v524 = vrot.slane %v520, 4
        %v526 = vshrl.u32 %v423, 16
        %v528 = vrot.slane %v526, 7
        %v529 = vshll.u32 %v423, 16
        %v531 = vor.u32 %v528, %v529
        %v532 = vsel %vm484, %v524, %v531
        %v534 = vshrl.u32 %v424, 16
        %v536 = vrot.slane %v534, 7
        %v537 = vshll.u32 %v424, 16
        %v539 = vor.u32 %v536, %v537
        %v540 = vrot.slane %v536, 4
        %v542 = vshrl.u32 %v425, 16
        %v544 = vrot.slane %v542, 7
        %v545 = vshll.u32 %v425, 16
        %v547 = vor.u32 %v544, %v545
        %v548 = vsel %vm484, %v540, %v547
        %v550 = vshrl.u32 %v426, 16
        %v552 = vrot.slane %v550, 7
        %v553 = vshll.u32 %v426, 16
        %v555 = vor.u32 %v552, %v553
        %v556 = vrot.slane %v552, 4
        %v558 = vshrl.u32 %v427, 16
        %v560 = vrot.slane %v558, 7
        %v561 = vshll.u32 %v427, 16
        %v563 = vor.u32 %v560, %v561
        %v564 = vsel %vm484, %v556, %v563
        %v566 = vshrl.u32 %v428, 16
        %v568 = vrot.slane %v566, 7
        %v569 = vshll.u32 %v428, 16
        %v571 = vor.u32 %v568, %v569
        %v572 = vrot.slane %v568, 4
        %v574 = vshrl.u32 %v429, 16
        %v576 = vrot.slane %v574, 7
        %v577 = vshll.u32 %v429, 16
        %v579 = vor.u32 %v576, %v577
        %v580 = vsel %vm484, %v572, %v579
        %v582 = vshrl.u32 %v430, 16
        %v584 = vrot.slane %v582, 7
        %v585 = vshll.u32 %v430, 16
        %v587 = vor.u32 %v584, %v585
        %v588 = vrot.slane %v584, 4
        %v590 = vshrl.u32 %v431, 16
        %v592 = vrot.slane %v590, 7
        %v593 = vshll.u32 %v431, 16
        %v595 = vor.u32 %v592, %v593
        %v596 = vsel %vm484, %v588, %v595
        %v598 = vshrl.u32 %v432, 16
        %v600 = vrot.slane %v598, 7
        %v601 = vshll.u32 %v432, 16
        %v603 = vor.u32 %v600, %v601
        %v604 = vrot.slane %v600, 4
        %v606 = vshrl.u32 %v433, 16
        %v608 = vrot.slane %v606, 7
        %v609 = vshll.u32 %v433, 16
        %v611 = vor.u32 %v608, %v609
        %v612 = vsel %vm484, %v604, %v611
        %v614 = vshrl.u32 %v434, 16
        %v616 = vrot.slane %v614, 7
        %v617 = vshll.u32 %v434, 16
        %v619 = vor.u32 %v616, %v617
        %v620 = vrot.slane %v616, 4
        %v622 = vshrl.u32 %v435, 16
        %v624 = vrot.slane %v622, 7
        %v625 = vshll.u32 %v435, 16
        %v627 = vor.u32 %v624, %v625
        %v628 = vsel %vm484, %v620, %v627
        %v630 = vshrl.u32 %v436, 16
        %v632 = vrot.slane %v630, 7
        %v633 = vshll.u32 %v436, 16
        %v635 = vor.u32 %v632, %v633
        %v636 = vrot.slane %v632, 4
        %v638 = vshrl.u32 %v437, 16
        %v640 = vrot.slane %v638, 7
        %v641 = vshll.u32 %v437, 16
        %v643 = vor.u32 %v640, %v641
        %v644 = vsel %vm484, %v636, %v643
        %v646 = vshrl.u32 %v438, 16
        %v648 = vrot.slane %v646, 7
        %v649 = vshll.u32 %v438, 16
        %v651 = vor.u32 %v648, %v649
        %v652 = vrot.slane %v648, 4
        %v654 = vshrl.u32 %v439, 16
        %v656 = vrot.slane %v654, 7
        %v657 = vshll.u32 %v439, 16
        %v659 = vor.u32 %v656, %v657
        %v660 = vsel %vm484, %v652, %v659
        %v662 = vshrl.u32 %v440, 16
        %v664 = vrot.slane %v662, 7
        %v665 = vshll.u32 %v440, 16
        %v667 = vor.u32 %v664, %v665
        %v668 = vrot.slane %v664, 4
        %v670 = vshrl.u32 %v441, 16
        %v672 = vrot.slane %v670, 7
        %v673 = vshll.u32 %v441, 16
        %v675 = vor.u32 %v672, %v673
        %v676 = vsel %vm484, %v668, %v675
        %v678 = vshrl.u32 %v442, 16
        %v680 = vrot.slane %v678, 7
        %v681 = vshll.u32 %v442, 16
        %v683 = vor.u32 %v680, %v681
        %v684 = vrot.slane %v680, 4
        %v686 = vshrl.u32 %v443, 16
        %v688 = vrot.slane %v686, 7
        %v689 = vshll.u32 %v443, 16
        %v691 = vor.u32 %v688, %v689
        %v692 = vsel %vm484, %v684, %v691
        %v694 = vshrl.u32 %v444, 16
        %v696 = vrot.slane %v694, 7
        %v697 = vshll.u32 %v444, 16
        %v699 = vor.u32 %v696, %v697
        %v700 = vrot.slane %v696, 4
        %v702 = vshrl.u32 %v445, 16
        %v704 = vrot.slane %v702, 7
        %v705 = vshll.u32 %v445, 16
        %v707 = vor.u32 %v704, %v705
        %v708 = vsel %vm484, %v700, %v707
        %v710 = vshrl.u32 %v446, 16
        %v712 = vrot.slane %v710, 7
        %v713 = vshll.u32 %v446, 16
        %v715 = vor.u32 %v712, %v713
        %v716 = vrot.slane %v712, 4
        %v718 = vshrl.u32 %v447, 16
        %v720 = vrot.slane %v718, 7
        %v721 = vshll.u32 %v447, 16
        %v723 = vor.u32 %v720, %v721
        %v724 = vsel %vm484, %v716, %v723
        %v726 = vshrl.u32 %v448, 16
        %v728 = vrot.slane %v726, 7
        %v729 = vshll.u32 %v448, 16
        %v731 = vor.u32 %v728, %v729
        %v732 = vrot.slane %v728, 4
        %v734 = vshrl.u32 %v449, 16
        %v736 = vrot.slane %v734, 7
        %v737 = vshll.u32 %v449, 16
        %v739 = vor.u32 %v736, %v737
        %v740 = vsel %vm484, %v732, %v739
        %vm773 = vcmask 1043456
        %vm774 = vsmask.f32 7938
        %vm775 = vmand %vm773, %vm774
        %v776 = vld [vmem:[%s450] sm:$0xf]
        %v777 = vsel %vm775, %v491, %v776
        %778 = vst [vmem:[%s450] sm:$0xf] %v777
        %779 = vst [vmem:[%s450 + $0xc] sm:$0xf] %v500
        %v780 = vld [vmem:[%s450 + $0x18] sm:$0xf]
        %v781 = vsel %vm775, %v507, %v780
        %782 = vst [vmem:[%s450 + $0x18] sm:$0xf] %v781
        %783 = vst [vmem:[%s450 + $0x24] sm:$0xf] %v516
        %v784 = vld [vmem:[%s450 + $0x30] sm:$0xf]
        %v785 = vsel %vm775, %v523, %v784
        %786 = vst [vmem:[%s450 + $0x30] sm:$0xf] %v785
        %787 = vst [vmem:[%s450 + $0x3c] sm:$0xf] %v532
        %v788 = vld [vmem:[%s450 + $0x48] sm:$0xf]
        %v789 = vsel %vm775, %v539, %v788
        %790 = vst [vmem:[%s450 + $0x48] sm:$0xf] %v789
        %791 = vst [vmem:[%s450 + $0x54] sm:$0xf] %v548
        %v792 = vld [vmem:[%s450 + $0x60] sm:$0xf]
        %v793 = vsel %vm775, %v555, %v792
        %794 = vst [vmem:[%s450 + $0x60] sm:$0xf] %v793
        %795 = vst [vmem:[%s450 + $0x6c] sm:$0xf] %v564
        %v796 = vld [vmem:[%s450 + $0x78] sm:$0xf]
        %v797 = vsel %vm775, %v571, %v796
        %798 = vst [vmem:[%s450 + $0x78] sm:$0xf] %v797
        %799 = vst [vmem:[%s450 + $0x84] sm:$0xf] %v580
        %v800 = vld [vmem:[%s450 + $0x90] sm:$0xf]
        %v801 = vsel %vm775, %v587, %v800
        %802 = vst [vmem:[%s450 + $0x90] sm:$0xf] %v801
        %803 = vst [vmem:[%s450 + $0x9c] sm:$0xf] %v596
        %v804 = vld [vmem:[%s450 + $0xa8] sm:$0xf]
        %v805 = vsel %vm775, %v603, %v804
        %806 = vst [vmem:[%s450 + $0xa8] sm:$0xf] %v805
        %807 = vst [vmem:[%s450 + $0xb4] sm:$0xf] %v612
        %v808 = vld [vmem:[%s450 + $0xc0] sm:$0xf]
        %v809 = vsel %vm775, %v619, %v808
        %810 = vst [vmem:[%s450 + $0xc0] sm:$0xf] %v809
        %811 = vst [vmem:[%s450 + $0xcc] sm:$0xf] %v628
        %v812 = vld [vmem:[%s450 + $0xd8] sm:$0xf]
        %v813 = vsel %vm775, %v635, %v812
        %814 = vst [vmem:[%s450 + $0xd8] sm:$0xf] %v813
        %815 = vst [vmem:[%s450 + $0xe4] sm:$0xf] %v644
        %v816 = vld [vmem:[%s450 + $0xf0] sm:$0xf]
        %v817 = vsel %vm775, %v651, %v816
        %818 = vst [vmem:[%s450 + $0xf0] sm:$0xf] %v817
        %819 = vst [vmem:[%s450 + $0xfc] sm:$0xf] %v660
        %v820 = vld [vmem:[%s450 + $0x108] sm:$0xf]
        %v821 = vsel %vm775, %v667, %v820
        %822 = vst [vmem:[%s450 + $0x108] sm:$0xf] %v821
        %823 = vst [vmem:[%s450 + $0x114] sm:$0xf] %v676
        %v824 = vld [vmem:[%s450 + $0x120] sm:$0xf]
        %v825 = vsel %vm775, %v683, %v824
        %826 = vst [vmem:[%s450 + $0x120] sm:$0xf] %v825
        %827 = vst [vmem:[%s450 + $0x12c] sm:$0xf] %v692
        %v828 = vld [vmem:[%s450 + $0x138] sm:$0xf]
        %v829 = vsel %vm775, %v699, %v828
        %830 = vst [vmem:[%s450 + $0x138] sm:$0xf] %v829
        %831 = vst [vmem:[%s450 + $0x144] sm:$0xf] %v708
        %v832 = vld [vmem:[%s450 + $0x150] sm:$0xf]
        %v833 = vsel %vm775, %v715, %v832
        %834 = vst [vmem:[%s450 + $0x150] sm:$0xf] %v833
        %835 = vst [vmem:[%s450 + $0x15c] sm:$0xf] %v724
        %v836 = vld [vmem:[%s450 + $0x168] sm:$0xf]
        %v837 = vsel %vm775, %v731, %v836
        %838 = vst [vmem:[%s450 + $0x168] sm:$0xf] %v837
        %839 = vst [vmem:[%s450 + $0x174] sm:$0xf] %v740
        %vm840 = vsmask.f32 3328
        %vm841 = vsmask.f32 7440
        %vm842 = vmor %vm840, %vm841
        %v843 = vrot.slane %v486, 4
        %v844 = vrot.slane %v489, 5
        %v845 = vor.u32 %v843, %v844
        %v846 = vrot.slane %v845, 4
        %v847 = vrot.slane %v497, 5
        %v848 = vsel %vm842, %v846, %v847
        %v849 = vrot.slane %v494, 4
        %v850 = vor.u32 %v849, %v847
        %v851 = vrot.slane %v850, 4
        %v852 = vrot.slane %v502, 4
        %v853 = vrot.slane %v505, 5
        %v854 = vor.u32 %v852, %v853
        %v855 = vrot.slane %v854, 4
        %v856 = vrot.slane %v513, 5
        %v857 = vsel %vm842, %v855, %v856
        %v858 = vrot.slane %v510, 4
        %v859 = vor.u32 %v858, %v856
        %v860 = vrot.slane %v859, 4
        %v861 = vrot.slane %v518, 4
        %v862 = vrot.slane %v521, 5
        %v863 = vor.u32 %v861, %v862
        %v864 = vrot.slane %v863, 4
        %v865 = vrot.slane %v529, 5
        %v866 = vsel %vm842, %v864, %v865
        %v867 = vrot.slane %v526, 4
        %v868 = vor.u32 %v867, %v865
        %v869 = vrot.slane %v868, 4
        %v870 = vrot.slane %v534, 4
        %v871 = vrot.slane %v537, 5
        %v872 = vor.u32 %v870, %v871
        %v873 = vrot.slane %v872, 4
        %v874 = vrot.slane %v545, 5
        %v875 = vsel %vm842, %v873, %v874
        %v876 = vrot.slane %v542, 4
        %v877 = vor.u32 %v876, %v874
        %v878 = vrot.slane %v877, 4
        %v879 = vrot.slane %v550, 4
        %v880 = vrot.slane %v553, 5
        %v881 = vor.u32 %v879, %v880
        %v882 = vrot.slane %v881, 4
        %v883 = vrot.slane %v561, 5
        %v884 = vsel %vm842, %v882, %v883
        %v885 = vrot.slane %v558, 4
        %v886 = vor.u32 %v885, %v883
        %v887 = vrot.slane %v886, 4
        %v888 = vrot.slane %v566, 4
        %v889 = vrot.slane %v569, 5
        %v890 = vor.u32 %v888, %v889
        %v891 = vrot.slane %v890, 4
        %v892 = vrot.slane %v577, 5
        %v893 = vsel %vm842, %v891, %v892
        %v894 = vrot.slane %v574, 4
        %v895 = vor.u32 %v894, %v892
        %v896 = vrot.slane %v895, 4
        %v897 = vrot.slane %v582, 4
        %v898 = vrot.slane %v585, 5
        %v899 = vor.u32 %v897, %v898
        %v900 = vrot.slane %v899, 4
        %v901 = vrot.slane %v593, 5
        %v902 = vsel %vm842, %v900, %v901
        %v903 = vrot.slane %v590, 4
        %v904 = vor.u32 %v903, %v901
        %v905 = vrot.slane %v904, 4
        %v906 = vrot.slane %v598, 4
        %v907 = vrot.slane %v601, 5
        %v908 = vor.u32 %v906, %v907
        %v909 = vrot.slane %v908, 4
        %v910 = vrot.slane %v609, 5
        %v911 = vsel %vm842, %v909, %v910
        %v912 = vrot.slane %v606, 4
        %v913 = vor.u32 %v912, %v910
        %v914 = vrot.slane %v913, 4
        %v915 = vrot.slane %v614, 4
        %v916 = vrot.slane %v617, 5
        %v917 = vor.u32 %v915, %v916
        %v918 = vrot.slane %v917, 4
        %v919 = vrot.slane %v625, 5
        %v920 = vsel %vm842, %v918, %v919
        %v921 = vrot.slane %v622, 4
        %v922 = vor.u32 %v921, %v919
        %v923 = vrot.slane %v922, 4
        %v924 = vrot.slane %v630, 4
        %v925 = vrot.slane %v633, 5
        %v926 = vor.u32 %v924, %v925
        %v927 = vrot.slane %v926, 4
        %v928 = vrot.slane %v641, 5
        %v929 = vsel %vm842, %v927, %v928
        %v930 = vrot.slane %v638, 4
        %v931 = vor.u32 %v930, %v928
        %v932 = vrot.slane %v931, 4
        %v933 = vrot.slane %v646, 4
        %v934 = vrot.slane %v649, 5
        %v935 = vor.u32 %v933, %v934
        %v936 = vrot.slane %v935, 4
        %v937 = vrot.slane %v657, 5
        %v938 = vsel %vm842, %v936, %v937
        %v939 = vrot.slane %v654, 4
        %v940 = vor.u32 %v939, %v937
        %v941 = vrot.slane %v940, 4
        %v942 = vrot.slane %v662, 4
        %v943 = vrot.slane %v665, 5
        %v944 = vor.u32 %v942, %v943
        %v945 = vrot.slane %v944, 4
        %v946 = vrot.slane %v673, 5
        %v947 = vsel %vm842, %v945, %v946
        %v948 = vrot.slane %v670, 4
        %v949 = vor.u32 %v948, %v946
        %v950 = vrot.slane %v949, 4
        %v951 = vrot.slane %v678, 4
        %v952 = vrot.slane %v681, 5
        %v953 = vor.u32 %v951, %v952
        %v954 = vrot.slane %v953, 4
        %v955 = vrot.slane %v689, 5
        %v956 = vsel %vm842, %v954, %v955
        %v957 = vrot.slane %v686, 4
        %v958 = vor.u32 %v957, %v955
        %v959 = vrot.slane %v958, 4
        %v960 = vrot.slane %v694, 4
        %v961 = vrot.slane %v697, 5
        %v962 = vor.u32 %v960, %v961
        %v963 = vrot.slane %v962, 4
        %v964 = vrot.slane %v705, 5
        %v965 = vsel %vm842, %v963, %v964
        %v966 = vrot.slane %v702, 4
        %v967 = vor.u32 %v966, %v964
        %v968 = vrot.slane %v967, 4
        %v969 = vrot.slane %v710, 4
        %v970 = vrot.slane %v713, 5
        %v971 = vor.u32 %v969, %v970
        %v972 = vrot.slane %v971, 4
        %v973 = vrot.slane %v721, 5
        %v974 = vsel %vm842, %v972, %v973
        %v975 = vrot.slane %v718, 4
        %v976 = vor.u32 %v975, %v973
        %v977 = vrot.slane %v976, 4
        %v978 = vrot.slane %v726, 4
        %v979 = vrot.slane %v729, 5
        %v980 = vor.u32 %v978, %v979
        %v981 = vrot.slane %v980, 4
        %v982 = vrot.slane %v737, 5
        %v983 = vsel %vm842, %v981, %v982
        %v984 = vrot.slane %v734, 4
        %v985 = vor.u32 %v984, %v982
        %v986 = vrot.slane %v985, 4
        %1019 = vst [vmem:[%s450 + $0x8] sm:$0xf] %v848
        %vm1020 = vmand %vm773, %vm840
        %v1021 = vld [vmem:[%s450 + $0x14] sm:$0xf]
        %v1022 = vsel %vm1020, %v851, %v1021
        %1023 = vst [vmem:[%s450 + $0x14] sm:$0xf] %v1022
        %1024 = vst [vmem:[%s450 + $0x20] sm:$0xf] %v857
        %v1025 = vld [vmem:[%s450 + $0x2c] sm:$0xf]
        %v1026 = vsel %vm1020, %v860, %v1025
        %1027 = vst [vmem:[%s450 + $0x2c] sm:$0xf] %v1026
        %1028 = vst [vmem:[%s450 + $0x38] sm:$0xf] %v866
        %v1029 = vld [vmem:[%s450 + $0x44] sm:$0xf]
        %v1030 = vsel %vm1020, %v869, %v1029
        %1031 = vst [vmem:[%s450 + $0x44] sm:$0xf] %v1030
        %1032 = vst [vmem:[%s450 + $0x50] sm:$0xf] %v875
        %v1033 = vld [vmem:[%s450 + $0x5c] sm:$0xf]
        %v1034 = vsel %vm1020, %v878, %v1033
        %1035 = vst [vmem:[%s450 + $0x5c] sm:$0xf] %v1034
        %1036 = vst [vmem:[%s450 + $0x68] sm:$0xf] %v884
        %v1037 = vld [vmem:[%s450 + $0x74] sm:$0xf]
        %v1038 = vsel %vm1020, %v887, %v1037
        %1039 = vst [vmem:[%s450 + $0x74] sm:$0xf] %v1038
        %1040 = vst [vmem:[%s450 + $0x80] sm:$0xf] %v893
        %v1041 = vld [vmem:[%s450 + $0x8c] sm:$0xf]
        %v1042 = vsel %vm1020, %v896, %v1041
        %1043 = vst [vmem:[%s450 + $0x8c] sm:$0xf] %v1042
        %1044 = vst [vmem:[%s450 + $0x98] sm:$0xf] %v902
        %v1045 = vld [vmem:[%s450 + $0xa4] sm:$0xf]
        %v1046 = vsel %vm1020, %v905, %v1045
        %1047 = vst [vmem:[%s450 + $0xa4] sm:$0xf] %v1046
        %1048 = vst [vmem:[%s450 + $0xb0] sm:$0xf] %v911
        %v1049 = vld [vmem:[%s450 + $0xbc] sm:$0xf]
        %v1050 = vsel %vm1020, %v914, %v1049
        %1051 = vst [vmem:[%s450 + $0xbc] sm:$0xf] %v1050
        %1052 = vst [vmem:[%s450 + $0xc8] sm:$0xf] %v920
        %v1053 = vld [vmem:[%s450 + $0xd4] sm:$0xf]
        %v1054 = vsel %vm1020, %v923, %v1053
        %1055 = vst [vmem:[%s450 + $0xd4] sm:$0xf] %v1054
        %1056 = vst [vmem:[%s450 + $0xe0] sm:$0xf] %v929
        %v1057 = vld [vmem:[%s450 + $0xec] sm:$0xf]
        %v1058 = vsel %vm1020, %v932, %v1057
        %1059 = vst [vmem:[%s450 + $0xec] sm:$0xf] %v1058
        %1060 = vst [vmem:[%s450 + $0xf8] sm:$0xf] %v938
        %v1061 = vld [vmem:[%s450 + $0x104] sm:$0xf]
        %v1062 = vsel %vm1020, %v941, %v1061
        %1063 = vst [vmem:[%s450 + $0x104] sm:$0xf] %v1062
        %1064 = vst [vmem:[%s450 + $0x110] sm:$0xf] %v947
        %v1065 = vld [vmem:[%s450 + $0x11c] sm:$0xf]
        %v1066 = vsel %vm1020, %v950, %v1065
        %1067 = vst [vmem:[%s450 + $0x11c] sm:$0xf] %v1066
        %1068 = vst [vmem:[%s450 + $0x128] sm:$0xf] %v956
        %v1069 = vld [vmem:[%s450 + $0x134] sm:$0xf]
        %v1070 = vsel %vm1020, %v959, %v1069
        %1071 = vst [vmem:[%s450 + $0x134] sm:$0xf] %v1070
        %1072 = vst [vmem:[%s450 + $0x140] sm:$0xf] %v965
        %v1073 = vld [vmem:[%s450 + $0x14c] sm:$0xf]
        %v1074 = vsel %vm1020, %v968, %v1073
        %1075 = vst [vmem:[%s450 + $0x14c] sm:$0xf] %v1074
        %1076 = vst [vmem:[%s450 + $0x158] sm:$0xf] %v974
        %v1077 = vld [vmem:[%s450 + $0x164] sm:$0xf]
        %v1078 = vsel %vm1020, %v977, %v1077
        %1079 = vst [vmem:[%s450 + $0x164] sm:$0xf] %v1078
        %1080 = vst [vmem:[%s450 + $0x170] sm:$0xf] %v983
        %v1081 = vld [vmem:[%s450 + $0x17c] sm:$0xf]
        %v1082 = vsel %vm1020, %v986, %v1081
        %1083 = vst [vmem:[%s450 + $0x17c] sm:$0xf] %v1082
        %v1084 = vld [vmem:[#allocation2] sm:$0xff]
        %v1085 = vld [vmem:[#allocation2 + $0x8] sm:$0xf]
        %v1086 = vld [vmem:[#allocation2 + $0xc] sm:$0xff]
        %v1087 = vld [vmem:[#allocation2 + $0x14] sm:$0xf]
        %v1088 = vld [vmem:[#allocation2 + $0x18] sm:$0xff]
        %v1089 = vld [vmem:[#allocation2 + $0x20] sm:$0xf]
        %v1090 = vld [vmem:[#allocation2 + $0x24] sm:$0xff]
        %v1091 = vld [vmem:[#allocation2 + $0x2c] sm:$0xf]
        %v1092 = vld [vmem:[#allocation2 + $0x30] sm:$0xff]
        %v1093 = vld [vmem:[#allocation2 + $0x38] sm:$0xf]
        %v1094 = vld [vmem:[#allocation2 + $0x3c] sm:$0xff]
        %v1095 = vld [vmem:[#allocation2 + $0x44] sm:$0xf]
        %v1096 = vld [vmem:[#allocation2 + $0x48] sm:$0xff]
        %v1097 = vld [vmem:[#allocation2 + $0x50] sm:$0xf]
        %v1098 = vld [vmem:[#allocation2 + $0x54] sm:$0xff]
        %v1099 = vld [vmem:[#allocation2 + $0x5c] sm:$0xf]
        %v1100 = vld [vmem:[#allocation2 + $0x60] sm:$0xff]
        %v1101 = vld [vmem:[#allocation2 + $0x68] sm:$0xf]
        %v1102 = vld [vmem:[#allocation2 + $0x6c] sm:$0xff]
        %v1103 = vld [vmem:[#allocation2 + $0x74] sm:$0xf]
        %v1104 = vld [vmem:[#allocation2 + $0x78] sm:$0xff]
        %v1105 = vld [vmem:[#allocation2 + $0x80] sm:$0xf]
        %v1106 = vld [vmem:[#allocation2 + $0x84] sm:$0xff]
        %v1107 = vld [vmem:[#allocation2 + $0x8c] sm:$0xf]
        %v1108 = vld [vmem:[#allocation2 + $0x90] sm:$0xff]
        %v1109 = vld [vmem:[#allocation2 + $0x98] sm:$0xf]
        %v1110 = vld [vmem:[#allocation2 + $0x9c] sm:$0xff]
        %v1111 = vld [vmem:[#allocation2 + $0xa4] sm:$0xf]
        %v1112 = vld [vmem:[#allocation2 + $0xa8] sm:$0xff]
        %v1113 = vld [vmem:[#allocation2 + $0xb0] sm:$0xf]
        %v1114 = vld [vmem:[#allocation2 + $0xb4] sm:$0xff]
        %v1115 = vld [vmem:[#allocation2 + $0xbc] sm:$0xf]
        %v1116 = vld [vmem:[#allocation2 + $0xc0] sm:$0xff]
        %v1117 = vld [vmem:[#allocation2 + $0xc8] sm:$0xf]
        %v1118 = vld [vmem:[#allocation2 + $0xcc] sm:$0xff]
        %v1119 = vld [vmem:[#allocation2 + $0xd4] sm:$0xf]
        %v1120 = vld [vmem:[#allocation2 + $0xd8] sm:$0xff]
        %v1121 = vld [vmem:[#allocation2 + $0xe0] sm:$0xf]
        %v1122 = vld [vmem:[#allocation2 + $0xe4] sm:$0xff]
        %v1123 = vld [vmem:[#allocation2 + $0xec] sm:$0xf]
        %v1124 = vld [vmem:[#allocation2 + $0xf0] sm:$0xff]
        %v1125 = vld [vmem:[#allocation2 + $0xf8] sm:$0xf]
        %v1126 = vld [vmem:[#allocation2 + $0xfc] sm:$0xff]
        %v1127 = vld [vmem:[#allocation2 + $0x104] sm:$0xf]
        %v1128 = vld [vmem:[#allocation2 + $0x108] sm:$0xff]
        %v1129 = vld [vmem:[#allocation2 + $0x110] sm:$0xf]
        %v1130 = vld [vmem:[#allocation2 + $0x114] sm:$0xff]
        %v1131 = vld [vmem:[#allocation2 + $0x11c] sm:$0xf]
        %v1132 = vld [vmem:[#allocation2 + $0x120] sm:$0xff]
        %v1133 = vld [vmem:[#allocation2 + $0x128] sm:$0xf]
        %v1134 = vld [vmem:[#allocation2 + $0x12c] sm:$0xff]
        %v1135 = vld [vmem:[#allocation2 + $0x134] sm:$0xf]
        %v1136 = vld [vmem:[#allocation2 + $0x138] sm:$0xff]
        %v1137 = vld [vmem:[#allocation2 + $0x140] sm:$0xf]
        %v1138 = vld [vmem:[#allocation2 + $0x144] sm:$0xff]
        %v1139 = vld [vmem:[#allocation2 + $0x14c] sm:$0xf]
        %v1140 = vld [vmem:[#allocation2 + $0x150] sm:$0xff]
        %v1141 = vld [vmem:[#allocation2 + $0x158] sm:$0xf]
        %v1142 = vld [vmem:[#allocation2 + $0x15c] sm:$0xff]
        %v1143 = vld [vmem:[#allocation2 + $0x164] sm:$0xf]
        %v1144 = vld [vmem:[#allocation2 + $0x168] sm:$0xff]
        %v1145 = vld [vmem:[#allocation2 + $0x170] sm:$0xf]
        %v1146 = vld [vmem:[#allocation2 + $0x174] sm:$0xff]
        %v1147 = vld [vmem:[#allocation2 + $0x17c] sm:$0xf]
        %v1148 = vld [vmem:[%s1] sm:$0xf]
        %v1149 = vld [vmem:[%s1 + $0x4] sm:$0xf]
        %v1150 = vld [vmem:[%s1 + $0x8] sm:$0xf]
        %v1151 = vld [vmem:[%s1 + $0xc] sm:$0xf]
        %v1152 = vld [vmem:[%s1 + $0x10] sm:$0xf]
        %v1153 = vld [vmem:[%s1 + $0x14] sm:$0xf]
        %v1154 = vld [vmem:[%s1 + $0x18] sm:$0xf]
        %v1155 = vld [vmem:[%s1 + $0x1c] sm:$0xf]
        %v1156 = vld [vmem:[%s1 + $0x20] sm:$0xf]
        %v1157 = vld [vmem:[%s1 + $0x24] sm:$0xf]
        %v1158 = vld [vmem:[%s1 + $0x28] sm:$0xf]
        %v1159 = vld [vmem:[%s1 + $0x2c] sm:$0xf]
        %v1160 = vld [vmem:[%s1 + $0x30] sm:$0xf]
        %v1161 = vld [vmem:[%s1 + $0x34] sm:$0xf]
        %v1162 = vld [vmem:[%s1 + $0x38] sm:$0xf]
        %v1163 = vld [vmem:[%s1 + $0x3c] sm:$0xf]
        %v1164 = vld [vmem:[%s1 + $0x40] sm:$0xf]
        %v1165 = vld [vmem:[%s1 + $0x44] sm:$0xf]
        %v1166 = vld [vmem:[%s1 + $0x48] sm:$0xf]
        %v1167 = vld [vmem:[%s1 + $0x4c] sm:$0xf]
        %v1168 = vld [vmem:[%s1 + $0x50] sm:$0xf]
        %v1169 = vld [vmem:[%s1 + $0x54] sm:$0xf]
        %v1170 = vld [vmem:[%s1 + $0x58] sm:$0xf]
        %v1171 = vld [vmem:[%s1 + $0x5c] sm:$0xf]
        %v1172 = vld [vmem:[%s1 + $0x60] sm:$0xf]
        %v1173 = vld [vmem:[%s1 + $0x64] sm:$0xf]
        %v1174 = vld [vmem:[%s1 + $0x68] sm:$0xf]
        %v1175 = vld [vmem:[%s1 + $0x6c] sm:$0xf]
        %v1176 = vld [vmem:[%s1 + $0x70] sm:$0xf]
        %v1177 = vld [vmem:[%s1 + $0x74] sm:$0xf]
        %v1178 = vld [vmem:[%s1 + $0x78] sm:$0xf]
        %v1179 = vld [vmem:[%s1 + $0x7c] sm:$0xf]
        %v1180 = vld [vmem:[%s1 + $0x80] sm:$0xf]
        %v1181 = vld [vmem:[%s1 + $0x84] sm:$0xf]
        %v1182 = vld [vmem:[%s1 + $0x88] sm:$0xf]
        %v1183 = vld [vmem:[%s1 + $0x8c] sm:$0xf]
        %v1184 = vld [vmem:[%s1 + $0x90] sm:$0xf]
        %v1185 = vld [vmem:[%s1 + $0x94] sm:$0xf]
        %v1186 = vld [vmem:[%s1 + $0x98] sm:$0xf]
        %v1187 = vld [vmem:[%s1 + $0x9c] sm:$0xf]
        %v1188 = vld [vmem:[%s1 + $0xa0] sm:$0xf]
        %v1189 = vld [vmem:[%s1 + $0xa4] sm:$0xf]
        %v1190 = vld [vmem:[%s1 + $0xa8] sm:$0xf]
        %v1191 = vld [vmem:[%s1 + $0xac] sm:$0xf]
        %v1192 = vld [vmem:[%s1 + $0xb0] sm:$0xf]
        %v1193 = vld [vmem:[%s1 + $0xb4] sm:$0xf]
        %v1194 = vld [vmem:[%s1 + $0xb8] sm:$0xf]
        %v1195 = vld [vmem:[%s1 + $0xbc] sm:$0xf]
        %v1196 = vld [vmem:[%s450] sm:$0xff]
        %v1197 = vld [vmem:[%s450 + $0x8] sm:$0xf]
        %v1198 = vld [vmem:[%s450 + $0xc] sm:$0xff]
        %v1199 = vld [vmem:[%s450 + $0x14] sm:$0xf]
        %v1200 = vld [vmem:[%s450 + $0x18] sm:$0xff]
        %v1201 = vld [vmem:[%s450 + $0x20] sm:$0xf]
        %v1202 = vld [vmem:[%s450 + $0x24] sm:$0xff]
        %v1203 = vld [vmem:[%s450 + $0x2c] sm:$0xf]
        %v1204 = vld [vmem:[%s450 + $0x30] sm:$0xff]
        %v1205 = vld [vmem:[%s450 + $0x38] sm:$0xf]
        %v1206 = vld [vmem:[%s450 + $0x3c] sm:$0xff]
        %v1207 = vld [vmem:[%s450 + $0x44] sm:$0xf]
        %v1208 = vld [vmem:[%s450 + $0x48] sm:$0xff]
        %v1209 = vld [vmem:[%s450 + $0x50] sm:$0xf]
        %v1210 = vld [vmem:[%s450 + $0x54] sm:$0xff]
        %v1211 = vld [vmem:[%s450 + $0x5c] sm:$0xf]
        %v1212 = vld [vmem:[%s450 + $0x60] sm:$0xff]
        %v1213 = vld [vmem:[%s450 + $0x68] sm:$0xf]
        %v1214 = vld [vmem:[%s450 + $0x6c] sm:$0xff]
        %v1215 = vld [vmem:[%s450 + $0x74] sm:$0xf]
        %v1216 = vld [vmem:[%s450 + $0x78] sm:$0xff]
        %v1217 = vld [vmem:[%s450 + $0x80] sm:$0xf]
        %v1218 = vld [vmem:[%s450 + $0x84] sm:$0xff]
        %v1219 = vld [vmem:[%s450 + $0x8c] sm:$0xf]
        %v1220 = vld [vmem:[%s450 + $0x90] sm:$0xff]
        %v1221 = vld [vmem:[%s450 + $0x98] sm:$0xf]
        %v1222 = vld [vmem:[%s450 + $0x9c] sm:$0xff]
        %v1223 = vld [vmem:[%s450 + $0xa4] sm:$0xf]
        %v1224 = vld [vmem:[%s450 + $0xa8] sm:$0xff]
        %v1225 = vld [vmem:[%s450 + $0xb0] sm:$0xf]
        %v1226 = vld [vmem:[%s450 + $0xb4] sm:$0xff]
        %v1227 = vld [vmem:[%s450 + $0xbc] sm:$0xf]
        %v1228 = vld [vmem:[%s450 + $0xc0] sm:$0xff]
        %v1229 = vld [vmem:[%s450 + $0xc8] sm:$0xf]
        %v1230 = vld [vmem:[%s450 + $0xcc] sm:$0xff]
        %v1231 = vld [vmem:[%s450 + $0xd4] sm:$0xf]
        %v1232 = vld [vmem:[%s450 + $0xd8] sm:$0xff]
        %v1233 = vld [vmem:[%s450 + $0xe0] sm:$0xf]
        %v1234 = vld [vmem:[%s450 + $0xe4] sm:$0xff]
        %v1235 = vld [vmem:[%s450 + $0xec] sm:$0xf]
        %v1236 = vld [vmem:[%s450 + $0xf0] sm:$0xff]
        %v1237 = vld [vmem:[%s450 + $0xf8] sm:$0xf]
        %v1238 = vld [vmem:[%s450 + $0xfc] sm:$0xff]
        %v1239 = vld [vmem:[%s450 + $0x104] sm:$0xf]
        %v1240 = vld [vmem:[%s450 + $0x108] sm:$0xff]
        %v1241 = vld [vmem:[%s450 + $0x110] sm:$0xf]
        %v1242 = vld [vmem:[%s450 + $0x114] sm:$0xff]
        %v1243 = vld [vmem:[%s450 + $0x11c] sm:$0xf]
        %v1244 = vld [vmem:[%s450 + $0x120] sm:$0xff]
        %v1245 = vld [vmem:[%s450 + $0x128] sm:$0xf]
        %v1246 = vld [vmem:[%s450 + $0x12c] sm:$0xff]
        %v1247 = vld [vmem:[%s450 + $0x134] sm:$0xf]
        %v1248 = vld [vmem:[%s450 + $0x138] sm:$0xff]
        %v1249 = vld [vmem:[%s450 + $0x140] sm:$0xf]
        %v1250 = vld [vmem:[%s450 + $0x144] sm:$0xff]
        %v1251 = vld [vmem:[%s450 + $0x14c] sm:$0xf]
        %v1252 = vld [vmem:[%s450 + $0x150] sm:$0xff]
        %v1253 = vld [vmem:[%s450 + $0x158] sm:$0xf]
        %v1254 = vld [vmem:[%s450 + $0x15c] sm:$0xff]
        %v1255 = vld [vmem:[%s450 + $0x164] sm:$0xf]
        %v1256 = vld [vmem:[%s450 + $0x168] sm:$0xff]
        %v1257 = vld [vmem:[%s450 + $0x170] sm:$0xf]
        %v1258 = vld [vmem:[%s450 + $0x174] sm:$0xff]
        %v1259 = vld [vmem:[%s450 + $0x17c] sm:$0xf]
        %v1260 = vld [vmem:[%s1 + $0xc0] sm:$0xf]
        %v1261 = vld [vmem:[%s1 + $0xc4] sm:$0xf]
        %v1262 = vld [vmem:[%s1 + $0xc8] sm:$0xf]
        %v1263 = vld [vmem:[%s1 + $0xcc] sm:$0xf]
        %v1264 = vld [vmem:[%s1 + $0xd0] sm:$0xf]
        %v1265 = vld [vmem:[%s1 + $0xd4] sm:$0xf]
        %v1266 = vld [vmem:[%s1 + $0xd8] sm:$0xf]
        %v1267 = vld [vmem:[%s1 + $0xdc] sm:$0xf]
        %v1268 = vld [vmem:[%s1 + $0xe0] sm:$0xf]
        %v1269 = vld [vmem:[%s1 + $0xe4] sm:$0xf]
        %v1270 = vld [vmem:[%s1 + $0xe8] sm:$0xf]
        %v1271 = vld [vmem:[%s1 + $0xec] sm:$0xf]
        %v1272 = vld [vmem:[%s1 + $0xf0] sm:$0xf]
        %v1273 = vld [vmem:[%s1 + $0xf4] sm:$0xf]
        %v1274 = vld [vmem:[%s1 + $0xf8] sm:$0xf]
        %v1275 = vld [vmem:[%s1 + $0xfc] sm:$0xf]
        %v1276 = vld [vmem:[%s1 + $0x100] sm:$0xf]
        %v1277 = vld [vmem:[%s1 + $0x104] sm:$0xf]
        %v1278 = vld [vmem:[%s1 + $0x108] sm:$0xf]
        %v1279 = vld [vmem:[%s1 + $0x10c] sm:$0xf]
        %v1280 = vld [vmem:[%s1 + $0x110] sm:$0xf]
        %v1281 = vld [vmem:[%s1 + $0x114] sm:$0xf]
        %v1282 = vld [vmem:[%s1 + $0x118] sm:$0xf]
        %v1283 = vld [vmem:[%s1 + $0x11c] sm:$0xf]
        %v1284 = vld [vmem:[%s1 + $0x120] sm:$0xf]
        %v1285 = vld [vmem:[%s1 + $0x124] sm:$0xf]
        %v1286 = vld [vmem:[%s1 + $0x128] sm:$0xf]
        %v1287 = vld [vmem:[%s1 + $0x12c] sm:$0xf]
        %v1288 = vld [vmem:[%s1 + $0x130] sm:$0xf]
        %v1289 = vld [vmem:[%s1 + $0x134] sm:$0xf]
        %v1290 = vld [vmem:[%s1 + $0x138] sm:$0xf]
        %v1291 = vld [vmem:[%s1 + $0x13c] sm:$0xf]
        %v1292 = vld [vmem:[%s1 + $0x140] sm:$0xf]
        %v1293 = vld [vmem:[%s1 + $0x144] sm:$0xf]
        %v1294 = vld [vmem:[%s1 + $0x148] sm:$0xf]
        %v1295 = vld [vmem:[%s1 + $0x14c] sm:$0xf]
        %v1296 = vld [vmem:[%s1 + $0x150] sm:$0xf]
        %v1297 = vld [vmem:[%s1 + $0x154] sm:$0xf]
        %v1298 = vld [vmem:[%s1 + $0x158] sm:$0xf]
        %v1299 = vld [vmem:[%s1 + $0x15c] sm:$0xf]
        %v1300 = vld [vmem:[%s1 + $0x160] sm:$0xf]
        %v1301 = vld [vmem:[%s1 + $0x164] sm:$0xf]
        %v1302 = vld [vmem:[%s1 + $0x168] sm:$0xf]
        %v1303 = vld [vmem:[%s1 + $0x16c] sm:$0xf]
        %v1304 = vld [vmem:[%s1 + $0x170] sm:$0xf]
        %v1305 = vld [vmem:[%s1 + $0x174] sm:$0xf]
        %v1306 = vld [vmem:[%s1 + $0x178] sm:$0xf]
        %v1307 = vld [vmem:[%s1 + $0x17c] sm:$0xf]
        %v1372 = vunpack.c.l.b16 %v1196
        %v1373 = vunpack.c.h.b16 %v1196
        %v1374 = vunpack.c.l.b16 %v1197
        %v1375 = vunpack.c.l.b16 %v1198
        %v1376 = vunpack.c.h.b16 %v1198
        %v1377 = vunpack.c.l.b16 %v1199
        %v1378 = vunpack.c.l.b16 %v1200
        %v1379 = vunpack.c.h.b16 %v1200
        %v1380 = vunpack.c.l.b16 %v1201
        %v1381 = vunpack.c.l.b16 %v1202
        %v1382 = vunpack.c.h.b16 %v1202
        %v1383 = vunpack.c.l.b16 %v1203
        %v1384 = vunpack.c.l.b16 %v1204
        %v1385 = vunpack.c.h.b16 %v1204
        %v1386 = vunpack.c.l.b16 %v1205
        %v1387 = vunpack.c.l.b16 %v1206
        %v1388 = vunpack.c.h.b16 %v1206
        %v1389 = vunpack.c.l.b16 %v1207
        %v1390 = vunpack.c.l.b16 %v1208
        %v1391 = vunpack.c.h.b16 %v1208
        %v1392 = vunpack.c.l.b16 %v1209
        %v1393 = vunpack.c.l.b16 %v1210
        %v1394 = vunpack.c.h.b16 %v1210
        %v1395 = vunpack.c.l.b16 %v1211
        %v1396 = vunpack.c.l.b16 %v1212
        %v1397 = vunpack.c.h.b16 %v1212
        %v1398 = vunpack.c.l.b16 %v1213
        %v1399 = vunpack.c.l.b16 %v1214
        %v1400 = vunpack.c.h.b16 %v1214
        %v1401 = vunpack.c.l.b16 %v1215
        %v1402 = vunpack.c.l.b16 %v1216
        %v1403 = vunpack.c.h.b16 %v1216
        %v1404 = vunpack.c.l.b16 %v1217
        %v1405 = vunpack.c.l.b16 %v1218
        %v1406 = vunpack.c.h.b16 %v1218
        %v1407 = vunpack.c.l.b16 %v1219
        %v1408 = vunpack.c.l.b16 %v1220
        %v1409 = vunpack.c.h.b16 %v1220
        %v1410 = vunpack.c.l.b16 %v1221
        %v1411 = vunpack.c.l.b16 %v1222
        %v1412 = vunpack.c.h.b16 %v1222
        %v1413 = vunpack.c.l.b16 %v1223
        %v1414 = vunpack.c.l.b16 %v1224
        %v1415 = vunpack.c.h.b16 %v1224
        %v1416 = vunpack.c.l.b16 %v1225
        %v1417 = vunpack.c.l.b16 %v1226
        %v1418 = vunpack.c.h.b16 %v1226
        %v1419 = vunpack.c.l.b16 %v1227
        %v1420 = vunpack.c.l.b16 %v1228
        %v1421 = vunpack.c.h.b16 %v1228
        %v1422 = vunpack.c.l.b16 %v1229
        %v1423 = vunpack.c.l.b16 %v1230
        %v1424 = vunpack.c.h.b16 %v1230
        %v1425 = vunpack.c.l.b16 %v1231
        %v1426 = vunpack.c.l.b16 %v1232
        %v1427 = vunpack.c.h.b16 %v1232
        %v1428 = vunpack.c.l.b16 %v1233
        %v1429 = vunpack.c.l.b16 %v1234
        %v1430 = vunpack.c.h.b16 %v1234
        %v1431 = vunpack.c.l.b16 %v1235
        %v1432 = vunpack.c.l.b16 %v1236
        %v1433 = vunpack.c.h.b16 %v1236
        %v1434 = vunpack.c.l.b16 %v1237
        %v1435 = vunpack.c.l.b16 %v1238
        %v1436 = vunpack.c.h.b16 %v1238
        %v1437 = vunpack.c.l.b16 %v1239
        %v1438 = vunpack.c.l.b16 %v1240
        %v1439 = vunpack.c.h.b16 %v1240
        %v1440 = vunpack.c.l.b16 %v1241
        %v1441 = vunpack.c.l.b16 %v1242
        %v1442 = vunpack.c.h.b16 %v1242
        %v1443 = vunpack.c.l.b16 %v1243
        %v1444 = vunpack.c.l.b16 %v1244
        %v1445 = vunpack.c.h.b16 %v1244
        %v1446 = vunpack.c.l.b16 %v1245
        %v1447 = vunpack.c.l.b16 %v1246
        %v1448 = vunpack.c.h.b16 %v1246
        %v1449 = vunpack.c.l.b16 %v1247
        %v1450 = vunpack.c.l.b16 %v1248
        %v1451 = vunpack.c.h.b16 %v1248
        %v1452 = vunpack.c.l.b16 %v1249
        %v1453 = vunpack.c.l.b16 %v1250
        %v1454 = vunpack.c.h.b16 %v1250
        %v1455 = vunpack.c.l.b16 %v1251
        %v1456 = vunpack.c.l.b16 %v1252
        %v1457 = vunpack.c.h.b16 %v1252
        %v1458 = vunpack.c.l.b16 %v1253
        %v1459 = vunpack.c.l.b16 %v1254
        %v1460 = vunpack.c.h.b16 %v1254
        %v1461 = vunpack.c.l.b16 %v1255
        %v1462 = vunpack.c.l.b16 %v1256
        %v1463 = vunpack.c.h.b16 %v1256
        %v1464 = vunpack.c.l.b16 %v1257
        %v1465 = vunpack.c.l.b16 %v1258
        %v1466 = vunpack.c.h.b16 %v1258
        %v1467 = vunpack.c.l.b16 %v1259
        %v1468 = vpack.c.b16 %v1375, %v1372
        %v1469 = vpack.c.b16 %v1376, %v1373
        %v1470 = vpack.c.b16 %v1377, %v1374
        %v1471 = vpack.c.b16 %v1381, %v1378
        %v1472 = vpack.c.b16 %v1382, %v1379
        %v1473 = vpack.c.b16 %v1383, %v1380
        %v1474 = vpack.c.b16 %v1387, %v1384
        %v1475 = vpack.c.b16 %v1388, %v1385
        %v1476 = vpack.c.b16 %v1389, %v1386
        %v1477 = vpack.c.b16 %v1393, %v1390
        %v1478 = vpack.c.b16 %v1394, %v1391
        %v1479 = vpack.c.b16 %v1395, %v1392
        %v1480 = vpack.c.b16 %v1399, %v1396
        %v1481 = vpack.c.b16 %v1400, %v1397
        %v1482 = vpack.c.b16 %v1401, %v1398
        %v1483 = vpack.c.b16 %v1405, %v1402
        %v1484 = vpack.c.b16 %v1406, %v1403
        %v1485 = vpack.c.b16 %v1407, %v1404
        %v1486 = vpack.c.b16 %v1411, %v1408
        %v1487 = vpack.c.b16 %v1412, %v1409
        %v1488 = vpack.c.b16 %v1413, %v1410
        %v1489 = vpack.c.b16 %v1417, %v1414
        %v1490 = vpack.c.b16 %v1418, %v1415
        %v1491 = vpack.c.b16 %v1419, %v1416
        %v1492 = vpack.c.b16 %v1423, %v1420
        %v1493 = vpack.c.b16 %v1424, %v1421
        %v1494 = vpack.c.b16 %v1425, %v1422
        %v1495 = vpack.c.b16 %v1429, %v1426
        %v1496 = vpack.c.b16 %v1430, %v1427
        %v1497 = vpack.c.b16 %v1431, %v1428
        %v1498 = vpack.c.b16 %v1435, %v1432
        %v1499 = vpack.c.b16 %v1436, %v1433
        %v1500 = vpack.c.b16 %v1437, %v1434
        %v1501 = vpack.c.b16 %v1441, %v1438
        %v1502 = vpack.c.b16 %v1442, %v1439
        %v1503 = vpack.c.b16 %v1443, %v1440
        %v1504 = vpack.c.b16 %v1447, %v1444
        %v1505 = vpack.c.b16 %v1448, %v1445
        %v1506 = vpack.c.b16 %v1449, %v1446
        %v1507 = vpack.c.b16 %v1453, %v1450
        %v1508 = vpack.c.b16 %v1454, %v1451
        %v1509 = vpack.c.b16 %v1455, %v1452
        %v1510 = vpack.c.b16 %v1459, %v1456
        %v1511 = vpack.c.b16 %v1460, %v1457
        %v1512 = vpack.c.b16 %v1461, %v1458
        %v1513 = vpack.c.b16 %v1465, %v1462
        %v1514 = vpack.c.b16 %v1466, %v1463
        %v1515 = vpack.c.b16 %v1467, %v1464
        %v1612 = vunpack.c.l.b16 %v1260
        %v1613 = vunpack.c.l.b16 %v1261
        %v1614 = vunpack.c.l.b16 %v1262
        %v1615 = vunpack.c.l.b16 %v1263
        %v1616 = vunpack.c.l.b16 %v1264
        %v1617 = vunpack.c.l.b16 %v1265
        %v1618 = vunpack.c.l.b16 %v1266
        %v1619 = vunpack.c.l.b16 %v1267
        %v1620 = vunpack.c.l.b16 %v1268
        %v1621 = vunpack.c.l.b16 %v1269
        %v1622 = vunpack.c.l.b16 %v1270
        %v1623 = vunpack.c.l.b16 %v1271
        %v1624 = vunpack.c.l.b16 %v1272
        %v1625 = vunpack.c.l.b16 %v1273
        %v1626 = vunpack.c.l.b16 %v1274
        %v1627 = vunpack.c.l.b16 %v1275
        %v1628 = vunpack.c.l.b16 %v1276
        %v1629 = vunpack.c.l.b16 %v1277
        %v1630 = vunpack.c.l.b16 %v1278
        %v1631 = vunpack.c.l.b16 %v1279
        %v1632 = vunpack.c.l.b16 %v1280
        %v1633 = vunpack.c.l.b16 %v1281
        %v1634 = vunpack.c.l.b16 %v1282
        %v1635 = vunpack.c.l.b16 %v1283
        %v1636 = vunpack.c.l.b16 %v1284
        %v1637 = vunpack.c.l.b16 %v1285
        %v1638 = vunpack.c.l.b16 %v1286
        %v1639 = vunpack.c.l.b16 %v1287
        %v1640 = vunpack.c.l.b16 %v1288
        %v1641 = vunpack.c.l.b16 %v1289
        %v1642 = vunpack.c.l.b16 %v1290
        %v1643 = vunpack.c.l.b16 %v1291
        %v1644 = vunpack.c.l.b16 %v1292
        %v1645 = vunpack.c.l.b16 %v1293
        %v1646 = vunpack.c.l.b16 %v1294
        %v1647 = vunpack.c.l.b16 %v1295
        %v1648 = vunpack.c.l.b16 %v1296
        %v1649 = vunpack.c.l.b16 %v1297
        %v1650 = vunpack.c.l.b16 %v1298
        %v1651 = vunpack.c.l.b16 %v1299
        %v1652 = vunpack.c.l.b16 %v1300
        %v1653 = vunpack.c.l.b16 %v1301
        %v1654 = vunpack.c.l.b16 %v1302
        %v1655 = vunpack.c.l.b16 %v1303
        %v1656 = vunpack.c.l.b16 %v1304
        %v1657 = vunpack.c.l.b16 %v1305
        %v1658 = vunpack.c.l.b16 %v1306
        %v1659 = vunpack.c.l.b16 %v1307
        %v1660 = vpack.c.b16 %v1613, %v1612
        %v1661 = vpack.c.b16 %v1615, %v1614
        %v1662 = vpack.c.b16 %v1617, %v1616
        %v1663 = vpack.c.b16 %v1619, %v1618
        %v1664 = vpack.c.b16 %v1621, %v1620
        %v1665 = vpack.c.b16 %v1623, %v1622
        %v1666 = vpack.c.b16 %v1625, %v1624
        %v1667 = vpack.c.b16 %v1627, %v1626
        %v1668 = vpack.c.b16 %v1629, %v1628
        %v1669 = vpack.c.b16 %v1631, %v1630
        %v1670 = vpack.c.b16 %v1633, %v1632
        %v1671 = vpack.c.b16 %v1635, %v1634
        %v1672 = vpack.c.b16 %v1637, %v1636
        %v1673 = vpack.c.b16 %v1639, %v1638
        %v1674 = vpack.c.b16 %v1641, %v1640
        %v1675 = vpack.c.b16 %v1643, %v1642
        %v1676 = vpack.c.b16 %v1645, %v1644
        %v1677 = vpack.c.b16 %v1647, %v1646
        %v1678 = vpack.c.b16 %v1649, %v1648
        %v1679 = vpack.c.b16 %v1651, %v1650
        %v1680 = vpack.c.b16 %v1653, %v1652
        %v1681 = vpack.c.b16 %v1655, %v1654
        %v1682 = vpack.c.b16 %v1657, %v1656
        %v1683 = vpack.c.b16 %v1659, %v1658
        %1708 = vmatprep.subr.bf16.mxu0 0
        %1709 = vmatpush1.bf16.msra.mxu0 %v1667
        %1710 = vmatprep.subr.bf16.mxu0 0
        %1711 = vmatpush1.bf16.msra.mxu0 %v1666
        %1712 = vmatprep.subr.bf16.mxu0 0
        %1713 = vmatpush1.bf16.msra.mxu0 %v1665
        %1714 = vmatprep.subr.bf16.mxu0 0
        %1715 = vmatpush1.bf16.msra.mxu0 %v1664
        %1716 = vmatprep.subr.bf16.mxu0 0
        %1717 = vmatpush1.bf16.msra.mxu0 %v1663
        %1718 = vmatprep.subr.bf16.mxu0 0
        %1719 = vmatpush1.bf16.msra.mxu0 %v1662
        %1720 = vmatprep.subr.bf16.mxu0 0
        %1721 = vmatpush1.bf16.msra.mxu0 %v1661
        %1722 = vmatprep.subr.bf16.mxu0 0
        %1723 = vmatpush1.bf16.msra.mxu0 %v1660
        %1724 = vmatprep.subr.bf16.mxu0 0
        %1725 = vmatpush2.bf16.msra.mxu0 %v1675
        %1726 = vmatprep.subr.bf16.mxu0 0
        %1727 = vmatpush2.bf16.msra.mxu0 %v1674
        %1728 = vmatprep.subr.bf16.mxu0 0
        %1729 = vmatpush2.bf16.msra.mxu0 %v1673
        %1730 = vmatprep.subr.bf16.mxu0 0
        %1731 = vmatpush2.bf16.msra.mxu0 %v1672
        %1732 = vmatprep.subr.bf16.mxu0 0
        %1733 = vmatpush2.bf16.msra.mxu0 %v1671
        %1734 = vmatprep.subr.bf16.mxu0 0
        %1735 = vmatpush2.bf16.msra.mxu0 %v1670
        %1736 = vmatprep.subr.bf16.mxu0 0
        %1737 = vmatpush2.bf16.msra.mxu0 %v1669
        %1738 = vmatprep.subr.bf16.mxu0 0
        %1739 = vmatpush2.bf16.msra.mxu0 %v1668
        %1740 = vmatprep.mubr.bf16.mxu0 %v1469
        %1741 = vmatmul.mubr.bf16.gmra.mxu0 %v1468
        %v1742 = vpop.f32.mrf.mxu0
        %v1743 = vadd.f32 0.0, %v1742
        %v1744 = vpop.f32.mrf.mxu0
        %v1745 = vpop.f32.mrf.mxu0
        %v1746 = vadd.f32 0.0, %v1745
        %v1747 = vpop.f32.mrf.mxu0
        %1748 = vmatprep.mubr.bf16.mxu0 %v1472
        %1749 = vmatmul.mubr.bf16.gmra.mxu0 %v1471
        %v1750 = vpop.f32.mrf.mxu0
        %v1751 = vadd.f32 0.0, %v1750
        %v1752 = vpop.f32.mrf.mxu0
        %v1753 = vpop.f32.mrf.mxu0
        %v1754 = vadd.f32 0.0, %v1753
        %v1755 = vpop.f32.mrf.mxu0
        %1756 = vmatprep.mubr.bf16.mxu0 %v1475
        %1757 = vmatmul.mubr.bf16.gmra.mxu0 %v1474
        %v1758 = vpop.f32.mrf.mxu0
        %v1759 = vadd.f32 0.0, %v1758
        %v1760 = vpop.f32.mrf.mxu0
        %v1761 = vpop.f32.mrf.mxu0
        %v1762 = vadd.f32 0.0, %v1761
        %v1763 = vpop.f32.mrf.mxu0
        %1764 = vmatprep.mubr.bf16.mxu0 %v1478
        %1765 = vmatmul.mubr.bf16.gmra.mxu0 %v1477
        %v1766 = vpop.f32.mrf.mxu0
        %v1767 = vadd.f32 0.0, %v1766
        %v1768 = vpop.f32.mrf.mxu0
        %v1769 = vpop.f32.mrf.mxu0
        %v1770 = vadd.f32 0.0, %v1769
        %v1771 = vpop.f32.mrf.mxu0
        %1772 = vmatprep.mubr.bf16.mxu0 %v1481
        %1773 = vmatmul.mubr.bf16.gmra.mxu0 %v1480
        %v1774 = vpop.f32.mrf.mxu0
        %v1775 = vadd.f32 0.0, %v1774
        %v1776 = vpop.f32.mrf.mxu0
        %v1777 = vpop.f32.mrf.mxu0
        %v1778 = vadd.f32 0.0, %v1777
        %v1779 = vpop.f32.mrf.mxu0
        %1780 = vmatprep.mubr.bf16.mxu0 %v1484
        %1781 = vmatmul.mubr.bf16.gmra.mxu0 %v1483
        %v1782 = vpop.f32.mrf.mxu0
        %v1783 = vadd.f32 0.0, %v1782
        %v1784 = vpop.f32.mrf.mxu0
        %v1785 = vpop.f32.mrf.mxu0
        %v1786 = vadd.f32 0.0, %v1785
        %v1787 = vpop.f32.mrf.mxu0
        %1788 = vmatprep.mubr.bf16.mxu0 %v1487
        %1789 = vmatmul.mubr.bf16.gmra.mxu0 %v1486
        %v1790 = vpop.f32.mrf.mxu0
        %v1791 = vadd.f32 0.0, %v1790
        %v1792 = vpop.f32.mrf.mxu0
        %v1793 = vpop.f32.mrf.mxu0
        %v1794 = vadd.f32 0.0, %v1793
        %v1795 = vpop.f32.mrf.mxu0
        %1796 = vmatprep.mubr.bf16.mxu0 %v1490
        %1797 = vmatmul.mubr.bf16.gmra.mxu0 %v1489
        %v1798 = vpop.f32.mrf.mxu0
        %v1799 = vadd.f32 0.0, %v1798
        %v1800 = vpop.f32.mrf.mxu0
        %v1801 = vpop.f32.mrf.mxu0
        %v1802 = vadd.f32 0.0, %v1801
        %v1803 = vpop.f32.mrf.mxu0
        %1804 = vmatprep.mubr.bf16.mxu0 %v1493
        %1805 = vmatmul.mubr.bf16.gmra.mxu0 %v1492
        %v1806 = vpop.f32.mrf.mxu0
        %v1807 = vadd.f32 0.0, %v1806
        %v1808 = vpop.f32.mrf.mxu0
        %v1809 = vpop.f32.mrf.mxu0
        %v1810 = vadd.f32 0.0, %v1809
        %v1811 = vpop.f32.mrf.mxu0
        %1812 = vmatprep.mubr.bf16.mxu0 %v1496
        %1813 = vmatmul.mubr.bf16.gmra.mxu0 %v1495
        %v1814 = vpop.f32.mrf.mxu0
        %v1815 = vadd.f32 0.0, %v1814
        %v1816 = vpop.f32.mrf.mxu0
        %v1817 = vpop.f32.mrf.mxu0
        %v1818 = vadd.f32 0.0, %v1817
        %v1819 = vpop.f32.mrf.mxu0
        %1820 = vmatprep.mubr.bf16.mxu0 %v1499
        %1821 = vmatmul.mubr.bf16.gmra.mxu0 %v1498
        %v1822 = vpop.f32.mrf.mxu0
        %v1823 = vadd.f32 0.0, %v1822
        %v1824 = vpop.f32.mrf.mxu0
        %v1825 = vpop.f32.mrf.mxu0
        %v1826 = vadd.f32 0.0, %v1825
        %v1827 = vpop.f32.mrf.mxu0
        %1828 = vmatprep.mubr.bf16.mxu0 %v1502
        %1829 = vmatmul.mubr.bf16.gmra.mxu0 %v1501
        %v1830 = vpop.f32.mrf.mxu0
        %v1831 = vadd.f32 0.0, %v1830
        %v1832 = vpop.f32.mrf.mxu0
        %v1833 = vpop.f32.mrf.mxu0
        %v1834 = vadd.f32 0.0, %v1833
        %v1835 = vpop.f32.mrf.mxu0
        %1836 = vmatprep.mubr.bf16.mxu0 %v1505
        %1837 = vmatmul.mubr.bf16.gmra.mxu0 %v1504
        %v1838 = vpop.f32.mrf.mxu0
        %v1839 = vadd.f32 0.0, %v1838
        %v1840 = vpop.f32.mrf.mxu0
        %v1841 = vpop.f32.mrf.mxu0
        %v1842 = vadd.f32 0.0, %v1841
        %v1843 = vpop.f32.mrf.mxu0
        %1844 = vmatprep.mubr.bf16.mxu0 %v1508
        %1845 = vmatmul.mubr.bf16.gmra.mxu0 %v1507
        %v1846 = vpop.f32.mrf.mxu0
        %v1847 = vadd.f32 0.0, %v1846
        %v1848 = vpop.f32.mrf.mxu0
        %v1849 = vpop.f32.mrf.mxu0
        %v1850 = vadd.f32 0.0, %v1849
        %v1851 = vpop.f32.mrf.mxu0
        %1852 = vmatprep.mubr.bf16.mxu0 %v1511
        %1853 = vmatmul.mubr.bf16.gmra.mxu0 %v1510
        %v1854 = vpop.f32.mrf.mxu0
        %v1855 = vadd.f32 0.0, %v1854
        %v1856 = vpop.f32.mrf.mxu0
        %v1857 = vpop.f32.mrf.mxu0
        %v1858 = vadd.f32 0.0, %v1857
        %v1859 = vpop.f32.mrf.mxu0
        %1860 = vmatprep.mubr.bf16.mxu0 %v1514
        %1861 = vmatmul.mubr.bf16.gmra.mxu0 %v1513
        %v1862 = vpop.f32.mrf.mxu0
        %v1863 = vadd.f32 0.0, %v1862
        %v1864 = vpop.f32.mrf.mxu0
        %v1865 = vpop.f32.mrf.mxu0
        %v1866 = vadd.f32 0.0, %v1865
        %v1867 = vpop.f32.mrf.mxu0
        %1868 = vdwg.mxu0
        %1869 = vmatprep.subr.bf16.mxu0 0
        %1870 = vmatpush1.bf16.msra.mxu0 %v1683
        %1871 = vmatprep.subr.bf16.mxu0 0
        %1872 = vmatpush1.bf16.msra.mxu0 %v1682
        %1873 = vmatprep.subr.bf16.mxu0 0
        %1874 = vmatpush1.bf16.msra.mxu0 %v1681
        %1875 = vmatprep.subr.bf16.mxu0 0
        %1876 = vmatpush1.bf16.msra.mxu0 %v1680
        %1877 = vmatprep.subr.bf16.mxu0 0
        %1878 = vmatpush1.bf16.msra.mxu0 %v1679
        %1879 = vmatprep.subr.bf16.mxu0 0
        %1880 = vmatpush1.bf16.msra.mxu0 %v1678
        %1881 = vmatprep.subr.bf16.mxu0 0
        %1882 = vmatpush1.bf16.msra.mxu0 %v1677
        %1883 = vmatprep.subr.bf16.mxu0 0
        %1884 = vmatpush1.bf16.msra.mxu0 %v1676
        %1885 = vmatprep.subr.bf16.mxu0 0
        %1886 = vmatpush2.bf16.msra.mxu0 0
        %1887 = vmatprep.subr.bf16.mxu0 0
        %1888 = vmatpush2.bf16.msra.mxu0 0
        %1889 = vmatprep.subr.bf16.mxu0 0
        %1890 = vmatpush2.bf16.msra.mxu0 0
        %1891 = vmatprep.subr.bf16.mxu0 0
        %1892 = vmatpush2.bf16.msra.mxu0 0
        %1893 = vmatprep.subr.bf16.mxu0 0
        %1894 = vmatpush2.bf16.msra.mxu0 0
        %1895 = vmatprep.subr.bf16.mxu0 0
        %1896 = vmatpush2.bf16.msra.mxu0 0
        %1897 = vmatprep.subr.bf16.mxu0 0
        %1898 = vmatpush2.bf16.msra.mxu0 0
        %1899 = vmatprep.subr.bf16.mxu0 0
        %1900 = vmatpush2.bf16.msra.mxu0 0
        %1901 = vmatprep.mubr.bf16.mxu0 0
        %1902 = vmatmul.mubr.bf16.gmra.mxu0 %v1470
        %v1903 = vpop.f32.mrf.mxu0
        %v1904 = vadd.f32 %v1743, %v1903
        %v1905 = vpop.f32.mrf.mxu0
        %v1906 = vpop.f32.mrf.mxu0
        %v1907 = vadd.f32 %v1746, %v1906
        %v1908 = vpop.f32.mrf.mxu0
        %1909 = vmatprep.mubr.bf16.mxu0 0
        %1910 = vmatmul.mubr.bf16.gmra.mxu0 %v1473
        %v1911 = vpop.f32.mrf.mxu0
        %v1912 = vadd.f32 %v1751, %v1911
        %v1913 = vpop.f32.mrf.mxu0
        %v1914 = vpop.f32.mrf.mxu0
        %v1915 = vadd.f32 %v1754, %v1914
        %v1916 = vpop.f32.mrf.mxu0
        %1917 = vmatprep.mubr.bf16.mxu0 0
        %1918 = vmatmul.mubr.bf16.gmra.mxu0 %v1476
        %v1919 = vpop.f32.mrf.mxu0
        %v1920 = vadd.f32 %v1759, %v1919
        %v1921 = vpop.f32.mrf.mxu0
        %v1922 = vpop.f32.mrf.mxu0
        %v1923 = vadd.f32 %v1762, %v1922
        %v1924 = vpop.f32.mrf.mxu0
        %1925 = vmatprep.mubr.bf16.mxu0 0
        %1926 = vmatmul.mubr.bf16.gmra.mxu0 %v1479
        %v1927 = vpop.f32.mrf.mxu0
        %v1928 = vadd.f32 %v1767, %v1927
        %v1929 = vpop.f32.mrf.mxu0
        %v1930 = vpop.f32.mrf.mxu0
        %v1931 = vadd.f32 %v1770, %v1930
        %v1932 = vpop.f32.mrf.mxu0
        %1933 = vmatprep.mubr.bf16.mxu0 0
        %1934 = vmatmul.mubr.bf16.gmra.mxu0 %v1482
        %v1935 = vpop.f32.mrf.mxu0
        %v1936 = vadd.f32 %v1775, %v1935
        %v1937 = vpop.f32.mrf.mxu0
        %v1938 = vpop.f32.mrf.mxu0
        %v1939 = vadd.f32 %v1778, %v1938
        %v1940 = vpop.f32.mrf.mxu0
        %1941 = vmatprep.mubr.bf16.mxu0 0
        %1942 = vmatmul.mubr.bf16.gmra.mxu0 %v1485
        %v1943 = vpop.f32.mrf.mxu0
        %v1944 = vadd.f32 %v1783, %v1943
        %v1945 = vpop.f32.mrf.mxu0
        %v1946 = vpop.f32.mrf.mxu0
        %v1947 = vadd.f32 %v1786, %v1946
        %v1948 = vpop.f32.mrf.mxu0
        %1949 = vmatprep.mubr.bf16.mxu0 0
        %1950 = vmatmul.mubr.bf16.gmra.mxu0 %v1488
        %v1951 = vpop.f32.mrf.mxu0
        %v1952 = vadd.f32 %v1791, %v1951
        %v1953 = vpop.f32.mrf.mxu0
        %v1954 = vpop.f32.mrf.mxu0
        %v1955 = vadd.f32 %v1794, %v1954
        %v1956 = vpop.f32.mrf.mxu0
        %1957 = vmatprep.mubr.bf16.mxu0 0
        %1958 = vmatmul.mubr.bf16.gmra.mxu0 %v1491
        %v1959 = vpop.f32.mrf.mxu0
        %v1960 = vadd.f32 %v1799, %v1959
        %v1961 = vpop.f32.mrf.mxu0
        %v1962 = vpop.f32.mrf.mxu0
        %v1963 = vadd.f32 %v1802, %v1962
        %v1964 = vpop.f32.mrf.mxu0
        %1965 = vmatprep.mubr.bf16.mxu0 0
        %1966 = vmatmul.mubr.bf16.gmra.mxu0 %v1494
        %v1967 = vpop.f32.mrf.mxu0
        %v1968 = vadd.f32 %v1807, %v1967
        %v1969 = vpop.f32.mrf.mxu0
        %v1970 = vpop.f32.mrf.mxu0
        %v1971 = vadd.f32 %v1810, %v1970
        %v1972 = vpop.f32.mrf.mxu0
        %1973 = vmatprep.mubr.bf16.mxu0 0
        %1974 = vmatmul.mubr.bf16.gmra.mxu0 %v1497
        %v1975 = vpop.f32.mrf.mxu0
        %v1976 = vadd.f32 %v1815, %v1975
        %v1977 = vpop.f32.mrf.mxu0
        %v1978 = vpop.f32.mrf.mxu0
        %v1979 = vadd.f32 %v1818, %v1978
        %v1980 = vpop.f32.mrf.mxu0
        %1981 = vmatprep.mubr.bf16.mxu0 0
        %1982 = vmatmul.mubr.bf16.gmra.mxu0 %v1500
        %v1983 = vpop.f32.mrf.mxu0
        %v1984 = vadd.f32 %v1823, %v1983
        %v1985 = vpop.f32.mrf.mxu0
        %v1986 = vpop.f32.mrf.mxu0
        %v1987 = vadd.f32 %v1826, %v1986
        %v1988 = vpop.f32.mrf.mxu0
        %1989 = vmatprep.mubr.bf16.mxu0 0
        %1990 = vmatmul.mubr.bf16.gmra.mxu0 %v1503
        %v1991 = vpop.f32.mrf.mxu0
        %v1992 = vadd.f32 %v1831, %v1991
        %v1993 = vpop.f32.mrf.mxu0
        %v1994 = vpop.f32.mrf.mxu0
        %v1995 = vadd.f32 %v1834, %v1994
        %v1996 = vpop.f32.mrf.mxu0
        %1997 = vmatprep.mubr.bf16.mxu0 0
        %1998 = vmatmul.mubr.bf16.gmra.mxu0 %v1506
        %v1999 = vpop.f32.mrf.mxu0
        %v2000 = vadd.f32 %v1839, %v1999
        %v2001 = vpop.f32.mrf.mxu0
        %v2002 = vpop.f32.mrf.mxu0
        %v2003 = vadd.f32 %v1842, %v2002
        %v2004 = vpop.f32.mrf.mxu0
        %2005 = vmatprep.mubr.bf16.mxu0 0
        %2006 = vmatmul.mubr.bf16.gmra.mxu0 %v1509
        %v2007 = vpop.f32.mrf.mxu0
        %v2008 = vadd.f32 %v1847, %v2007
        %v2009 = vpop.f32.mrf.mxu0
        %v2010 = vpop.f32.mrf.mxu0
        %v2011 = vadd.f32 %v1850, %v2010
        %v2012 = vpop.f32.mrf.mxu0
        %2013 = vmatprep.mubr.bf16.mxu0 0
        %2014 = vmatmul.mubr.bf16.gmra.mxu0 %v1512
        %v2015 = vpop.f32.mrf.mxu0
        %v2016 = vadd.f32 %v1855, %v2015
        %v2017 = vpop.f32.mrf.mxu0
        %v2018 = vpop.f32.mrf.mxu0
        %v2019 = vadd.f32 %v1858, %v2018
        %v2020 = vpop.f32.mrf.mxu0
        %2021 = vmatprep.mubr.bf16.mxu0 0
        %2022 = vmatmul.mubr.bf16.gmra.mxu0 %v1515
        %v2023 = vpop.f32.mrf.mxu0
        %v2024 = vadd.f32 %v1863, %v2023
        %v2025 = vpop.f32.mrf.mxu0
        %v2026 = vpop.f32.mrf.mxu0
        %v2027 = vadd.f32 %v1866, %v2026
        %v2028 = vpop.f32.mrf.mxu0
        %2029 = vdwg.mxu0
        %v2094 = vunpack.c.l.b16 %v1084
        %v2095 = vunpack.c.h.b16 %v1084
        %v2096 = vunpack.c.l.b16 %v1085
        %v2097 = vunpack.c.l.b16 %v1086
        %v2098 = vunpack.c.h.b16 %v1086
        %v2099 = vunpack.c.l.b16 %v1087
        %v2100 = vunpack.c.l.b16 %v1088
        %v2101 = vunpack.c.h.b16 %v1088
        %v2102 = vunpack.c.l.b16 %v1089
        %v2103 = vunpack.c.l.b16 %v1090
        %v2104 = vunpack.c.h.b16 %v1090
        %v2105 = vunpack.c.l.b16 %v1091
        %v2106 = vunpack.c.l.b16 %v1092
        %v2107 = vunpack.c.h.b16 %v1092
        %v2108 = vunpack.c.l.b16 %v1093
        %v2109 = vunpack.c.l.b16 %v1094
        %v2110 = vunpack.c.h.b16 %v1094
        %v2111 = vunpack.c.l.b16 %v1095
        %v2112 = vunpack.c.l.b16 %v1096
        %v2113 = vunpack.c.h.b16 %v1096
        %v2114 = vunpack.c.l.b16 %v1097
        %v2115 = vunpack.c.l.b16 %v1098
        %v2116 = vunpack.c.h.b16 %v1098
        %v2117 = vunpack.c.l.b16 %v1099
        %v2118 = vunpack.c.l.b16 %v1100
        %v2119 = vunpack.c.h.b16 %v1100
        %v2120 = vunpack.c.l.b16 %v1101
        %v2121 = vunpack.c.l.b16 %v1102
        %v2122 = vunpack.c.h.b16 %v1102
        %v2123 = vunpack.c.l.b16 %v1103
        %v2124 = vunpack.c.l.b16 %v1104
        %v2125 = vunpack.c.h.b16 %v1104
        %v2126 = vunpack.c.l.b16 %v1105
        %v2127 = vunpack.c.l.b16 %v1106
        %v2128 = vunpack.c.h.b16 %v1106
        %v2129 = vunpack.c.l.b16 %v1107
        %v2130 = vunpack.c.l.b16 %v1108
        %v2131 = vunpack.c.h.b16 %v1108
        %v2132 = vunpack.c.l.b16 %v1109
        %v2133 = vunpack.c.l.b16 %v1110
        %v2134 = vunpack.c.h.b16 %v1110
        %v2135 = vunpack.c.l.b16 %v1111
        %v2136 = vunpack.c.l.b16 %v1112
        %v2137 = vunpack.c.h.b16 %v1112
        %v2138 = vunpack.c.l.b16 %v1113
        %v2139 = vunpack.c.l.b16 %v1114
        %v2140 = vunpack.c.h.b16 %v1114
        %v2141 = vunpack.c.l.b16 %v1115
        %v2142 = vunpack.c.l.b16 %v1116
        %v2143 = vunpack.c.h.b16 %v1116
        %v2144 = vunpack.c.l.b16 %v1117
        %v2145 = vunpack.c.l.b16 %v1118
        %v2146 = vunpack.c.h.b16 %v1118
        %v2147 = vunpack.c.l.b16 %v1119
        %v2148 = vunpack.c.l.b16 %v1120
        %v2149 = vunpack.c.h.b16 %v1120
        %v2150 = vunpack.c.l.b16 %v1121
        %v2151 = vunpack.c.l.b16 %v1122
        %v2152 = vunpack.c.h.b16 %v1122
        %v2153 = vunpack.c.l.b16 %v1123
        %v2154 = vunpack.c.l.b16 %v1124
        %v2155 = vunpack.c.h.b16 %v1124
        %v2156 = vunpack.c.l.b16 %v1125
        %v2157 = vunpack.c.l.b16 %v1126
        %v2158 = vunpack.c.h.b16 %v1126
        %v2159 = vunpack.c.l.b16 %v1127
        %v2160 = vunpack.c.l.b16 %v1128
        %v2161 = vunpack.c.h.b16 %v1128
        %v2162 = vunpack.c.l.b16 %v1129
        %v2163 = vunpack.c.l.b16 %v1130
        %v2164 = vunpack.c.h.b16 %v1130
        %v2165 = vunpack.c.l.b16 %v1131
        %v2166 = vunpack.c.l.b16 %v1132
        %v2167 = vunpack.c.h.b16 %v1132
        %v2168 = vunpack.c.l.b16 %v1133
        %v2169 = vunpack.c.l.b16 %v1134
        %v2170 = vunpack.c.h.b16 %v1134
        %v2171 = vunpack.c.l.b16 %v1135
        %v2172 = vunpack.c.l.b16 %v1136
        %v2173 = vunpack.c.h.b16 %v1136
        %v2174 = vunpack.c.l.b16 %v1137
        %v2175 = vunpack.c.l.b16 %v1138
        %v2176 = vunpack.c.h.b16 %v1138
        %v2177 = vunpack.c.l.b16 %v1139
        %v2178 = vunpack.c.l.b16 %v1140
        %v2179 = vunpack.c.h.b16 %v1140
        %v2180 = vunpack.c.l.b16 %v1141
        %v2181 = vunpack.c.l.b16 %v1142
        %v2182 = vunpack.c.h.b16 %v1142
        %v2183 = vunpack.c.l.b16 %v1143
        %v2184 = vunpack.c.l.b16 %v1144
        %v2185 = vunpack.c.h.b16 %v1144
        %v2186 = vunpack.c.l.b16 %v1145
        %v2187 = vunpack.c.l.b16 %v1146
        %v2188 = vunpack.c.h.b16 %v1146
        %v2189 = vunpack.c.l.b16 %v1147
        %v2190 = vpack.c.b16 %v2097, %v2094
        %v2191 = vpack.c.b16 %v2098, %v2095
        %v2192 = vpack.c.b16 %v2099, %v2096
        %v2193 = vpack.c.b16 %v2103, %v2100
        %v2194 = vpack.c.b16 %v2104, %v2101
        %v2195 = vpack.c.b16 %v2105, %v2102
        %v2196 = vpack.c.b16 %v2109, %v2106
        %v2197 = vpack.c.b16 %v2110, %v2107
        %v2198 = vpack.c.b16 %v2111, %v2108
        %v2199 = vpack.c.b16 %v2115, %v2112
        %v2200 = vpack.c.b16 %v2116, %v2113
        %v2201 = vpack.c.b16 %v2117, %v2114
        %v2202 = vpack.c.b16 %v2121, %v2118
        %v2203 = vpack.c.b16 %v2122, %v2119
        %v2204 = vpack.c.b16 %v2123, %v2120
        %v2205 = vpack.c.b16 %v2127, %v2124
        %v2206 = vpack.c.b16 %v2128, %v2125
        %v2207 = vpack.c.b16 %v2129, %v2126
        %v2208 = vpack.c.b16 %v2133, %v2130
        %v2209 = vpack.c.b16 %v2134, %v2131
        %v2210 = vpack.c.b16 %v2135, %v2132
        %v2211 = vpack.c.b16 %v2139, %v2136
        %v2212 = vpack.c.b16 %v2140, %v2137
        %v2213 = vpack.c.b16 %v2141, %v2138
        %v2214 = vpack.c.b16 %v2145, %v2142
        %v2215 = vpack.c.b16 %v2146, %v2143
        %v2216 = vpack.c.b16 %v2147, %v2144
        %v2217 = vpack.c.b16 %v2151, %v2148
        %v2218 = vpack.c.b16 %v2152, %v2149
        %v2219 = vpack.c.b16 %v2153, %v2150
        %v2220 = vpack.c.b16 %v2157, %v2154
        %v2221 = vpack.c.b16 %v2158, %v2155
        %v2222 = vpack.c.b16 %v2159, %v2156
        %v2223 = vpack.c.b16 %v2163, %v2160
        %v2224 = vpack.c.b16 %v2164, %v2161
        %v2225 = vpack.c.b16 %v2165, %v2162
        %v2226 = vpack.c.b16 %v2169, %v2166
        %v2227 = vpack.c.b16 %v2170, %v2167
        %v2228 = vpack.c.b16 %v2171, %v2168
        %v2229 = vpack.c.b16 %v2175, %v2172
        %v2230 = vpack.c.b16 %v2176, %v2173
        %v2231 = vpack.c.b16 %v2177, %v2174
        %v2232 = vpack.c.b16 %v2181, %v2178
        %v2233 = vpack.c.b16 %v2182, %v2179
        %v2234 = vpack.c.b16 %v2183, %v2180
        %v2235 = vpack.c.b16 %v2187, %v2184
        %v2236 = vpack.c.b16 %v2188, %v2185
        %v2237 = vpack.c.b16 %v2189, %v2186
        %v2334 = vunpack.c.l.b16 %v1148
        %v2335 = vunpack.c.l.b16 %v1149
        %v2336 = vunpack.c.l.b16 %v1150
        %v2337 = vunpack.c.l.b16 %v1151
        %v2338 = vunpack.c.l.b16 %v1152
        %v2339 = vunpack.c.l.b16 %v1153
        %v2340 = vunpack.c.l.b16 %v1154
        %v2341 = vunpack.c.l.b16 %v1155
        %v2342 = vunpack.c.l.b16 %v1156
        %v2343 = vunpack.c.l.b16 %v1157
        %v2344 = vunpack.c.l.b16 %v1158
        %v2345 = vunpack.c.l.b16 %v1159
        %v2346 = vunpack.c.l.b16 %v1160
        %v2347 = vunpack.c.l.b16 %v1161
        %v2348 = vunpack.c.l.b16 %v1162
        %v2349 = vunpack.c.l.b16 %v1163
        %v2350 = vunpack.c.l.b16 %v1164
        %v2351 = vunpack.c.l.b16 %v1165
        %v2352 = vunpack.c.l.b16 %v1166
        %v2353 = vunpack.c.l.b16 %v1167
        %v2354 = vunpack.c.l.b16 %v1168
        %v2355 = vunpack.c.l.b16 %v1169
        %v2356 = vunpack.c.l.b16 %v1170
        %v2357 = vunpack.c.l.b16 %v1171
        %v2358 = vunpack.c.l.b16 %v1172
        %v2359 = vunpack.c.l.b16 %v1173
        %v2360 = vunpack.c.l.b16 %v1174
        %v2361 = vunpack.c.l.b16 %v1175
        %v2362 = vunpack.c.l.b16 %v1176
        %v2363 = vunpack.c.l.b16 %v1177
        %v2364 = vunpack.c.l.b16 %v1178
        %v2365 = vunpack.c.l.b16 %v1179
        %v2366 = vunpack.c.l.b16 %v1180
        %v2367 = vunpack.c.l.b16 %v1181
        %v2368 = vunpack.c.l.b16 %v1182
        %v2369 = vunpack.c.l.b16 %v1183
        %v2370 = vunpack.c.l.b16 %v1184
        %v2371 = vunpack.c.l.b16 %v1185
        %v2372 = vunpack.c.l.b16 %v1186
        %v2373 = vunpack.c.l.b16 %v1187
        %v2374 = vunpack.c.l.b16 %v1188
        %v2375 = vunpack.c.l.b16 %v1189
        %v2376 = vunpack.c.l.b16 %v1190
        %v2377 = vunpack.c.l.b16 %v1191
        %v2378 = vunpack.c.l.b16 %v1192
        %v2379 = vunpack.c.l.b16 %v1193
        %v2380 = vunpack.c.l.b16 %v1194
        %v2381 = vunpack.c.l.b16 %v1195
        %v2382 = vpack.c.b16 %v2335, %v2334
        %v2383 = vpack.c.b16 %v2337, %v2336
        %v2384 = vpack.c.b16 %v2339, %v2338
        %v2385 = vpack.c.b16 %v2341, %v2340
        %v2386 = vpack.c.b16 %v2343, %v2342
        %v2387 = vpack.c.b16 %v2345, %v2344
        %v2388 = vpack.c.b16 %v2347, %v2346
        %v2389 = vpack.c.b16 %v2349, %v2348
        %v2390 = vpack.c.b16 %v2351, %v2350
        %v2391 = vpack.c.b16 %v2353, %v2352
        %v2392 = vpack.c.b16 %v2355, %v2354
        %v2393 = vpack.c.b16 %v2357, %v2356
        %v2394 = vpack.c.b16 %v2359, %v2358
        %v2395 = vpack.c.b16 %v2361, %v2360
        %v2396 = vpack.c.b16 %v2363, %v2362
        %v2397 = vpack.c.b16 %v2365, %v2364
        %v2398 = vpack.c.b16 %v2367, %v2366
        %v2399 = vpack.c.b16 %v2369, %v2368
        %v2400 = vpack.c.b16 %v2371, %v2370
        %v2401 = vpack.c.b16 %v2373, %v2372
        %v2402 = vpack.c.b16 %v2375, %v2374
        %v2403 = vpack.c.b16 %v2377, %v2376
        %v2404 = vpack.c.b16 %v2379, %v2378
        %v2405 = vpack.c.b16 %v2381, %v2380
        %2430 = vmatprep.subr.bf16.mxu0 0
        %2431 = vmatpush1.bf16.msra.mxu0 %v2389
        %2432 = vmatprep.subr.bf16.mxu0 0
        %2433 = vmatpush1.bf16.msra.mxu0 %v2388
        %2434 = vmatprep.subr.bf16.mxu0 0
        %2435 = vmatpush1.bf16.msra.mxu0 %v2387
        %2436 = vmatprep.subr.bf16.mxu0 0
        %2437 = vmatpush1.bf16.msra.mxu0 %v2386
        %2438 = vmatprep.subr.bf16.mxu0 0
        %2439 = vmatpush1.bf16.msra.mxu0 %v2385
        %2440 = vmatprep.subr.bf16.mxu0 0
        %2441 = vmatpush1.bf16.msra.mxu0 %v2384
        %2442 = vmatprep.subr.bf16.mxu0 0
        %2443 = vmatpush1.bf16.msra.mxu0 %v2383
        %2444 = vmatprep.subr.bf16.mxu0 0
        %2445 = vmatpush1.bf16.msra.mxu0 %v2382
        %2446 = vmatprep.subr.bf16.mxu0 0
        %2447 = vmatpush2.bf16.msra.mxu0 %v2397
        %2448 = vmatprep.subr.bf16.mxu0 0
        %2449 = vmatpush2.bf16.msra.mxu0 %v2396
        %2450 = vmatprep.subr.bf16.mxu0 0
        %2451 = vmatpush2.bf16.msra.mxu0 %v2395
        %2452 = vmatprep.subr.bf16.mxu0 0
        %2453 = vmatpush2.bf16.msra.mxu0 %v2394
        %2454 = vmatprep.subr.bf16.mxu0 0
        %2455 = vmatpush2.bf16.msra.mxu0 %v2393
        %2456 = vmatprep.subr.bf16.mxu0 0
        %2457 = vmatpush2.bf16.msra.mxu0 %v2392
        %2458 = vmatprep.subr.bf16.mxu0 0
        %2459 = vmatpush2.bf16.msra.mxu0 %v2391
        %2460 = vmatprep.subr.bf16.mxu0 0
        %2461 = vmatpush2.bf16.msra.mxu0 %v2390
        %2462 = vmatprep.mubr.bf16.mxu0 %v2191
        %2463 = vmatmul.mubr.bf16.gmra.mxu0 %v2190
        %v2464 = vpop.f32.mrf.mxu0
        %v2465 = vadd.f32 %v1904, %v2464
        %v2466 = vpop.f32.mrf.mxu0
        %v2467 = vpop.f32.mrf.mxu0
        %v2468 = vadd.f32 %v1907, %v2467
        %v2469 = vpop.f32.mrf.mxu0
        %2470 = vmatprep.mubr.bf16.mxu0 %v2194
        %2471 = vmatmul.mubr.bf16.gmra.mxu0 %v2193
        %v2472 = vpop.f32.mrf.mxu0
        %v2473 = vadd.f32 %v1912, %v2472
        %v2474 = vpop.f32.mrf.mxu0
        %v2475 = vpop.f32.mrf.mxu0
        %v2476 = vadd.f32 %v1915, %v2475
        %v2477 = vpop.f32.mrf.mxu0
        %2478 = vmatprep.mubr.bf16.mxu0 %v2197
        %2479 = vmatmul.mubr.bf16.gmra.mxu0 %v2196
        %v2480 = vpop.f32.mrf.mxu0
        %v2481 = vadd.f32 %v1920, %v2480
        %v2482 = vpop.f32.mrf.mxu0
        %v2483 = vpop.f32.mrf.mxu0
        %v2484 = vadd.f32 %v1923, %v2483
        %v2485 = vpop.f32.mrf.mxu0
        %2486 = vmatprep.mubr.bf16.mxu0 %v2200
        %2487 = vmatmul.mubr.bf16.gmra.mxu0 %v2199
        %v2488 = vpop.f32.mrf.mxu0
        %v2489 = vadd.f32 %v1928, %v2488
        %v2490 = vpop.f32.mrf.mxu0
        %v2491 = vpop.f32.mrf.mxu0
        %v2492 = vadd.f32 %v1931, %v2491
        %v2493 = vpop.f32.mrf.mxu0
        %2494 = vmatprep.mubr.bf16.mxu0 %v2203
        %2495 = vmatmul.mubr.bf16.gmra.mxu0 %v2202
        %v2496 = vpop.f32.mrf.mxu0
        %v2497 = vadd.f32 %v1936, %v2496
        %v2498 = vpop.f32.mrf.mxu0
        %v2499 = vpop.f32.mrf.mxu0
        %v2500 = vadd.f32 %v1939, %v2499
        %v2501 = vpop.f32.mrf.mxu0
        %2502 = vmatprep.mubr.bf16.mxu0 %v2206
        %2503 = vmatmul.mubr.bf16.gmra.mxu0 %v2205
        %v2504 = vpop.f32.mrf.mxu0
        %v2505 = vadd.f32 %v1944, %v2504
        %v2506 = vpop.f32.mrf.mxu0
        %v2507 = vpop.f32.mrf.mxu0
        %v2508 = vadd.f32 %v1947, %v2507
        %v2509 = vpop.f32.mrf.mxu0
        %2510 = vmatprep.mubr.bf16.mxu0 %v2209
        %2511 = vmatmul.mubr.bf16.gmra.mxu0 %v2208
        %v2512 = vpop.f32.mrf.mxu0
        %v2513 = vadd.f32 %v1952, %v2512
        %v2514 = vpop.f32.mrf.mxu0
        %v2515 = vpop.f32.mrf.mxu0
        %v2516 = vadd.f32 %v1955, %v2515
        %v2517 = vpop.f32.mrf.mxu0
        %2518 = vmatprep.mubr.bf16.mxu0 %v2212
        %2519 = vmatmul.mubr.bf16.gmra.mxu0 %v2211
        %v2520 = vpop.f32.mrf.mxu0
        %v2521 = vadd.f32 %v1960, %v2520
        %v2522 = vpop.f32.mrf.mxu0
        %v2523 = vpop.f32.mrf.mxu0
        %v2524 = vadd.f32 %v1963, %v2523
        %v2525 = vpop.f32.mrf.mxu0
        %2526 = vmatprep.mubr.bf16.mxu0 %v2215
        %2527 = vmatmul.mubr.bf16.gmra.mxu0 %v2214
        %v2528 = vpop.f32.mrf.mxu0
        %v2529 = vadd.f32 %v1968, %v2528
        %v2530 = vpop.f32.mrf.mxu0
        %v2531 = vpop.f32.mrf.mxu0
        %v2532 = vadd.f32 %v1971, %v2531
        %v2533 = vpop.f32.mrf.mxu0
        %2534 = vmatprep.mubr.bf16.mxu0 %v2218
        %2535 = vmatmul.mubr.bf16.gmra.mxu0 %v2217
        %v2536 = vpop.f32.mrf.mxu0
        %v2537 = vadd.f32 %v1976, %v2536
        %v2538 = vpop.f32.mrf.mxu0
        %v2539 = vpop.f32.mrf.mxu0
        %v2540 = vadd.f32 %v1979, %v2539
        %v2541 = vpop.f32.mrf.mxu0
        %2542 = vmatprep.mubr.bf16.mxu0 %v2221
        %2543 = vmatmul.mubr.bf16.gmra.mxu0 %v2220
        %v2544 = vpop.f32.mrf.mxu0
        %v2545 = vadd.f32 %v1984, %v2544
        %v2546 = vpop.f32.mrf.mxu0
        %v2547 = vpop.f32.mrf.mxu0
        %v2548 = vadd.f32 %v1987, %v2547
        %v2549 = vpop.f32.mrf.mxu0
        %2550 = vmatprep.mubr.bf16.mxu0 %v2224
        %2551 = vmatmul.mubr.bf16.gmra.mxu0 %v2223
        %v2552 = vpop.f32.mrf.mxu0
        %v2553 = vadd.f32 %v1992, %v2552
        %v2554 = vpop.f32.mrf.mxu0
        %v2555 = vpop.f32.mrf.mxu0
        %v2556 = vadd.f32 %v1995, %v2555
        %v2557 = vpop.f32.mrf.mxu0
        %2558 = vmatprep.mubr.bf16.mxu0 %v2227
        %2559 = vmatmul.mubr.bf16.gmra.mxu0 %v2226
        %v2560 = vpop.f32.mrf.mxu0
        %v2561 = vadd.f32 %v2000, %v2560
        %v2562 = vpop.f32.mrf.mxu0
        %v2563 = vpop.f32.mrf.mxu0
        %v2564 = vadd.f32 %v2003, %v2563
        %v2565 = vpop.f32.mrf.mxu0
        %2566 = vmatprep.mubr.bf16.mxu0 %v2230
        %2567 = vmatmul.mubr.bf16.gmra.mxu0 %v2229
        %v2568 = vpop.f32.mrf.mxu0
        %v2569 = vadd.f32 %v2008, %v2568
        %v2570 = vpop.f32.mrf.mxu0
        %v2571 = vpop.f32.mrf.mxu0
        %v2572 = vadd.f32 %v2011, %v2571
        %v2573 = vpop.f32.mrf.mxu0
        %2574 = vmatprep.mubr.bf16.mxu0 %v2233
        %2575 = vmatmul.mubr.bf16.gmra.mxu0 %v2232
        %v2576 = vpop.f32.mrf.mxu0
        %v2577 = vadd.f32 %v2016, %v2576
        %v2578 = vpop.f32.mrf.mxu0
        %v2579 = vpop.f32.mrf.mxu0
        %v2580 = vadd.f32 %v2019, %v2579
        %v2581 = vpop.f32.mrf.mxu0
        %2582 = vmatprep.mubr.bf16.mxu0 %v2236
        %2583 = vmatmul.mubr.bf16.gmra.mxu0 %v2235
        %v2584 = vpop.f32.mrf.mxu0
        %v2585 = vadd.f32 %v2024, %v2584
        %v2586 = vpop.f32.mrf.mxu0
        %v2587 = vpop.f32.mrf.mxu0
        %v2588 = vadd.f32 %v2027, %v2587
        %v2589 = vpop.f32.mrf.mxu0
        %2590 = vdwg.mxu0
        %2591 = vmatprep.subr.bf16.mxu0 0
        %2592 = vmatpush1.bf16.msra.mxu0 %v2405
        %2593 = vmatprep.subr.bf16.mxu0 0
        %2594 = vmatpush1.bf16.msra.mxu0 %v2404
        %2595 = vmatprep.subr.bf16.mxu0 0
        %2596 = vmatpush1.bf16.msra.mxu0 %v2403
        %2597 = vmatprep.subr.bf16.mxu0 0
        %2598 = vmatpush1.bf16.msra.mxu0 %v2402
        %2599 = vmatprep.subr.bf16.mxu0 0
        %2600 = vmatpush1.bf16.msra.mxu0 %v2401
        %2601 = vmatprep.subr.bf16.mxu0 0
        %2602 = vmatpush1.bf16.msra.mxu0 %v2400
        %2603 = vmatprep.subr.bf16.mxu0 0
        %2604 = vmatpush1.bf16.msra.mxu0 %v2399
        %2605 = vmatprep.subr.bf16.mxu0 0
        %2606 = vmatpush1.bf16.msra.mxu0 %v2398
        %2607 = vmatprep.subr.bf16.mxu0 0
        %2608 = vmatpush2.bf16.msra.mxu0 0
        %2609 = vmatprep.subr.bf16.mxu0 0
        %2610 = vmatpush2.bf16.msra.mxu0 0
        %2611 = vmatprep.subr.bf16.mxu0 0
        %2612 = vmatpush2.bf16.msra.mxu0 0
        %2613 = vmatprep.subr.bf16.mxu0 0
        %2614 = vmatpush2.bf16.msra.mxu0 0
        %2615 = vmatprep.subr.bf16.mxu0 0
        %2616 = vmatpush2.bf16.msra.mxu0 0
        %2617 = vmatprep.subr.bf16.mxu0 0
        %2618 = vmatpush2.bf16.msra.mxu0 0
        %2619 = vmatprep.subr.bf16.mxu0 0
        %2620 = vmatpush2.bf16.msra.mxu0 0
        %2621 = vmatprep.subr.bf16.mxu0 0
        %2622 = vmatpush2.bf16.msra.mxu0 0
        %2623 = vmatprep.mubr.bf16.mxu0 0
        %2624 = vmatmul.mubr.bf16.gmra.mxu0 %v2192
        %v2625 = vpop.f32.mrf.mxu0
        %v2626 = vadd.f32 %v2465, %v2625
        %v2627 = vpop.f32.mrf.mxu0
        %v2628 = vpop.f32.mrf.mxu0
        %v2629 = vadd.f32 %v2468, %v2628
        %v2630 = vpop.f32.mrf.mxu0
        %2631 = vmatprep.mubr.bf16.mxu0 0
        %2632 = vmatmul.mubr.bf16.gmra.mxu0 %v2195
        %v2633 = vpop.f32.mrf.mxu0
        %v2634 = vadd.f32 %v2473, %v2633
        %v2635 = vpop.f32.mrf.mxu0
        %v2636 = vpop.f32.mrf.mxu0
        %v2637 = vadd.f32 %v2476, %v2636
        %v2638 = vpop.f32.mrf.mxu0
        %2639 = vmatprep.mubr.bf16.mxu0 0
        %2640 = vmatmul.mubr.bf16.gmra.mxu0 %v2198
        %v2641 = vpop.f32.mrf.mxu0
        %v2642 = vadd.f32 %v2481, %v2641
        %v2643 = vpop.f32.mrf.mxu0
        %v2644 = vpop.f32.mrf.mxu0
        %v2645 = vadd.f32 %v2484, %v2644
        %v2646 = vpop.f32.mrf.mxu0
        %2647 = vmatprep.mubr.bf16.mxu0 0
        %2648 = vmatmul.mubr.bf16.gmra.mxu0 %v2201
        %v2649 = vpop.f32.mrf.mxu0
        %v2650 = vadd.f32 %v2489, %v2649
        %v2651 = vpop.f32.mrf.mxu0
        %v2652 = vpop.f32.mrf.mxu0
        %v2653 = vadd.f32 %v2492, %v2652
        %v2654 = vpop.f32.mrf.mxu0
        %2655 = vmatprep.mubr.bf16.mxu0 0
        %2656 = vmatmul.mubr.bf16.gmra.mxu0 %v2204
        %v2657 = vpop.f32.mrf.mxu0
        %v2658 = vadd.f32 %v2497, %v2657
        %v2659 = vpop.f32.mrf.mxu0
        %v2660 = vpop.f32.mrf.mxu0
        %v2661 = vadd.f32 %v2500, %v2660
        %v2662 = vpop.f32.mrf.mxu0
        %2663 = vmatprep.mubr.bf16.mxu0 0
        %2664 = vmatmul.mubr.bf16.gmra.mxu0 %v2207
        %v2665 = vpop.f32.mrf.mxu0
        %v2666 = vadd.f32 %v2505, %v2665
        %v2667 = vpop.f32.mrf.mxu0
        %v2668 = vpop.f32.mrf.mxu0
        %v2669 = vadd.f32 %v2508, %v2668
        %v2670 = vpop.f32.mrf.mxu0
        %2671 = vmatprep.mubr.bf16.mxu0 0
        %2672 = vmatmul.mubr.bf16.gmra.mxu0 %v2210
        %v2673 = vpop.f32.mrf.mxu0
        %v2674 = vadd.f32 %v2513, %v2673
        %v2675 = vpop.f32.mrf.mxu0
        %v2676 = vpop.f32.mrf.mxu0
        %v2677 = vadd.f32 %v2516, %v2676
        %v2678 = vpop.f32.mrf.mxu0
        %2679 = vmatprep.mubr.bf16.mxu0 0
        %2680 = vmatmul.mubr.bf16.gmra.mxu0 %v2213
        %v2681 = vpop.f32.mrf.mxu0
        %v2682 = vadd.f32 %v2521, %v2681
        %v2683 = vpop.f32.mrf.mxu0
        %v2684 = vpop.f32.mrf.mxu0
        %v2685 = vadd.f32 %v2524, %v2684
        %v2686 = vpop.f32.mrf.mxu0
        %2687 = vmatprep.mubr.bf16.mxu0 0
        %2688 = vmatmul.mubr.bf16.gmra.mxu0 %v2216
        %v2689 = vpop.f32.mrf.mxu0
        %v2690 = vadd.f32 %v2529, %v2689
        %v2691 = vpop.f32.mrf.mxu0
        %v2692 = vpop.f32.mrf.mxu0
        %v2693 = vadd.f32 %v2532, %v2692
        %v2694 = vpop.f32.mrf.mxu0
        %2695 = vmatprep.mubr.bf16.mxu0 0
        %2696 = vmatmul.mubr.bf16.gmra.mxu0 %v2219
        %v2697 = vpop.f32.mrf.mxu0
        %v2698 = vadd.f32 %v2537, %v2697
        %v2699 = vpop.f32.mrf.mxu0
        %v2700 = vpop.f32.mrf.mxu0
        %v2701 = vadd.f32 %v2540, %v2700
        %v2702 = vpop.f32.mrf.mxu0
        %2703 = vmatprep.mubr.bf16.mxu0 0
        %2704 = vmatmul.mubr.bf16.gmra.mxu0 %v2222
        %v2705 = vpop.f32.mrf.mxu0
        %v2706 = vadd.f32 %v2545, %v2705
        %v2707 = vpop.f32.mrf.mxu0
        %v2708 = vpop.f32.mrf.mxu0
        %v2709 = vadd.f32 %v2548, %v2708
        %v2710 = vpop.f32.mrf.mxu0
        %2711 = vmatprep.mubr.bf16.mxu0 0
        %2712 = vmatmul.mubr.bf16.gmra.mxu0 %v2225
        %v2713 = vpop.f32.mrf.mxu0
        %v2714 = vadd.f32 %v2553, %v2713
        %v2715 = vpop.f32.mrf.mxu0
        %v2716 = vpop.f32.mrf.mxu0
        %v2717 = vadd.f32 %v2556, %v2716
        %v2718 = vpop.f32.mrf.mxu0
        %2719 = vmatprep.mubr.bf16.mxu0 0
        %2720 = vmatmul.mubr.bf16.gmra.mxu0 %v2228
        %v2721 = vpop.f32.mrf.mxu0
        %v2722 = vadd.f32 %v2561, %v2721
        %v2723 = vpop.f32.mrf.mxu0
        %v2724 = vpop.f32.mrf.mxu0
        %v2725 = vadd.f32 %v2564, %v2724
        %v2726 = vpop.f32.mrf.mxu0
        %2727 = vmatprep.mubr.bf16.mxu0 0
        %2728 = vmatmul.mubr.bf16.gmra.mxu0 %v2231
        %v2729 = vpop.f32.mrf.mxu0
        %v2730 = vadd.f32 %v2569, %v2729
        %v2731 = vpop.f32.mrf.mxu0
        %v2732 = vpop.f32.mrf.mxu0
        %v2733 = vadd.f32 %v2572, %v2732
        %v2734 = vpop.f32.mrf.mxu0
        %2735 = vmatprep.mubr.bf16.mxu0 0
        %2736 = vmatmul.mubr.bf16.gmra.mxu0 %v2234
        %v2737 = vpop.f32.mrf.mxu0
        %v2738 = vadd.f32 %v2577, %v2737
        %v2739 = vpop.f32.mrf.mxu0
        %v2740 = vpop.f32.mrf.mxu0
        %v2741 = vadd.f32 %v2580, %v2740
        %v2742 = vpop.f32.mrf.mxu0
        %2743 = vmatprep.mubr.bf16.mxu0 0
        %2744 = vmatmul.mubr.bf16.gmra.mxu0 %v2237
        %v2745 = vpop.f32.mrf.mxu0
        %v2746 = vadd.f32 %v2585, %v2745
        %v2747 = vpop.f32.mrf.mxu0
        %v2748 = vpop.f32.mrf.mxu0
        %v2749 = vadd.f32 %v2588, %v2748
        %v2750 = vpop.f32.mrf.mxu0
        %2751 = vdwg.mxu0
        %s2752 = scalar_lea.vmem [#allocation2], 48
        %v2753 = vld [vmem:[%s2752] sm:$0xff]
        %v2754 = vld [vmem:[%s2752 + $0x8] sm:$0xf]
        %v2755 = vld [vmem:[%s2752 + $0xc] sm:$0xff]
        %v2756 = vld [vmem:[%s2752 + $0x14] sm:$0xf]
        %v2757 = vld [vmem:[%s2752 + $0x18] sm:$0xff]
        %v2758 = vld [vmem:[%s2752 + $0x20] sm:$0xf]
        %v2759 = vld [vmem:[%s2752 + $0x24] sm:$0xff]
        %v2760 = vld [vmem:[%s2752 + $0x2c] sm:$0xf]
        %v2761 = vld [vmem:[%s2752 + $0x30] sm:$0xff]
        %v2762 = vld [vmem:[%s2752 + $0x38] sm:$0xf]
        %v2763 = vld [vmem:[%s2752 + $0x3c] sm:$0xff]
        %v2764 = vld [vmem:[%s2752 + $0x44] sm:$0xf]
        %v2765 = vld [vmem:[%s2752 + $0x48] sm:$0xff]
        %v2766 = vld [vmem:[%s2752 + $0x50] sm:$0xf]
        %v2767 = vld [vmem:[%s2752 + $0x54] sm:$0xff]
        %v2768 = vld [vmem:[%s2752 + $0x5c] sm:$0xf]
        %v2769 = vld [vmem:[%s2752 + $0x60] sm:$0xff]
        %v2770 = vld [vmem:[%s2752 + $0x68] sm:$0xf]
        %v2771 = vld [vmem:[%s2752 + $0x6c] sm:$0xff]
        %v2772 = vld [vmem:[%s2752 + $0x74] sm:$0xf]
        %v2773 = vld [vmem:[%s2752 + $0x78] sm:$0xff]
        %v2774 = vld [vmem:[%s2752 + $0x80] sm:$0xf]
        %v2775 = vld [vmem:[%s2752 + $0x84] sm:$0xff]
        %v2776 = vld [vmem:[%s2752 + $0x8c] sm:$0xf]
        %v2777 = vld [vmem:[%s2752 + $0x90] sm:$0xff]
        %v2778 = vld [vmem:[%s2752 + $0x98] sm:$0xf]
        %v2779 = vld [vmem:[%s2752 + $0x9c] sm:$0xff]
        %v2780 = vld [vmem:[%s2752 + $0xa4] sm:$0xf]
        %v2781 = vld [vmem:[%s2752 + $0xa8] sm:$0xff]
        %v2782 = vld [vmem:[%s2752 + $0xb0] sm:$0xf]
        %v2783 = vld [vmem:[%s2752 + $0xb4] sm:$0xff]
        %v2784 = vld [vmem:[%s2752 + $0xbc] sm:$0xf]
        %v2785 = vld [vmem:[%s2752 + $0xc0] sm:$0xff]
        %v2786 = vld [vmem:[%s2752 + $0xc8] sm:$0xf]
        %v2787 = vld [vmem:[%s2752 + $0xcc] sm:$0xff]
        %v2788 = vld [vmem:[%s2752 + $0xd4] sm:$0xf]
        %v2789 = vld [vmem:[%s2752 + $0xd8] sm:$0xff]
        %v2790 = vld [vmem:[%s2752 + $0xe0] sm:$0xf]
        %v2791 = vld [vmem:[%s2752 + $0xe4] sm:$0xff]
        %v2792 = vld [vmem:[%s2752 + $0xec] sm:$0xf]
        %v2793 = vld [vmem:[%s2752 + $0xf0] sm:$0xff]
        %v2794 = vld [vmem:[%s2752 + $0xf8] sm:$0xf]
        %v2795 = vld [vmem:[%s2752 + $0xfc] sm:$0xff]
        %v2796 = vld [vmem:[%s2752 + $0x104] sm:$0xf]
        %v2797 = vld [vmem:[%s2752 + $0x108] sm:$0xff]
        %v2798 = vld [vmem:[%s2752 + $0x110] sm:$0xf]
        %v2799 = vld [vmem:[%s2752 + $0x114] sm:$0xff]
        %v2800 = vld [vmem:[%s2752 + $0x11c] sm:$0xf]
        %v2801 = vld [vmem:[%s2752 + $0x120] sm:$0xff]
        %v2802 = vld [vmem:[%s2752 + $0x128] sm:$0xf]
        %v2803 = vld [vmem:[%s2752 + $0x12c] sm:$0xff]
        %v2804 = vld [vmem:[%s2752 + $0x134] sm:$0xf]
        %v2805 = vld [vmem:[%s2752 + $0x138] sm:$0xff]
        %v2806 = vld [vmem:[%s2752 + $0x140] sm:$0xf]
        %v2807 = vld [vmem:[%s2752 + $0x144] sm:$0xff]
        %v2808 = vld [vmem:[%s2752 + $0x14c] sm:$0xf]
        %v2809 = vld [vmem:[%s2752 + $0x150] sm:$0xff]
        %v2810 = vld [vmem:[%s2752 + $0x158] sm:$0xf]
        %v2811 = vld [vmem:[%s2752 + $0x15c] sm:$0xff]
        %v2812 = vld [vmem:[%s2752 + $0x164] sm:$0xf]
        %v2813 = vld [vmem:[%s2752 + $0x168] sm:$0xff]
        %v2814 = vld [vmem:[%s2752 + $0x170] sm:$0xf]
        %v2815 = vld [vmem:[%s2752 + $0x174] sm:$0xff]
        %v2816 = vld [vmem:[%s2752 + $0x17c] sm:$0xf]
        %v2817 = vld [vmem:[%s1 + $0x180] sm:$0xf]
        %v2818 = vld [vmem:[%s1 + $0x184] sm:$0xf]
        %v2819 = vld [vmem:[%s1 + $0x188] sm:$0xf]
        %v2820 = vld [vmem:[%s1 + $0x18c] sm:$0xf]
        %v2821 = vld [vmem:[%s1 + $0x190] sm:$0xf]
        %v2822 = vld [vmem:[%s1 + $0x194] sm:$0xf]
        %v2823 = vld [vmem:[%s1 + $0x198] sm:$0xf]
        %v2824 = vld [vmem:[%s1 + $0x19c] sm:$0xf]
        %v2825 = vld [vmem:[%s1 + $0x1a0] sm:$0xf]
        %v2826 = vld [vmem:[%s1 + $0x1a4] sm:$0xf]
        %v2827 = vld [vmem:[%s1 + $0x1a8] sm:$0xf]
        %v2828 = vld [vmem:[%s1 + $0x1ac] sm:$0xf]
        %v2829 = vld [vmem:[%s1 + $0x1b0] sm:$0xf]
        %v2830 = vld [vmem:[%s1 + $0x1b4] sm:$0xf]
        %v2831 = vld [vmem:[%s1 + $0x1b8] sm:$0xf]
        %v2832 = vld [vmem:[%s1 + $0x1bc] sm:$0xf]
        %v2833 = vld [vmem:[%s1 + $0x1c0] sm:$0xf]
        %v2834 = vld [vmem:[%s1 + $0x1c4] sm:$0xf]
        %v2835 = vld [vmem:[%s1 + $0x1c8] sm:$0xf]
        %v2836 = vld [vmem:[%s1 + $0x1cc] sm:$0xf]
        %v2837 = vld [vmem:[%s1 + $0x1d0] sm:$0xf]
        %v2838 = vld [vmem:[%s1 + $0x1d4] sm:$0xf]
        %v2839 = vld [vmem:[%s1 + $0x1d8] sm:$0xf]
        %v2840 = vld [vmem:[%s1 + $0x1dc] sm:$0xf]
        %v2841 = vld [vmem:[%s1 + $0x1e0] sm:$0xf]
        %v2842 = vld [vmem:[%s1 + $0x1e4] sm:$0xf]
        %v2843 = vld [vmem:[%s1 + $0x1e8] sm:$0xf]
        %v2844 = vld [vmem:[%s1 + $0x1ec] sm:$0xf]
        %v2845 = vld [vmem:[%s1 + $0x1f0] sm:$0xf]
        %v2846 = vld [vmem:[%s1 + $0x1f4] sm:$0xf]
        %v2847 = vld [vmem:[%s1 + $0x1f8] sm:$0xf]
        %v2848 = vld [vmem:[%s1 + $0x1fc] sm:$0xf]
        %v2849 = vld [vmem:[%s1 + $0x200] sm:$0xf]
        %v2850 = vld [vmem:[%s1 + $0x204] sm:$0xf]
        %v2851 = vld [vmem:[%s1 + $0x208] sm:$0xf]
        %v2852 = vld [vmem:[%s1 + $0x20c] sm:$0xf]
        %v2853 = vld [vmem:[%s1 + $0x210] sm:$0xf]
        %v2854 = vld [vmem:[%s1 + $0x214] sm:$0xf]
        %v2855 = vld [vmem:[%s1 + $0x218] sm:$0xf]
        %v2856 = vld [vmem:[%s1 + $0x21c] sm:$0xf]
        %v2857 = vld [vmem:[%s1 + $0x220] sm:$0xf]
        %v2858 = vld [vmem:[%s1 + $0x224] sm:$0xf]
        %v2859 = vld [vmem:[%s1 + $0x228] sm:$0xf]
        %v2860 = vld [vmem:[%s1 + $0x22c] sm:$0xf]
        %v2861 = vld [vmem:[%s1 + $0x230] sm:$0xf]
        %v2862 = vld [vmem:[%s1 + $0x234] sm:$0xf]
        %v2863 = vld [vmem:[%s1 + $0x238] sm:$0xf]
        %v2864 = vld [vmem:[%s1 + $0x23c] sm:$0xf]
        %v2929 = vunpack.c.l.b16 %v2753
        %v2930 = vunpack.c.h.b16 %v2753
        %v2931 = vunpack.c.l.b16 %v2754
        %v2932 = vunpack.c.l.b16 %v2755
        %v2933 = vunpack.c.h.b16 %v2755
        %v2934 = vunpack.c.l.b16 %v2756
        %v2935 = vunpack.c.l.b16 %v2757
        %v2936 = vunpack.c.h.b16 %v2757
        %v2937 = vunpack.c.l.b16 %v2758
        %v2938 = vunpack.c.l.b16 %v2759
        %v2939 = vunpack.c.h.b16 %v2759
        %v2940 = vunpack.c.l.b16 %v2760
        %v2941 = vunpack.c.l.b16 %v2761
        %v2942 = vunpack.c.h.b16 %v2761
        %v2943 = vunpack.c.l.b16 %v2762
        %v2944 = vunpack.c.l.b16 %v2763
        %v2945 = vunpack.c.h.b16 %v2763
        %v2946 = vunpack.c.l.b16 %v2764
        %v2947 = vunpack.c.l.b16 %v2765
        %v2948 = vunpack.c.h.b16 %v2765
        %v2949 = vunpack.c.l.b16 %v2766
        %v2950 = vunpack.c.l.b16 %v2767
        %v2951 = vunpack.c.h.b16 %v2767
        %v2952 = vunpack.c.l.b16 %v2768
        %v2953 = vunpack.c.l.b16 %v2769
        %v2954 = vunpack.c.h.b16 %v2769
        %v2955 = vunpack.c.l.b16 %v2770
        %v2956 = vunpack.c.l.b16 %v2771
        %v2957 = vunpack.c.h.b16 %v2771
        %v2958 = vunpack.c.l.b16 %v2772
        %v2959 = vunpack.c.l.b16 %v2773
        %v2960 = vunpack.c.h.b16 %v2773
        %v2961 = vunpack.c.l.b16 %v2774
        %v2962 = vunpack.c.l.b16 %v2775
        %v2963 = vunpack.c.h.b16 %v2775
        %v2964 = vunpack.c.l.b16 %v2776
        %v2965 = vunpack.c.l.b16 %v2777
        %v2966 = vunpack.c.h.b16 %v2777
        %v2967 = vunpack.c.l.b16 %v2778
        %v2968 = vunpack.c.l.b16 %v2779
        %v2969 = vunpack.c.h.b16 %v2779
        %v2970 = vunpack.c.l.b16 %v2780
        %v2971 = vunpack.c.l.b16 %v2781
        %v2972 = vunpack.c.h.b16 %v2781
        %v2973 = vunpack.c.l.b16 %v2782
        %v2974 = vunpack.c.l.b16 %v2783
        %v2975 = vunpack.c.h.b16 %v2783
        %v2976 = vunpack.c.l.b16 %v2784
        %v2977 = vunpack.c.l.b16 %v2785
        %v2978 = vunpack.c.h.b16 %v2785
        %v2979 = vunpack.c.l.b16 %v2786
        %v2980 = vunpack.c.l.b16 %v2787
        %v2981 = vunpack.c.h.b16 %v2787
        %v2982 = vunpack.c.l.b16 %v2788
        %v2983 = vunpack.c.l.b16 %v2789
        %v2984 = vunpack.c.h.b16 %v2789
        %v2985 = vunpack.c.l.b16 %v2790
        %v2986 = vunpack.c.l.b16 %v2791
        %v2987 = vunpack.c.h.b16 %v2791
        %v2988 = vunpack.c.l.b16 %v2792
        %v2989 = vunpack.c.l.b16 %v2793
        %v2990 = vunpack.c.h.b16 %v2793
        %v2991 = vunpack.c.l.b16 %v2794
        %v2992 = vunpack.c.l.b16 %v2795
        %v2993 = vunpack.c.h.b16 %v2795
        %v2994 = vunpack.c.l.b16 %v2796
        %v2995 = vunpack.c.l.b16 %v2797
        %v2996 = vunpack.c.h.b16 %v2797
        %v2997 = vunpack.c.l.b16 %v2798
        %v2998 = vunpack.c.l.b16 %v2799
        %v2999 = vunpack.c.h.b16 %v2799
        %v3000 = vunpack.c.l.b16 %v2800
        %v3001 = vunpack.c.l.b16 %v2801
        %v3002 = vunpack.c.h.b16 %v2801
        %v3003 = vunpack.c.l.b16 %v2802
        %v3004 = vunpack.c.l.b16 %v2803
        %v3005 = vunpack.c.h.b16 %v2803
        %v3006 = vunpack.c.l.b16 %v2804
        %v3007 = vunpack.c.l.b16 %v2805
        %v3008 = vunpack.c.h.b16 %v2805
        %v3009 = vunpack.c.l.b16 %v2806
        %v3010 = vunpack.c.l.b16 %v2807
        %v3011 = vunpack.c.h.b16 %v2807
        %v3012 = vunpack.c.l.b16 %v2808
        %v3013 = vunpack.c.l.b16 %v2809
        %v3014 = vunpack.c.h.b16 %v2809
        %v3015 = vunpack.c.l.b16 %v2810
        %v3016 = vunpack.c.l.b16 %v2811
        %v3017 = vunpack.c.h.b16 %v2811
        %v3018 = vunpack.c.l.b16 %v2812
        %v3019 = vunpack.c.l.b16 %v2813
        %v3020 = vunpack.c.h.b16 %v2813
        %v3021 = vunpack.c.l.b16 %v2814
        %v3022 = vunpack.c.l.b16 %v2815
        %v3023 = vunpack.c.h.b16 %v2815
        %v3024 = vunpack.c.l.b16 %v2816
        %v3025 = vpack.c.b16 %v2932, %v2929
        %v3026 = vpack.c.b16 %v2933, %v2930
        %v3027 = vpack.c.b16 %v2934, %v2931
        %v3028 = vpack.c.b16 %v2938, %v2935
        %v3029 = vpack.c.b16 %v2939, %v2936
        %v3030 = vpack.c.b16 %v2940, %v2937
        %v3031 = vpack.c.b16 %v2944, %v2941
        %v3032 = vpack.c.b16 %v2945, %v2942
        %v3033 = vpack.c.b16 %v2946, %v2943
        %v3034 = vpack.c.b16 %v2950, %v2947
        %v3035 = vpack.c.b16 %v2951, %v2948
        %v3036 = vpack.c.b16 %v2952, %v2949
        %v3037 = vpack.c.b16 %v2956, %v2953
        %v3038 = vpack.c.b16 %v2957, %v2954
        %v3039 = vpack.c.b16 %v2958, %v2955
        %v3040 = vpack.c.b16 %v2962, %v2959
        %v3041 = vpack.c.b16 %v2963, %v2960
        %v3042 = vpack.c.b16 %v2964, %v2961
        %v3043 = vpack.c.b16 %v2968, %v2965
        %v3044 = vpack.c.b16 %v2969, %v2966
        %v3045 = vpack.c.b16 %v2970, %v2967
        %v3046 = vpack.c.b16 %v2974, %v2971
        %v3047 = vpack.c.b16 %v2975, %v2972
        %v3048 = vpack.c.b16 %v2976, %v2973
        %v3049 = vpack.c.b16 %v2980, %v2977
        %v3050 = vpack.c.b16 %v2981, %v2978
        %v3051 = vpack.c.b16 %v2982, %v2979
        %v3052 = vpack.c.b16 %v2986, %v2983
        %v3053 = vpack.c.b16 %v2987, %v2984
        %v3054 = vpack.c.b16 %v2988, %v2985
        %v3055 = vpack.c.b16 %v2992, %v2989
        %v3056 = vpack.c.b16 %v2993, %v2990
        %v3057 = vpack.c.b16 %v2994, %v2991
        %v3058 = vpack.c.b16 %v2998, %v2995
        %v3059 = vpack.c.b16 %v2999, %v2996
        %v3060 = vpack.c.b16 %v3000, %v2997
        %v3061 = vpack.c.b16 %v3004, %v3001
        %v3062 = vpack.c.b16 %v3005, %v3002
        %v3063 = vpack.c.b16 %v3006, %v3003
        %v3064 = vpack.c.b16 %v3010, %v3007
        %v3065 = vpack.c.b16 %v3011, %v3008
        %v3066 = vpack.c.b16 %v3012, %v3009
        %v3067 = vpack.c.b16 %v3016, %v3013
        %v3068 = vpack.c.b16 %v3017, %v3014
        %v3069 = vpack.c.b16 %v3018, %v3015
        %v3070 = vpack.c.b16 %v3022, %v3019
        %v3071 = vpack.c.b16 %v3023, %v3020
        %v3072 = vpack.c.b16 %v3024, %v3021
        %v3169 = vunpack.c.l.b16 %v2817
        %v3170 = vunpack.c.l.b16 %v2818
        %v3171 = vunpack.c.l.b16 %v2819
        %v3172 = vunpack.c.l.b16 %v2820
        %v3173 = vunpack.c.l.b16 %v2821
        %v3174 = vunpack.c.l.b16 %v2822
        %v3175 = vunpack.c.l.b16 %v2823
        %v3176 = vunpack.c.l.b16 %v2824
        %v3177 = vunpack.c.l.b16 %v2825
        %v3178 = vunpack.c.l.b16 %v2826
        %v3179 = vunpack.c.l.b16 %v2827
        %v3180 = vunpack.c.l.b16 %v2828
        %v3181 = vunpack.c.l.b16 %v2829
        %v3182 = vunpack.c.l.b16 %v2830
        %v3183 = vunpack.c.l.b16 %v2831
        %v3184 = vunpack.c.l.b16 %v2832
        %v3185 = vunpack.c.l.b16 %v2833
        %v3186 = vunpack.c.l.b16 %v2834
        %v3187 = vunpack.c.l.b16 %v2835
        %v3188 = vunpack.c.l.b16 %v2836
        %v3189 = vunpack.c.l.b16 %v2837
        %v3190 = vunpack.c.l.b16 %v2838
        %v3191 = vunpack.c.l.b16 %v2839
        %v3192 = vunpack.c.l.b16 %v2840
        %v3193 = vunpack.c.l.b16 %v2841
        %v3194 = vunpack.c.l.b16 %v2842
        %v3195 = vunpack.c.l.b16 %v2843
        %v3196 = vunpack.c.l.b16 %v2844
        %v3197 = vunpack.c.l.b16 %v2845
        %v3198 = vunpack.c.l.b16 %v2846
        %v3199 = vunpack.c.l.b16 %v2847
        %v3200 = vunpack.c.l.b16 %v2848
        %v3201 = vunpack.c.l.b16 %v2849
        %v3202 = vunpack.c.l.b16 %v2850
        %v3203 = vunpack.c.l.b16 %v2851
        %v3204 = vunpack.c.l.b16 %v2852
        %v3205 = vunpack.c.l.b16 %v2853
        %v3206 = vunpack.c.l.b16 %v2854
        %v3207 = vunpack.c.l.b16 %v2855
        %v3208 = vunpack.c.l.b16 %v2856
        %v3209 = vunpack.c.l.b16 %v2857
        %v3210 = vunpack.c.l.b16 %v2858
        %v3211 = vunpack.c.l.b16 %v2859
        %v3212 = vunpack.c.l.b16 %v2860
        %v3213 = vunpack.c.l.b16 %v2861
        %v3214 = vunpack.c.l.b16 %v2862
        %v3215 = vunpack.c.l.b16 %v2863
        %v3216 = vunpack.c.l.b16 %v2864
        %v3217 = vpack.c.b16 %v3170, %v3169
        %v3218 = vpack.c.b16 %v3172, %v3171
        %v3219 = vpack.c.b16 %v3174, %v3173
        %v3220 = vpack.c.b16 %v3176, %v3175
        %v3221 = vpack.c.b16 %v3178, %v3177
        %v3222 = vpack.c.b16 %v3180, %v3179
        %v3223 = vpack.c.b16 %v3182, %v3181
        %v3224 = vpack.c.b16 %v3184, %v3183
        %v3225 = vpack.c.b16 %v3186, %v3185
        %v3226 = vpack.c.b16 %v3188, %v3187
        %v3227 = vpack.c.b16 %v3190, %v3189
        %v3228 = vpack.c.b16 %v3192, %v3191
        %v3229 = vpack.c.b16 %v3194, %v3193
        %v3230 = vpack.c.b16 %v3196, %v3195
        %v3231 = vpack.c.b16 %v3198, %v3197
        %v3232 = vpack.c.b16 %v3200, %v3199
        %v3233 = vpack.c.b16 %v3202, %v3201
        %v3234 = vpack.c.b16 %v3204, %v3203
        %v3235 = vpack.c.b16 %v3206, %v3205
        %v3236 = vpack.c.b16 %v3208, %v3207
        %v3237 = vpack.c.b16 %v3210, %v3209
        %v3238 = vpack.c.b16 %v3212, %v3211
        %v3239 = vpack.c.b16 %v3214, %v3213
        %v3240 = vpack.c.b16 %v3216, %v3215
        %3265 = vmatprep.subr.bf16.mxu0 0
        %3266 = vmatpush1.bf16.msra.mxu0 %v3224
        %3267 = vmatprep.subr.bf16.mxu0 0
        %3268 = vmatpush1.bf16.msra.mxu0 %v3223
        %3269 = vmatprep.subr.bf16.mxu0 0
        %3270 = vmatpush1.bf16.msra.mxu0 %v3222
        %3271 = vmatprep.subr.bf16.mxu0 0
        %3272 = vmatpush1.bf16.msra.mxu0 %v3221
        %3273 = vmatprep.subr.bf16.mxu0 0
        %3274 = vmatpush1.bf16.msra.mxu0 %v3220
        %3275 = vmatprep.subr.bf16.mxu0 0
        %3276 = vmatpush1.bf16.msra.mxu0 %v3219
        %3277 = vmatprep.subr.bf16.mxu0 0
        %3278 = vmatpush1.bf16.msra.mxu0 %v3218
        %3279 = vmatprep.subr.bf16.mxu0 0
        %3280 = vmatpush1.bf16.msra.mxu0 %v3217
        %3281 = vmatprep.subr.bf16.mxu0 0
        %3282 = vmatpush2.bf16.msra.mxu0 %v3232
        %3283 = vmatprep.subr.bf16.mxu0 0
        %3284 = vmatpush2.bf16.msra.mxu0 %v3231
        %3285 = vmatprep.subr.bf16.mxu0 0
        %3286 = vmatpush2.bf16.msra.mxu0 %v3230
        %3287 = vmatprep.subr.bf16.mxu0 0
        %3288 = vmatpush2.bf16.msra.mxu0 %v3229
        %3289 = vmatprep.subr.bf16.mxu0 0
        %3290 = vmatpush2.bf16.msra.mxu0 %v3228
        %3291 = vmatprep.subr.bf16.mxu0 0
        %3292 = vmatpush2.bf16.msra.mxu0 %v3227
        %3293 = vmatprep.subr.bf16.mxu0 0
        %3294 = vmatpush2.bf16.msra.mxu0 %v3226
        %3295 = vmatprep.subr.bf16.mxu0 0
        %3296 = vmatpush2.bf16.msra.mxu0 %v3225
        %3297 = vmatprep.mubr.bf16.mxu0 %v3026
        %3298 = vmatmul.mubr.bf16.gmra.mxu0 %v3025
        %v3299 = vpop.f32.mrf.mxu0
        %v3300 = vadd.f32 0.0, %v3299
        %v3301 = vpop.f32.mrf.mxu0
        %v3302 = vpop.f32.mrf.mxu0
        %v3303 = vadd.f32 0.0, %v3302
        %v3304 = vpop.f32.mrf.mxu0
        %3305 = vmatprep.mubr.bf16.mxu0 %v3029
        %3306 = vmatmul.mubr.bf16.gmra.mxu0 %v3028
        %v3307 = vpop.f32.mrf.mxu0
        %v3308 = vadd.f32 0.0, %v3307
        %v3309 = vpop.f32.mrf.mxu0
        %v3310 = vpop.f32.mrf.mxu0
        %v3311 = vadd.f32 0.0, %v3310
        %v3312 = vpop.f32.mrf.mxu0
        %3313 = vmatprep.mubr.bf16.mxu0 %v3032
        %3314 = vmatmul.mubr.bf16.gmra.mxu0 %v3031
        %v3315 = vpop.f32.mrf.mxu0
        %v3316 = vadd.f32 0.0, %v3315
        %v3317 = vpop.f32.mrf.mxu0
        %v3318 = vpop.f32.mrf.mxu0
        %v3319 = vadd.f32 0.0, %v3318
        %v3320 = vpop.f32.mrf.mxu0
        %3321 = vmatprep.mubr.bf16.mxu0 %v3035
        %3322 = vmatmul.mubr.bf16.gmra.mxu0 %v3034
        %v3323 = vpop.f32.mrf.mxu0
        %v3324 = vadd.f32 0.0, %v3323
        %v3325 = vpop.f32.mrf.mxu0
        %v3326 = vpop.f32.mrf.mxu0
        %v3327 = vadd.f32 0.0, %v3326
        %v3328 = vpop.f32.mrf.mxu0
        %3329 = vmatprep.mubr.bf16.mxu0 %v3038
        %3330 = vmatmul.mubr.bf16.gmra.mxu0 %v3037
        %v3331 = vpop.f32.mrf.mxu0
        %v3332 = vadd.f32 0.0, %v3331
        %v3333 = vpop.f32.mrf.mxu0
        %v3334 = vpop.f32.mrf.mxu0
        %v3335 = vadd.f32 0.0, %v3334
        %v3336 = vpop.f32.mrf.mxu0
        %3337 = vmatprep.mubr.bf16.mxu0 %v3041
        %3338 = vmatmul.mubr.bf16.gmra.mxu0 %v3040
        %v3339 = vpop.f32.mrf.mxu0
        %v3340 = vadd.f32 0.0, %v3339
        %v3341 = vpop.f32.mrf.mxu0
        %v3342 = vpop.f32.mrf.mxu0
        %v3343 = vadd.f32 0.0, %v3342
        %v3344 = vpop.f32.mrf.mxu0
        %3345 = vmatprep.mubr.bf16.mxu0 %v3044
        %3346 = vmatmul.mubr.bf16.gmra.mxu0 %v3043
        %v3347 = vpop.f32.mrf.mxu0
        %v3348 = vadd.f32 0.0, %v3347
        %v3349 = vpop.f32.mrf.mxu0
        %v3350 = vpop.f32.mrf.mxu0
        %v3351 = vadd.f32 0.0, %v3350
        %v3352 = vpop.f32.mrf.mxu0
        %3353 = vmatprep.mubr.bf16.mxu0 %v3047
        %3354 = vmatmul.mubr.bf16.gmra.mxu0 %v3046
        %v3355 = vpop.f32.mrf.mxu0
        %v3356 = vadd.f32 0.0, %v3355
        %v3357 = vpop.f32.mrf.mxu0
        %v3358 = vpop.f32.mrf.mxu0
        %v3359 = vadd.f32 0.0, %v3358
        %v3360 = vpop.f32.mrf.mxu0
        %3361 = vmatprep.mubr.bf16.mxu0 %v3050
        %3362 = vmatmul.mubr.bf16.gmra.mxu0 %v3049
        %v3363 = vpop.f32.mrf.mxu0
        %v3364 = vadd.f32 0.0, %v3363
        %v3365 = vpop.f32.mrf.mxu0
        %v3366 = vpop.f32.mrf.mxu0
        %v3367 = vadd.f32 0.0, %v3366
        %v3368 = vpop.f32.mrf.mxu0
        %3369 = vmatprep.mubr.bf16.mxu0 %v3053
        %3370 = vmatmul.mubr.bf16.gmra.mxu0 %v3052
        %v3371 = vpop.f32.mrf.mxu0
        %v3372 = vadd.f32 0.0, %v3371
        %v3373 = vpop.f32.mrf.mxu0
        %v3374 = vpop.f32.mrf.mxu0
        %v3375 = vadd.f32 0.0, %v3374
        %v3376 = vpop.f32.mrf.mxu0
        %3377 = vmatprep.mubr.bf16.mxu0 %v3056
        %3378 = vmatmul.mubr.bf16.gmra.mxu0 %v3055
        %v3379 = vpop.f32.mrf.mxu0
        %v3380 = vadd.f32 0.0, %v3379
        %v3381 = vpop.f32.mrf.mxu0
        %v3382 = vpop.f32.mrf.mxu0
        %v3383 = vadd.f32 0.0, %v3382
        %v3384 = vpop.f32.mrf.mxu0
        %3385 = vmatprep.mubr.bf16.mxu0 %v3059
        %3386 = vmatmul.mubr.bf16.gmra.mxu0 %v3058
        %v3387 = vpop.f32.mrf.mxu0
        %v3388 = vadd.f32 0.0, %v3387
        %v3389 = vpop.f32.mrf.mxu0
        %v3390 = vpop.f32.mrf.mxu0
        %v3391 = vadd.f32 0.0, %v3390
        %v3392 = vpop.f32.mrf.mxu0
        %3393 = vmatprep.mubr.bf16.mxu0 %v3062
        %3394 = vmatmul.mubr.bf16.gmra.mxu0 %v3061
        %v3395 = vpop.f32.mrf.mxu0
        %v3396 = vadd.f32 0.0, %v3395
        %v3397 = vpop.f32.mrf.mxu0
        %v3398 = vpop.f32.mrf.mxu0
        %v3399 = vadd.f32 0.0, %v3398
        %v3400 = vpop.f32.mrf.mxu0
        %3401 = vmatprep.mubr.bf16.mxu0 %v3065
        %3402 = vmatmul.mubr.bf16.gmra.mxu0 %v3064
        %v3403 = vpop.f32.mrf.mxu0
        %v3404 = vadd.f32 0.0, %v3403
        %v3405 = vpop.f32.mrf.mxu0
        %v3406 = vpop.f32.mrf.mxu0
        %v3407 = vadd.f32 0.0, %v3406
        %v3408 = vpop.f32.mrf.mxu0
        %3409 = vmatprep.mubr.bf16.mxu0 %v3068
        %3410 = vmatmul.mubr.bf16.gmra.mxu0 %v3067
        %v3411 = vpop.f32.mrf.mxu0
        %v3412 = vadd.f32 0.0, %v3411
        %v3413 = vpop.f32.mrf.mxu0
        %v3414 = vpop.f32.mrf.mxu0
        %v3415 = vadd.f32 0.0, %v3414
        %v3416 = vpop.f32.mrf.mxu0
        %3417 = vmatprep.mubr.bf16.mxu0 %v3071
        %3418 = vmatmul.mubr.bf16.gmra.mxu0 %v3070
        %v3419 = vpop.f32.mrf.mxu0
        %v3420 = vadd.f32 0.0, %v3419
        %v3421 = vpop.f32.mrf.mxu0
        %v3422 = vpop.f32.mrf.mxu0
        %v3423 = vadd.f32 0.0, %v3422
        %v3424 = vpop.f32.mrf.mxu0
        %3425 = vdwg.mxu0
        %3426 = vmatprep.subr.bf16.mxu0 0
        %3427 = vmatpush1.bf16.msra.mxu0 %v3240
        %3428 = vmatprep.subr.bf16.mxu0 0
        %3429 = vmatpush1.bf16.msra.mxu0 %v3239
        %3430 = vmatprep.subr.bf16.mxu0 0
        %3431 = vmatpush1.bf16.msra.mxu0 %v3238
        %3432 = vmatprep.subr.bf16.mxu0 0
        %3433 = vmatpush1.bf16.msra.mxu0 %v3237
        %3434 = vmatprep.subr.bf16.mxu0 0
        %3435 = vmatpush1.bf16.msra.mxu0 %v3236
        %3436 = vmatprep.subr.bf16.mxu0 0
        %3437 = vmatpush1.bf16.msra.mxu0 %v3235
        %3438 = vmatprep.subr.bf16.mxu0 0
        %3439 = vmatpush1.bf16.msra.mxu0 %v3234
        %3440 = vmatprep.subr.bf16.mxu0 0
        %3441 = vmatpush1.bf16.msra.mxu0 %v3233
        %3442 = vmatprep.subr.bf16.mxu0 0
        %3443 = vmatpush2.bf16.msra.mxu0 0
        %3444 = vmatprep.subr.bf16.mxu0 0
        %3445 = vmatpush2.bf16.msra.mxu0 0
        %3446 = vmatprep.subr.bf16.mxu0 0
        %3447 = vmatpush2.bf16.msra.mxu0 0
        %3448 = vmatprep.subr.bf16.mxu0 0
        %3449 = vmatpush2.bf16.msra.mxu0 0
        %3450 = vmatprep.subr.bf16.mxu0 0
        %3451 = vmatpush2.bf16.msra.mxu0 0
        %3452 = vmatprep.subr.bf16.mxu0 0
        %3453 = vmatpush2.bf16.msra.mxu0 0
        %3454 = vmatprep.subr.bf16.mxu0 0
        %3455 = vmatpush2.bf16.msra.mxu0 0
        %3456 = vmatprep.subr.bf16.mxu0 0
        %3457 = vmatpush2.bf16.msra.mxu0 0
        %3458 = vmatprep.mubr.bf16.mxu0 0
        %3459 = vmatmul.mubr.bf16.gmra.mxu0 %v3027
        %v3460 = vpop.f32.mrf.mxu0
        %v3461 = vadd.f32 %v3300, %v3460
        %v3462 = vpop.f32.mrf.mxu0
        %v3463 = vpop.f32.mrf.mxu0
        %v3464 = vadd.f32 %v3303, %v3463
        %v3465 = vpop.f32.mrf.mxu0
        %3466 = vmatprep.mubr.bf16.mxu0 0
        %3467 = vmatmul.mubr.bf16.gmra.mxu0 %v3030
        %v3468 = vpop.f32.mrf.mxu0
        %v3469 = vadd.f32 %v3308, %v3468
        %v3470 = vpop.f32.mrf.mxu0
        %v3471 = vpop.f32.mrf.mxu0
        %v3472 = vadd.f32 %v3311, %v3471
        %v3473 = vpop.f32.mrf.mxu0
        %3474 = vmatprep.mubr.bf16.mxu0 0
        %3475 = vmatmul.mubr.bf16.gmra.mxu0 %v3033
        %v3476 = vpop.f32.mrf.mxu0
        %v3477 = vadd.f32 %v3316, %v3476
        %v3478 = vpop.f32.mrf.mxu0
        %v3479 = vpop.f32.mrf.mxu0
        %v3480 = vadd.f32 %v3319, %v3479
        %v3481 = vpop.f32.mrf.mxu0
        %3482 = vmatprep.mubr.bf16.mxu0 0
        %3483 = vmatmul.mubr.bf16.gmra.mxu0 %v3036
        %v3484 = vpop.f32.mrf.mxu0
        %v3485 = vadd.f32 %v3324, %v3484
        %v3486 = vpop.f32.mrf.mxu0
        %v3487 = vpop.f32.mrf.mxu0
        %v3488 = vadd.f32 %v3327, %v3487
        %v3489 = vpop.f32.mrf.mxu0
        %3490 = vmatprep.mubr.bf16.mxu0 0
        %3491 = vmatmul.mubr.bf16.gmra.mxu0 %v3039
        %v3492 = vpop.f32.mrf.mxu0
        %v3493 = vadd.f32 %v3332, %v3492
        %v3494 = vpop.f32.mrf.mxu0
        %v3495 = vpop.f32.mrf.mxu0
        %v3496 = vadd.f32 %v3335, %v3495
        %v3497 = vpop.f32.mrf.mxu0
        %3498 = vmatprep.mubr.bf16.mxu0 0
        %3499 = vmatmul.mubr.bf16.gmra.mxu0 %v3042
        %v3500 = vpop.f32.mrf.mxu0
        %v3501 = vadd.f32 %v3340, %v3500
        %v3502 = vpop.f32.mrf.mxu0
        %v3503 = vpop.f32.mrf.mxu0
        %v3504 = vadd.f32 %v3343, %v3503
        %v3505 = vpop.f32.mrf.mxu0
        %3506 = vmatprep.mubr.bf16.mxu0 0
        %3507 = vmatmul.mubr.bf16.gmra.mxu0 %v3045
        %v3508 = vpop.f32.mrf.mxu0
        %v3509 = vadd.f32 %v3348, %v3508
        %v3510 = vpop.f32.mrf.mxu0
        %v3511 = vpop.f32.mrf.mxu0
        %v3512 = vadd.f32 %v3351, %v3511
        %v3513 = vpop.f32.mrf.mxu0
        %3514 = vmatprep.mubr.bf16.mxu0 0
        %3515 = vmatmul.mubr.bf16.gmra.mxu0 %v3048
        %v3516 = vpop.f32.mrf.mxu0
        %v3517 = vadd.f32 %v3356, %v3516
        %v3518 = vpop.f32.mrf.mxu0
        %v3519 = vpop.f32.mrf.mxu0
        %v3520 = vadd.f32 %v3359, %v3519
        %v3521 = vpop.f32.mrf.mxu0
        %3522 = vmatprep.mubr.bf16.mxu0 0
        %3523 = vmatmul.mubr.bf16.gmra.mxu0 %v3051
        %v3524 = vpop.f32.mrf.mxu0
        %v3525 = vadd.f32 %v3364, %v3524
        %v3526 = vpop.f32.mrf.mxu0
        %v3527 = vpop.f32.mrf.mxu0
        %v3528 = vadd.f32 %v3367, %v3527
        %v3529 = vpop.f32.mrf.mxu0
        %3530 = vmatprep.mubr.bf16.mxu0 0
        %3531 = vmatmul.mubr.bf16.gmra.mxu0 %v3054
        %v3532 = vpop.f32.mrf.mxu0
        %v3533 = vadd.f32 %v3372, %v3532
        %v3534 = vpop.f32.mrf.mxu0
        %v3535 = vpop.f32.mrf.mxu0
        %v3536 = vadd.f32 %v3375, %v3535
        %v3537 = vpop.f32.mrf.mxu0
        %3538 = vmatprep.mubr.bf16.mxu0 0
        %3539 = vmatmul.mubr.bf16.gmra.mxu0 %v3057
        %v3540 = vpop.f32.mrf.mxu0
        %v3541 = vadd.f32 %v3380, %v3540
        %v3542 = vpop.f32.mrf.mxu0
        %v3543 = vpop.f32.mrf.mxu0
        %v3544 = vadd.f32 %v3383, %v3543
        %v3545 = vpop.f32.mrf.mxu0
        %3546 = vmatprep.mubr.bf16.mxu0 0
        %3547 = vmatmul.mubr.bf16.gmra.mxu0 %v3060
        %v3548 = vpop.f32.mrf.mxu0
        %v3549 = vadd.f32 %v3388, %v3548
        %v3550 = vpop.f32.mrf.mxu0
        %v3551 = vpop.f32.mrf.mxu0
        %v3552 = vadd.f32 %v3391, %v3551
        %v3553 = vpop.f32.mrf.mxu0
        %3554 = vmatprep.mubr.bf16.mxu0 0
        %3555 = vmatmul.mubr.bf16.gmra.mxu0 %v3063
        %v3556 = vpop.f32.mrf.mxu0
        %v3557 = vadd.f32 %v3396, %v3556
        %v3558 = vpop.f32.mrf.mxu0
        %v3559 = vpop.f32.mrf.mxu0
        %v3560 = vadd.f32 %v3399, %v3559
        %v3561 = vpop.f32.mrf.mxu0
        %3562 = vmatprep.mubr.bf16.mxu0 0
        %3563 = vmatmul.mubr.bf16.gmra.mxu0 %v3066
        %v3564 = vpop.f32.mrf.mxu0
        %v3565 = vadd.f32 %v3404, %v3564
        %v3566 = vpop.f32.mrf.mxu0
        %v3567 = vpop.f32.mrf.mxu0
        %v3568 = vadd.f32 %v3407, %v3567
        %v3569 = vpop.f32.mrf.mxu0
        %3570 = vmatprep.mubr.bf16.mxu0 0
        %3571 = vmatmul.mubr.bf16.gmra.mxu0 %v3069
        %v3572 = vpop.f32.mrf.mxu0
        %v3573 = vadd.f32 %v3412, %v3572
        %v3574 = vpop.f32.mrf.mxu0
        %v3575 = vpop.f32.mrf.mxu0
        %v3576 = vadd.f32 %v3415, %v3575
        %v3577 = vpop.f32.mrf.mxu0
        %3578 = vmatprep.mubr.bf16.mxu0 0
        %3579 = vmatmul.mubr.bf16.gmra.mxu0 %v3072
        %v3580 = vpop.f32.mrf.mxu0
        %v3581 = vadd.f32 %v3420, %v3580
        %v3582 = vpop.f32.mrf.mxu0
        %v3583 = vpop.f32.mrf.mxu0
        %v3584 = vadd.f32 %v3423, %v3583
        %v3585 = vpop.f32.mrf.mxu0
        %3586 = vdwg.mxu0
        %v3587 = vadd.f32 %v2626, %v3461
        %v3588 = vadd.f32 %v2629, %v3464
        %v3589 = vadd.f32 %v2634, %v3469
        %v3590 = vadd.f32 %v2637, %v3472
        %v3591 = vadd.f32 %v2642, %v3477
        %v3592 = vadd.f32 %v2645, %v3480
        %v3593 = vadd.f32 %v2650, %v3485
        %v3594 = vadd.f32 %v2653, %v3488
        %v3595 = vadd.f32 %v2658, %v3493
        %v3596 = vadd.f32 %v2661, %v3496
        %v3597 = vadd.f32 %v2666, %v3501
        %v3598 = vadd.f32 %v2669, %v3504
        %v3599 = vadd.f32 %v2674, %v3509
        %v3600 = vadd.f32 %v2677, %v3512
        %v3601 = vadd.f32 %v2682, %v3517
        %v3602 = vadd.f32 %v2685, %v3520
        %v3603 = vadd.f32 %v2690, %v3525
        %v3604 = vadd.f32 %v2693, %v3528
        %v3605 = vadd.f32 %v2698, %v3533
        %v3606 = vadd.f32 %v2701, %v3536
        %v3607 = vadd.f32 %v2706, %v3541
        %v3608 = vadd.f32 %v2709, %v3544
        %v3609 = vadd.f32 %v2714, %v3549
        %v3610 = vadd.f32 %v2717, %v3552
        %v3611 = vadd.f32 %v2722, %v3557
        %v3612 = vadd.f32 %v2725, %v3560
        %v3613 = vadd.f32 %v2730, %v3565
        %v3614 = vadd.f32 %v2733, %v3568
        %v3615 = vadd.f32 %v2738, %v3573
        %v3616 = vadd.f32 %v2741, %v3576
        %v3617 = vadd.f32 %v2746, %v3581
        %v3618 = vadd.f32 %v2749, %v3584
        %v3619 = vld [vmem:[%s3] sm:$0x1]
        %v3621 = vlaneseq
        %v3622 = vshrl.u32 %v3621, 7
        %v3623 = vsub.s32 0, %v3622
        %v3624 = vrot.slane %v3619, %v3623
        %v3626 = vmul.f32 %v3587, %v3624
        %v3627 = vmul.f32 %v3588, %v3624
        %v3628 = vmul.f32 %v3589, %v3624
        %v3629 = vmul.f32 %v3590, %v3624
        %v3630 = vmul.f32 %v3591, %v3624
        %v3631 = vmul.f32 %v3592, %v3624
        %v3632 = vmul.f32 %v3593, %v3624
        %v3633 = vmul.f32 %v3594, %v3624
        %v3634 = vmul.f32 %v3595, %v3624
        %v3635 = vmul.f32 %v3596, %v3624
        %v3636 = vmul.f32 %v3597, %v3624
        %v3637 = vmul.f32 %v3598, %v3624
        %v3638 = vmul.f32 %v3599, %v3624
        %v3639 = vmul.f32 %v3600, %v3624
        %v3640 = vmul.f32 %v3601, %v3624
        %v3641 = vmul.f32 %v3602, %v3624
        %v3642 = vmul.f32 %v3603, %v3624
        %v3643 = vmul.f32 %v3604, %v3624
        %v3644 = vmul.f32 %v3605, %v3624
        %v3645 = vmul.f32 %v3606, %v3624
        %v3646 = vmul.f32 %v3607, %v3624
        %v3647 = vmul.f32 %v3608, %v3624
        %v3648 = vmul.f32 %v3609, %v3624
        %v3649 = vmul.f32 %v3610, %v3624
        %v3650 = vmul.f32 %v3611, %v3624
        %v3651 = vmul.f32 %v3612, %v3624
        %v3652 = vmul.f32 %v3613, %v3624
        %v3653 = vmul.f32 %v3614, %v3624
        %v3654 = vmul.f32 %v3615, %v3624
        %v3655 = vmul.f32 %v3616, %v3624
        %v3656 = vmul.f32 %v3617, %v3624
        %v3657 = vmul.f32 %v3618, %v3624
        %v3658 = vld [vmem:[%s4] sm:$0x1]
        %v3660 = vlaneseq
        %v3661 = vshrl.u32 %v3660, 7
        %v3662 = vsub.s32 0, %v3661
        %v3663 = vrot.slane %v3658, %v3662
        %v3665 = vadd.f32 %v3626, %v3663
        %v3666 = vadd.f32 %v3627, %v3663
        %v3667 = vadd.f32 %v3628, %v3663
        %v3668 = vadd.f32 %v3629, %v3663
        %v3669 = vadd.f32 %v3630, %v3663
        %v3670 = vadd.f32 %v3631, %v3663
        %v3671 = vadd.f32 %v3632, %v3663
        %v3672 = vadd.f32 %v3633, %v3663
        %v3673 = vadd.f32 %v3634, %v3663
        %v3674 = vadd.f32 %v3635, %v3663
        %v3675 = vadd.f32 %v3636, %v3663
        %v3676 = vadd.f32 %v3637, %v3663
        %v3677 = vadd.f32 %v3638, %v3663
        %v3678 = vadd.f32 %v3639, %v3663
        %v3679 = vadd.f32 %v3640, %v3663
        %v3680 = vadd.f32 %v3641, %v3663
        %v3681 = vadd.f32 %v3642, %v3663
        %v3682 = vadd.f32 %v3643, %v3663
        %v3683 = vadd.f32 %v3644, %v3663
        %v3684 = vadd.f32 %v3645, %v3663
        %v3685 = vadd.f32 %v3646, %v3663
        %v3686 = vadd.f32 %v3647, %v3663
        %v3687 = vadd.f32 %v3648, %v3663
        %v3688 = vadd.f32 %v3649, %v3663
        %v3689 = vadd.f32 %v3650, %v3663
        %v3690 = vadd.f32 %v3651, %v3663
        %v3691 = vadd.f32 %v3652, %v3663
        %v3692 = vadd.f32 %v3653, %v3663
        %v3693 = vadd.f32 %v3654, %v3663
        %v3694 = vadd.f32 %v3655, %v3663
        %v3695 = vadd.f32 %v3656, %v3663
        %v3696 = vadd.f32 %v3657, %v3663
        %v3697 = vmax.f32 %v3665, 0.0
        %v3698 = vmax.f32 %v3666, 0.0
        %v3699 = vmax.f32 %v3667, 0.0
        %v3700 = vmax.f32 %v3668, 0.0
        %v3701 = vmax.f32 %v3669, 0.0
        %v3702 = vmax.f32 %v3670, 0.0
        %v3703 = vmax.f32 %v3671, 0.0
        %v3704 = vmax.f32 %v3672, 0.0
        %v3705 = vmax.f32 %v3673, 0.0
        %v3706 = vmax.f32 %v3674, 0.0
        %v3707 = vmax.f32 %v3675, 0.0
        %v3708 = vmax.f32 %v3676, 0.0
        %v3709 = vmax.f32 %v3677, 0.0
        %v3710 = vmax.f32 %v3678, 0.0
        %v3711 = vmax.f32 %v3679, 0.0
        %v3712 = vmax.f32 %v3680, 0.0
        %v3713 = vmax.f32 %v3681, 0.0
        %v3714 = vmax.f32 %v3682, 0.0
        %v3715 = vmax.f32 %v3683, 0.0
        %v3716 = vmax.f32 %v3684, 0.0
        %v3717 = vmax.f32 %v3685, 0.0
        %v3718 = vmax.f32 %v3686, 0.0
        %v3719 = vmax.f32 %v3687, 0.0
        %v3720 = vmax.f32 %v3688, 0.0
        %v3721 = vmax.f32 %v3689, 0.0
        %v3722 = vmax.f32 %v3690, 0.0
        %v3723 = vmax.f32 %v3691, 0.0
        %v3724 = vmax.f32 %v3692, 0.0
        %v3725 = vmax.f32 %v3693, 0.0
        %v3726 = vmax.f32 %v3694, 0.0
        %v3727 = vmax.f32 %v3695, 0.0
        %v3728 = vmax.f32 %v3696, 0.0
        %v3729 = vpack.c.bf16 %v3698, %v3697
        %v3730 = vpack.c.bf16 %v3700, %v3699
        %v3731 = vpack.c.bf16 %v3702, %v3701
        %v3732 = vpack.c.bf16 %v3704, %v3703
        %v3733 = vpack.c.bf16 %v3706, %v3705
        %v3734 = vpack.c.bf16 %v3708, %v3707
        %v3735 = vpack.c.bf16 %v3710, %v3709
        %v3736 = vpack.c.bf16 %v3712, %v3711
        %v3737 = vpack.c.bf16 %v3714, %v3713
        %v3738 = vpack.c.bf16 %v3716, %v3715
        %v3739 = vpack.c.bf16 %v3718, %v3717
        %v3740 = vpack.c.bf16 %v3720, %v3719
        %v3741 = vpack.c.bf16 %v3722, %v3721
        %v3742 = vpack.c.bf16 %v3724, %v3723
        %v3743 = vpack.c.bf16 %v3726, %v3725
        %v3744 = vpack.c.bf16 %v3728, %v3727
        %v3761 = vunpack.c.l.b16 %v3729
        %v3762 = vunpack.c.h.b16 %v3729
        %v3763 = vunpack.c.l.b16 %v3730
        %v3764 = vunpack.c.h.b16 %v3730
        %v3765 = vunpack.c.l.b16 %v3731
        %v3766 = vunpack.c.h.b16 %v3731
        %v3767 = vunpack.c.l.b16 %v3732
        %v3768 = vunpack.c.h.b16 %v3732
        %v3769 = vunpack.c.l.b16 %v3733
        %v3770 = vunpack.c.h.b16 %v3733
        %v3771 = vunpack.c.l.b16 %v3734
        %v3772 = vunpack.c.h.b16 %v3734
        %v3773 = vunpack.c.l.b16 %v3735
        %v3774 = vunpack.c.h.b16 %v3735
        %v3775 = vunpack.c.l.b16 %v3736
        %v3776 = vunpack.c.h.b16 %v3736
        %v3777 = vunpack.c.l.b16 %v3737
        %v3778 = vunpack.c.h.b16 %v3737
        %v3779 = vunpack.c.l.b16 %v3738
        %v3780 = vunpack.c.h.b16 %v3738
        %v3781 = vunpack.c.l.b16 %v3739
        %v3782 = vunpack.c.h.b16 %v3739
        %v3783 = vunpack.c.l.b16 %v3740
        %v3784 = vunpack.c.h.b16 %v3740
        %v3785 = vunpack.c.l.b16 %v3741
        %v3786 = vunpack.c.h.b16 %v3741
        %v3787 = vunpack.c.l.b16 %v3742
        %v3788 = vunpack.c.h.b16 %v3742
        %v3789 = vunpack.c.l.b16 %v3743
        %v3790 = vunpack.c.h.b16 %v3743
        %v3791 = vunpack.c.l.b16 %v3744
        %v3792 = vunpack.c.h.b16 %v3744
        %v3793 = vpack.c.b16 %v3761, %v3761
        %v3794 = vpack.c.b16 %v3762, %v3762
        %v3795 = vpack.c.b16 %v3763, %v3763
        %v3796 = vpack.c.b16 %v3764, %v3764
        %v3797 = vpack.c.b16 %v3765, %v3765
        %v3798 = vpack.c.b16 %v3766, %v3766
        %v3799 = vpack.c.b16 %v3767, %v3767
        %v3800 = vpack.c.b16 %v3768, %v3768
        %v3801 = vpack.c.b16 %v3769, %v3769
        %v3802 = vpack.c.b16 %v3770, %v3770
        %v3803 = vpack.c.b16 %v3771, %v3771
        %v3804 = vpack.c.b16 %v3772, %v3772
        %v3805 = vpack.c.b16 %v3773, %v3773
        %v3806 = vpack.c.b16 %v3774, %v3774
        %v3807 = vpack.c.b16 %v3775, %v3775
        %v3808 = vpack.c.b16 %v3776, %v3776
        %v3809 = vpack.c.b16 %v3777, %v3777
        %v3810 = vpack.c.b16 %v3778, %v3778
        %v3811 = vpack.c.b16 %v3779, %v3779
        %v3812 = vpack.c.b16 %v3780, %v3780
        %v3813 = vpack.c.b16 %v3781, %v3781
        %v3814 = vpack.c.b16 %v3782, %v3782
        %v3815 = vpack.c.b16 %v3783, %v3783
        %v3816 = vpack.c.b16 %v3784, %v3784
        %v3817 = vpack.c.b16 %v3785, %v3785
        %v3818 = vpack.c.b16 %v3786, %v3786
        %v3819 = vpack.c.b16 %v3787, %v3787
        %v3820 = vpack.c.b16 %v3788, %v3788
        %v3821 = vpack.c.b16 %v3789, %v3789
        %v3822 = vpack.c.b16 %v3790, %v3790
        %v3823 = vpack.c.b16 %v3791, %v3791
        %v3824 = vpack.c.b16 %v3792, %v3792
        %3857 = vst [vmem:[%s450 + $0x4] sm:$0xf] %v3793
        %3858 = vst [vmem:[%s450 + $0x10] sm:$0xf] %v3794
        %3859 = vst [vmem:[%s450 + $0x1c] sm:$0xf] %v3795
        %3860 = vst [vmem:[%s450 + $0x28] sm:$0xf] %v3796
        %3861 = vst [vmem:[%s450 + $0x34] sm:$0xf] %v3797
        %3862 = vst [vmem:[%s450 + $0x40] sm:$0xf] %v3798
        %3863 = vst [vmem:[%s450 + $0x4c] sm:$0xf] %v3799
        %3864 = vst [vmem:[%s450 + $0x58] sm:$0xf] %v3800
        %3865 = vst [vmem:[%s450 + $0x64] sm:$0xf] %v3801
        %3866 = vst [vmem:[%s450 + $0x70] sm:$0xf] %v3802
        %3867 = vst [vmem:[%s450 + $0x7c] sm:$0xf] %v3803
        %3868 = vst [vmem:[%s450 + $0x88] sm:$0xf] %v3804
        %3869 = vst [vmem:[%s450 + $0x94] sm:$0xf] %v3805
        %3870 = vst [vmem:[%s450 + $0xa0] sm:$0xf] %v3806
        %3871 = vst [vmem:[%s450 + $0xac] sm:$0xf] %v3807
        %3872 = vst [vmem:[%s450 + $0xb8] sm:$0xf] %v3808
        %3873 = vst [vmem:[%s450 + $0xc4] sm:$0xf] %v3809
        %3874 = vst [vmem:[%s450 + $0xd0] sm:$0xf] %v3810
        %3875 = vst [vmem:[%s450 + $0xdc] sm:$0xf] %v3811
        %3876 = vst [vmem:[%s450 + $0xe8] sm:$0xf] %v3812
        %3877 = vst [vmem:[%s450 + $0xf4] sm:$0xf] %v3813
        %3878 = vst [vmem:[%s450 + $0x100] sm:$0xf] %v3814
        %3879 = vst [vmem:[%s450 + $0x10c] sm:$0xf] %v3815
        %3880 = vst [vmem:[%s450 + $0x118] sm:$0xf] %v3816
        %3881 = vst [vmem:[%s450 + $0x124] sm:$0xf] %v3817
        %3882 = vst [vmem:[%s450 + $0x130] sm:$0xf] %v3818
        %3883 = vst [vmem:[%s450 + $0x13c] sm:$0xf] %v3819
        %3884 = vst [vmem:[%s450 + $0x148] sm:$0xf] %v3820
        %3885 = vst [vmem:[%s450 + $0x154] sm:$0xf] %v3821
        %3886 = vst [vmem:[%s450 + $0x160] sm:$0xf] %v3822
        %3887 = vst [vmem:[%s450 + $0x16c] sm:$0xf] %v3823
        %3888 = vst [vmem:[%s450 + $0x178] sm:$0xf] %v3824
        %v3890 = vshrl.u32 %v3793, 16
        %v3892 = vrot.slane %v3890, 7
        %v3893 = vshll.u32 %v3793, 16
        %v3895 = vor.u32 %v3892, %v3893
        %v3896 = vrot.slane %v3892, 4
        %v3898 = vshrl.u32 %v3794, 16
        %v3900 = vrot.slane %v3898, 7
        %v3901 = vshll.u32 %v3794, 16
        %v3903 = vor.u32 %v3900, %v3901
        %v3904 = vsel %vm484, %v3896, %v3903
        %v3906 = vshrl.u32 %v3795, 16
        %v3908 = vrot.slane %v3906, 7
        %v3909 = vshll.u32 %v3795, 16
        %v3911 = vor.u32 %v3908, %v3909
        %v3912 = vrot.slane %v3908, 4
        %v3914 = vshrl.u32 %v3796, 16
        %v3916 = vrot.slane %v3914, 7
        %v3917 = vshll.u32 %v3796, 16
        %v3919 = vor.u32 %v3916, %v3917
        %v3920 = vsel %vm484, %v3912, %v3919
        %v3922 = vshrl.u32 %v3797, 16
        %v3924 = vrot.slane %v3922, 7
        %v3925 = vshll.u32 %v3797, 16
        %v3927 = vor.u32 %v3924, %v3925
        %v3928 = vrot.slane %v3924, 4
        %v3930 = vshrl.u32 %v3798, 16
        %v3932 = vrot.slane %v3930, 7
        %v3933 = vshll.u32 %v3798, 16
        %v3935 = vor.u32 %v3932, %v3933
        %v3936 = vsel %vm484, %v3928, %v3935
        %v3938 = vshrl.u32 %v3799, 16
        %v3940 = vrot.slane %v3938, 7
        %v3941 = vshll.u32 %v3799, 16
        %v3943 = vor.u32 %v3940, %v3941
        %v3944 = vrot.slane %v3940, 4
        %v3946 = vshrl.u32 %v3800, 16
        %v3948 = vrot.slane %v3946, 7
        %v3949 = vshll.u32 %v3800, 16
        %v3951 = vor.u32 %v3948, %v3949
        %v3952 = vsel %vm484, %v3944, %v3951
        %v3954 = vshrl.u32 %v3801, 16
        %v3956 = vrot.slane %v3954, 7
        %v3957 = vshll.u32 %v3801, 16
        %v3959 = vor.u32 %v3956, %v3957
        %v3960 = vrot.slane %v3956, 4
        %v3962 = vshrl.u32 %v3802, 16
        %v3964 = vrot.slane %v3962, 7
        %v3965 = vshll.u32 %v3802, 16
        %v3967 = vor.u32 %v3964, %v3965
        %v3968 = vsel %vm484, %v3960, %v3967
        %v3970 = vshrl.u32 %v3803, 16
        %v3972 = vrot.slane %v3970, 7
        %v3973 = vshll.u32 %v3803, 16
        %v3975 = vor.u32 %v3972, %v3973
        %v3976 = vrot.slane %v3972, 4
        %v3978 = vshrl.u32 %v3804, 16
        %v3980 = vrot.slane %v3978, 7
        %v3981 = vshll.u32 %v3804, 16
        %v3983 = vor.u32 %v3980, %v3981
        %v3984 = vsel %vm484, %v3976, %v3983
        %v3986 = vshrl.u32 %v3805, 16
        %v3988 = vrot.slane %v3986, 7
        %v3989 = vshll.u32 %v3805, 16
        %v3991 = vor.u32 %v3988, %v3989
        %v3992 = vrot.slane %v3988, 4
        %v3994 = vshrl.u32 %v3806, 16
        %v3996 = vrot.slane %v3994, 7
        %v3997 = vshll.u32 %v3806, 16
        %v3999 = vor.u32 %v3996, %v3997
        %v4000 = vsel %vm484, %v3992, %v3999
        %v4002 = vshrl.u32 %v3807, 16
        %v4004 = vrot.slane %v4002, 7
        %v4005 = vshll.u32 %v3807, 16
        %v4007 = vor.u32 %v4004, %v4005
        %v4008 = vrot.slane %v4004, 4
        %v4010 = vshrl.u32 %v3808, 16
        %v4012 = vrot.slane %v4010, 7
        %v4013 = vshll.u32 %v3808, 16
        %v4015 = vor.u32 %v4012, %v4013
        %v4016 = vsel %vm484, %v4008, %v4015
        %v4018 = vshrl.u32 %v3809, 16
        %v4020 = vrot.slane %v4018, 7
        %v4021 = vshll.u32 %v3809, 16
        %v4023 = vor.u32 %v4020, %v4021
        %v4024 = vrot.slane %v4020, 4
        %v4026 = vshrl.u32 %v3810, 16
        %v4028 = vrot.slane %v4026, 7
        %v4029 = vshll.u32 %v3810, 16
        %v4031 = vor.u32 %v4028, %v4029
        %v4032 = vsel %vm484, %v4024, %v4031
        %v4034 = vshrl.u32 %v3811, 16
        %v4036 = vrot.slane %v4034, 7
        %v4037 = vshll.u32 %v3811, 16
        %v4039 = vor.u32 %v4036, %v4037
        %v4040 = vrot.slane %v4036, 4
        %v4042 = vshrl.u32 %v3812, 16
        %v4044 = vrot.slane %v4042, 7
        %v4045 = vshll.u32 %v3812, 16
        %v4047 = vor.u32 %v4044, %v4045
        %v4048 = vsel %vm484, %v4040, %v4047
        %v4050 = vshrl.u32 %v3813, 16
        %v4052 = vrot.slane %v4050, 7
        %v4053 = vshll.u32 %v3813, 16
        %v4055 = vor.u32 %v4052, %v4053
        %v4056 = vrot.slane %v4052, 4
        %v4058 = vshrl.u32 %v3814, 16
        %v4060 = vrot.slane %v4058, 7
        %v4061 = vshll.u32 %v3814, 16
        %v4063 = vor.u32 %v4060, %v4061
        %v4064 = vsel %vm484, %v4056, %v4063
        %v4066 = vshrl.u32 %v3815, 16
        %v4068 = vrot.slane %v4066, 7
        %v4069 = vshll.u32 %v3815, 16
        %v4071 = vor.u32 %v4068, %v4069
        %v4072 = vrot.slane %v4068, 4
        %v4074 = vshrl.u32 %v3816, 16
        %v4076 = vrot.slane %v4074, 7
        %v4077 = vshll.u32 %v3816, 16
        %v4079 = vor.u32 %v4076, %v4077
        %v4080 = vsel %vm484, %v4072, %v4079
        %v4082 = vshrl.u32 %v3817, 16
        %v4084 = vrot.slane %v4082, 7
        %v4085 = vshll.u32 %v3817, 16
        %v4087 = vor.u32 %v4084, %v4085
        %v4088 = vrot.slane %v4084, 4
        %v4090 = vshrl.u32 %v3818, 16
        %v4092 = vrot.slane %v4090, 7
        %v4093 = vshll.u32 %v3818, 16
        %v4095 = vor.u32 %v4092, %v4093
        %v4096 = vsel %vm484, %v4088, %v4095
        %v4098 = vshrl.u32 %v3819, 16
        %v4100 = vrot.slane %v4098, 7
        %v4101 = vshll.u32 %v3819, 16
        %v4103 = vor.u32 %v4100, %v4101
        %v4104 = vrot.slane %v4100, 4
        %v4106 = vshrl.u32 %v3820, 16
        %v4108 = vrot.slane %v4106, 7
        %v4109 = vshll.u32 %v3820, 16
        %v4111 = vor.u32 %v4108, %v4109
        %v4112 = vsel %vm484, %v4104, %v4111
        %v4114 = vshrl.u32 %v3821, 16
        %v4116 = vrot.slane %v4114, 7
        %v4117 = vshll.u32 %v3821, 16
        %v4119 = vor.u32 %v4116, %v4117
        %v4120 = vrot.slane %v4116, 4
        %v4122 = vshrl.u32 %v3822, 16
        %v4124 = vrot.slane %v4122, 7
        %v4125 = vshll.u32 %v3822, 16
        %v4127 = vor.u32 %v4124, %v4125
        %v4128 = vsel %vm484, %v4120, %v4127
        %v4130 = vshrl.u32 %v3823, 16
        %v4132 = vrot.slane %v4130, 7
        %v4133 = vshll.u32 %v3823, 16
        %v4135 = vor.u32 %v4132, %v4133
        %v4136 = vrot.slane %v4132, 4
        %v4138 = vshrl.u32 %v3824, 16
        %v4140 = vrot.slane %v4138, 7
        %v4141 = vshll.u32 %v3824, 16
        %v4143 = vor.u32 %v4140, %v4141
        %v4144 = vsel %vm484, %v4136, %v4143
        %v4177 = vld [vmem:[%s450] sm:$0xf]
        %v4178 = vsel %vm775, %v3895, %v4177
        %4179 = vst [vmem:[%s450] sm:$0xf] %v4178
        %4180 = vst [vmem:[%s450 + $0xc] sm:$0xf] %v3904
        %v4181 = vld [vmem:[%s450 + $0x18] sm:$0xf]
        %v4182 = vsel %vm775, %v3911, %v4181
        %4183 = vst [vmem:[%s450 + $0x18] sm:$0xf] %v4182
        %4184 = vst [vmem:[%s450 + $0x24] sm:$0xf] %v3920
        %v4185 = vld [vmem:[%s450 + $0x30] sm:$0xf]
        %v4186 = vsel %vm775, %v3927, %v4185
        %4187 = vst [vmem:[%s450 + $0x30] sm:$0xf] %v4186
        %4188 = vst [vmem:[%s450 + $0x3c] sm:$0xf] %v3936
        %v4189 = vld [vmem:[%s450 + $0x48] sm:$0xf]
        %v4190 = vsel %vm775, %v3943, %v4189
        %4191 = vst [vmem:[%s450 + $0x48] sm:$0xf] %v4190
        %4192 = vst [vmem:[%s450 + $0x54] sm:$0xf] %v3952
        %v4193 = vld [vmem:[%s450 + $0x60] sm:$0xf]
        %v4194 = vsel %vm775, %v3959, %v4193
        %4195 = vst [vmem:[%s450 + $0x60] sm:$0xf] %v4194
        %4196 = vst [vmem:[%s450 + $0x6c] sm:$0xf] %v3968
        %v4197 = vld [vmem:[%s450 + $0x78] sm:$0xf]
        %v4198 = vsel %vm775, %v3975, %v4197
        %4199 = vst [vmem:[%s450 + $0x78] sm:$0xf] %v4198
        %4200 = vst [vmem:[%s450 + $0x84] sm:$0xf] %v3984
        %v4201 = vld [vmem:[%s450 + $0x90] sm:$0xf]
        %v4202 = vsel %vm775, %v3991, %v4201
        %4203 = vst [vmem:[%s450 + $0x90] sm:$0xf] %v4202
        %4204 = vst [vmem:[%s450 + $0x9c] sm:$0xf] %v4000
        %v4205 = vld [vmem:[%s450 + $0xa8] sm:$0xf]
        %v4206 = vsel %vm775, %v4007, %v4205
        %4207 = vst [vmem:[%s450 + $0xa8] sm:$0xf] %v4206
        %4208 = vst [vmem:[%s450 + $0xb4] sm:$0xf] %v4016
        %v4209 = vld [vmem:[%s450 + $0xc0] sm:$0xf]
        %v4210 = vsel %vm775, %v4023, %v4209
        %4211 = vst [vmem:[%s450 + $0xc0] sm:$0xf] %v4210
        %4212 = vst [vmem:[%s450 + $0xcc] sm:$0xf] %v4032
        %v4213 = vld [vmem:[%s450 + $0xd8] sm:$0xf]
        %v4214 = vsel %vm775, %v4039, %v4213
        %4215 = vst [vmem:[%s450 + $0xd8] sm:$0xf] %v4214
        %4216 = vst [vmem:[%s450 + $0xe4] sm:$0xf] %v4048
        %v4217 = vld [vmem:[%s450 + $0xf0] sm:$0xf]
        %v4218 = vsel %vm775, %v4055, %v4217
        %4219 = vst [vmem:[%s450 + $0xf0] sm:$0xf] %v4218
        %4220 = vst [vmem:[%s450 + $0xfc] sm:$0xf] %v4064
        %v4221 = vld [vmem:[%s450 + $0x108] sm:$0xf]
        %v4222 = vsel %vm775, %v4071, %v4221
        %4223 = vst [vmem:[%s450 + $0x108] sm:$0xf] %v4222
        %4224 = vst [vmem:[%s450 + $0x114] sm:$0xf] %v4080
        %v4225 = vld [vmem:[%s450 + $0x120] sm:$0xf]
        %v4226 = vsel %vm775, %v4087, %v4225
        %4227 = vst [vmem:[%s450 + $0x120] sm:$0xf] %v4226
        %4228 = vst [vmem:[%s450 + $0x12c] sm:$0xf] %v4096
        %v4229 = vld [vmem:[%s450 + $0x138] sm:$0xf]
        %v4230 = vsel %vm775, %v4103, %v4229
        %4231 = vst [vmem:[%s450 + $0x138] sm:$0xf] %v4230
        %4232 = vst [vmem:[%s450 + $0x144] sm:$0xf] %v4112
        %v4233 = vld [vmem:[%s450 + $0x150] sm:$0xf]
        %v4234 = vsel %vm775, %v4119, %v4233
        %4235 = vst [vmem:[%s450 + $0x150] sm:$0xf] %v4234
        %4236 = vst [vmem:[%s450 + $0x15c] sm:$0xf] %v4128
        %v4237 = vld [vmem:[%s450 + $0x168] sm:$0xf]
        %v4238 = vsel %vm775, %v4135, %v4237
        %4239 = vst [vmem:[%s450 + $0x168] sm:$0xf] %v4238
        %4240 = vst [vmem:[%s450 + $0x174] sm:$0xf] %v4144
        %v4241 = vrot.slane %v3890, 4
        %v4242 = vrot.slane %v3893, 5
        %v4243 = vor.u32 %v4241, %v4242
        %v4244 = vrot.slane %v4243, 4
        %v4245 = vrot.slane %v3901, 5
        %v4246 = vsel %vm842, %v4244, %v4245
        %v4247 = vrot.slane %v3898, 4
        %v4248 = vor.u32 %v4247, %v4245
        %v4249 = vrot.slane %v4248, 4
        %v4250 = vrot.slane %v3906, 4
        %v4251 = vrot.slane %v3909, 5
        %v4252 = vor.u32 %v4250, %v4251
        %v4253 = vrot.slane %v4252, 4
        %v4254 = vrot.slane %v3917, 5
        %v4255 = vsel %vm842, %v4253, %v4254
        %v4256 = vrot.slane %v3914, 4
        %v4257 = vor.u32 %v4256, %v4254
        %v4258 = vrot.slane %v4257, 4
        %v4259 = vrot.slane %v3922, 4
        %v4260 = vrot.slane %v3925, 5
        %v4261 = vor.u32 %v4259, %v4260
        %v4262 = vrot.slane %v4261, 4
        %v4263 = vrot.slane %v3933, 5
        %v4264 = vsel %vm842, %v4262, %v4263
        %v4265 = vrot.slane %v3930, 4
        %v4266 = vor.u32 %v4265, %v4263
        %v4267 = vrot.slane %v4266, 4
        %v4268 = vrot.slane %v3938, 4
        %v4269 = vrot.slane %v3941, 5
        %v4270 = vor.u32 %v4268, %v4269
        %v4271 = vrot.slane %v4270, 4
        %v4272 = vrot.slane %v3949, 5
        %v4273 = vsel %vm842, %v4271, %v4272
        %v4274 = vrot.slane %v3946, 4
        %v4275 = vor.u32 %v4274, %v4272
        %v4276 = vrot.slane %v4275, 4
        %v4277 = vrot.slane %v3954, 4
        %v4278 = vrot.slane %v3957, 5
        %v4279 = vor.u32 %v4277, %v4278
        %v4280 = vrot.slane %v4279, 4
        %v4281 = vrot.slane %v3965, 5
        %v4282 = vsel %vm842, %v4280, %v4281
        %v4283 = vrot.slane %v3962, 4
        %v4284 = vor.u32 %v4283, %v4281
        %v4285 = vrot.slane %v4284, 4
        %v4286 = vrot.slane %v3970, 4
        %v4287 = vrot.slane %v3973, 5
        %v4288 = vor.u32 %v4286, %v4287
        %v4289 = vrot.slane %v4288, 4
        %v4290 = vrot.slane %v3981, 5
        %v4291 = vsel %vm842, %v4289, %v4290
        %v4292 = vrot.slane %v3978, 4
        %v4293 = vor.u32 %v4292, %v4290
        %v4294 = vrot.slane %v4293, 4
        %v4295 = vrot.slane %v3986, 4
        %v4296 = vrot.slane %v3989, 5
        %v4297 = vor.u32 %v4295, %v4296
        %v4298 = vrot.slane %v4297, 4
        %v4299 = vrot.slane %v3997, 5
        %v4300 = vsel %vm842, %v4298, %v4299
        %v4301 = vrot.slane %v3994, 4
        %v4302 = vor.u32 %v4301, %v4299
        %v4303 = vrot.slane %v4302, 4
        %v4304 = vrot.slane %v4002, 4
        %v4305 = vrot.slane %v4005, 5
        %v4306 = vor.u32 %v4304, %v4305
        %v4307 = vrot.slane %v4306, 4
        %v4308 = vrot.slane %v4013, 5
        %v4309 = vsel %vm842, %v4307, %v4308
        %v4310 = vrot.slane %v4010, 4
        %v4311 = vor.u32 %v4310, %v4308
        %v4312 = vrot.slane %v4311, 4
        %v4313 = vrot.slane %v4018, 4
        %v4314 = vrot.slane %v4021, 5
        %v4315 = vor.u32 %v4313, %v4314
        %v4316 = vrot.slane %v4315, 4
        %v4317 = vrot.slane %v4029, 5
        %v4318 = vsel %vm842, %v4316, %v4317
        %v4319 = vrot.slane %v4026, 4
        %v4320 = vor.u32 %v4319, %v4317
        %v4321 = vrot.slane %v4320, 4
        %v4322 = vrot.slane %v4034, 4
        %v4323 = vrot.slane %v4037, 5
        %v4324 = vor.u32 %v4322, %v4323
        %v4325 = vrot.slane %v4324, 4
        %v4326 = vrot.slane %v4045, 5
        %v4327 = vsel %vm842, %v4325, %v4326
        %v4328 = vrot.slane %v4042, 4
        %v4329 = vor.u32 %v4328, %v4326
        %v4330 = vrot.slane %v4329, 4
        %v4331 = vrot.slane %v4050, 4
        %v4332 = vrot.slane %v4053, 5
        %v4333 = vor.u32 %v4331, %v4332
        %v4334 = vrot.slane %v4333, 4
        %v4335 = vrot.slane %v4061, 5
        %v4336 = vsel %vm842, %v4334, %v4335
        %v4337 = vrot.slane %v4058, 4
        %v4338 = vor.u32 %v4337, %v4335
        %v4339 = vrot.slane %v4338, 4
        %v4340 = vrot.slane %v4066, 4
        %v4341 = vrot.slane %v4069, 5
        %v4342 = vor.u32 %v4340, %v4341
        %v4343 = vrot.slane %v4342, 4
        %v4344 = vrot.slane %v4077, 5
        %v4345 = vsel %vm842, %v4343, %v4344
        %v4346 = vrot.slane %v4074, 4
        %v4347 = vor.u32 %v4346, %v4344
        %v4348 = vrot.slane %v4347, 4
        %v4349 = vrot.slane %v4082, 4
        %v4350 = vrot.slane %v4085, 5
        %v4351 = vor.u32 %v4349, %v4350
        %v4352 = vrot.slane %v4351, 4
        %v4353 = vrot.slane %v4093, 5
        %v4354 = vsel %vm842, %v4352, %v4353
        %v4355 = vrot.slane %v4090, 4
        %v4356 = vor.u32 %v4355, %v4353
        %v4357 = vrot.slane %v4356, 4
        %v4358 = vrot.slane %v4098, 4
        %v4359 = vrot.slane %v4101, 5
        %v4360 = vor.u32 %v4358, %v4359
        %v4361 = vrot.slane %v4360, 4
        %v4362 = vrot.slane %v4109, 5
        %v4363 = vsel %vm842, %v4361, %v4362
        %v4364 = vrot.slane %v4106, 4
        %v4365 = vor.u32 %v4364, %v4362
        %v4366 = vrot.slane %v4365, 4
        %v4367 = vrot.slane %v4114, 4
        %v4368 = vrot.slane %v4117, 5
        %v4369 = vor.u32 %v4367, %v4368
        %v4370 = vrot.slane %v4369, 4
        %v4371 = vrot.slane %v4125, 5
        %v4372 = vsel %vm842, %v4370, %v4371
        %v4373 = vrot.slane %v4122, 4
        %v4374 = vor.u32 %v4373, %v4371
        %v4375 = vrot.slane %v4374, 4
        %v4376 = vrot.slane %v4130, 4
        %v4377 = vrot.slane %v4133, 5
        %v4378 = vor.u32 %v4376, %v4377
        %v4379 = vrot.slane %v4378, 4
        %v4380 = vrot.slane %v4141, 5
        %v4381 = vsel %vm842, %v4379, %v4380
        %v4382 = vrot.slane %v4138, 4
        %v4383 = vor.u32 %v4382, %v4380
        %v4384 = vrot.slane %v4383, 4
        %4417 = vst [vmem:[%s450 + $0x8] sm:$0xf] %v4246
        %v4418 = vld [vmem:[%s450 + $0x14] sm:$0xf]
        %v4419 = vsel %vm1020, %v4249, %v4418
        %4420 = vst [vmem:[%s450 + $0x14] sm:$0xf] %v4419
        %4421 = vst [vmem:[%s450 + $0x20] sm:$0xf] %v4255
        %v4422 = vld [vmem:[%s450 + $0x2c] sm:$0xf]
        %v4423 = vsel %vm1020, %v4258, %v4422
        %4424 = vst [vmem:[%s450 + $0x2c] sm:$0xf] %v4423
        %4425 = vst [vmem:[%s450 + $0x38] sm:$0xf] %v4264
        %v4426 = vld [vmem:[%s450 + $0x44] sm:$0xf]
        %v4427 = vsel %vm1020, %v4267, %v4426
        %4428 = vst [vmem:[%s450 + $0x44] sm:$0xf] %v4427
        %4429 = vst [vmem:[%s450 + $0x50] sm:$0xf] %v4273
        %v4430 = vld [vmem:[%s450 + $0x5c] sm:$0xf]
        %v4431 = vsel %vm1020, %v4276, %v4430
        %4432 = vst [vmem:[%s450 + $0x5c] sm:$0xf] %v4431
        %4433 = vst [vmem:[%s450 + $0x68] sm:$0xf] %v4282
        %v4434 = vld [vmem:[%s450 + $0x74] sm:$0xf]
        %v4435 = vsel %vm1020, %v4285, %v4434
        %4436 = vst [vmem:[%s450 + $0x74] sm:$0xf] %v4435
        %4437 = vst [vmem:[%s450 + $0x80] sm:$0xf] %v4291
        %v4438 = vld [vmem:[%s450 + $0x8c] sm:$0xf]
        %v4439 = vsel %vm1020, %v4294, %v4438
        %4440 = vst [vmem:[%s450 + $0x8c] sm:$0xf] %v4439
        %4441 = vst [vmem:[%s450 + $0x98] sm:$0xf] %v4300
        %v4442 = vld [vmem:[%s450 + $0xa4] sm:$0xf]
        %v4443 = vsel %vm1020, %v4303, %v4442
        %4444 = vst [vmem:[%s450 + $0xa4] sm:$0xf] %v4443
        %4445 = vst [vmem:[%s450 + $0xb0] sm:$0xf] %v4309
        %v4446 = vld [vmem:[%s450 + $0xbc] sm:$0xf]
        %v4447 = vsel %vm1020, %v4312, %v4446
        %4448 = vst [vmem:[%s450 + $0xbc] sm:$0xf] %v4447
        %4449 = vst [vmem:[%s450 + $0xc8] sm:$0xf] %v4318
        %v4450 = vld [vmem:[%s450 + $0xd4] sm:$0xf]
        %v4451 = vsel %vm1020, %v4321, %v4450
        %4452 = vst [vmem:[%s450 + $0xd4] sm:$0xf] %v4451
        %4453 = vst [vmem:[%s450 + $0xe0] sm:$0xf] %v4327
        %v4454 = vld [vmem:[%s450 + $0xec] sm:$0xf]
        %v4455 = vsel %vm1020, %v4330, %v4454
        %4456 = vst [vmem:[%s450 + $0xec] sm:$0xf] %v4455
        %4457 = vst [vmem:[%s450 + $0xf8] sm:$0xf] %v4336
        %v4458 = vld [vmem:[%s450 + $0x104] sm:$0xf]
        %v4459 = vsel %vm1020, %v4339, %v4458
        %4460 = vst [vmem:[%s450 + $0x104] sm:$0xf] %v4459
        %4461 = vst [vmem:[%s450 + $0x110] sm:$0xf] %v4345
        %v4462 = vld [vmem:[%s450 + $0x11c] sm:$0xf]
        %v4463 = vsel %vm1020, %v4348, %v4462
        %4464 = vst [vmem:[%s450 + $0x11c] sm:$0xf] %v4463
        %4465 = vst [vmem:[%s450 + $0x128] sm:$0xf] %v4354
        %v4466 = vld [vmem:[%s450 + $0x134] sm:$0xf]
        %v4467 = vsel %vm1020, %v4357, %v4466
        %4468 = vst [vmem:[%s450 + $0x134] sm:$0xf] %v4467
        %4469 = vst [vmem:[%s450 + $0x140] sm:$0xf] %v4363
        %v4470 = vld [vmem:[%s450 + $0x14c] sm:$0xf]
        %v4471 = vsel %vm1020, %v4366, %v4470
        %4472 = vst [vmem:[%s450 + $0x14c] sm:$0xf] %v4471
        %4473 = vst [vmem:[%s450 + $0x158] sm:$0xf] %v4372
        %v4474 = vld [vmem:[%s450 + $0x164] sm:$0xf]
        %v4475 = vsel %vm1020, %v4375, %v4474
        %4476 = vst [vmem:[%s450 + $0x164] sm:$0xf] %v4475
        %4477 = vst [vmem:[%s450 + $0x170] sm:$0xf] %v4381
        %v4478 = vld [vmem:[%s450 + $0x17c] sm:$0xf]
        %v4479 = vsel %vm1020, %v4384, %v4478
        %4480 = vst [vmem:[%s450 + $0x17c] sm:$0xf] %v4479
        %v4481 = vld [vmem:[#allocation2] sm:$0xff]
        %v4482 = vld [vmem:[#allocation2 + $0x8] sm:$0xf]
        %v4483 = vld [vmem:[#allocation2 + $0xc] sm:$0xff]
        %v4484 = vld [vmem:[#allocation2 + $0x14] sm:$0xf]
        %v4485 = vld [vmem:[#allocation2 + $0x18] sm:$0xff]
        %v4486 = vld [vmem:[#allocation2 + $0x20] sm:$0xf]
        %v4487 = vld [vmem:[#allocation2 + $0x24] sm:$0xff]
        %v4488 = vld [vmem:[#allocation2 + $0x2c] sm:$0xf]
        %v4489 = vld [vmem:[#allocation2 + $0x30] sm:$0xff]
        %v4490 = vld [vmem:[#allocation2 + $0x38] sm:$0xf]
        %v4491 = vld [vmem:[#allocation2 + $0x3c] sm:$0xff]
        %v4492 = vld [vmem:[#allocation2 + $0x44] sm:$0xf]
        %v4493 = vld [vmem:[#allocation2 + $0x48] sm:$0xff]
        %v4494 = vld [vmem:[#allocation2 + $0x50] sm:$0xf]
        %v4495 = vld [vmem:[#allocation2 + $0x54] sm:$0xff]
        %v4496 = vld [vmem:[#allocation2 + $0x5c] sm:$0xf]
        %v4497 = vld [vmem:[#allocation2 + $0x60] sm:$0xff]
        %v4498 = vld [vmem:[#allocation2 + $0x68] sm:$0xf]
        %v4499 = vld [vmem:[#allocation2 + $0x6c] sm:$0xff]
        %v4500 = vld [vmem:[#allocation2 + $0x74] sm:$0xf]
        %v4501 = vld [vmem:[#allocation2 + $0x78] sm:$0xff]
        %v4502 = vld [vmem:[#allocation2 + $0x80] sm:$0xf]
        %v4503 = vld [vmem:[#allocation2 + $0x84] sm:$0xff]
        %v4504 = vld [vmem:[#allocation2 + $0x8c] sm:$0xf]
        %v4505 = vld [vmem:[#allocation2 + $0x90] sm:$0xff]
        %v4506 = vld [vmem:[#allocation2 + $0x98] sm:$0xf]
        %v4507 = vld [vmem:[#allocation2 + $0x9c] sm:$0xff]
        %v4508 = vld [vmem:[#allocation2 + $0xa4] sm:$0xf]
        %v4509 = vld [vmem:[#allocation2 + $0xa8] sm:$0xff]
        %v4510 = vld [vmem:[#allocation2 + $0xb0] sm:$0xf]
        %v4511 = vld [vmem:[#allocation2 + $0xb4] sm:$0xff]
        %v4512 = vld [vmem:[#allocation2 + $0xbc] sm:$0xf]
        %v4513 = vld [vmem:[#allocation2 + $0xc0] sm:$0xff]
        %v4514 = vld [vmem:[#allocation2 + $0xc8] sm:$0xf]
        %v4515 = vld [vmem:[#allocation2 + $0xcc] sm:$0xff]
        %v4516 = vld [vmem:[#allocation2 + $0xd4] sm:$0xf]
        %v4517 = vld [vmem:[#allocation2 + $0xd8] sm:$0xff]
        %v4518 = vld [vmem:[#allocation2 + $0xe0] sm:$0xf]
        %v4519 = vld [vmem:[#allocation2 + $0xe4] sm:$0xff]
        %v4520 = vld [vmem:[#allocation2 + $0xec] sm:$0xf]
        %v4521 = vld [vmem:[#allocation2 + $0xf0] sm:$0xff]
        %v4522 = vld [vmem:[#allocation2 + $0xf8] sm:$0xf]
        %v4523 = vld [vmem:[#allocation2 + $0xfc] sm:$0xff]
        %v4524 = vld [vmem:[#allocation2 + $0x104] sm:$0xf]
        %v4525 = vld [vmem:[#allocation2 + $0x108] sm:$0xff]
        %v4526 = vld [vmem:[#allocation2 + $0x110] sm:$0xf]
        %v4527 = vld [vmem:[#allocation2 + $0x114] sm:$0xff]
        %v4528 = vld [vmem:[#allocation2 + $0x11c] sm:$0xf]
        %v4529 = vld [vmem:[#allocation2 + $0x120] sm:$0xff]
        %v4530 = vld [vmem:[#allocation2 + $0x128] sm:$0xf]
        %v4531 = vld [vmem:[#allocation2 + $0x12c] sm:$0xff]
        %v4532 = vld [vmem:[#allocation2 + $0x134] sm:$0xf]
        %v4533 = vld [vmem:[#allocation2 + $0x138] sm:$0xff]
        %v4534 = vld [vmem:[#allocation2 + $0x140] sm:$0xf]
        %v4535 = vld [vmem:[#allocation2 + $0x144] sm:$0xff]
        %v4536 = vld [vmem:[#allocation2 + $0x14c] sm:$0xf]
        %v4537 = vld [vmem:[#allocation2 + $0x150] sm:$0xff]
        %v4538 = vld [vmem:[#allocation2 + $0x158] sm:$0xf]
        %v4539 = vld [vmem:[#allocation2 + $0x15c] sm:$0xff]
        %v4540 = vld [vmem:[#allocation2 + $0x164] sm:$0xf]
        %v4541 = vld [vmem:[#allocation2 + $0x168] sm:$0xff]
        %v4542 = vld [vmem:[#allocation2 + $0x170] sm:$0xf]
        %v4543 = vld [vmem:[#allocation2 + $0x174] sm:$0xff]
        %v4544 = vld [vmem:[#allocation2 + $0x17c] sm:$0xf]
        %v4545 = vld [vmem:[#allocation3] sm:$0xf]
        %v4546 = vld [vmem:[#allocation3 + $0x4] sm:$0xf]
        %v4547 = vld [vmem:[#allocation3 + $0x8] sm:$0xf]
        %v4548 = vld [vmem:[#allocation3 + $0xc] sm:$0xf]
        %v4549 = vld [vmem:[#allocation3 + $0x10] sm:$0xf]
        %v4550 = vld [vmem:[#allocation3 + $0x14] sm:$0xf]
        %v4551 = vld [vmem:[#allocation3 + $0x18] sm:$0xf]
        %v4552 = vld [vmem:[#allocation3 + $0x1c] sm:$0xf]
        %v4553 = vld [vmem:[#allocation3 + $0x20] sm:$0xf]
        %v4554 = vld [vmem:[#allocation3 + $0x24] sm:$0xf]
        %v4555 = vld [vmem:[#allocation3 + $0x28] sm:$0xf]
        %v4556 = vld [vmem:[#allocation3 + $0x2c] sm:$0xf]
        %v4557 = vld [vmem:[#allocation3 + $0x30] sm:$0xf]
        %v4558 = vld [vmem:[#allocation3 + $0x34] sm:$0xf]
        %v4559 = vld [vmem:[#allocation3 + $0x38] sm:$0xf]
        %v4560 = vld [vmem:[#allocation3 + $0x3c] sm:$0xf]
        %v4561 = vld [vmem:[#allocation3 + $0x40] sm:$0xf]
        %v4562 = vld [vmem:[#allocation3 + $0x44] sm:$0xf]
        %v4563 = vld [vmem:[#allocation3 + $0x48] sm:$0xf]
        %v4564 = vld [vmem:[#allocation3 + $0x4c] sm:$0xf]
        %v4565 = vld [vmem:[#allocation3 + $0x50] sm:$0xf]
        %v4566 = vld [vmem:[#allocation3 + $0x54] sm:$0xf]
        %v4567 = vld [vmem:[#allocation3 + $0x58] sm:$0xf]
        %v4568 = vld [vmem:[#allocation3 + $0x5c] sm:$0xf]
        %v4569 = vld [vmem:[#allocation3 + $0x60] sm:$0xf]
        %v4570 = vld [vmem:[#allocation3 + $0x64] sm:$0xf]
        %v4571 = vld [vmem:[#allocation3 + $0x68] sm:$0xf]
        %v4572 = vld [vmem:[#allocation3 + $0x6c] sm:$0xf]
        %v4573 = vld [vmem:[#allocation3 + $0x70] sm:$0xf]
        %v4574 = vld [vmem:[#allocation3 + $0x74] sm:$0xf]
        %v4575 = vld [vmem:[#allocation3 + $0x78] sm:$0xf]
        %v4576 = vld [vmem:[#allocation3 + $0x7c] sm:$0xf]
        %v4577 = vld [vmem:[#allocation3 + $0x80] sm:$0xf]
        %v4578 = vld [vmem:[#allocation3 + $0x84] sm:$0xf]
        %v4579 = vld [vmem:[#allocation3 + $0x88] sm:$0xf]
        %v4580 = vld [vmem:[#allocation3 + $0x8c] sm:$0xf]
        %v4581 = vld [vmem:[#allocation3 + $0x90] sm:$0xf]
        %v4582 = vld [vmem:[#allocation3 + $0x94] sm:$0xf]
        %v4583 = vld [vmem:[#allocation3 + $0x98] sm:$0xf]
        %v4584 = vld [vmem:[#allocation3 + $0x9c] sm:$0xf]
        %v4585 = vld [vmem:[#allocation3 + $0xa0] sm:$0xf]
        %v4586 = vld [vmem:[#allocation3 + $0xa4] sm:$0xf]
        %v4587 = vld [vmem:[#allocation3 + $0xa8] sm:$0xf]
        %v4588 = vld [vmem:[#allocation3 + $0xac] sm:$0xf]
        %v4589 = vld [vmem:[#allocation3 + $0xb0] sm:$0xf]
        %v4590 = vld [vmem:[#allocation3 + $0xb4] sm:$0xf]
        %v4591 = vld [vmem:[#allocation3 + $0xb8] sm:$0xf]
        %v4592 = vld [vmem:[#allocation3 + $0xbc] sm:$0xf]
        %v4593 = vld [vmem:[%s450] sm:$0xff]
        %v4594 = vld [vmem:[%s450 + $0x8] sm:$0xf]
        %v4595 = vld [vmem:[%s450 + $0xc] sm:$0xff]
        %v4596 = vld [vmem:[%s450 + $0x14] sm:$0xf]
        %v4597 = vld [vmem:[%s450 + $0x18] sm:$0xff]
        %v4598 = vld [vmem:[%s450 + $0x20] sm:$0xf]
        %v4599 = vld [vmem:[%s450 + $0x24] sm:$0xff]
        %v4600 = vld [vmem:[%s450 + $0x2c] sm:$0xf]
        %v4601 = vld [vmem:[%s450 + $0x30] sm:$0xff]
        %v4602 = vld [vmem:[%s450 + $0x38] sm:$0xf]
        %v4603 = vld [vmem:[%s450 + $0x3c] sm:$0xff]
        %v4604 = vld [vmem:[%s450 + $0x44] sm:$0xf]
        %v4605 = vld [vmem:[%s450 + $0x48] sm:$0xff]
        %v4606 = vld [vmem:[%s450 + $0x50] sm:$0xf]
        %v4607 = vld [vmem:[%s450 + $0x54] sm:$0xff]
        %v4608 = vld [vmem:[%s450 + $0x5c] sm:$0xf]
        %v4609 = vld [vmem:[%s450 + $0x60] sm:$0xff]
        %v4610 = vld [vmem:[%s450 + $0x68] sm:$0xf]
        %v4611 = vld [vmem:[%s450 + $0x6c] sm:$0xff]
        %v4612 = vld [vmem:[%s450 + $0x74] sm:$0xf]
        %v4613 = vld [vmem:[%s450 + $0x78] sm:$0xff]
        %v4614 = vld [vmem:[%s450 + $0x80] sm:$0xf]
        %v4615 = vld [vmem:[%s450 + $0x84] sm:$0xff]
        %v4616 = vld [vmem:[%s450 + $0x8c] sm:$0xf]
        %v4617 = vld [vmem:[%s450 + $0x90] sm:$0xff]
        %v4618 = vld [vmem:[%s450 + $0x98] sm:$0xf]
        %v4619 = vld [vmem:[%s450 + $0x9c] sm:$0xff]
        %v4620 = vld [vmem:[%s450 + $0xa4] sm:$0xf]
        %v4621 = vld [vmem:[%s450 + $0xa8] sm:$0xff]
        %v4622 = vld [vmem:[%s450 + $0xb0] sm:$0xf]
        %v4623 = vld [vmem:[%s450 + $0xb4] sm:$0xff]
        %v4624 = vld [vmem:[%s450 + $0xbc] sm:$0xf]
        %v4625 = vld [vmem:[%s450 + $0xc0] sm:$0xff]
        %v4626 = vld [vmem:[%s450 + $0xc8] sm:$0xf]
        %v4627 = vld [vmem:[%s450 + $0xcc] sm:$0xff]
        %v4628 = vld [vmem:[%s450 + $0xd4] sm:$0xf]
        %v4629 = vld [vmem:[%s450 + $0xd8] sm:$0xff]
        %v4630 = vld [vmem:[%s450 + $0xe0] sm:$0xf]
        %v4631 = vld [vmem:[%s450 + $0xe4] sm:$0xff]
        %v4632 = vld [vmem:[%s450 + $0xec] sm:$0xf]
        %v4633 = vld [vmem:[%s450 + $0xf0] sm:$0xff]
        %v4634 = vld [vmem:[%s450 + $0xf8] sm:$0xf]
        %v4635 = vld [vmem:[%s450 + $0xfc] sm:$0xff]
        %v4636 = vld [vmem:[%s450 + $0x104] sm:$0xf]
        %v4637 = vld [vmem:[%s450 + $0x108] sm:$0xff]
        %v4638 = vld [vmem:[%s450 + $0x110] sm:$0xf]
        %v4639 = vld [vmem:[%s450 + $0x114] sm:$0xff]
        %v4640 = vld [vmem:[%s450 + $0x11c] sm:$0xf]
        %v4641 = vld [vmem:[%s450 + $0x120] sm:$0xff]
        %v4642 = vld [vmem:[%s450 + $0x128] sm:$0xf]
        %v4643 = vld [vmem:[%s450 + $0x12c] sm:$0xff]
        %v4644 = vld [vmem:[%s450 + $0x134] sm:$0xf]
        %v4645 = vld [vmem:[%s450 + $0x138] sm:$0xff]
        %v4646 = vld [vmem:[%s450 + $0x140] sm:$0xf]
        %v4647 = vld [vmem:[%s450 + $0x144] sm:$0xff]
        %v4648 = vld [vmem:[%s450 + $0x14c] sm:$0xf]
        %v4649 = vld [vmem:[%s450 + $0x150] sm:$0xff]
        %v4650 = vld [vmem:[%s450 + $0x158] sm:$0xf]
        %v4651 = vld [vmem:[%s450 + $0x15c] sm:$0xff]
        %v4652 = vld [vmem:[%s450 + $0x164] sm:$0xf]
        %v4653 = vld [vmem:[%s450 + $0x168] sm:$0xff]
        %v4654 = vld [vmem:[%s450 + $0x170] sm:$0xf]
        %v4655 = vld [vmem:[%s450 + $0x174] sm:$0xff]
        %v4656 = vld [vmem:[%s450 + $0x17c] sm:$0xf]
        %v4657 = vld [vmem:[#allocation3 + $0xc0] sm:$0xf]
        %v4658 = vld [vmem:[#allocation3 + $0xc4] sm:$0xf]
        %v4659 = vld [vmem:[#allocation3 + $0xc8] sm:$0xf]
        %v4660 = vld [vmem:[#allocation3 + $0xcc] sm:$0xf]
        %v4661 = vld [vmem:[#allocation3 + $0xd0] sm:$0xf]
        %v4662 = vld [vmem:[#allocation3 + $0xd4] sm:$0xf]
        %v4663 = vld [vmem:[#allocation3 + $0xd8] sm:$0xf]
        %v4664 = vld [vmem:[#allocation3 + $0xdc] sm:$0xf]
        %v4665 = vld [vmem:[#allocation3 + $0xe0] sm:$0xf]
        %v4666 = vld [vmem:[#allocation3 + $0xe4] sm:$0xf]
        %v4667 = vld [vmem:[#allocation3 + $0xe8] sm:$0xf]
        %v4668 = vld [vmem:[#allocation3 + $0xec] sm:$0xf]
        %v4669 = vld [vmem:[#allocation3 + $0xf0] sm:$0xf]
        %v4670 = vld [vmem:[#allocation3 + $0xf4] sm:$0xf]
        %v4671 = vld [vmem:[#allocation3 + $0xf8] sm:$0xf]
        %v4672 = vld [vmem:[#allocation3 + $0xfc] sm:$0xf]
        %v4673 = vld [vmem:[#allocation3 + $0x100] sm:$0xf]
        %v4674 = vld [vmem:[#allocation3 + $0x104] sm:$0xf]
        %v4675 = vld [vmem:[#allocation3 + $0x108] sm:$0xf]
        %v4676 = vld [vmem:[#allocation3 + $0x10c] sm:$0xf]
        %v4677 = vld [vmem:[#allocation3 + $0x110] sm:$0xf]
        %v4678 = vld [vmem:[#allocation3 + $0x114] sm:$0xf]
        %v4679 = vld [vmem:[#allocation3 + $0x118] sm:$0xf]
        %v4680 = vld [vmem:[#allocation3 + $0x11c] sm:$0xf]
        %v4681 = vld [vmem:[#allocation3 + $0x120] sm:$0xf]
        %v4682 = vld [vmem:[#allocation3 + $0x124] sm:$0xf]
        %v4683 = vld [vmem:[#allocation3 + $0x128] sm:$0xf]
        %v4684 = vld [vmem:[#allocation3 + $0x12c] sm:$0xf]
        %v4685 = vld [vmem:[#allocation3 + $0x130] sm:$0xf]
        %v4686 = vld [vmem:[#allocation3 + $0x134] sm:$0xf]
        %v4687 = vld [vmem:[#allocation3 + $0x138] sm:$0xf]
        %v4688 = vld [vmem:[#allocation3 + $0x13c] sm:$0xf]
        %v4689 = vld [vmem:[#allocation3 + $0x140] sm:$0xf]
        %v4690 = vld [vmem:[#allocation3 + $0x144] sm:$0xf]
        %v4691 = vld [vmem:[#allocation3 + $0x148] sm:$0xf]
        %v4692 = vld [vmem:[#allocation3 + $0x14c] sm:$0xf]
        %v4693 = vld [vmem:[#allocation3 + $0x150] sm:$0xf]
        %v4694 = vld [vmem:[#allocation3 + $0x154] sm:$0xf]
        %v4695 = vld [vmem:[#allocation3 + $0x158] sm:$0xf]
        %v4696 = vld [vmem:[#allocation3 + $0x15c] sm:$0xf]
        %v4697 = vld [vmem:[#allocation3 + $0x160] sm:$0xf]
        %v4698 = vld [vmem:[#allocation3 + $0x164] sm:$0xf]
        %v4699 = vld [vmem:[#allocation3 + $0x168] sm:$0xf]
        %v4700 = vld [vmem:[#allocation3 + $0x16c] sm:$0xf]
        %v4701 = vld [vmem:[#allocation3 + $0x170] sm:$0xf]
        %v4702 = vld [vmem:[#allocation3 + $0x174] sm:$0xf]
        %v4703 = vld [vmem:[#allocation3 + $0x178] sm:$0xf]
        %v4704 = vld [vmem:[#allocation3 + $0x17c] sm:$0xf]
        %v4769 = vunpack.c.l.b16 %v4593
        %v4770 = vunpack.c.h.b16 %v4593
        %v4771 = vunpack.c.l.b16 %v4594
        %v4772 = vunpack.c.l.b16 %v4595
        %v4773 = vunpack.c.h.b16 %v4595
        %v4774 = vunpack.c.l.b16 %v4596
        %v4775 = vunpack.c.l.b16 %v4597
        %v4776 = vunpack.c.h.b16 %v4597
        %v4777 = vunpack.c.l.b16 %v4598
        %v4778 = vunpack.c.l.b16 %v4599
        %v4779 = vunpack.c.h.b16 %v4599
        %v4780 = vunpack.c.l.b16 %v4600
        %v4781 = vunpack.c.l.b16 %v4601
        %v4782 = vunpack.c.h.b16 %v4601
        %v4783 = vunpack.c.l.b16 %v4602
        %v4784 = vunpack.c.l.b16 %v4603
        %v4785 = vunpack.c.h.b16 %v4603
        %v4786 = vunpack.c.l.b16 %v4604
        %v4787 = vunpack.c.l.b16 %v4605
        %v4788 = vunpack.c.h.b16 %v4605
        %v4789 = vunpack.c.l.b16 %v4606
        %v4790 = vunpack.c.l.b16 %v4607
        %v4791 = vunpack.c.h.b16 %v4607
        %v4792 = vunpack.c.l.b16 %v4608
        %v4793 = vunpack.c.l.b16 %v4609
        %v4794 = vunpack.c.h.b16 %v4609
        %v4795 = vunpack.c.l.b16 %v4610
        %v4796 = vunpack.c.l.b16 %v4611
        %v4797 = vunpack.c.h.b16 %v4611
        %v4798 = vunpack.c.l.b16 %v4612
        %v4799 = vunpack.c.l.b16 %v4613
        %v4800 = vunpack.c.h.b16 %v4613
        %v4801 = vunpack.c.l.b16 %v4614
        %v4802 = vunpack.c.l.b16 %v4615
        %v4803 = vunpack.c.h.b16 %v4615
        %v4804 = vunpack.c.l.b16 %v4616
        %v4805 = vunpack.c.l.b16 %v4617
        %v4806 = vunpack.c.h.b16 %v4617
        %v4807 = vunpack.c.l.b16 %v4618
        %v4808 = vunpack.c.l.b16 %v4619
        %v4809 = vunpack.c.h.b16 %v4619
        %v4810 = vunpack.c.l.b16 %v4620
        %v4811 = vunpack.c.l.b16 %v4621
        %v4812 = vunpack.c.h.b16 %v4621
        %v4813 = vunpack.c.l.b16 %v4622
        %v4814 = vunpack.c.l.b16 %v4623
        %v4815 = vunpack.c.h.b16 %v4623
        %v4816 = vunpack.c.l.b16 %v4624
        %v4817 = vunpack.c.l.b16 %v4625
        %v4818 = vunpack.c.h.b16 %v4625
        %v4819 = vunpack.c.l.b16 %v4626
        %v4820 = vunpack.c.l.b16 %v4627
        %v4821 = vunpack.c.h.b16 %v4627
        %v4822 = vunpack.c.l.b16 %v4628
        %v4823 = vunpack.c.l.b16 %v4629
        %v4824 = vunpack.c.h.b16 %v4629
        %v4825 = vunpack.c.l.b16 %v4630
        %v4826 = vunpack.c.l.b16 %v4631
        %v4827 = vunpack.c.h.b16 %v4631
        %v4828 = vunpack.c.l.b16 %v4632
        %v4829 = vunpack.c.l.b16 %v4633
        %v4830 = vunpack.c.h.b16 %v4633
        %v4831 = vunpack.c.l.b16 %v4634
        %v4832 = vunpack.c.l.b16 %v4635
        %v4833 = vunpack.c.h.b16 %v4635
        %v4834 = vunpack.c.l.b16 %v4636
        %v4835 = vunpack.c.l.b16 %v4637
        %v4836 = vunpack.c.h.b16 %v4637
        %v4837 = vunpack.c.l.b16 %v4638
        %v4838 = vunpack.c.l.b16 %v4639
        %v4839 = vunpack.c.h.b16 %v4639
        %v4840 = vunpack.c.l.b16 %v4640
        %v4841 = vunpack.c.l.b16 %v4641
        %v4842 = vunpack.c.h.b16 %v4641
        %v4843 = vunpack.c.l.b16 %v4642
        %v4844 = vunpack.c.l.b16 %v4643
        %v4845 = vunpack.c.h.b16 %v4643
        %v4846 = vunpack.c.l.b16 %v4644
        %v4847 = vunpack.c.l.b16 %v4645
        %v4848 = vunpack.c.h.b16 %v4645
        %v4849 = vunpack.c.l.b16 %v4646
        %v4850 = vunpack.c.l.b16 %v4647
        %v4851 = vunpack.c.h.b16 %v4647
        %v4852 = vunpack.c.l.b16 %v4648
        %v4853 = vunpack.c.l.b16 %v4649
        %v4854 = vunpack.c.h.b16 %v4649
        %v4855 = vunpack.c.l.b16 %v4650
        %v4856 = vunpack.c.l.b16 %v4651
        %v4857 = vunpack.c.h.b16 %v4651
        %v4858 = vunpack.c.l.b16 %v4652
        %v4859 = vunpack.c.l.b16 %v4653
        %v4860 = vunpack.c.h.b16 %v4653
        %v4861 = vunpack.c.l.b16 %v4654
        %v4862 = vunpack.c.l.b16 %v4655
        %v4863 = vunpack.c.h.b16 %v4655
        %v4864 = vunpack.c.l.b16 %v4656
        %v4865 = vpack.c.b16 %v4772, %v4769
        %v4866 = vpack.c.b16 %v4773, %v4770
        %v4867 = vpack.c.b16 %v4774, %v4771
        %v4868 = vpack.c.b16 %v4778, %v4775
        %v4869 = vpack.c.b16 %v4779, %v4776
        %v4870 = vpack.c.b16 %v4780, %v4777
        %v4871 = vpack.c.b16 %v4784, %v4781
        %v4872 = vpack.c.b16 %v4785, %v4782
        %v4873 = vpack.c.b16 %v4786, %v4783
        %v4874 = vpack.c.b16 %v4790, %v4787
        %v4875 = vpack.c.b16 %v4791, %v4788
        %v4876 = vpack.c.b16 %v4792, %v4789
        %v4877 = vpack.c.b16 %v4796, %v4793
        %v4878 = vpack.c.b16 %v4797, %v4794
        %v4879 = vpack.c.b16 %v4798, %v4795
        %v4880 = vpack.c.b16 %v4802, %v4799
        %v4881 = vpack.c.b16 %v4803, %v4800
        %v4882 = vpack.c.b16 %v4804, %v4801
        %v4883 = vpack.c.b16 %v4808, %v4805
        %v4884 = vpack.c.b16 %v4809, %v4806
        %v4885 = vpack.c.b16 %v4810, %v4807
        %v4886 = vpack.c.b16 %v4814, %v4811
        %v4887 = vpack.c.b16 %v4815, %v4812
        %v4888 = vpack.c.b16 %v4816, %v4813
        %v4889 = vpack.c.b16 %v4820, %v4817
        %v4890 = vpack.c.b16 %v4821, %v4818
        %v4891 = vpack.c.b16 %v4822, %v4819
        %v4892 = vpack.c.b16 %v4826, %v4823
        %v4893 = vpack.c.b16 %v4827, %v4824
        %v4894 = vpack.c.b16 %v4828, %v4825
        %v4895 = vpack.c.b16 %v4832, %v4829
        %v4896 = vpack.c.b16 %v4833, %v4830
        %v4897 = vpack.c.b16 %v4834, %v4831
        %v4898 = vpack.c.b16 %v4838, %v4835
        %v4899 = vpack.c.b16 %v4839, %v4836
        %v4900 = vpack.c.b16 %v4840, %v4837
        %v4901 = vpack.c.b16 %v4844, %v4841
        %v4902 = vpack.c.b16 %v4845, %v4842
        %v4903 = vpack.c.b16 %v4846, %v4843
        %v4904 = vpack.c.b16 %v4850, %v4847
        %v4905 = vpack.c.b16 %v4851, %v4848
        %v4906 = vpack.c.b16 %v4852, %v4849
        %v4907 = vpack.c.b16 %v4856, %v4853
        %v4908 = vpack.c.b16 %v4857, %v4854
        %v4909 = vpack.c.b16 %v4858, %v4855
        %v4910 = vpack.c.b16 %v4862, %v4859
        %v4911 = vpack.c.b16 %v4863, %v4860
        %v4912 = vpack.c.b16 %v4864, %v4861
        %v5009 = vunpack.c.l.b16 %v4657
        %v5010 = vunpack.c.l.b16 %v4658
        %v5011 = vunpack.c.l.b16 %v4659
        %v5012 = vunpack.c.l.b16 %v4660
        %v5013 = vunpack.c.l.b16 %v4661
        %v5014 = vunpack.c.l.b16 %v4662
        %v5015 = vunpack.c.l.b16 %v4663
        %v5016 = vunpack.c.l.b16 %v4664
        %v5017 = vunpack.c.l.b16 %v4665
        %v5018 = vunpack.c.l.b16 %v4666
        %v5019 = vunpack.c.l.b16 %v4667
        %v5020 = vunpack.c.l.b16 %v4668
        %v5021 = vunpack.c.l.b16 %v4669
        %v5022 = vunpack.c.l.b16 %v4670
        %v5023 = vunpack.c.l.b16 %v4671
        %v5024 = vunpack.c.l.b16 %v4672
        %v5025 = vunpack.c.l.b16 %v4673
        %v5026 = vunpack.c.l.b16 %v4674
        %v5027 = vunpack.c.l.b16 %v4675
        %v5028 = vunpack.c.l.b16 %v4676
        %v5029 = vunpack.c.l.b16 %v4677
        %v5030 = vunpack.c.l.b16 %v4678
        %v5031 = vunpack.c.l.b16 %v4679
        %v5032 = vunpack.c.l.b16 %v4680
        %v5033 = vunpack.c.l.b16 %v4681
        %v5034 = vunpack.c.l.b16 %v4682
        %v5035 = vunpack.c.l.b16 %v4683
        %v5036 = vunpack.c.l.b16 %v4684
        %v5037 = vunpack.c.l.b16 %v4685
        %v5038 = vunpack.c.l.b16 %v4686
        %v5039 = vunpack.c.l.b16 %v4687
        %v5040 = vunpack.c.l.b16 %v4688
        %v5041 = vunpack.c.l.b16 %v4689
        %v5042 = vunpack.c.l.b16 %v4690
        %v5043 = vunpack.c.l.b16 %v4691
        %v5044 = vunpack.c.l.b16 %v4692
        %v5045 = vunpack.c.l.b16 %v4693
        %v5046 = vunpack.c.l.b16 %v4694
        %v5047 = vunpack.c.l.b16 %v4695
        %v5048 = vunpack.c.l.b16 %v4696
        %v5049 = vunpack.c.l.b16 %v4697
        %v5050 = vunpack.c.l.b16 %v4698
        %v5051 = vunpack.c.l.b16 %v4699
        %v5052 = vunpack.c.l.b16 %v4700
        %v5053 = vunpack.c.l.b16 %v4701
        %v5054 = vunpack.c.l.b16 %v4702
        %v5055 = vunpack.c.l.b16 %v4703
        %v5056 = vunpack.c.l.b16 %v4704
        %v5057 = vpack.c.b16 %v5010, %v5009
        %v5058 = vpack.c.b16 %v5012, %v5011
        %v5059 = vpack.c.b16 %v5014, %v5013
        %v5060 = vpack.c.b16 %v5016, %v5015
        %v5061 = vpack.c.b16 %v5018, %v5017
        %v5062 = vpack.c.b16 %v5020, %v5019
        %v5063 = vpack.c.b16 %v5022, %v5021
        %v5064 = vpack.c.b16 %v5024, %v5023
        %v5065 = vpack.c.b16 %v5026, %v5025
        %v5066 = vpack.c.b16 %v5028, %v5027
        %v5067 = vpack.c.b16 %v5030, %v5029
        %v5068 = vpack.c.b16 %v5032, %v5031
        %v5069 = vpack.c.b16 %v5034, %v5033
        %v5070 = vpack.c.b16 %v5036, %v5035
        %v5071 = vpack.c.b16 %v5038, %v5037
        %v5072 = vpack.c.b16 %v5040, %v5039
        %v5073 = vpack.c.b16 %v5042, %v5041
        %v5074 = vpack.c.b16 %v5044, %v5043
        %v5075 = vpack.c.b16 %v5046, %v5045
        %v5076 = vpack.c.b16 %v5048, %v5047
        %v5077 = vpack.c.b16 %v5050, %v5049
        %v5078 = vpack.c.b16 %v5052, %v5051
        %v5079 = vpack.c.b16 %v5054, %v5053
        %v5080 = vpack.c.b16 %v5056, %v5055
        %5105 = vmatprep.subr.bf16.mxu0 0
        %5106 = vmatpush1.bf16.msra.mxu0 %v5064
        %5107 = vmatprep.subr.bf16.mxu0 0
        %5108 = vmatpush1.bf16.msra.mxu0 %v5063
        %5109 = vmatprep.subr.bf16.mxu0 0
        %5110 = vmatpush1.bf16.msra.mxu0 %v5062
        %5111 = vmatprep.subr.bf16.mxu0 0
        %5112 = vmatpush1.bf16.msra.mxu0 %v5061
        %5113 = vmatprep.subr.bf16.mxu0 0
        %5114 = vmatpush1.bf16.msra.mxu0 %v5060
        %5115 = vmatprep.subr.bf16.mxu0 0
        %5116 = vmatpush1.bf16.msra.mxu0 %v5059
        %5117 = vmatprep.subr.bf16.mxu0 0
        %5118 = vmatpush1.bf16.msra.mxu0 %v5058
        %5119 = vmatprep.subr.bf16.mxu0 0
        %5120 = vmatpush1.bf16.msra.mxu0 %v5057
        %5121 = vmatprep.subr.bf16.mxu0 0
        %5122 = vmatpush2.bf16.msra.mxu0 %v5072
        %5123 = vmatprep.subr.bf16.mxu0 0
        %5124 = vmatpush2.bf16.msra.mxu0 %v5071
        %5125 = vmatprep.subr.bf16.mxu0 0
        %5126 = vmatpush2.bf16.msra.mxu0 %v5070
        %5127 = vmatprep.subr.bf16.mxu0 0
        %5128 = vmatpush2.bf16.msra.mxu0 %v5069
        %5129 = vmatprep.subr.bf16.mxu0 0
        %5130 = vmatpush2.bf16.msra.mxu0 %v5068
        %5131 = vmatprep.subr.bf16.mxu0 0
        %5132 = vmatpush2.bf16.msra.mxu0 %v5067
        %5133 = vmatprep.subr.bf16.mxu0 0
        %5134 = vmatpush2.bf16.msra.mxu0 %v5066
        %5135 = vmatprep.subr.bf16.mxu0 0
        %5136 = vmatpush2.bf16.msra.mxu0 %v5065
        %5137 = vmatprep.mubr.bf16.mxu0 %v4866
        %5138 = vmatmul.mubr.bf16.gmra.mxu0 %v4865
        %v5139 = vpop.f32.mrf.mxu0
        %v5140 = vadd.f32 0.0, %v5139
        %v5141 = vpop.f32.mrf.mxu0
        %v5142 = vpop.f32.mrf.mxu0
        %v5143 = vadd.f32 0.0, %v5142
        %v5144 = vpop.f32.mrf.mxu0
        %5145 = vmatprep.mubr.bf16.mxu0 %v4869
        %5146 = vmatmul.mubr.bf16.gmra.mxu0 %v4868
        %v5147 = vpop.f32.mrf.mxu0
        %v5148 = vadd.f32 0.0, %v5147
        %v5149 = vpop.f32.mrf.mxu0
        %v5150 = vpop.f32.mrf.mxu0
        %v5151 = vadd.f32 0.0, %v5150
        %v5152 = vpop.f32.mrf.mxu0
        %5153 = vmatprep.mubr.bf16.mxu0 %v4872
        %5154 = vmatmul.mubr.bf16.gmra.mxu0 %v4871
        %v5155 = vpop.f32.mrf.mxu0
        %v5156 = vadd.f32 0.0, %v5155
        %v5157 = vpop.f32.mrf.mxu0
        %v5158 = vpop.f32.mrf.mxu0
        %v5159 = vadd.f32 0.0, %v5158
        %v5160 = vpop.f32.mrf.mxu0
        %5161 = vmatprep.mubr.bf16.mxu0 %v4875
        %5162 = vmatmul.mubr.bf16.gmra.mxu0 %v4874
        %v5163 = vpop.f32.mrf.mxu0
        %v5164 = vadd.f32 0.0, %v5163
        %v5165 = vpop.f32.mrf.mxu0
        %v5166 = vpop.f32.mrf.mxu0
        %v5167 = vadd.f32 0.0, %v5166
        %v5168 = vpop.f32.mrf.mxu0
        %5169 = vmatprep.mubr.bf16.mxu0 %v4878
        %5170 = vmatmul.mubr.bf16.gmra.mxu0 %v4877
        %v5171 = vpop.f32.mrf.mxu0
        %v5172 = vadd.f32 0.0, %v5171
        %v5173 = vpop.f32.mrf.mxu0
        %v5174 = vpop.f32.mrf.mxu0
        %v5175 = vadd.f32 0.0, %v5174
        %v5176 = vpop.f32.mrf.mxu0
        %5177 = vmatprep.mubr.bf16.mxu0 %v4881
        %5178 = vmatmul.mubr.bf16.gmra.mxu0 %v4880
        %v5179 = vpop.f32.mrf.mxu0
        %v5180 = vadd.f32 0.0, %v5179
        %v5181 = vpop.f32.mrf.mxu0
        %v5182 = vpop.f32.mrf.mxu0
        %v5183 = vadd.f32 0.0, %v5182
        %v5184 = vpop.f32.mrf.mxu0
        %5185 = vmatprep.mubr.bf16.mxu0 %v4884
        %5186 = vmatmul.mubr.bf16.gmra.mxu0 %v4883
        %v5187 = vpop.f32.mrf.mxu0
        %v5188 = vadd.f32 0.0, %v5187
        %v5189 = vpop.f32.mrf.mxu0
        %v5190 = vpop.f32.mrf.mxu0
        %v5191 = vadd.f32 0.0, %v5190
        %v5192 = vpop.f32.mrf.mxu0
        %5193 = vmatprep.mubr.bf16.mxu0 %v4887
        %5194 = vmatmul.mubr.bf16.gmra.mxu0 %v4886
        %v5195 = vpop.f32.mrf.mxu0
        %v5196 = vadd.f32 0.0, %v5195
        %v5197 = vpop.f32.mrf.mxu0
        %v5198 = vpop.f32.mrf.mxu0
        %v5199 = vadd.f32 0.0, %v5198
        %v5200 = vpop.f32.mrf.mxu0
        %5201 = vmatprep.mubr.bf16.mxu0 %v4890
        %5202 = vmatmul.mubr.bf16.gmra.mxu0 %v4889
        %v5203 = vpop.f32.mrf.mxu0
        %v5204 = vadd.f32 0.0, %v5203
        %v5205 = vpop.f32.mrf.mxu0
        %v5206 = vpop.f32.mrf.mxu0
        %v5207 = vadd.f32 0.0, %v5206
        %v5208 = vpop.f32.mrf.mxu0
        %5209 = vmatprep.mubr.bf16.mxu0 %v4893
        %5210 = vmatmul.mubr.bf16.gmra.mxu0 %v4892
        %v5211 = vpop.f32.mrf.mxu0
        %v5212 = vadd.f32 0.0, %v5211
        %v5213 = vpop.f32.mrf.mxu0
        %v5214 = vpop.f32.mrf.mxu0
        %v5215 = vadd.f32 0.0, %v5214
        %v5216 = vpop.f32.mrf.mxu0
        %5217 = vmatprep.mubr.bf16.mxu0 %v4896
        %5218 = vmatmul.mubr.bf16.gmra.mxu0 %v4895
        %v5219 = vpop.f32.mrf.mxu0
        %v5220 = vadd.f32 0.0, %v5219
        %v5221 = vpop.f32.mrf.mxu0
        %v5222 = vpop.f32.mrf.mxu0
        %v5223 = vadd.f32 0.0, %v5222
        %v5224 = vpop.f32.mrf.mxu0
        %5225 = vmatprep.mubr.bf16.mxu0 %v4899
        %5226 = vmatmul.mubr.bf16.gmra.mxu0 %v4898
        %v5227 = vpop.f32.mrf.mxu0
        %v5228 = vadd.f32 0.0, %v5227
        %v5229 = vpop.f32.mrf.mxu0
        %v5230 = vpop.f32.mrf.mxu0
        %v5231 = vadd.f32 0.0, %v5230
        %v5232 = vpop.f32.mrf.mxu0
        %5233 = vmatprep.mubr.bf16.mxu0 %v4902
        %5234 = vmatmul.mubr.bf16.gmra.mxu0 %v4901
        %v5235 = vpop.f32.mrf.mxu0
        %v5236 = vadd.f32 0.0, %v5235
        %v5237 = vpop.f32.mrf.mxu0
        %v5238 = vpop.f32.mrf.mxu0
        %v5239 = vadd.f32 0.0, %v5238
        %v5240 = vpop.f32.mrf.mxu0
        %5241 = vmatprep.mubr.bf16.mxu0 %v4905
        %5242 = vmatmul.mubr.bf16.gmra.mxu0 %v4904
        %v5243 = vpop.f32.mrf.mxu0
        %v5244 = vadd.f32 0.0, %v5243
        %v5245 = vpop.f32.mrf.mxu0
        %v5246 = vpop.f32.mrf.mxu0
        %v5247 = vadd.f32 0.0, %v5246
        %v5248 = vpop.f32.mrf.mxu0
        %5249 = vmatprep.mubr.bf16.mxu0 %v4908
        %5250 = vmatmul.mubr.bf16.gmra.mxu0 %v4907
        %v5251 = vpop.f32.mrf.mxu0
        %v5252 = vadd.f32 0.0, %v5251
        %v5253 = vpop.f32.mrf.mxu0
        %v5254 = vpop.f32.mrf.mxu0
        %v5255 = vadd.f32 0.0, %v5254
        %v5256 = vpop.f32.mrf.mxu0
        %5257 = vmatprep.mubr.bf16.mxu0 %v4911
        %5258 = vmatmul.mubr.bf16.gmra.mxu0 %v4910
        %v5259 = vpop.f32.mrf.mxu0
        %v5260 = vadd.f32 0.0, %v5259
        %v5261 = vpop.f32.mrf.mxu0
        %v5262 = vpop.f32.mrf.mxu0
        %v5263 = vadd.f32 0.0, %v5262
        %v5264 = vpop.f32.mrf.mxu0
        %5265 = vdwg.mxu0
        %5266 = vmatprep.subr.bf16.mxu0 0
        %5267 = vmatpush1.bf16.msra.mxu0 %v5080
        %5268 = vmatprep.subr.bf16.mxu0 0
        %5269 = vmatpush1.bf16.msra.mxu0 %v5079
        %5270 = vmatprep.subr.bf16.mxu0 0
        %5271 = vmatpush1.bf16.msra.mxu0 %v5078
        %5272 = vmatprep.subr.bf16.mxu0 0
        %5273 = vmatpush1.bf16.msra.mxu0 %v5077
        %5274 = vmatprep.subr.bf16.mxu0 0
        %5275 = vmatpush1.bf16.msra.mxu0 %v5076
        %5276 = vmatprep.subr.bf16.mxu0 0
        %5277 = vmatpush1.bf16.msra.mxu0 %v5075
        %5278 = vmatprep.subr.bf16.mxu0 0
        %5279 = vmatpush1.bf16.msra.mxu0 %v5074
        %5280 = vmatprep.subr.bf16.mxu0 0
        %5281 = vmatpush1.bf16.msra.mxu0 %v5073
        %5282 = vmatprep.subr.bf16.mxu0 0
        %5283 = vmatpush2.bf16.msra.mxu0 0
        %5284 = vmatprep.subr.bf16.mxu0 0
        %5285 = vmatpush2.bf16.msra.mxu0 0
        %5286 = vmatprep.subr.bf16.mxu0 0
        %5287 = vmatpush2.bf16.msra.mxu0 0
        %5288 = vmatprep.subr.bf16.mxu0 0
        %5289 = vmatpush2.bf16.msra.mxu0 0
        %5290 = vmatprep.subr.bf16.mxu0 0
        %5291 = vmatpush2.bf16.msra.mxu0 0
        %5292 = vmatprep.subr.bf16.mxu0 0
        %5293 = vmatpush2.bf16.msra.mxu0 0
        %5294 = vmatprep.subr.bf16.mxu0 0
        %5295 = vmatpush2.bf16.msra.mxu0 0
        %5296 = vmatprep.subr.bf16.mxu0 0
        %5297 = vmatpush2.bf16.msra.mxu0 0
        %5298 = vmatprep.mubr.bf16.mxu0 0
        %5299 = vmatmul.mubr.bf16.gmra.mxu0 %v4867
        %v5300 = vpop.f32.mrf.mxu0
        %v5301 = vadd.f32 %v5140, %v5300
        %v5302 = vpop.f32.mrf.mxu0
        %v5303 = vpop.f32.mrf.mxu0
        %v5304 = vadd.f32 %v5143, %v5303
        %v5305 = vpop.f32.mrf.mxu0
        %5306 = vmatprep.mubr.bf16.mxu0 0
        %5307 = vmatmul.mubr.bf16.gmra.mxu0 %v4870
        %v5308 = vpop.f32.mrf.mxu0
        %v5309 = vadd.f32 %v5148, %v5308
        %v5310 = vpop.f32.mrf.mxu0
        %v5311 = vpop.f32.mrf.mxu0
        %v5312 = vadd.f32 %v5151, %v5311
        %v5313 = vpop.f32.mrf.mxu0
        %5314 = vmatprep.mubr.bf16.mxu0 0
        %5315 = vmatmul.mubr.bf16.gmra.mxu0 %v4873
        %v5316 = vpop.f32.mrf.mxu0
        %v5317 = vadd.f32 %v5156, %v5316
        %v5318 = vpop.f32.mrf.mxu0
        %v5319 = vpop.f32.mrf.mxu0
        %v5320 = vadd.f32 %v5159, %v5319
        %v5321 = vpop.f32.mrf.mxu0
        %5322 = vmatprep.mubr.bf16.mxu0 0
        %5323 = vmatmul.mubr.bf16.gmra.mxu0 %v4876
        %v5324 = vpop.f32.mrf.mxu0
        %v5325 = vadd.f32 %v5164, %v5324
        %v5326 = vpop.f32.mrf.mxu0
        %v5327 = vpop.f32.mrf.mxu0
        %v5328 = vadd.f32 %v5167, %v5327
        %v5329 = vpop.f32.mrf.mxu0
        %5330 = vmatprep.mubr.bf16.mxu0 0
        %5331 = vmatmul.mubr.bf16.gmra.mxu0 %v4879
        %v5332 = vpop.f32.mrf.mxu0
        %v5333 = vadd.f32 %v5172, %v5332
        %v5334 = vpop.f32.mrf.mxu0
        %v5335 = vpop.f32.mrf.mxu0
        %v5336 = vadd.f32 %v5175, %v5335
        %v5337 = vpop.f32.mrf.mxu0
        %5338 = vmatprep.mubr.bf16.mxu0 0
        %5339 = vmatmul.mubr.bf16.gmra.mxu0 %v4882
        %v5340 = vpop.f32.mrf.mxu0
        %v5341 = vadd.f32 %v5180, %v5340
        %v5342 = vpop.f32.mrf.mxu0
        %v5343 = vpop.f32.mrf.mxu0
        %v5344 = vadd.f32 %v5183, %v5343
        %v5345 = vpop.f32.mrf.mxu0
        %5346 = vmatprep.mubr.bf16.mxu0 0
        %5347 = vmatmul.mubr.bf16.gmra.mxu0 %v4885
        %v5348 = vpop.f32.mrf.mxu0
        %v5349 = vadd.f32 %v5188, %v5348
        %v5350 = vpop.f32.mrf.mxu0
        %v5351 = vpop.f32.mrf.mxu0
        %v5352 = vadd.f32 %v5191, %v5351
        %v5353 = vpop.f32.mrf.mxu0
        %5354 = vmatprep.mubr.bf16.mxu0 0
        %5355 = vmatmul.mubr.bf16.gmra.mxu0 %v4888
        %v5356 = vpop.f32.mrf.mxu0
        %v5357 = vadd.f32 %v5196, %v5356
        %v5358 = vpop.f32.mrf.mxu0
        %v5359 = vpop.f32.mrf.mxu0
        %v5360 = vadd.f32 %v5199, %v5359
        %v5361 = vpop.f32.mrf.mxu0
        %5362 = vmatprep.mubr.bf16.mxu0 0
        %5363 = vmatmul.mubr.bf16.gmra.mxu0 %v4891
        %v5364 = vpop.f32.mrf.mxu0
        %v5365 = vadd.f32 %v5204, %v5364
        %v5366 = vpop.f32.mrf.mxu0
        %v5367 = vpop.f32.mrf.mxu0
        %v5368 = vadd.f32 %v5207, %v5367
        %v5369 = vpop.f32.mrf.mxu0
        %5370 = vmatprep.mubr.bf16.mxu0 0
        %5371 = vmatmul.mubr.bf16.gmra.mxu0 %v4894
        %v5372 = vpop.f32.mrf.mxu0
        %v5373 = vadd.f32 %v5212, %v5372
        %v5374 = vpop.f32.mrf.mxu0
        %v5375 = vpop.f32.mrf.mxu0
        %v5376 = vadd.f32 %v5215, %v5375
        %v5377 = vpop.f32.mrf.mxu0
        %5378 = vmatprep.mubr.bf16.mxu0 0
        %5379 = vmatmul.mubr.bf16.gmra.mxu0 %v4897
        %v5380 = vpop.f32.mrf.mxu0
        %v5381 = vadd.f32 %v5220, %v5380
        %v5382 = vpop.f32.mrf.mxu0
        %v5383 = vpop.f32.mrf.mxu0
        %v5384 = vadd.f32 %v5223, %v5383
        %v5385 = vpop.f32.mrf.mxu0
        %5386 = vmatprep.mubr.bf16.mxu0 0
        %5387 = vmatmul.mubr.bf16.gmra.mxu0 %v4900
        %v5388 = vpop.f32.mrf.mxu0
        %v5389 = vadd.f32 %v5228, %v5388
        %v5390 = vpop.f32.mrf.mxu0
        %v5391 = vpop.f32.mrf.mxu0
        %v5392 = vadd.f32 %v5231, %v5391
        %v5393 = vpop.f32.mrf.mxu0
        %5394 = vmatprep.mubr.bf16.mxu0 0
        %5395 = vmatmul.mubr.bf16.gmra.mxu0 %v4903
        %v5396 = vpop.f32.mrf.mxu0
        %v5397 = vadd.f32 %v5236, %v5396
        %v5398 = vpop.f32.mrf.mxu0
        %v5399 = vpop.f32.mrf.mxu0
        %v5400 = vadd.f32 %v5239, %v5399
        %v5401 = vpop.f32.mrf.mxu0
        %5402 = vmatprep.mubr.bf16.mxu0 0
        %5403 = vmatmul.mubr.bf16.gmra.mxu0 %v4906
        %v5404 = vpop.f32.mrf.mxu0
        %v5405 = vadd.f32 %v5244, %v5404
        %v5406 = vpop.f32.mrf.mxu0
        %v5407 = vpop.f32.mrf.mxu0
        %v5408 = vadd.f32 %v5247, %v5407
        %v5409 = vpop.f32.mrf.mxu0
        %5410 = vmatprep.mubr.bf16.mxu0 0
        %5411 = vmatmul.mubr.bf16.gmra.mxu0 %v4909
        %v5412 = vpop.f32.mrf.mxu0
        %v5413 = vadd.f32 %v5252, %v5412
        %v5414 = vpop.f32.mrf.mxu0
        %v5415 = vpop.f32.mrf.mxu0
        %v5416 = vadd.f32 %v5255, %v5415
        %v5417 = vpop.f32.mrf.mxu0
        %5418 = vmatprep.mubr.bf16.mxu0 0
        %5419 = vmatmul.mubr.bf16.gmra.mxu0 %v4912
        %v5420 = vpop.f32.mrf.mxu0
        %v5421 = vadd.f32 %v5260, %v5420
        %v5422 = vpop.f32.mrf.mxu0
        %v5423 = vpop.f32.mrf.mxu0
        %v5424 = vadd.f32 %v5263, %v5423
        %v5425 = vpop.f32.mrf.mxu0
        %5426 = vdwg.mxu0
        %v5491 = vunpack.c.l.b16 %v4481
        %v5492 = vunpack.c.h.b16 %v4481
        %v5493 = vunpack.c.l.b16 %v4482
        %v5494 = vunpack.c.l.b16 %v4483
        %v5495 = vunpack.c.h.b16 %v4483
        %v5496 = vunpack.c.l.b16 %v4484
        %v5497 = vunpack.c.l.b16 %v4485
        %v5498 = vunpack.c.h.b16 %v4485
        %v5499 = vunpack.c.l.b16 %v4486
        %v5500 = vunpack.c.l.b16 %v4487
        %v5501 = vunpack.c.h.b16 %v4487
        %v5502 = vunpack.c.l.b16 %v4488
        %v5503 = vunpack.c.l.b16 %v4489
        %v5504 = vunpack.c.h.b16 %v4489
        %v5505 = vunpack.c.l.b16 %v4490
        %v5506 = vunpack.c.l.b16 %v4491
        %v5507 = vunpack.c.h.b16 %v4491
        %v5508 = vunpack.c.l.b16 %v4492
        %v5509 = vunpack.c.l.b16 %v4493
        %v5510 = vunpack.c.h.b16 %v4493
        %v5511 = vunpack.c.l.b16 %v4494
        %v5512 = vunpack.c.l.b16 %v4495
        %v5513 = vunpack.c.h.b16 %v4495
        %v5514 = vunpack.c.l.b16 %v4496
        %v5515 = vunpack.c.l.b16 %v4497
        %v5516 = vunpack.c.h.b16 %v4497
        %v5517 = vunpack.c.l.b16 %v4498
        %v5518 = vunpack.c.l.b16 %v4499
        %v5519 = vunpack.c.h.b16 %v4499
        %v5520 = vunpack.c.l.b16 %v4500
        %v5521 = vunpack.c.l.b16 %v4501
        %v5522 = vunpack.c.h.b16 %v4501
        %v5523 = vunpack.c.l.b16 %v4502
        %v5524 = vunpack.c.l.b16 %v4503
        %v5525 = vunpack.c.h.b16 %v4503
        %v5526 = vunpack.c.l.b16 %v4504
        %v5527 = vunpack.c.l.b16 %v4505
        %v5528 = vunpack.c.h.b16 %v4505
        %v5529 = vunpack.c.l.b16 %v4506
        %v5530 = vunpack.c.l.b16 %v4507
        %v5531 = vunpack.c.h.b16 %v4507
        %v5532 = vunpack.c.l.b16 %v4508
        %v5533 = vunpack.c.l.b16 %v4509
        %v5534 = vunpack.c.h.b16 %v4509
        %v5535 = vunpack.c.l.b16 %v4510
        %v5536 = vunpack.c.l.b16 %v4511
        %v5537 = vunpack.c.h.b16 %v4511
        %v5538 = vunpack.c.l.b16 %v4512
        %v5539 = vunpack.c.l.b16 %v4513
        %v5540 = vunpack.c.h.b16 %v4513
        %v5541 = vunpack.c.l.b16 %v4514
        %v5542 = vunpack.c.l.b16 %v4515
        %v5543 = vunpack.c.h.b16 %v4515
        %v5544 = vunpack.c.l.b16 %v4516
        %v5545 = vunpack.c.l.b16 %v4517
        %v5546 = vunpack.c.h.b16 %v4517
        %v5547 = vunpack.c.l.b16 %v4518
        %v5548 = vunpack.c.l.b16 %v4519
        %v5549 = vunpack.c.h.b16 %v4519
        %v5550 = vunpack.c.l.b16 %v4520
        %v5551 = vunpack.c.l.b16 %v4521
        %v5552 = vunpack.c.h.b16 %v4521
        %v5553 = vunpack.c.l.b16 %v4522
        %v5554 = vunpack.c.l.b16 %v4523
        %v5555 = vunpack.c.h.b16 %v4523
        %v5556 = vunpack.c.l.b16 %v4524
        %v5557 = vunpack.c.l.b16 %v4525
        %v5558 = vunpack.c.h.b16 %v4525
        %v5559 = vunpack.c.l.b16 %v4526
        %v5560 = vunpack.c.l.b16 %v4527
        %v5561 = vunpack.c.h.b16 %v4527
        %v5562 = vunpack.c.l.b16 %v4528
        %v5563 = vunpack.c.l.b16 %v4529
        %v5564 = vunpack.c.h.b16 %v4529
        %v5565 = vunpack.c.l.b16 %v4530
        %v5566 = vunpack.c.l.b16 %v4531
        %v5567 = vunpack.c.h.b16 %v4531
        %v5568 = vunpack.c.l.b16 %v4532
        %v5569 = vunpack.c.l.b16 %v4533
        %v5570 = vunpack.c.h.b16 %v4533
        %v5571 = vunpack.c.l.b16 %v4534
        %v5572 = vunpack.c.l.b16 %v4535
        %v5573 = vunpack.c.h.b16 %v4535
        %v5574 = vunpack.c.l.b16 %v4536
        %v5575 = vunpack.c.l.b16 %v4537
        %v5576 = vunpack.c.h.b16 %v4537
        %v5577 = vunpack.c.l.b16 %v4538
        %v5578 = vunpack.c.l.b16 %v4539
        %v5579 = vunpack.c.h.b16 %v4539
        %v5580 = vunpack.c.l.b16 %v4540
        %v5581 = vunpack.c.l.b16 %v4541
        %v5582 = vunpack.c.h.b16 %v4541
        %v5583 = vunpack.c.l.b16 %v4542
        %v5584 = vunpack.c.l.b16 %v4543
        %v5585 = vunpack.c.h.b16 %v4543
        %v5586 = vunpack.c.l.b16 %v4544
        %v5587 = vpack.c.b16 %v5494, %v5491
        %v5588 = vpack.c.b16 %v5495, %v5492
        %v5589 = vpack.c.b16 %v5496, %v5493
        %v5590 = vpack.c.b16 %v5500, %v5497
        %v5591 = vpack.c.b16 %v5501, %v5498
        %v5592 = vpack.c.b16 %v5502, %v5499
        %v5593 = vpack.c.b16 %v5506, %v5503
        %v5594 = vpack.c.b16 %v5507, %v5504
        %v5595 = vpack.c.b16 %v5508, %v5505
        %v5596 = vpack.c.b16 %v5512, %v5509
        %v5597 = vpack.c.b16 %v5513, %v5510
        %v5598 = vpack.c.b16 %v5514, %v5511
        %v5599 = vpack.c.b16 %v5518, %v5515
        %v5600 = vpack.c.b16 %v5519, %v5516
        %v5601 = vpack.c.b16 %v5520, %v5517
        %v5602 = vpack.c.b16 %v5524, %v5521
        %v5603 = vpack.c.b16 %v5525, %v5522
        %v5604 = vpack.c.b16 %v5526, %v5523
        %v5605 = vpack.c.b16 %v5530, %v5527
        %v5606 = vpack.c.b16 %v5531, %v5528
        %v5607 = vpack.c.b16 %v5532, %v5529
        %v5608 = vpack.c.b16 %v5536, %v5533
        %v5609 = vpack.c.b16 %v5537, %v5534
        %v5610 = vpack.c.b16 %v5538, %v5535
        %v5611 = vpack.c.b16 %v5542, %v5539
        %v5612 = vpack.c.b16 %v5543, %v5540
        %v5613 = vpack.c.b16 %v5544, %v5541
        %v5614 = vpack.c.b16 %v5548, %v5545
        %v5615 = vpack.c.b16 %v5549, %v5546
        %v5616 = vpack.c.b16 %v5550, %v5547
        %v5617 = vpack.c.b16 %v5554, %v5551
        %v5618 = vpack.c.b16 %v5555, %v5552
        %v5619 = vpack.c.b16 %v5556, %v5553
        %v5620 = vpack.c.b16 %v5560, %v5557
        %v5621 = vpack.c.b16 %v5561, %v5558
        %v5622 = vpack.c.b16 %v5562, %v5559
        %v5623 = vpack.c.b16 %v5566, %v5563
        %v5624 = vpack.c.b16 %v5567, %v5564
        %v5625 = vpack.c.b16 %v5568, %v5565
        %v5626 = vpack.c.b16 %v5572, %v5569
        %v5627 = vpack.c.b16 %v5573, %v5570
        %v5628 = vpack.c.b16 %v5574, %v5571
        %v5629 = vpack.c.b16 %v5578, %v5575
        %v5630 = vpack.c.b16 %v5579, %v5576
        %v5631 = vpack.c.b16 %v5580, %v5577
        %v5632 = vpack.c.b16 %v5584, %v5581
        %v5633 = vpack.c.b16 %v5585, %v5582
        %v5634 = vpack.c.b16 %v5586, %v5583
        %v5731 = vunpack.c.l.b16 %v4545
        %v5732 = vunpack.c.l.b16 %v4546
        %v5733 = vunpack.c.l.b16 %v4547
        %v5734 = vunpack.c.l.b16 %v4548
        %v5735 = vunpack.c.l.b16 %v4549
        %v5736 = vunpack.c.l.b16 %v4550
        %v5737 = vunpack.c.l.b16 %v4551
        %v5738 = vunpack.c.l.b16 %v4552
        %v5739 = vunpack.c.l.b16 %v4553
        %v5740 = vunpack.c.l.b16 %v4554
        %v5741 = vunpack.c.l.b16 %v4555
        %v5742 = vunpack.c.l.b16 %v4556
        %v5743 = vunpack.c.l.b16 %v4557
        %v5744 = vunpack.c.l.b16 %v4558
        %v5745 = vunpack.c.l.b16 %v4559
        %v5746 = vunpack.c.l.b16 %v4560
        %v5747 = vunpack.c.l.b16 %v4561
        %v5748 = vunpack.c.l.b16 %v4562
        %v5749 = vunpack.c.l.b16 %v4563
        %v5750 = vunpack.c.l.b16 %v4564
        %v5751 = vunpack.c.l.b16 %v4565
        %v5752 = vunpack.c.l.b16 %v4566
        %v5753 = vunpack.c.l.b16 %v4567
        %v5754 = vunpack.c.l.b16 %v4568
        %v5755 = vunpack.c.l.b16 %v4569
        %v5756 = vunpack.c.l.b16 %v4570
        %v5757 = vunpack.c.l.b16 %v4571
        %v5758 = vunpack.c.l.b16 %v4572
        %v5759 = vunpack.c.l.b16 %v4573
        %v5760 = vunpack.c.l.b16 %v4574
        %v5761 = vunpack.c.l.b16 %v4575
        %v5762 = vunpack.c.l.b16 %v4576
        %v5763 = vunpack.c.l.b16 %v4577
        %v5764 = vunpack.c.l.b16 %v4578
        %v5765 = vunpack.c.l.b16 %v4579
        %v5766 = vunpack.c.l.b16 %v4580
        %v5767 = vunpack.c.l.b16 %v4581
        %v5768 = vunpack.c.l.b16 %v4582
        %v5769 = vunpack.c.l.b16 %v4583
        %v5770 = vunpack.c.l.b16 %v4584
        %v5771 = vunpack.c.l.b16 %v4585
        %v5772 = vunpack.c.l.b16 %v4586
        %v5773 = vunpack.c.l.b16 %v4587
        %v5774 = vunpack.c.l.b16 %v4588
        %v5775 = vunpack.c.l.b16 %v4589
        %v5776 = vunpack.c.l.b16 %v4590
        %v5777 = vunpack.c.l.b16 %v4591
        %v5778 = vunpack.c.l.b16 %v4592
        %v5779 = vpack.c.b16 %v5732, %v5731
        %v5780 = vpack.c.b16 %v5734, %v5733
        %v5781 = vpack.c.b16 %v5736, %v5735
        %v5782 = vpack.c.b16 %v5738, %v5737
        %v5783 = vpack.c.b16 %v5740, %v5739
        %v5784 = vpack.c.b16 %v5742, %v5741
        %v5785 = vpack.c.b16 %v5744, %v5743
        %v5786 = vpack.c.b16 %v5746, %v5745
        %v5787 = vpack.c.b16 %v5748, %v5747
        %v5788 = vpack.c.b16 %v5750, %v5749
        %v5789 = vpack.c.b16 %v5752, %v5751
        %v5790 = vpack.c.b16 %v5754, %v5753
        %v5791 = vpack.c.b16 %v5756, %v5755
        %v5792 = vpack.c.b16 %v5758, %v5757
        %v5793 = vpack.c.b16 %v5760, %v5759
        %v5794 = vpack.c.b16 %v5762, %v5761
        %v5795 = vpack.c.b16 %v5764, %v5763
        %v5796 = vpack.c.b16 %v5766, %v5765
        %v5797 = vpack.c.b16 %v5768, %v5767
        %v5798 = vpack.c.b16 %v5770, %v5769
        %v5799 = vpack.c.b16 %v5772, %v5771
        %v5800 = vpack.c.b16 %v5774, %v5773
        %v5801 = vpack.c.b16 %v5776, %v5775
        %v5802 = vpack.c.b16 %v5778, %v5777
        %5827 = vmatprep.subr.bf16.mxu0 0
        %5828 = vmatpush1.bf16.msra.mxu0 %v5786
        %5829 = vmatprep.subr.bf16.mxu0 0
        %5830 = vmatpush1.bf16.msra.mxu0 %v5785
        %5831 = vmatprep.subr.bf16.mxu0 0
        %5832 = vmatpush1.bf16.msra.mxu0 %v5784
        %5833 = vmatprep.subr.bf16.mxu0 0
        %5834 = vmatpush1.bf16.msra.mxu0 %v5783
        %5835 = vmatprep.subr.bf16.mxu0 0
        %5836 = vmatpush1.bf16.msra.mxu0 %v5782
        %5837 = vmatprep.subr.bf16.mxu0 0
        %5838 = vmatpush1.bf16.msra.mxu0 %v5781
        %5839 = vmatprep.subr.bf16.mxu0 0
        %5840 = vmatpush1.bf16.msra.mxu0 %v5780
        %5841 = vmatprep.subr.bf16.mxu0 0
        %5842 = vmatpush1.bf16.msra.mxu0 %v5779
        %5843 = vmatprep.subr.bf16.mxu0 0
        %5844 = vmatpush2.bf16.msra.mxu0 %v5794
        %5845 = vmatprep.subr.bf16.mxu0 0
        %5846 = vmatpush2.bf16.msra.mxu0 %v5793
        %5847 = vmatprep.subr.bf16.mxu0 0
        %5848 = vmatpush2.bf16.msra.mxu0 %v5792
        %5849 = vmatprep.subr.bf16.mxu0 0
        %5850 = vmatpush2.bf16.msra.mxu0 %v5791
        %5851 = vmatprep.subr.bf16.mxu0 0
        %5852 = vmatpush2.bf16.msra.mxu0 %v5790
        %5853 = vmatprep.subr.bf16.mxu0 0
        %5854 = vmatpush2.bf16.msra.mxu0 %v5789
        %5855 = vmatprep.subr.bf16.mxu0 0
        %5856 = vmatpush2.bf16.msra.mxu0 %v5788
        %5857 = vmatprep.subr.bf16.mxu0 0
        %5858 = vmatpush2.bf16.msra.mxu0 %v5787
        %5859 = vmatprep.mubr.bf16.mxu0 %v5588
        %5860 = vmatmul.mubr.bf16.gmra.mxu0 %v5587
        %v5861 = vpop.f32.mrf.mxu0
        %v5862 = vadd.f32 %v5301, %v5861
        %v5863 = vpop.f32.mrf.mxu0
        %v5864 = vpop.f32.mrf.mxu0
        %v5865 = vadd.f32 %v5304, %v5864
        %v5866 = vpop.f32.mrf.mxu0
        %5867 = vmatprep.mubr.bf16.mxu0 %v5591
        %5868 = vmatmul.mubr.bf16.gmra.mxu0 %v5590
        %v5869 = vpop.f32.mrf.mxu0
        %v5870 = vadd.f32 %v5309, %v5869
        %v5871 = vpop.f32.mrf.mxu0
        %v5872 = vpop.f32.mrf.mxu0
        %v5873 = vadd.f32 %v5312, %v5872
        %v5874 = vpop.f32.mrf.mxu0
        %5875 = vmatprep.mubr.bf16.mxu0 %v5594
        %5876 = vmatmul.mubr.bf16.gmra.mxu0 %v5593
        %v5877 = vpop.f32.mrf.mxu0
        %v5878 = vadd.f32 %v5317, %v5877
        %v5879 = vpop.f32.mrf.mxu0
        %v5880 = vpop.f32.mrf.mxu0
        %v5881 = vadd.f32 %v5320, %v5880
        %v5882 = vpop.f32.mrf.mxu0
        %5883 = vmatprep.mubr.bf16.mxu0 %v5597
        %5884 = vmatmul.mubr.bf16.gmra.mxu0 %v5596
        %v5885 = vpop.f32.mrf.mxu0
        %v5886 = vadd.f32 %v5325, %v5885
        %v5887 = vpop.f32.mrf.mxu0
        %v5888 = vpop.f32.mrf.mxu0
        %v5889 = vadd.f32 %v5328, %v5888
        %v5890 = vpop.f32.mrf.mxu0
        %5891 = vmatprep.mubr.bf16.mxu0 %v5600
        %5892 = vmatmul.mubr.bf16.gmra.mxu0 %v5599
        %v5893 = vpop.f32.mrf.mxu0
        %v5894 = vadd.f32 %v5333, %v5893
        %v5895 = vpop.f32.mrf.mxu0
        %v5896 = vpop.f32.mrf.mxu0
        %v5897 = vadd.f32 %v5336, %v5896
        %v5898 = vpop.f32.mrf.mxu0
        %5899 = vmatprep.mubr.bf16.mxu0 %v5603
        %5900 = vmatmul.mubr.bf16.gmra.mxu0 %v5602
        %v5901 = vpop.f32.mrf.mxu0
        %v5902 = vadd.f32 %v5341, %v5901
        %v5903 = vpop.f32.mrf.mxu0
        %v5904 = vpop.f32.mrf.mxu0
        %v5905 = vadd.f32 %v5344, %v5904
        %v5906 = vpop.f32.mrf.mxu0
        %5907 = vmatprep.mubr.bf16.mxu0 %v5606
        %5908 = vmatmul.mubr.bf16.gmra.mxu0 %v5605
        %v5909 = vpop.f32.mrf.mxu0
        %v5910 = vadd.f32 %v5349, %v5909
        %v5911 = vpop.f32.mrf.mxu0
        %v5912 = vpop.f32.mrf.mxu0
        %v5913 = vadd.f32 %v5352, %v5912
        %v5914 = vpop.f32.mrf.mxu0
        %5915 = vmatprep.mubr.bf16.mxu0 %v5609
        %5916 = vmatmul.mubr.bf16.gmra.mxu0 %v5608
        %v5917 = vpop.f32.mrf.mxu0
        %v5918 = vadd.f32 %v5357, %v5917
        %v5919 = vpop.f32.mrf.mxu0
        %v5920 = vpop.f32.mrf.mxu0
        %v5921 = vadd.f32 %v5360, %v5920
        %v5922 = vpop.f32.mrf.mxu0
        %5923 = vmatprep.mubr.bf16.mxu0 %v5612
        %5924 = vmatmul.mubr.bf16.gmra.mxu0 %v5611
        %v5925 = vpop.f32.mrf.mxu0
        %v5926 = vadd.f32 %v5365, %v5925
        %v5927 = vpop.f32.mrf.mxu0
        %v5928 = vpop.f32.mrf.mxu0
        %v5929 = vadd.f32 %v5368, %v5928
        %v5930 = vpop.f32.mrf.mxu0
        %5931 = vmatprep.mubr.bf16.mxu0 %v5615
        %5932 = vmatmul.mubr.bf16.gmra.mxu0 %v5614
        %v5933 = vpop.f32.mrf.mxu0
        %v5934 = vadd.f32 %v5373, %v5933
        %v5935 = vpop.f32.mrf.mxu0
        %v5936 = vpop.f32.mrf.mxu0
        %v5937 = vadd.f32 %v5376, %v5936
        %v5938 = vpop.f32.mrf.mxu0
        %5939 = vmatprep.mubr.bf16.mxu0 %v5618
        %5940 = vmatmul.mubr.bf16.gmra.mxu0 %v5617
        %v5941 = vpop.f32.mrf.mxu0
        %v5942 = vadd.f32 %v5381, %v5941
        %v5943 = vpop.f32.mrf.mxu0
        %v5944 = vpop.f32.mrf.mxu0
        %v5945 = vadd.f32 %v5384, %v5944
        %v5946 = vpop.f32.mrf.mxu0
        %5947 = vmatprep.mubr.bf16.mxu0 %v5621
        %5948 = vmatmul.mubr.bf16.gmra.mxu0 %v5620
        %v5949 = vpop.f32.mrf.mxu0
        %v5950 = vadd.f32 %v5389, %v5949
        %v5951 = vpop.f32.mrf.mxu0
        %v5952 = vpop.f32.mrf.mxu0
        %v5953 = vadd.f32 %v5392, %v5952
        %v5954 = vpop.f32.mrf.mxu0
        %5955 = vmatprep.mubr.bf16.mxu0 %v5624
        %5956 = vmatmul.mubr.bf16.gmra.mxu0 %v5623
        %v5957 = vpop.f32.mrf.mxu0
        %v5958 = vadd.f32 %v5397, %v5957
        %v5959 = vpop.f32.mrf.mxu0
        %v5960 = vpop.f32.mrf.mxu0
        %v5961 = vadd.f32 %v5400, %v5960
        %v5962 = vpop.f32.mrf.mxu0
        %5963 = vmatprep.mubr.bf16.mxu0 %v5627
        %5964 = vmatmul.mubr.bf16.gmra.mxu0 %v5626
        %v5965 = vpop.f32.mrf.mxu0
        %v5966 = vadd.f32 %v5405, %v5965
        %v5967 = vpop.f32.mrf.mxu0
        %v5968 = vpop.f32.mrf.mxu0
        %v5969 = vadd.f32 %v5408, %v5968
        %v5970 = vpop.f32.mrf.mxu0
        %5971 = vmatprep.mubr.bf16.mxu0 %v5630
        %5972 = vmatmul.mubr.bf16.gmra.mxu0 %v5629
        %v5973 = vpop.f32.mrf.mxu0
        %v5974 = vadd.f32 %v5413, %v5973
        %v5975 = vpop.f32.mrf.mxu0
        %v5976 = vpop.f32.mrf.mxu0
        %v5977 = vadd.f32 %v5416, %v5976
        %v5978 = vpop.f32.mrf.mxu0
        %5979 = vmatprep.mubr.bf16.mxu0 %v5633
        %5980 = vmatmul.mubr.bf16.gmra.mxu0 %v5632
        %v5981 = vpop.f32.mrf.mxu0
        %v5982 = vadd.f32 %v5421, %v5981
        %v5983 = vpop.f32.mrf.mxu0
        %v5984 = vpop.f32.mrf.mxu0
        %v5985 = vadd.f32 %v5424, %v5984
        %v5986 = vpop.f32.mrf.mxu0
        %5987 = vdwg.mxu0
        %5988 = vmatprep.subr.bf16.mxu0 0
        %5989 = vmatpush1.bf16.msra.mxu0 %v5802
        %5990 = vmatprep.subr.bf16.mxu0 0
        %5991 = vmatpush1.bf16.msra.mxu0 %v5801
        %5992 = vmatprep.subr.bf16.mxu0 0
        %5993 = vmatpush1.bf16.msra.mxu0 %v5800
        %5994 = vmatprep.subr.bf16.mxu0 0
        %5995 = vmatpush1.bf16.msra.mxu0 %v5799
        %5996 = vmatprep.subr.bf16.mxu0 0
        %5997 = vmatpush1.bf16.msra.mxu0 %v5798
        %5998 = vmatprep.subr.bf16.mxu0 0
        %5999 = vmatpush1.bf16.msra.mxu0 %v5797
        %6000 = vmatprep.subr.bf16.mxu0 0
        %6001 = vmatpush1.bf16.msra.mxu0 %v5796
        %6002 = vmatprep.subr.bf16.mxu0 0
        %6003 = vmatpush1.bf16.msra.mxu0 %v5795
        %6004 = vmatprep.subr.bf16.mxu0 0
        %6005 = vmatpush2.bf16.msra.mxu0 0
        %6006 = vmatprep.subr.bf16.mxu0 0
        %6007 = vmatpush2.bf16.msra.mxu0 0
        %6008 = vmatprep.subr.bf16.mxu0 0
        %6009 = vmatpush2.bf16.msra.mxu0 0
        %6010 = vmatprep.subr.bf16.mxu0 0
        %6011 = vmatpush2.bf16.msra.mxu0 0
        %6012 = vmatprep.subr.bf16.mxu0 0
        %6013 = vmatpush2.bf16.msra.mxu0 0
        %6014 = vmatprep.subr.bf16.mxu0 0
        %6015 = vmatpush2.bf16.msra.mxu0 0
        %6016 = vmatprep.subr.bf16.mxu0 0
        %6017 = vmatpush2.bf16.msra.mxu0 0
        %6018 = vmatprep.subr.bf16.mxu0 0
        %6019 = vmatpush2.bf16.msra.mxu0 0
        %6020 = vmatprep.mubr.bf16.mxu0 0
        %6021 = vmatmul.mubr.bf16.gmra.mxu0 %v5589
        %v6022 = vpop.f32.mrf.mxu0
        %v6023 = vadd.f32 %v5862, %v6022
        %v6024 = vpop.f32.mrf.mxu0
        %v6025 = vpop.f32.mrf.mxu0
        %v6026 = vadd.f32 %v5865, %v6025
        %v6027 = vpop.f32.mrf.mxu0
        %6028 = vmatprep.mubr.bf16.mxu0 0
        %6029 = vmatmul.mubr.bf16.gmra.mxu0 %v5592
        %v6030 = vpop.f32.mrf.mxu0
        %v6031 = vadd.f32 %v5870, %v6030
        %v6032 = vpop.f32.mrf.mxu0
        %v6033 = vpop.f32.mrf.mxu0
        %v6034 = vadd.f32 %v5873, %v6033
        %v6035 = vpop.f32.mrf.mxu0
        %6036 = vmatprep.mubr.bf16.mxu0 0
        %6037 = vmatmul.mubr.bf16.gmra.mxu0 %v5595
        %v6038 = vpop.f32.mrf.mxu0
        %v6039 = vadd.f32 %v5878, %v6038
        %v6040 = vpop.f32.mrf.mxu0
        %v6041 = vpop.f32.mrf.mxu0
        %v6042 = vadd.f32 %v5881, %v6041
        %v6043 = vpop.f32.mrf.mxu0
        %6044 = vmatprep.mubr.bf16.mxu0 0
        %6045 = vmatmul.mubr.bf16.gmra.mxu0 %v5598
        %v6046 = vpop.f32.mrf.mxu0
        %v6047 = vadd.f32 %v5886, %v6046
        %v6048 = vpop.f32.mrf.mxu0
        %v6049 = vpop.f32.mrf.mxu0
        %v6050 = vadd.f32 %v5889, %v6049
        %v6051 = vpop.f32.mrf.mxu0
        %6052 = vmatprep.mubr.bf16.mxu0 0
        %6053 = vmatmul.mubr.bf16.gmra.mxu0 %v5601
        %v6054 = vpop.f32.mrf.mxu0
        %v6055 = vadd.f32 %v5894, %v6054
        %v6056 = vpop.f32.mrf.mxu0
        %v6057 = vpop.f32.mrf.mxu0
        %v6058 = vadd.f32 %v5897, %v6057
        %v6059 = vpop.f32.mrf.mxu0
        %6060 = vmatprep.mubr.bf16.mxu0 0
        %6061 = vmatmul.mubr.bf16.gmra.mxu0 %v5604
        %v6062 = vpop.f32.mrf.mxu0
        %v6063 = vadd.f32 %v5902, %v6062
        %v6064 = vpop.f32.mrf.mxu0
        %v6065 = vpop.f32.mrf.mxu0
        %v6066 = vadd.f32 %v5905, %v6065
        %v6067 = vpop.f32.mrf.mxu0
        %6068 = vmatprep.mubr.bf16.mxu0 0
        %6069 = vmatmul.mubr.bf16.gmra.mxu0 %v5607
        %v6070 = vpop.f32.mrf.mxu0
        %v6071 = vadd.f32 %v5910, %v6070
        %v6072 = vpop.f32.mrf.mxu0
        %v6073 = vpop.f32.mrf.mxu0
        %v6074 = vadd.f32 %v5913, %v6073
        %v6075 = vpop.f32.mrf.mxu0
        %6076 = vmatprep.mubr.bf16.mxu0 0
        %6077 = vmatmul.mubr.bf16.gmra.mxu0 %v5610
        %v6078 = vpop.f32.mrf.mxu0
        %v6079 = vadd.f32 %v5918, %v6078
        %v6080 = vpop.f32.mrf.mxu0
        %v6081 = vpop.f32.mrf.mxu0
        %v6082 = vadd.f32 %v5921, %v6081
        %v6083 = vpop.f32.mrf.mxu0
        %6084 = vmatprep.mubr.bf16.mxu0 0
        %6085 = vmatmul.mubr.bf16.gmra.mxu0 %v5613
        %v6086 = vpop.f32.mrf.mxu0
        %v6087 = vadd.f32 %v5926, %v6086
        %v6088 = vpop.f32.mrf.mxu0
        %v6089 = vpop.f32.mrf.mxu0
        %v6090 = vadd.f32 %v5929, %v6089
        %v6091 = vpop.f32.mrf.mxu0
        %6092 = vmatprep.mubr.bf16.mxu0 0
        %6093 = vmatmul.mubr.bf16.gmra.mxu0 %v5616
        %v6094 = vpop.f32.mrf.mxu0
        %v6095 = vadd.f32 %v5934, %v6094
        %v6096 = vpop.f32.mrf.mxu0
        %v6097 = vpop.f32.mrf.mxu0
        %v6098 = vadd.f32 %v5937, %v6097
        %v6099 = vpop.f32.mrf.mxu0
        %6100 = vmatprep.mubr.bf16.mxu0 0
        %6101 = vmatmul.mubr.bf16.gmra.mxu0 %v5619
        %v6102 = vpop.f32.mrf.mxu0
        %v6103 = vadd.f32 %v5942, %v6102
        %v6104 = vpop.f32.mrf.mxu0
        %v6105 = vpop.f32.mrf.mxu0
        %v6106 = vadd.f32 %v5945, %v6105
        %v6107 = vpop.f32.mrf.mxu0
        %6108 = vmatprep.mubr.bf16.mxu0 0
        %6109 = vmatmul.mubr.bf16.gmra.mxu0 %v5622
        %v6110 = vpop.f32.mrf.mxu0
        %v6111 = vadd.f32 %v5950, %v6110
        %v6112 = vpop.f32.mrf.mxu0
        %v6113 = vpop.f32.mrf.mxu0
        %v6114 = vadd.f32 %v5953, %v6113
        %v6115 = vpop.f32.mrf.mxu0
        %6116 = vmatprep.mubr.bf16.mxu0 0
        %6117 = vmatmul.mubr.bf16.gmra.mxu0 %v5625
        %v6118 = vpop.f32.mrf.mxu0
        %v6119 = vadd.f32 %v5958, %v6118
        %v6120 = vpop.f32.mrf.mxu0
        %v6121 = vpop.f32.mrf.mxu0
        %v6122 = vadd.f32 %v5961, %v6121
        %v6123 = vpop.f32.mrf.mxu0
        %6124 = vmatprep.mubr.bf16.mxu0 0
        %6125 = vmatmul.mubr.bf16.gmra.mxu0 %v5628
        %v6126 = vpop.f32.mrf.mxu0
        %v6127 = vadd.f32 %v5966, %v6126
        %v6128 = vpop.f32.mrf.mxu0
        %v6129 = vpop.f32.mrf.mxu0
        %v6130 = vadd.f32 %v5969, %v6129
        %v6131 = vpop.f32.mrf.mxu0
        %6132 = vmatprep.mubr.bf16.mxu0 0
        %6133 = vmatmul.mubr.bf16.gmra.mxu0 %v5631
        %v6134 = vpop.f32.mrf.mxu0
        %v6135 = vadd.f32 %v5974, %v6134
        %v6136 = vpop.f32.mrf.mxu0
        %v6137 = vpop.f32.mrf.mxu0
        %v6138 = vadd.f32 %v5977, %v6137
        %v6139 = vpop.f32.mrf.mxu0
        %6140 = vmatprep.mubr.bf16.mxu0 0
        %6141 = vmatmul.mubr.bf16.gmra.mxu0 %v5634
        %v6142 = vpop.f32.mrf.mxu0
        %v6143 = vadd.f32 %v5982, %v6142
        %v6144 = vpop.f32.mrf.mxu0
        %v6145 = vpop.f32.mrf.mxu0
        %v6146 = vadd.f32 %v5985, %v6145
        %v6147 = vpop.f32.mrf.mxu0
        %6148 = vdwg.mxu0
        %v6149 = vld [vmem:[%s2752] sm:$0xff]
        %v6150 = vld [vmem:[%s2752 + $0x8] sm:$0xf]
        %v6151 = vld [vmem:[%s2752 + $0xc] sm:$0xff]
        %v6152 = vld [vmem:[%s2752 + $0x14] sm:$0xf]
        %v6153 = vld [vmem:[%s2752 + $0x18] sm:$0xff]
        %v6154 = vld [vmem:[%s2752 + $0x20] sm:$0xf]
        %v6155 = vld [vmem:[%s2752 + $0x24] sm:$0xff]
        %v6156 = vld [vmem:[%s2752 + $0x2c] sm:$0xf]
        %v6157 = vld [vmem:[%s2752 + $0x30] sm:$0xff]
        %v6158 = vld [vmem:[%s2752 + $0x38] sm:$0xf]
        %v6159 = vld [vmem:[%s2752 + $0x3c] sm:$0xff]
        %v6160 = vld [vmem:[%s2752 + $0x44] sm:$0xf]
        %v6161 = vld [vmem:[%s2752 + $0x48] sm:$0xff]
        %v6162 = vld [vmem:[%s2752 + $0x50] sm:$0xf]
        %v6163 = vld [vmem:[%s2752 + $0x54] sm:$0xff]
        %v6164 = vld [vmem:[%s2752 + $0x5c] sm:$0xf]
        %v6165 = vld [vmem:[%s2752 + $0x60] sm:$0xff]
        %v6166 = vld [vmem:[%s2752 + $0x68] sm:$0xf]
        %v6167 = vld [vmem:[%s2752 + $0x6c] sm:$0xff]
        %v6168 = vld [vmem:[%s2752 + $0x74] sm:$0xf]
        %v6169 = vld [vmem:[%s2752 + $0x78] sm:$0xff]
        %v6170 = vld [vmem:[%s2752 + $0x80] sm:$0xf]
        %v6171 = vld [vmem:[%s2752 + $0x84] sm:$0xff]
        %v6172 = vld [vmem:[%s2752 + $0x8c] sm:$0xf]
        %v6173 = vld [vmem:[%s2752 + $0x90] sm:$0xff]
        %v6174 = vld [vmem:[%s2752 + $0x98] sm:$0xf]
        %v6175 = vld [vmem:[%s2752 + $0x9c] sm:$0xff]
        %v6176 = vld [vmem:[%s2752 + $0xa4] sm:$0xf]
        %v6177 = vld [vmem:[%s2752 + $0xa8] sm:$0xff]
        %v6178 = vld [vmem:[%s2752 + $0xb0] sm:$0xf]
        %v6179 = vld [vmem:[%s2752 + $0xb4] sm:$0xff]
        %v6180 = vld [vmem:[%s2752 + $0xbc] sm:$0xf]
        %v6181 = vld [vmem:[%s2752 + $0xc0] sm:$0xff]
        %v6182 = vld [vmem:[%s2752 + $0xc8] sm:$0xf]
        %v6183 = vld [vmem:[%s2752 + $0xcc] sm:$0xff]
        %v6184 = vld [vmem:[%s2752 + $0xd4] sm:$0xf]
        %v6185 = vld [vmem:[%s2752 + $0xd8] sm:$0xff]
        %v6186 = vld [vmem:[%s2752 + $0xe0] sm:$0xf]
        %v6187 = vld [vmem:[%s2752 + $0xe4] sm:$0xff]
        %v6188 = vld [vmem:[%s2752 + $0xec] sm:$0xf]
        %v6189 = vld [vmem:[%s2752 + $0xf0] sm:$0xff]
        %v6190 = vld [vmem:[%s2752 + $0xf8] sm:$0xf]
        %v6191 = vld [vmem:[%s2752 + $0xfc] sm:$0xff]
        %v6192 = vld [vmem:[%s2752 + $0x104] sm:$0xf]
        %v6193 = vld [vmem:[%s2752 + $0x108] sm:$0xff]
        %v6194 = vld [vmem:[%s2752 + $0x110] sm:$0xf]
        %v6195 = vld [vmem:[%s2752 + $0x114] sm:$0xff]
        %v6196 = vld [vmem:[%s2752 + $0x11c] sm:$0xf]
        %v6197 = vld [vmem:[%s2752 + $0x120] sm:$0xff]
        %v6198 = vld [vmem:[%s2752 + $0x128] sm:$0xf]
        %v6199 = vld [vmem:[%s2752 + $0x12c] sm:$0xff]
        %v6200 = vld [vmem:[%s2752 + $0x134] sm:$0xf]
        %v6201 = vld [vmem:[%s2752 + $0x138] sm:$0xff]
        %v6202 = vld [vmem:[%s2752 + $0x140] sm:$0xf]
        %v6203 = vld [vmem:[%s2752 + $0x144] sm:$0xff]
        %v6204 = vld [vmem:[%s2752 + $0x14c] sm:$0xf]
        %v6205 = vld [vmem:[%s2752 + $0x150] sm:$0xff]
        %v6206 = vld [vmem:[%s2752 + $0x158] sm:$0xf]
        %v6207 = vld [vmem:[%s2752 + $0x15c] sm:$0xff]
        %v6208 = vld [vmem:[%s2752 + $0x164] sm:$0xf]
        %v6209 = vld [vmem:[%s2752 + $0x168] sm:$0xff]
        %v6210 = vld [vmem:[%s2752 + $0x170] sm:$0xf]
        %v6211 = vld [vmem:[%s2752 + $0x174] sm:$0xff]
        %v6212 = vld [vmem:[%s2752 + $0x17c] sm:$0xf]
        %v6213 = vld [vmem:[#allocation3 + $0x180] sm:$0xf]
        %v6214 = vld [vmem:[#allocation3 + $0x184] sm:$0xf]
        %v6215 = vld [vmem:[#allocation3 + $0x188] sm:$0xf]
        %v6216 = vld [vmem:[#allocation3 + $0x18c] sm:$0xf]
        %v6217 = vld [vmem:[#allocation3 + $0x190] sm:$0xf]
        %v6218 = vld [vmem:[#allocation3 + $0x194] sm:$0xf]
        %v6219 = vld [vmem:[#allocation3 + $0x198] sm:$0xf]
        %v6220 = vld [vmem:[#allocation3 + $0x19c] sm:$0xf]
        %v6221 = vld [vmem:[#allocation3 + $0x1a0] sm:$0xf]
        %v6222 = vld [vmem:[#allocation3 + $0x1a4] sm:$0xf]
        %v6223 = vld [vmem:[#allocation3 + $0x1a8] sm:$0xf]
        %v6224 = vld [vmem:[#allocation3 + $0x1ac] sm:$0xf]
        %v6225 = vld [vmem:[#allocation3 + $0x1b0] sm:$0xf]
        %v6226 = vld [vmem:[#allocation3 + $0x1b4] sm:$0xf]
        %v6227 = vld [vmem:[#allocation3 + $0x1b8] sm:$0xf]
        %v6228 = vld [vmem:[#allocation3 + $0x1bc] sm:$0xf]
        %v6229 = vld [vmem:[#allocation3 + $0x1c0] sm:$0xf]
        %v6230 = vld [vmem:[#allocation3 + $0x1c4] sm:$0xf]
        %v6231 = vld [vmem:[#allocation3 + $0x1c8] sm:$0xf]
        %v6232 = vld [vmem:[#allocation3 + $0x1cc] sm:$0xf]
        %v6233 = vld [vmem:[#allocation3 + $0x1d0] sm:$0xf]
        %v6234 = vld [vmem:[#allocation3 + $0x1d4] sm:$0xf]
        %v6235 = vld [vmem:[#allocation3 + $0x1d8] sm:$0xf]
        %v6236 = vld [vmem:[#allocation3 + $0x1dc] sm:$0xf]
        %v6237 = vld [vmem:[#allocation3 + $0x1e0] sm:$0xf]
        %v6238 = vld [vmem:[#allocation3 + $0x1e4] sm:$0xf]
        %v6239 = vld [vmem:[#allocation3 + $0x1e8] sm:$0xf]
        %v6240 = vld [vmem:[#allocation3 + $0x1ec] sm:$0xf]
        %v6241 = vld [vmem:[#allocation3 + $0x1f0] sm:$0xf]
        %v6242 = vld [vmem:[#allocation3 + $0x1f4] sm:$0xf]
        %v6243 = vld [vmem:[#allocation3 + $0x1f8] sm:$0xf]
        %v6244 = vld [vmem:[#allocation3 + $0x1fc] sm:$0xf]
        %v6245 = vld [vmem:[#allocation3 + $0x200] sm:$0xf]
        %v6246 = vld [vmem:[#allocation3 + $0x204] sm:$0xf]
        %v6247 = vld [vmem:[#allocation3 + $0x208] sm:$0xf]
        %v6248 = vld [vmem:[#allocation3 + $0x20c] sm:$0xf]
        %v6249 = vld [vmem:[#allocation3 + $0x210] sm:$0xf]
        %v6250 = vld [vmem:[#allocation3 + $0x214] sm:$0xf]
        %v6251 = vld [vmem:[#allocation3 + $0x218] sm:$0xf]
        %v6252 = vld [vmem:[#allocation3 + $0x21c] sm:$0xf]
        %v6253 = vld [vmem:[#allocation3 + $0x220] sm:$0xf]
        %v6254 = vld [vmem:[#allocation3 + $0x224] sm:$0xf]
        %v6255 = vld [vmem:[#allocation3 + $0x228] sm:$0xf]
        %v6256 = vld [vmem:[#allocation3 + $0x22c] sm:$0xf]
        %v6257 = vld [vmem:[#allocation3 + $0x230] sm:$0xf]
        %v6258 = vld [vmem:[#allocation3 + $0x234] sm:$0xf]
        %v6259 = vld [vmem:[#allocation3 + $0x238] sm:$0xf]
        %v6260 = vld [vmem:[#allocation3 + $0x23c] sm:$0xf]
        %v6325 = vunpack.c.l.b16 %v6149
        %v6326 = vunpack.c.h.b16 %v6149
        %v6327 = vunpack.c.l.b16 %v6150
        %v6328 = vunpack.c.l.b16 %v6151
        %v6329 = vunpack.c.h.b16 %v6151
        %v6330 = vunpack.c.l.b16 %v6152
        %v6331 = vunpack.c.l.b16 %v6153
        %v6332 = vunpack.c.h.b16 %v6153
        %v6333 = vunpack.c.l.b16 %v6154
        %v6334 = vunpack.c.l.b16 %v6155
        %v6335 = vunpack.c.h.b16 %v6155
        %v6336 = vunpack.c.l.b16 %v6156
        %v6337 = vunpack.c.l.b16 %v6157
        %v6338 = vunpack.c.h.b16 %v6157
        %v6339 = vunpack.c.l.b16 %v6158
        %v6340 = vunpack.c.l.b16 %v6159
        %v6341 = vunpack.c.h.b16 %v6159
        %v6342 = vunpack.c.l.b16 %v6160
        %v6343 = vunpack.c.l.b16 %v6161
        %v6344 = vunpack.c.h.b16 %v6161
        %v6345 = vunpack.c.l.b16 %v6162
        %v6346 = vunpack.c.l.b16 %v6163
        %v6347 = vunpack.c.h.b16 %v6163
        %v6348 = vunpack.c.l.b16 %v6164
        %v6349 = vunpack.c.l.b16 %v6165
        %v6350 = vunpack.c.h.b16 %v6165
        %v6351 = vunpack.c.l.b16 %v6166
        %v6352 = vunpack.c.l.b16 %v6167
        %v6353 = vunpack.c.h.b16 %v6167
        %v6354 = vunpack.c.l.b16 %v6168
        %v6355 = vunpack.c.l.b16 %v6169
        %v6356 = vunpack.c.h.b16 %v6169
        %v6357 = vunpack.c.l.b16 %v6170
        %v6358 = vunpack.c.l.b16 %v6171
        %v6359 = vunpack.c.h.b16 %v6171
        %v6360 = vunpack.c.l.b16 %v6172
        %v6361 = vunpack.c.l.b16 %v6173
        %v6362 = vunpack.c.h.b16 %v6173
        %v6363 = vunpack.c.l.b16 %v6174
        %v6364 = vunpack.c.l.b16 %v6175
        %v6365 = vunpack.c.h.b16 %v6175
        %v6366 = vunpack.c.l.b16 %v6176
        %v6367 = vunpack.c.l.b16 %v6177
        %v6368 = vunpack.c.h.b16 %v6177
        %v6369 = vunpack.c.l.b16 %v6178
        %v6370 = vunpack.c.l.b16 %v6179
        %v6371 = vunpack.c.h.b16 %v6179
        %v6372 = vunpack.c.l.b16 %v6180
        %v6373 = vunpack.c.l.b16 %v6181
        %v6374 = vunpack.c.h.b16 %v6181
        %v6375 = vunpack.c.l.b16 %v6182
        %v6376 = vunpack.c.l.b16 %v6183
        %v6377 = vunpack.c.h.b16 %v6183
        %v6378 = vunpack.c.l.b16 %v6184
        %v6379 = vunpack.c.l.b16 %v6185
        %v6380 = vunpack.c.h.b16 %v6185
        %v6381 = vunpack.c.l.b16 %v6186
        %v6382 = vunpack.c.l.b16 %v6187
        %v6383 = vunpack.c.h.b16 %v6187
        %v6384 = vunpack.c.l.b16 %v6188
        %v6385 = vunpack.c.l.b16 %v6189
        %v6386 = vunpack.c.h.b16 %v6189
        %v6387 = vunpack.c.l.b16 %v6190
        %v6388 = vunpack.c.l.b16 %v6191
        %v6389 = vunpack.c.h.b16 %v6191
        %v6390 = vunpack.c.l.b16 %v6192
        %v6391 = vunpack.c.l.b16 %v6193
        %v6392 = vunpack.c.h.b16 %v6193
        %v6393 = vunpack.c.l.b16 %v6194
        %v6394 = vunpack.c.l.b16 %v6195
        %v6395 = vunpack.c.h.b16 %v6195
        %v6396 = vunpack.c.l.b16 %v6196
        %v6397 = vunpack.c.l.b16 %v6197
        %v6398 = vunpack.c.h.b16 %v6197
        %v6399 = vunpack.c.l.b16 %v6198
        %v6400 = vunpack.c.l.b16 %v6199
        %v6401 = vunpack.c.h.b16 %v6199
        %v6402 = vunpack.c.l.b16 %v6200
        %v6403 = vunpack.c.l.b16 %v6201
        %v6404 = vunpack.c.h.b16 %v6201
        %v6405 = vunpack.c.l.b16 %v6202
        %v6406 = vunpack.c.l.b16 %v6203
        %v6407 = vunpack.c.h.b16 %v6203
        %v6408 = vunpack.c.l.b16 %v6204
        %v6409 = vunpack.c.l.b16 %v6205
        %v6410 = vunpack.c.h.b16 %v6205
        %v6411 = vunpack.c.l.b16 %v6206
        %v6412 = vunpack.c.l.b16 %v6207
        %v6413 = vunpack.c.h.b16 %v6207
        %v6414 = vunpack.c.l.b16 %v6208
        %v6415 = vunpack.c.l.b16 %v6209
        %v6416 = vunpack.c.h.b16 %v6209
        %v6417 = vunpack.c.l.b16 %v6210
        %v6418 = vunpack.c.l.b16 %v6211
        %v6419 = vunpack.c.h.b16 %v6211
        %v6420 = vunpack.c.l.b16 %v6212
        %v6421 = vpack.c.b16 %v6328, %v6325
        %v6422 = vpack.c.b16 %v6329, %v6326
        %v6423 = vpack.c.b16 %v6330, %v6327
        %v6424 = vpack.c.b16 %v6334, %v6331
        %v6425 = vpack.c.b16 %v6335, %v6332
        %v6426 = vpack.c.b16 %v6336, %v6333
        %v6427 = vpack.c.b16 %v6340, %v6337
        %v6428 = vpack.c.b16 %v6341, %v6338
        %v6429 = vpack.c.b16 %v6342, %v6339
        %v6430 = vpack.c.b16 %v6346, %v6343
        %v6431 = vpack.c.b16 %v6347, %v6344
        %v6432 = vpack.c.b16 %v6348, %v6345
        %v6433 = vpack.c.b16 %v6352, %v6349
        %v6434 = vpack.c.b16 %v6353, %v6350
        %v6435 = vpack.c.b16 %v6354, %v6351
        %v6436 = vpack.c.b16 %v6358, %v6355
        %v6437 = vpack.c.b16 %v6359, %v6356
        %v6438 = vpack.c.b16 %v6360, %v6357
        %v6439 = vpack.c.b16 %v6364, %v6361
        %v6440 = vpack.c.b16 %v6365, %v6362
        %v6441 = vpack.c.b16 %v6366, %v6363
        %v6442 = vpack.c.b16 %v6370, %v6367
        %v6443 = vpack.c.b16 %v6371, %v6368
        %v6444 = vpack.c.b16 %v6372, %v6369
        %v6445 = vpack.c.b16 %v6376, %v6373
        %v6446 = vpack.c.b16 %v6377, %v6374
        %v6447 = vpack.c.b16 %v6378, %v6375
        %v6448 = vpack.c.b16 %v6382, %v6379
        %v6449 = vpack.c.b16 %v6383, %v6380
        %v6450 = vpack.c.b16 %v6384, %v6381
        %v6451 = vpack.c.b16 %v6388, %v6385
        %v6452 = vpack.c.b16 %v6389, %v6386
        %v6453 = vpack.c.b16 %v6390, %v6387
        %v6454 = vpack.c.b16 %v6394, %v6391
        %v6455 = vpack.c.b16 %v6395, %v6392
        %v6456 = vpack.c.b16 %v6396, %v6393
        %v6457 = vpack.c.b16 %v6400, %v6397
        %v6458 = vpack.c.b16 %v6401, %v6398
        %v6459 = vpack.c.b16 %v6402, %v6399
        %v6460 = vpack.c.b16 %v6406, %v6403
        %v6461 = vpack.c.b16 %v6407, %v6404
        %v6462 = vpack.c.b16 %v6408, %v6405
        %v6463 = vpack.c.b16 %v6412, %v6409
        %v6464 = vpack.c.b16 %v6413, %v6410
        %v6465 = vpack.c.b16 %v6414, %v6411
        %v6466 = vpack.c.b16 %v6418, %v6415
        %v6467 = vpack.c.b16 %v6419, %v6416
        %v6468 = vpack.c.b16 %v6420, %v6417
        %v6565 = vunpack.c.l.b16 %v6213
        %v6566 = vunpack.c.l.b16 %v6214
        %v6567 = vunpack.c.l.b16 %v6215
        %v6568 = vunpack.c.l.b16 %v6216
        %v6569 = vunpack.c.l.b16 %v6217
        %v6570 = vunpack.c.l.b16 %v6218
        %v6571 = vunpack.c.l.b16 %v6219
        %v6572 = vunpack.c.l.b16 %v6220
        %v6573 = vunpack.c.l.b16 %v6221
        %v6574 = vunpack.c.l.b16 %v6222
        %v6575 = vunpack.c.l.b16 %v6223
        %v6576 = vunpack.c.l.b16 %v6224
        %v6577 = vunpack.c.l.b16 %v6225
        %v6578 = vunpack.c.l.b16 %v6226
        %v6579 = vunpack.c.l.b16 %v6227
        %v6580 = vunpack.c.l.b16 %v6228
        %v6581 = vunpack.c.l.b16 %v6229
        %v6582 = vunpack.c.l.b16 %v6230
        %v6583 = vunpack.c.l.b16 %v6231
        %v6584 = vunpack.c.l.b16 %v6232
        %v6585 = vunpack.c.l.b16 %v6233
        %v6586 = vunpack.c.l.b16 %v6234
        %v6587 = vunpack.c.l.b16 %v6235
        %v6588 = vunpack.c.l.b16 %v6236
        %v6589 = vunpack.c.l.b16 %v6237
        %v6590 = vunpack.c.l.b16 %v6238
        %v6591 = vunpack.c.l.b16 %v6239
        %v6592 = vunpack.c.l.b16 %v6240
        %v6593 = vunpack.c.l.b16 %v6241
        %v6594 = vunpack.c.l.b16 %v6242
        %v6595 = vunpack.c.l.b16 %v6243
        %v6596 = vunpack.c.l.b16 %v6244
        %v6597 = vunpack.c.l.b16 %v6245
        %v6598 = vunpack.c.l.b16 %v6246
        %v6599 = vunpack.c.l.b16 %v6247
        %v6600 = vunpack.c.l.b16 %v6248
        %v6601 = vunpack.c.l.b16 %v6249
        %v6602 = vunpack.c.l.b16 %v6250
        %v6603 = vunpack.c.l.b16 %v6251
        %v6604 = vunpack.c.l.b16 %v6252
        %v6605 = vunpack.c.l.b16 %v6253
        %v6606 = vunpack.c.l.b16 %v6254
        %v6607 = vunpack.c.l.b16 %v6255
        %v6608 = vunpack.c.l.b16 %v6256
        %v6609 = vunpack.c.l.b16 %v6257
        %v6610 = vunpack.c.l.b16 %v6258
        %v6611 = vunpack.c.l.b16 %v6259
        %v6612 = vunpack.c.l.b16 %v6260
        %v6613 = vpack.c.b16 %v6566, %v6565
        %v6614 = vpack.c.b16 %v6568, %v6567
        %v6615 = vpack.c.b16 %v6570, %v6569
        %v6616 = vpack.c.b16 %v6572, %v6571
        %v6617 = vpack.c.b16 %v6574, %v6573
        %v6618 = vpack.c.b16 %v6576, %v6575
        %v6619 = vpack.c.b16 %v6578, %v6577
        %v6620 = vpack.c.b16 %v6580, %v6579
        %v6621 = vpack.c.b16 %v6582, %v6581
        %v6622 = vpack.c.b16 %v6584, %v6583
        %v6623 = vpack.c.b16 %v6586, %v6585
        %v6624 = vpack.c.b16 %v6588, %v6587
        %v6625 = vpack.c.b16 %v6590, %v6589
        %v6626 = vpack.c.b16 %v6592, %v6591
        %v6627 = vpack.c.b16 %v6594, %v6593
        %v6628 = vpack.c.b16 %v6596, %v6595
        %v6629 = vpack.c.b16 %v6598, %v6597
        %v6630 = vpack.c.b16 %v6600, %v6599
        %v6631 = vpack.c.b16 %v6602, %v6601
        %v6632 = vpack.c.b16 %v6604, %v6603
        %v6633 = vpack.c.b16 %v6606, %v6605
        %v6634 = vpack.c.b16 %v6608, %v6607
        %v6635 = vpack.c.b16 %v6610, %v6609
        %v6636 = vpack.c.b16 %v6612, %v6611
        %6661 = vmatprep.subr.bf16.mxu0 0
        %6662 = vmatpush1.bf16.msra.mxu0 %v6620
        %6663 = vmatprep.subr.bf16.mxu0 0
        %6664 = vmatpush1.bf16.msra.mxu0 %v6619
        %6665 = vmatprep.subr.bf16.mxu0 0
        %6666 = vmatpush1.bf16.msra.mxu0 %v6618
        %6667 = vmatprep.subr.bf16.mxu0 0
        %6668 = vmatpush1.bf16.msra.mxu0 %v6617
        %6669 = vmatprep.subr.bf16.mxu0 0
        %6670 = vmatpush1.bf16.msra.mxu0 %v6616
        %6671 = vmatprep.subr.bf16.mxu0 0
        %6672 = vmatpush1.bf16.msra.mxu0 %v6615
        %6673 = vmatprep.subr.bf16.mxu0 0
        %6674 = vmatpush1.bf16.msra.mxu0 %v6614
        %6675 = vmatprep.subr.bf16.mxu0 0
        %6676 = vmatpush1.bf16.msra.mxu0 %v6613
        %6677 = vmatprep.subr.bf16.mxu0 0
        %6678 = vmatpush2.bf16.msra.mxu0 %v6628
        %6679 = vmatprep.subr.bf16.mxu0 0
        %6680 = vmatpush2.bf16.msra.mxu0 %v6627
        %6681 = vmatprep.subr.bf16.mxu0 0
        %6682 = vmatpush2.bf16.msra.mxu0 %v6626
        %6683 = vmatprep.subr.bf16.mxu0 0
        %6684 = vmatpush2.bf16.msra.mxu0 %v6625
        %6685 = vmatprep.subr.bf16.mxu0 0
        %6686 = vmatpush2.bf16.msra.mxu0 %v6624
        %6687 = vmatprep.subr.bf16.mxu0 0
        %6688 = vmatpush2.bf16.msra.mxu0 %v6623
        %6689 = vmatprep.subr.bf16.mxu0 0
        %6690 = vmatpush2.bf16.msra.mxu0 %v6622
        %6691 = vmatprep.subr.bf16.mxu0 0
        %6692 = vmatpush2.bf16.msra.mxu0 %v6621
        %6693 = vmatprep.mubr.bf16.mxu0 %v6422
        %6694 = vmatmul.mubr.bf16.gmra.mxu0 %v6421
        %v6695 = vpop.f32.mrf.mxu0
        %v6696 = vadd.f32 0.0, %v6695
        %v6697 = vpop.f32.mrf.mxu0
        %v6698 = vpop.f32.mrf.mxu0
        %v6699 = vadd.f32 0.0, %v6698
        %v6700 = vpop.f32.mrf.mxu0
        %6701 = vmatprep.mubr.bf16.mxu0 %v6425
        %6702 = vmatmul.mubr.bf16.gmra.mxu0 %v6424
        %v6703 = vpop.f32.mrf.mxu0
        %v6704 = vadd.f32 0.0, %v6703
        %v6705 = vpop.f32.mrf.mxu0
        %v6706 = vpop.f32.mrf.mxu0
        %v6707 = vadd.f32 0.0, %v6706
        %v6708 = vpop.f32.mrf.mxu0
        %6709 = vmatprep.mubr.bf16.mxu0 %v6428
        %6710 = vmatmul.mubr.bf16.gmra.mxu0 %v6427
        %v6711 = vpop.f32.mrf.mxu0
        %v6712 = vadd.f32 0.0, %v6711
        %v6713 = vpop.f32.mrf.mxu0
        %v6714 = vpop.f32.mrf.mxu0
        %v6715 = vadd.f32 0.0, %v6714
        %v6716 = vpop.f32.mrf.mxu0
        %6717 = vmatprep.mubr.bf16.mxu0 %v6431
        %6718 = vmatmul.mubr.bf16.gmra.mxu0 %v6430
        %v6719 = vpop.f32.mrf.mxu0
        %v6720 = vadd.f32 0.0, %v6719
        %v6721 = vpop.f32.mrf.mxu0
        %v6722 = vpop.f32.mrf.mxu0
        %v6723 = vadd.f32 0.0, %v6722
        %v6724 = vpop.f32.mrf.mxu0
        %6725 = vmatprep.mubr.bf16.mxu0 %v6434
        %6726 = vmatmul.mubr.bf16.gmra.mxu0 %v6433
        %v6727 = vpop.f32.mrf.mxu0
        %v6728 = vadd.f32 0.0, %v6727
        %v6729 = vpop.f32.mrf.mxu0
        %v6730 = vpop.f32.mrf.mxu0
        %v6731 = vadd.f32 0.0, %v6730
        %v6732 = vpop.f32.mrf.mxu0
        %6733 = vmatprep.mubr.bf16.mxu0 %v6437
        %6734 = vmatmul.mubr.bf16.gmra.mxu0 %v6436
        %v6735 = vpop.f32.mrf.mxu0
        %v6736 = vadd.f32 0.0, %v6735
        %v6737 = vpop.f32.mrf.mxu0
        %v6738 = vpop.f32.mrf.mxu0
        %v6739 = vadd.f32 0.0, %v6738
        %v6740 = vpop.f32.mrf.mxu0
        %6741 = vmatprep.mubr.bf16.mxu0 %v6440
        %6742 = vmatmul.mubr.bf16.gmra.mxu0 %v6439
        %v6743 = vpop.f32.mrf.mxu0
        %v6744 = vadd.f32 0.0, %v6743
        %v6745 = vpop.f32.mrf.mxu0
        %v6746 = vpop.f32.mrf.mxu0
        %v6747 = vadd.f32 0.0, %v6746
        %v6748 = vpop.f32.mrf.mxu0
        %6749 = vmatprep.mubr.bf16.mxu0 %v6443
        %6750 = vmatmul.mubr.bf16.gmra.mxu0 %v6442
        %v6751 = vpop.f32.mrf.mxu0
        %v6752 = vadd.f32 0.0, %v6751
        %v6753 = vpop.f32.mrf.mxu0
        %v6754 = vpop.f32.mrf.mxu0
        %v6755 = vadd.f32 0.0, %v6754
        %v6756 = vpop.f32.mrf.mxu0
        %6757 = vmatprep.mubr.bf16.mxu0 %v6446
        %6758 = vmatmul.mubr.bf16.gmra.mxu0 %v6445
        %v6759 = vpop.f32.mrf.mxu0
        %v6760 = vadd.f32 0.0, %v6759
        %v6761 = vpop.f32.mrf.mxu0
        %v6762 = vpop.f32.mrf.mxu0
        %v6763 = vadd.f32 0.0, %v6762
        %v6764 = vpop.f32.mrf.mxu0
        %6765 = vmatprep.mubr.bf16.mxu0 %v6449
        %6766 = vmatmul.mubr.bf16.gmra.mxu0 %v6448
        %v6767 = vpop.f32.mrf.mxu0
        %v6768 = vadd.f32 0.0, %v6767
        %v6769 = vpop.f32.mrf.mxu0
        %v6770 = vpop.f32.mrf.mxu0
        %v6771 = vadd.f32 0.0, %v6770
        %v6772 = vpop.f32.mrf.mxu0
        %6773 = vmatprep.mubr.bf16.mxu0 %v6452
        %6774 = vmatmul.mubr.bf16.gmra.mxu0 %v6451
        %v6775 = vpop.f32.mrf.mxu0
        %v6776 = vadd.f32 0.0, %v6775
        %v6777 = vpop.f32.mrf.mxu0
        %v6778 = vpop.f32.mrf.mxu0
        %v6779 = vadd.f32 0.0, %v6778
        %v6780 = vpop.f32.mrf.mxu0
        %6781 = vmatprep.mubr.bf16.mxu0 %v6455
        %6782 = vmatmul.mubr.bf16.gmra.mxu0 %v6454
        %v6783 = vpop.f32.mrf.mxu0
        %v6784 = vadd.f32 0.0, %v6783
        %v6785 = vpop.f32.mrf.mxu0
        %v6786 = vpop.f32.mrf.mxu0
        %v6787 = vadd.f32 0.0, %v6786
        %v6788 = vpop.f32.mrf.mxu0
        %6789 = vmatprep.mubr.bf16.mxu0 %v6458
        %6790 = vmatmul.mubr.bf16.gmra.mxu0 %v6457
        %v6791 = vpop.f32.mrf.mxu0
        %v6792 = vadd.f32 0.0, %v6791
        %v6793 = vpop.f32.mrf.mxu0
        %v6794 = vpop.f32.mrf.mxu0
        %v6795 = vadd.f32 0.0, %v6794
        %v6796 = vpop.f32.mrf.mxu0
        %6797 = vmatprep.mubr.bf16.mxu0 %v6461
        %6798 = vmatmul.mubr.bf16.gmra.mxu0 %v6460
        %v6799 = vpop.f32.mrf.mxu0
        %v6800 = vadd.f32 0.0, %v6799
        %v6801 = vpop.f32.mrf.mxu0
        %v6802 = vpop.f32.mrf.mxu0
        %v6803 = vadd.f32 0.0, %v6802
        %v6804 = vpop.f32.mrf.mxu0
        %6805 = vmatprep.mubr.bf16.mxu0 %v6464
        %6806 = vmatmul.mubr.bf16.gmra.mxu0 %v6463
        %v6807 = vpop.f32.mrf.mxu0
        %v6808 = vadd.f32 0.0, %v6807
        %v6809 = vpop.f32.mrf.mxu0
        %v6810 = vpop.f32.mrf.mxu0
        %v6811 = vadd.f32 0.0, %v6810
        %v6812 = vpop.f32.mrf.mxu0
        %6813 = vmatprep.mubr.bf16.mxu0 %v6467
        %6814 = vmatmul.mubr.bf16.gmra.mxu0 %v6466
        %v6815 = vpop.f32.mrf.mxu0
        %v6816 = vadd.f32 0.0, %v6815
        %v6817 = vpop.f32.mrf.mxu0
        %v6818 = vpop.f32.mrf.mxu0
        %v6819 = vadd.f32 0.0, %v6818
        %v6820 = vpop.f32.mrf.mxu0
        %6821 = vdwg.mxu0
        %6822 = vmatprep.subr.bf16.mxu0 0
        %6823 = vmatpush1.bf16.msra.mxu0 %v6636
        %6824 = vmatprep.subr.bf16.mxu0 0
        %6825 = vmatpush1.bf16.msra.mxu0 %v6635
        %6826 = vmatprep.subr.bf16.mxu0 0
        %6827 = vmatpush1.bf16.msra.mxu0 %v6634
        %6828 = vmatprep.subr.bf16.mxu0 0
        %6829 = vmatpush1.bf16.msra.mxu0 %v6633
        %6830 = vmatprep.subr.bf16.mxu0 0
        %6831 = vmatpush1.bf16.msra.mxu0 %v6632
        %6832 = vmatprep.subr.bf16.mxu0 0
        %6833 = vmatpush1.bf16.msra.mxu0 %v6631
        %6834 = vmatprep.subr.bf16.mxu0 0
        %6835 = vmatpush1.bf16.msra.mxu0 %v6630
        %6836 = vmatprep.subr.bf16.mxu0 0
        %6837 = vmatpush1.bf16.msra.mxu0 %v6629
        %6838 = vmatprep.subr.bf16.mxu0 0
        %6839 = vmatpush2.bf16.msra.mxu0 0
        %6840 = vmatprep.subr.bf16.mxu0 0
        %6841 = vmatpush2.bf16.msra.mxu0 0
        %6842 = vmatprep.subr.bf16.mxu0 0
        %6843 = vmatpush2.bf16.msra.mxu0 0
        %6844 = vmatprep.subr.bf16.mxu0 0
        %6845 = vmatpush2.bf16.msra.mxu0 0
        %6846 = vmatprep.subr.bf16.mxu0 0
        %6847 = vmatpush2.bf16.msra.mxu0 0
        %6848 = vmatprep.subr.bf16.mxu0 0
        %6849 = vmatpush2.bf16.msra.mxu0 0
        %6850 = vmatprep.subr.bf16.mxu0 0
        %6851 = vmatpush2.bf16.msra.mxu0 0
        %6852 = vmatprep.subr.bf16.mxu0 0
        %6853 = vmatpush2.bf16.msra.mxu0 0
        %6854 = vmatprep.mubr.bf16.mxu0 0
        %6855 = vmatmul.mubr.bf16.gmra.mxu0 %v6423
        %v6856 = vpop.f32.mrf.mxu0
        %v6857 = vadd.f32 %v6696, %v6856
        %v6858 = vpop.f32.mrf.mxu0
        %v6859 = vpop.f32.mrf.mxu0
        %v6860 = vadd.f32 %v6699, %v6859
        %v6861 = vpop.f32.mrf.mxu0
        %6862 = vmatprep.mubr.bf16.mxu0 0
        %6863 = vmatmul.mubr.bf16.gmra.mxu0 %v6426
        %v6864 = vpop.f32.mrf.mxu0
        %v6865 = vadd.f32 %v6704, %v6864
        %v6866 = vpop.f32.mrf.mxu0
        %v6867 = vpop.f32.mrf.mxu0
        %v6868 = vadd.f32 %v6707, %v6867
        %v6869 = vpop.f32.mrf.mxu0
        %6870 = vmatprep.mubr.bf16.mxu0 0
        %6871 = vmatmul.mubr.bf16.gmra.mxu0 %v6429
        %v6872 = vpop.f32.mrf.mxu0
        %v6873 = vadd.f32 %v6712, %v6872
        %v6874 = vpop.f32.mrf.mxu0
        %v6875 = vpop.f32.mrf.mxu0
        %v6876 = vadd.f32 %v6715, %v6875
        %v6877 = vpop.f32.mrf.mxu0
        %6878 = vmatprep.mubr.bf16.mxu0 0
        %6879 = vmatmul.mubr.bf16.gmra.mxu0 %v6432
        %v6880 = vpop.f32.mrf.mxu0
        %v6881 = vadd.f32 %v6720, %v6880
        %v6882 = vpop.f32.mrf.mxu0
        %v6883 = vpop.f32.mrf.mxu0
        %v6884 = vadd.f32 %v6723, %v6883
        %v6885 = vpop.f32.mrf.mxu0
        %6886 = vmatprep.mubr.bf16.mxu0 0
        %6887 = vmatmul.mubr.bf16.gmra.mxu0 %v6435
        %v6888 = vpop.f32.mrf.mxu0
        %v6889 = vadd.f32 %v6728, %v6888
        %v6890 = vpop.f32.mrf.mxu0
        %v6891 = vpop.f32.mrf.mxu0
        %v6892 = vadd.f32 %v6731, %v6891
        %v6893 = vpop.f32.mrf.mxu0
        %6894 = vmatprep.mubr.bf16.mxu0 0
        %6895 = vmatmul.mubr.bf16.gmra.mxu0 %v6438
        %v6896 = vpop.f32.mrf.mxu0
        %v6897 = vadd.f32 %v6736, %v6896
        %v6898 = vpop.f32.mrf.mxu0
        %v6899 = vpop.f32.mrf.mxu0
        %v6900 = vadd.f32 %v6739, %v6899
        %v6901 = vpop.f32.mrf.mxu0
        %6902 = vmatprep.mubr.bf16.mxu0 0
        %6903 = vmatmul.mubr.bf16.gmra.mxu0 %v6441
        %v6904 = vpop.f32.mrf.mxu0
        %v6905 = vadd.f32 %v6744, %v6904
        %v6906 = vpop.f32.mrf.mxu0
        %v6907 = vpop.f32.mrf.mxu0
        %v6908 = vadd.f32 %v6747, %v6907
        %v6909 = vpop.f32.mrf.mxu0
        %6910 = vmatprep.mubr.bf16.mxu0 0
        %6911 = vmatmul.mubr.bf16.gmra.mxu0 %v6444
        %v6912 = vpop.f32.mrf.mxu0
        %v6913 = vadd.f32 %v6752, %v6912
        %v6914 = vpop.f32.mrf.mxu0
        %v6915 = vpop.f32.mrf.mxu0
        %v6916 = vadd.f32 %v6755, %v6915
        %v6917 = vpop.f32.mrf.mxu0
        %6918 = vmatprep.mubr.bf16.mxu0 0
        %6919 = vmatmul.mubr.bf16.gmra.mxu0 %v6447
        %v6920 = vpop.f32.mrf.mxu0
        %v6921 = vadd.f32 %v6760, %v6920
        %v6922 = vpop.f32.mrf.mxu0
        %v6923 = vpop.f32.mrf.mxu0
        %v6924 = vadd.f32 %v6763, %v6923
        %v6925 = vpop.f32.mrf.mxu0
        %6926 = vmatprep.mubr.bf16.mxu0 0
        %6927 = vmatmul.mubr.bf16.gmra.mxu0 %v6450
        %v6928 = vpop.f32.mrf.mxu0
        %v6929 = vadd.f32 %v6768, %v6928
        %v6930 = vpop.f32.mrf.mxu0
        %v6931 = vpop.f32.mrf.mxu0
        %v6932 = vadd.f32 %v6771, %v6931
        %v6933 = vpop.f32.mrf.mxu0
        %6934 = vmatprep.mubr.bf16.mxu0 0
        %6935 = vmatmul.mubr.bf16.gmra.mxu0 %v6453
        %v6936 = vpop.f32.mrf.mxu0
        %v6937 = vadd.f32 %v6776, %v6936
        %v6938 = vpop.f32.mrf.mxu0
        %v6939 = vpop.f32.mrf.mxu0
        %v6940 = vadd.f32 %v6779, %v6939
        %v6941 = vpop.f32.mrf.mxu0
        %6942 = vmatprep.mubr.bf16.mxu0 0
        %6943 = vmatmul.mubr.bf16.gmra.mxu0 %v6456
        %v6944 = vpop.f32.mrf.mxu0
        %v6945 = vadd.f32 %v6784, %v6944
        %v6946 = vpop.f32.mrf.mxu0
        %v6947 = vpop.f32.mrf.mxu0
        %v6948 = vadd.f32 %v6787, %v6947
        %v6949 = vpop.f32.mrf.mxu0
        %6950 = vmatprep.mubr.bf16.mxu0 0
        %6951 = vmatmul.mubr.bf16.gmra.mxu0 %v6459
        %v6952 = vpop.f32.mrf.mxu0
        %v6953 = vadd.f32 %v6792, %v6952
        %v6954 = vpop.f32.mrf.mxu0
        %v6955 = vpop.f32.mrf.mxu0
        %v6956 = vadd.f32 %v6795, %v6955
        %v6957 = vpop.f32.mrf.mxu0
        %6958 = vmatprep.mubr.bf16.mxu0 0
        %6959 = vmatmul.mubr.bf16.gmra.mxu0 %v6462
        %v6960 = vpop.f32.mrf.mxu0
        %v6961 = vadd.f32 %v6800, %v6960
        %v6962 = vpop.f32.mrf.mxu0
        %v6963 = vpop.f32.mrf.mxu0
        %v6964 = vadd.f32 %v6803, %v6963
        %v6965 = vpop.f32.mrf.mxu0
        %6966 = vmatprep.mubr.bf16.mxu0 0
        %6967 = vmatmul.mubr.bf16.gmra.mxu0 %v6465
        %v6968 = vpop.f32.mrf.mxu0
        %v6969 = vadd.f32 %v6808, %v6968
        %v6970 = vpop.f32.mrf.mxu0
        %v6971 = vpop.f32.mrf.mxu0
        %v6972 = vadd.f32 %v6811, %v6971
        %v6973 = vpop.f32.mrf.mxu0
        %6974 = vmatprep.mubr.bf16.mxu0 0
        %6975 = vmatmul.mubr.bf16.gmra.mxu0 %v6468
        %v6976 = vpop.f32.mrf.mxu0
        %v6977 = vadd.f32 %v6816, %v6976
        %v6978 = vpop.f32.mrf.mxu0
        %v6979 = vpop.f32.mrf.mxu0
        %v6980 = vadd.f32 %v6819, %v6979
        %v6981 = vpop.f32.mrf.mxu0
        %6982 = vdwg.mxu0
        %v6983 = vadd.f32 %v6023, %v6857
        %v6984 = vadd.f32 %v6026, %v6860
        %v6985 = vadd.f32 %v6031, %v6865
        %v6986 = vadd.f32 %v6034, %v6868
        %v6987 = vadd.f32 %v6039, %v6873
        %v6988 = vadd.f32 %v6042, %v6876
        %v6989 = vadd.f32 %v6047, %v6881
        %v6990 = vadd.f32 %v6050, %v6884
        %v6991 = vadd.f32 %v6055, %v6889
        %v6992 = vadd.f32 %v6058, %v6892
        %v6993 = vadd.f32 %v6063, %v6897
        %v6994 = vadd.f32 %v6066, %v6900
        %v6995 = vadd.f32 %v6071, %v6905
        %v6996 = vadd.f32 %v6074, %v6908
        %v6997 = vadd.f32 %v6079, %v6913
        %v6998 = vadd.f32 %v6082, %v6916
        %v6999 = vadd.f32 %v6087, %v6921
        %v7000 = vadd.f32 %v6090, %v6924
        %v7001 = vadd.f32 %v6095, %v6929
        %v7002 = vadd.f32 %v6098, %v6932
        %v7003 = vadd.f32 %v6103, %v6937
        %v7004 = vadd.f32 %v6106, %v6940
        %v7005 = vadd.f32 %v6111, %v6945
        %v7006 = vadd.f32 %v6114, %v6948
        %v7007 = vadd.f32 %v6119, %v6953
        %v7008 = vadd.f32 %v6122, %v6956
        %v7009 = vadd.f32 %v6127, %v6961
        %v7010 = vadd.f32 %v6130, %v6964
        %v7011 = vadd.f32 %v6135, %v6969
        %v7012 = vadd.f32 %v6138, %v6972
        %v7013 = vadd.f32 %v6143, %v6977
        %v7014 = vadd.f32 %v6146, %v6980
        %v7015 = vunpack.c.l.bf16 %v418
        %v7016 = vunpack.c.l.bf16 %v419
        %v7017 = vunpack.c.l.bf16 %v420
        %v7018 = vunpack.c.l.bf16 %v421
        %v7019 = vunpack.c.l.bf16 %v422
        %v7020 = vunpack.c.l.bf16 %v423
        %v7021 = vunpack.c.l.bf16 %v424
        %v7022 = vunpack.c.l.bf16 %v425
        %v7023 = vunpack.c.l.bf16 %v426
        %v7024 = vunpack.c.l.bf16 %v427
        %v7025 = vunpack.c.l.bf16 %v428
        %v7026 = vunpack.c.l.bf16 %v429
        %v7027 = vunpack.c.l.bf16 %v430
        %v7028 = vunpack.c.l.bf16 %v431
        %v7029 = vunpack.c.l.bf16 %v432
        %v7030 = vunpack.c.l.bf16 %v433
        %v7031 = vunpack.c.l.bf16 %v434
        %v7032 = vunpack.c.l.bf16 %v435
        %v7033 = vunpack.c.l.bf16 %v436
        %v7034 = vunpack.c.l.bf16 %v437
        %v7035 = vunpack.c.l.bf16 %v438
        %v7036 = vunpack.c.l.bf16 %v439
        %v7037 = vunpack.c.l.bf16 %v440
        %v7038 = vunpack.c.l.bf16 %v441
        %v7039 = vunpack.c.l.bf16 %v442
        %v7040 = vunpack.c.l.bf16 %v443
        %v7041 = vunpack.c.l.bf16 %v444
        %v7042 = vunpack.c.l.bf16 %v445
        %v7043 = vunpack.c.l.bf16 %v446
        %v7044 = vunpack.c.l.bf16 %v447
        %v7045 = vunpack.c.l.bf16 %v448
        %v7046 = vunpack.c.l.bf16 %v449
        %v7047 = vld [vmem:[%s5] sm:$0x1]
        %v7049 = vlaneseq
        %v7050 = vshrl.u32 %v7049, 7
        %v7051 = vsub.s32 0, %v7050
        %v7052 = vrot.slane %v7047, %v7051
        %v7054 = vmul.f32 %v6983, %v7052
        %v7055 = vmul.f32 %v6984, %v7052
        %v7056 = vmul.f32 %v6985, %v7052
        %v7057 = vmul.f32 %v6986, %v7052
        %v7058 = vmul.f32 %v6987, %v7052
        %v7059 = vmul.f32 %v6988, %v7052
        %v7060 = vmul.f32 %v6989, %v7052
        %v7061 = vmul.f32 %v6990, %v7052
        %v7062 = vmul.f32 %v6991, %v7052
        %v7063 = vmul.f32 %v6992, %v7052
        %v7064 = vmul.f32 %v6993, %v7052
        %v7065 = vmul.f32 %v6994, %v7052
        %v7066 = vmul.f32 %v6995, %v7052
        %v7067 = vmul.f32 %v6996, %v7052
        %v7068 = vmul.f32 %v6997, %v7052
        %v7069 = vmul.f32 %v6998, %v7052
        %v7070 = vmul.f32 %v6999, %v7052
        %v7071 = vmul.f32 %v7000, %v7052
        %v7072 = vmul.f32 %v7001, %v7052
        %v7073 = vmul.f32 %v7002, %v7052
        %v7074 = vmul.f32 %v7003, %v7052
        %v7075 = vmul.f32 %v7004, %v7052
        %v7076 = vmul.f32 %v7005, %v7052
        %v7077 = vmul.f32 %v7006, %v7052
        %v7078 = vmul.f32 %v7007, %v7052
        %v7079 = vmul.f32 %v7008, %v7052
        %v7080 = vmul.f32 %v7009, %v7052
        %v7081 = vmul.f32 %v7010, %v7052
        %v7082 = vmul.f32 %v7011, %v7052
        %v7083 = vmul.f32 %v7012, %v7052
        %v7084 = vmul.f32 %v7013, %v7052
        %v7085 = vmul.f32 %v7014, %v7052
        %v7086 = vld [vmem:[%s6] sm:$0x1]
        %v7088 = vlaneseq
        %v7089 = vshrl.u32 %v7088, 7
        %v7090 = vsub.s32 0, %v7089
        %v7091 = vrot.slane %v7086, %v7090
        %v7093 = vadd.f32 %v7054, %v7091
        %v7094 = vadd.f32 %v7055, %v7091
        %v7095 = vadd.f32 %v7056, %v7091
        %v7096 = vadd.f32 %v7057, %v7091
        %v7097 = vadd.f32 %v7058, %v7091
        %v7098 = vadd.f32 %v7059, %v7091
        %v7099 = vadd.f32 %v7060, %v7091
        %v7100 = vadd.f32 %v7061, %v7091
        %v7101 = vadd.f32 %v7062, %v7091
        %v7102 = vadd.f32 %v7063, %v7091
        %v7103 = vadd.f32 %v7064, %v7091
        %v7104 = vadd.f32 %v7065, %v7091
        %v7105 = vadd.f32 %v7066, %v7091
        %v7106 = vadd.f32 %v7067, %v7091
        %v7107 = vadd.f32 %v7068, %v7091
        %v7108 = vadd.f32 %v7069, %v7091
        %v7109 = vadd.f32 %v7070, %v7091
        %v7110 = vadd.f32 %v7071, %v7091
        %v7111 = vadd.f32 %v7072, %v7091
        %v7112 = vadd.f32 %v7073, %v7091
        %v7113 = vadd.f32 %v7074, %v7091
        %v7114 = vadd.f32 %v7075, %v7091
        %v7115 = vadd.f32 %v7076, %v7091
        %v7116 = vadd.f32 %v7077, %v7091
        %v7117 = vadd.f32 %v7078, %v7091
        %v7118 = vadd.f32 %v7079, %v7091
        %v7119 = vadd.f32 %v7080, %v7091
        %v7120 = vadd.f32 %v7081, %v7091
        %v7121 = vadd.f32 %v7082, %v7091
        %v7122 = vadd.f32 %v7083, %v7091
        %v7123 = vadd.f32 %v7084, %v7091
        %v7124 = vadd.f32 %v7085, %v7091
        %v7125 = vadd.f32 %v7093, %v7015
        %v7126 = vadd.f32 %v7094, %v7016
        %v7127 = vadd.f32 %v7095, %v7017
        %v7128 = vadd.f32 %v7096, %v7018
        %v7129 = vadd.f32 %v7097, %v7019
        %v7130 = vadd.f32 %v7098, %v7020
        %v7131 = vadd.f32 %v7099, %v7021
        %v7132 = vadd.f32 %v7100, %v7022
        %v7133 = vadd.f32 %v7101, %v7023
        %v7134 = vadd.f32 %v7102, %v7024
        %v7135 = vadd.f32 %v7103, %v7025
        %v7136 = vadd.f32 %v7104, %v7026
        %v7137 = vadd.f32 %v7105, %v7027
        %v7138 = vadd.f32 %v7106, %v7028
        %v7139 = vadd.f32 %v7107, %v7029
        %v7140 = vadd.f32 %v7108, %v7030
        %v7141 = vadd.f32 %v7109, %v7031
        %v7142 = vadd.f32 %v7110, %v7032
        %v7143 = vadd.f32 %v7111, %v7033
        %v7144 = vadd.f32 %v7112, %v7034
        %v7145 = vadd.f32 %v7113, %v7035
        %v7146 = vadd.f32 %v7114, %v7036
        %v7147 = vadd.f32 %v7115, %v7037
        %v7148 = vadd.f32 %v7116, %v7038
        %v7149 = vadd.f32 %v7117, %v7039
        %v7150 = vadd.f32 %v7118, %v7040
        %v7151 = vadd.f32 %v7119, %v7041
        %v7152 = vadd.f32 %v7120, %v7042
        %v7153 = vadd.f32 %v7121, %v7043
        %v7154 = vadd.f32 %v7122, %v7044
        %v7155 = vadd.f32 %v7123, %v7045
        %v7156 = vadd.f32 %v7124, %v7046
        %v7157 = vmax.f32 %v7125, 0.0
        %v7158 = vmax.f32 %v7126, 0.0
        %v7159 = vmax.f32 %v7127, 0.0
        %v7160 = vmax.f32 %v7128, 0.0
        %v7161 = vmax.f32 %v7129, 0.0
        %v7162 = vmax.f32 %v7130, 0.0
        %v7163 = vmax.f32 %v7131, 0.0
        %v7164 = vmax.f32 %v7132, 0.0
        %v7165 = vmax.f32 %v7133, 0.0
        %v7166 = vmax.f32 %v7134, 0.0
        %v7167 = vmax.f32 %v7135, 0.0
        %v7168 = vmax.f32 %v7136, 0.0
        %v7169 = vmax.f32 %v7137, 0.0
        %v7170 = vmax.f32 %v7138, 0.0
        %v7171 = vmax.f32 %v7139, 0.0
        %v7172 = vmax.f32 %v7140, 0.0
        %v7173 = vmax.f32 %v7141, 0.0
        %v7174 = vmax.f32 %v7142, 0.0
        %v7175 = vmax.f32 %v7143, 0.0
        %v7176 = vmax.f32 %v7144, 0.0
        %v7177 = vmax.f32 %v7145, 0.0
        %v7178 = vmax.f32 %v7146, 0.0
        %v7179 = vmax.f32 %v7147, 0.0
        %v7180 = vmax.f32 %v7148, 0.0
        %v7181 = vmax.f32 %v7149, 0.0
        %v7182 = vmax.f32 %v7150, 0.0
        %v7183 = vmax.f32 %v7151, 0.0
        %v7184 = vmax.f32 %v7152, 0.0
        %v7185 = vmax.f32 %v7153, 0.0
        %v7186 = vmax.f32 %v7154, 0.0
        %v7187 = vmax.f32 %v7155, 0.0
        %v7188 = vmax.f32 %v7156, 0.0
        %v7189 = vpack.c.bf16 %v7158, %v7157
        %v7190 = vpack.c.bf16 %v7160, %v7159
        %v7191 = vpack.c.bf16 %v7162, %v7161
        %v7192 = vpack.c.bf16 %v7164, %v7163
        %v7193 = vpack.c.bf16 %v7166, %v7165
        %v7194 = vpack.c.bf16 %v7168, %v7167
        %v7195 = vpack.c.bf16 %v7170, %v7169
        %v7196 = vpack.c.bf16 %v7172, %v7171
        %v7197 = vpack.c.bf16 %v7174, %v7173
        %v7198 = vpack.c.bf16 %v7176, %v7175
        %v7199 = vpack.c.bf16 %v7178, %v7177
        %v7200 = vpack.c.bf16 %v7180, %v7179
        %v7201 = vpack.c.bf16 %v7182, %v7181
        %v7202 = vpack.c.bf16 %v7184, %v7183
        %v7203 = vpack.c.bf16 %v7186, %v7185
        %v7204 = vpack.c.bf16 %v7188, %v7187
        %v7221 = vunpack.c.l.b16 %v7189
        %v7222 = vunpack.c.h.b16 %v7189
        %v7223 = vunpack.c.l.b16 %v7190
        %v7224 = vunpack.c.h.b16 %v7190
        %v7225 = vunpack.c.l.b16 %v7191
        %v7226 = vunpack.c.h.b16 %v7191
        %v7227 = vunpack.c.l.b16 %v7192
        %v7228 = vunpack.c.h.b16 %v7192
        %v7229 = vunpack.c.l.b16 %v7193
        %v7230 = vunpack.c.h.b16 %v7193
        %v7231 = vunpack.c.l.b16 %v7194
        %v7232 = vunpack.c.h.b16 %v7194
        %v7233 = vunpack.c.l.b16 %v7195
        %v7234 = vunpack.c.h.b16 %v7195
        %v7235 = vunpack.c.l.b16 %v7196
        %v7236 = vunpack.c.h.b16 %v7196
        %v7237 = vunpack.c.l.b16 %v7197
        %v7238 = vunpack.c.h.b16 %v7197
        %v7239 = vunpack.c.l.b16 %v7198
        %v7240 = vunpack.c.h.b16 %v7198
        %v7241 = vunpack.c.l.b16 %v7199
        %v7242 = vunpack.c.h.b16 %v7199
        %v7243 = vunpack.c.l.b16 %v7200
        %v7244 = vunpack.c.h.b16 %v7200
        %v7245 = vunpack.c.l.b16 %v7201
        %v7246 = vunpack.c.h.b16 %v7201
        %v7247 = vunpack.c.l.b16 %v7202
        %v7248 = vunpack.c.h.b16 %v7202
        %v7249 = vunpack.c.l.b16 %v7203
        %v7250 = vunpack.c.h.b16 %v7203
        %v7251 = vunpack.c.l.b16 %v7204
        %v7252 = vunpack.c.h.b16 %v7204
        %v7253 = vpack.c.b16 %v7221, %v7221
        %v7254 = vpack.c.b16 %v7222, %v7222
        %v7255 = vpack.c.b16 %v7223, %v7223
        %v7256 = vpack.c.b16 %v7224, %v7224
        %v7257 = vpack.c.b16 %v7225, %v7225
        %v7258 = vpack.c.b16 %v7226, %v7226
        %v7259 = vpack.c.b16 %v7227, %v7227
        %v7260 = vpack.c.b16 %v7228, %v7228
        %v7261 = vpack.c.b16 %v7229, %v7229
        %v7262 = vpack.c.b16 %v7230, %v7230
        %v7263 = vpack.c.b16 %v7231, %v7231
        %v7264 = vpack.c.b16 %v7232, %v7232
        %v7265 = vpack.c.b16 %v7233, %v7233
        %v7266 = vpack.c.b16 %v7234, %v7234
        %v7267 = vpack.c.b16 %v7235, %v7235
        %v7268 = vpack.c.b16 %v7236, %v7236
        %v7269 = vpack.c.b16 %v7237, %v7237
        %v7270 = vpack.c.b16 %v7238, %v7238
        %v7271 = vpack.c.b16 %v7239, %v7239
        %v7272 = vpack.c.b16 %v7240, %v7240
        %v7273 = vpack.c.b16 %v7241, %v7241
        %v7274 = vpack.c.b16 %v7242, %v7242
        %v7275 = vpack.c.b16 %v7243, %v7243
        %v7276 = vpack.c.b16 %v7244, %v7244
        %v7277 = vpack.c.b16 %v7245, %v7245
        %v7278 = vpack.c.b16 %v7246, %v7246
        %v7279 = vpack.c.b16 %v7247, %v7247
        %v7280 = vpack.c.b16 %v7248, %v7248
        %v7281 = vpack.c.b16 %v7249, %v7249
        %v7282 = vpack.c.b16 %v7250, %v7250
        %v7283 = vpack.c.b16 %v7251, %v7251
        %v7284 = vpack.c.b16 %v7252, %v7252
        %7317 = vst [vmem:[%s293] sm:$0xf] %v7253
        %7318 = vst [vmem:[%s293 + $0x4] sm:$0xf] %v7254
        %7319 = vst [vmem:[%s293 + $0x8] sm:$0xf] %v7255
        %7320 = vst [vmem:[%s293 + $0xc] sm:$0xf] %v7256
        %7321 = vst [vmem:[%s293 + $0x10] sm:$0xf] %v7257
        %7322 = vst [vmem:[%s293 + $0x14] sm:$0xf] %v7258
        %7323 = vst [vmem:[%s293 + $0x18] sm:$0xf] %v7259
        %7324 = vst [vmem:[%s293 + $0x1c] sm:$0xf] %v7260
        %7325 = vst [vmem:[%s293 + $0x20] sm:$0xf] %v7261
        %7326 = vst [vmem:[%s293 + $0x24] sm:$0xf] %v7262
        %7327 = vst [vmem:[%s293 + $0x28] sm:$0xf] %v7263
        %7328 = vst [vmem:[%s293 + $0x2c] sm:$0xf] %v7264
        %7329 = vst [vmem:[%s293 + $0x30] sm:$0xf] %v7265
        %7330 = vst [vmem:[%s293 + $0x34] sm:$0xf] %v7266
        %7331 = vst [vmem:[%s293 + $0x38] sm:$0xf] %v7267
        %7332 = vst [vmem:[%s293 + $0x3c] sm:$0xf] %v7268
        %7333 = vst [vmem:[%s293 + $0x40] sm:$0xf] %v7269
        %7334 = vst [vmem:[%s293 + $0x44] sm:$0xf] %v7270
        %7335 = vst [vmem:[%s293 + $0x48] sm:$0xf] %v7271
        %7336 = vst [vmem:[%s293 + $0x4c] sm:$0xf] %v7272
        %7337 = vst [vmem:[%s293 + $0x50] sm:$0xf] %v7273
        %7338 = vst [vmem:[%s293 + $0x54] sm:$0xf] %v7274
        %7339 = vst [vmem:[%s293 + $0x58] sm:$0xf] %v7275
        %7340 = vst [vmem:[%s293 + $0x5c] sm:$0xf] %v7276
        %7341 = vst [vmem:[%s293 + $0x60] sm:$0xf] %v7277
        %7342 = vst [vmem:[%s293 + $0x64] sm:$0xf] %v7278
        %7343 = vst [vmem:[%s293 + $0x68] sm:$0xf] %v7279
        %7344 = vst [vmem:[%s293 + $0x6c] sm:$0xf] %v7280
        %7345 = vst [vmem:[%s293 + $0x70] sm:$0xf] %v7281
        %7346 = vst [vmem:[%s293 + $0x74] sm:$0xf] %v7282
        %7347 = vst [vmem:[%s293 + $0x78] sm:$0xf] %v7283
        %7348 = vst [vmem:[%s293 + $0x7c] sm:$0xf] %v7284
        %p7349 = scmp.lt.s32.totalorder %s19, 1
        %s7350 = scalar_select %p7349, %s19, 1
        %s7351 = smul.addr %s7350, 32
        %s7352 = smul.addr %s7351, 4
        %s7353 = scalar_lea.vmem %s7, %s7352
        // Predicated region
        $region53: #{basic_block_apply.1} parent=47 // pred_check
          %p7354 = pneg %p189
        $region54: #{basic_block_apply.1} parent=47 // pred_check_branch
          %7356 = sbr.rel (%p7354) target = $region56
        $region55: #{basic_block_apply.1} parent=47 // pred_region
          _
        $region56: #{basic_block_apply.1} parent=47 // pred_fallthru
          _
      $region48: #{basic_block_apply.1} parent=5 // pred_fallthru
        _
      %p7357 = scmp.le.s32.totalorder 2, %s14
      // Predicated region
      $region57: #{basic_block_apply.1} parent=5 // pred_check
        %p7358 = pneg %p7357
      $region58: #{basic_block_apply.1} parent=5 // pred_check_branch
        %7360 = sbr.rel (%p7358) target = $region60
      $region59: #{basic_block_apply.1} parent=5 // pred_region
        %s7361 = ssub.s32 %s14, 2
        // Predicated region
        $region61: #{basic_block_apply.1} parent=59 // pred_check
          %p7362 = pneg %p195
        $region62: #{basic_block_apply.1} parent=59 // pred_check_branch
          %7364 = sbr.rel (%p7362) target = $region64
        $region63: #{basic_block_apply.1} parent=59 // pred_region
          %p7365 = scmp.lt.s32.totalorder %s20, 1
          %s7366 = scalar_select %p7365, %s20, 1
          %s7367 = smul.addr %s7366, 32
          %s7368 = smul.addr %s7367, 4
          %s7369 = scalar_lea.vmem %s7, %s7368
        $region64: #{basic_block_apply.1} parent=59 // pred_fallthru
          _
      $region60: #{basic_block_apply.1} parent=5 // pred_fallthru
        _
    $region6: #{basic_block_apply.1} parent=1 // loop_footer
      %s18 = sadd.s32 1, %s14
    $region7: #{basic_block_apply.1} parent=1 // loop_footer_branch
      %13 = sbr.rel target = $region3
    $region8: #{basic_block_apply.1} parent=1 // loop_exit
      _
    %7370 = vsyncpa [#allocation4], 1
    %s7371 = scalar_lea.sflag [#allocation4], 1
    %7372 = vsyncpa %s7371, 1

</llo_original>
